<compile_context>
chip_gen: v6e
topology: v6e:2x2x1
jax: 0.10.0
libtpu: 0.0.40
codegen_flags: <defaults>
</compile_context>

<pallas_src>
import numpy as np
import jax
import jax.numpy as jnp
from jax.experimental import pallas as pl
from jax.experimental.pallas import tpu as pltpu

# ---------------------------------------------------------------------------
# Static problem geometry (fixed by the module: 1x28x28 input)
# ---------------------------------------------------------------------------
TILE_N_MAX = 128      # v7x-safe batch tile; v5e/v6e (128 MiB VMEM) can use 256
IH = IW = 28          # input spatial
KH = KW = 5           # conv kernel
OH = OW = 24          # conv output spatial
PH = PW = 12          # pooled spatial
C_OUT = 32            # conv channels
HID = 128             # fc1 width (also the padded logits width)
N_CLS = 10            # logits
POOL_COLS = PW * C_OUT          # 384  (cols = w*32 + c)
CONV_COLS = 2 * POOL_COLS       # 768  (cols = parity*384 + w*32 + c, ow = 2w+parity)
FC1_K = PH * POOL_COLS          # 4608


def _round_up(v, m):
    return -(-v // m) * m


# ---------------------------------------------------------------------------
# Fused kernel: conv + ReLU + maxpool + fc1 + ReLU + fc2 for one batch tile
# x block layout: (28, tile_n, 28) = (image_row, image, col) so every row-wise
# operation below is a sublane-aligned block slice (tile_n % 8 == 0).
# ---------------------------------------------------------------------------
def _make_kernel(tile_n):
    def kernel(x_ref, cmat_ref, cbias_ref, w1_ref, b1_ref, w2_ref, b2_ref, out_ref):
        x = x_ref[...]          # (28, tile_n, 28)
        cmat = cmat_ref[...]    # (5, 28, 768) banded row-conv matrices

        # ---- conv(1->32, 5x5) as 5 accumulated MXU matmuls --------------------
        # rows of `acc` = (oh, n)  (oh-major!), cols = parity*384 + w*32 + c.
        acc = None
        for di in range(KH):
            xd = x[di:di + OH].reshape(OH * tile_n, IW)    # aligned slice + free reshape
            term = jnp.dot(xd, cmat[di], preferred_element_type=jnp.float32)
            acc = term if acc is None else acc + term       # (24*tile_n, 768)
        acc = jnp.maximum(acc + cbias_ref[...], 0.0)        # bias + ReLU

        # ---- MaxPool2d(2,2), width half: even/odd column halves (lane-aligned) --
        zw = jnp.maximum(acc[:, :POOL_COLS], acc[:, POOL_COLS:])   # (24*tile_n, 384)

        # ---- height half + NCHW flatten ----------------------------------------
        # rows are (oh-major, n): rows 2h / 2h+1 are aligned tile_n-row blocks.
        # Concatenating the 12 pooled blocks along lanes gives the fc1 input
        # (tile_n, 4608) with col = h*384 + w*32 + c (weights pre-permuted).
        pooled = [jnp.maximum(zw[(2 * h) * tile_n:(2 * h + 1) * tile_n, :],
                              zw[(2 * h + 1) * tile_n:(2 * h + 2) * tile_n, :])
                  for h in range(PH)]
        flat = jnp.concatenate(pooled, axis=1)              # (tile_n, 4608)

        # ---- fc1 + ReLU (single K=4608 matmul), fc2 padded to 128 lanes --------
        h1 = jnp.maximum(jnp.dot(flat, w1_ref[...], preferred_element_type=jnp.float32)
                         + b1_ref[...], 0.0)                # (tile_n, 128)
        out_ref[...] = (jnp.dot(h1, w2_ref[...], preferred_element_type=jnp.float32)
                        + b2_ref[...])                      # dense (tile_n, 128) store
    return kernel


# ---------------------------------------------------------------------------
# One-time parameter preprocessing (hoisted off the forward path)
# ---------------------------------------------------------------------------
def prepare_params(params):
    w_conv, b_conv, w_fc1, b_fc1, w_fc2, b_fc2 = [
        np.asarray(p, np.float32) for p in params]

    # Conv folded into 5 banded (28 -> 768) matrices:
    #   cmat[di, 2w+p+dj, p*384 + w*32 + c] = w_conv[c, 0, di, dj]
    wc = w_conv.reshape(C_OUT, KH, KW)
    cmat = np.zeros((KH, IW, 2, PW, C_OUT), np.float32)
    for di in range(KH):
        for dj in range(KW):
            for w in range(PW):
                for p in range(2):
                    cmat[di, 2 * w + p + dj, p, w, :] = wc[:, di, dj]
    cmat = cmat.reshape(KH, IW, CONV_COLS)
    cbias = np.tile(b_conv, 2 * PW)[None, :]                 # (1, 768), col c = j % 32

    # fc1: torch flat index is c*144 + h*12 + w; kernel flat col is h*384 + w*32 + c.
    w1p = (w_fc1.reshape(HID, C_OUT, PH, PW)
           .transpose(2, 3, 1, 0)                            # (h, w, c, out)
           .reshape(FC1_K, HID))                             # (4608, 128)
    b1p = b_fc1.reshape(1, HID)

    # fc2 transposed and zero-padded to 128 output lanes (wrapper slices [:, :10]).
    w2p = np.zeros((HID, HID), np.float32)
    w2p[:, :N_CLS] = w_fc2.T
    b2p = np.zeros((1, HID), np.float32)
    b2p[0, :N_CLS] = b_fc2

    return tuple(jnp.asarray(a) for a in (cmat, cbias, w1p, b1p, w2p, b2p))


def _const_spec(arr):
    nd = arr.ndim
    # Resident (grid-invariant) weights.  Could be single-buffered via
    # pipeline_mode=pl.Buffered(1); kept default for compatibility (fits easily).
    return pl.BlockSpec(arr.shape, lambda i, _nd=nd: (0,) * _nd)


# ---------------------------------------------------------------------------
# Forward pass: one fused pallas_call gridded over batch tiles
# ---------------------------------------------------------------------------
@jax.jit
def convnet_forward(x, prep):
    """x: (N, 1, 28, 28) float32 (NCHW). prep = prepare_params(params). -> (N, 10)."""
    cmat, cbias, w1p, b1p, w2p, b2p = prep
    N = x.shape[0]
    tile_n = min(TILE_N_MAX, _round_up(max(N, 1), 8))        # big tiles for big batches
    n_pad = _round_up(N, tile_n)

    xs = x.reshape(N, IH, IW).astype(jnp.float32)
    if n_pad != N:
        # Pad rows compute garbage logits that are sliced off below (last-tile waste
        # only; acceptable per review).
        xs = jnp.pad(xs, ((0, n_pad - N), (0, 0), (0, 0)))
    # Layout plumbing in the wrapper: (image_row, image, col) so all in-kernel
    # row slices are sublane-aligned.
    xt = jnp.transpose(xs, (1, 0, 2))                        # (28, n_pad, 28)

    weights = (cmat, cbias, w1p, b1p, w2p, b2p)
    out = pl.pallas_call(
        _make_kernel(tile_n),
        grid=(n_pad // tile_n,),
        in_specs=[pl.BlockSpec((IH, tile_n, IW), lambda i: (0, i, 0))]
                 + [_const_spec(w) for w in weights],
        out_specs=pl.BlockSpec((tile_n, HID), lambda i: (i, 0)),
        out_shape=jax.ShapeDtypeStruct((n_pad, HID), jnp.float32),
        compiler_params=pltpu.CompilerParams(
            dimension_semantics=("parallel",),               # shards across v7x's 2 TCs
            vmem_limit_bytes=48 * 1024 * 1024),              # ~31 MiB peak at tile_n=128
    )(xt, *weights)
    return out[:N, :N_CLS]


# ---------------------------------------------------------------------------
# Plain-JAX reference of the PyTorch module (self-check only)
# ---------------------------------------------------------------------------
def _reference_forward(x, params):
    w_conv, b_conv, w_fc1, b_fc1, w_fc2, b_fc2 = params
    N = x.shape[0]
    patches = jnp.stack(
        [x[:, 0, di:di + OH, dj:dj + OW] for di in range(KH) for dj in range(KW)],
        axis=-1)                                                        # (N,24,24,25)
    conv = jnp.einsum("nhwk,kc->nhwc", patches,
                      w_conv.reshape(C_OUT, KH * KW).T) + b_conv
    conv = jnp.maximum(conv, 0.0)
    pooled = jnp.max(conv.reshape(N, PH, 2, PW, 2, C_OUT), axis=(2, 4))  # (N,12,12,32)
    flat = pooled.transpose(0, 3, 1, 2).reshape(N, C_OUT * PH * PW)      # NCHW flatten
    h = jnp.maximum(flat @ w_fc1.T + b_fc1, 0.0)
    return h @ w_fc2.T + b_fc2


# ---------------------------------------------------------------------------
# Smoke test
# ---------------------------------------------------------------------------
if __name__ == "__main__":
    key = jax.random.PRNGKey(0)
    ks = jax.random.split(key, 7)

    N = 2  # spatial must be 28x28 so 32*12*12 matches fc1
    x = jax.random.normal(ks[0], (N, 1, 28, 28), dtype=jnp.float32)

    # Torch-shaped parameters, deterministic synthetic init.
    w_conv = jax.random.normal(ks[1], (32, 1, 5, 5), dtype=jnp.float32) * 0.1
    b_conv = jax.random.normal(ks[2], (32,), dtype=jnp.float32) * 0.1
    w_fc1 = jax.random.normal(ks[3], (128, 32 * 12 * 12), dtype=jnp.float32) * 0.01
    b_fc1 = jax.random.normal(ks[4], (128,), dtype=jnp.float32) * 0.01
    w_fc2 = jax.random.normal(ks[5], (10, 128), dtype=jnp.float32) * 0.05
    b_fc2 = jax.random.normal(ks[6], (10,), dtype=jnp.float32) * 0.05
    params = (w_conv, b_conv, w_fc1, b_fc1, w_fc2, b_fc2)

    prep = prepare_params(params)          # one-time weight re-layout (off the hot path)
    out = convnet_forward(x, prep)
    jax.block_until_ready(out)
    assert out.shape == (N, 10) and out.dtype == jnp.float32

    ref = _reference_forward(x, params)
    err = float(jnp.max(jnp.abs(out - ref)))
    assert err < 2e-3, f"mismatch vs reference: {err}"

    print("KERNEL_OK")
</pallas_src>

<mosaic_0001>
module attributes {stable_mosaic.version = 11 : i64} {
  func.func @kernel(%arg0: i32, %arg1: memref<28x8x28xf32, #tpu.memory_space<vmem>>, %arg2: memref<5x28x768xf32, #tpu.memory_space<vmem>>, %arg3: memref<1x768xf32, #tpu.memory_space<vmem>>, %arg4: memref<4608x128xf32, #tpu.memory_space<vmem>>, %arg5: memref<1x128xf32, #tpu.memory_space<vmem>>, %arg6: memref<128x128xf32, #tpu.memory_space<vmem>>, %arg7: memref<1x128xf32, #tpu.memory_space<vmem>>, %arg8: memref<8x128xf32, #tpu.memory_space<vmem>>) attributes {dimension_semantics = [#tpu.dimension_semantics<parallel>], iteration_bounds = array<i64: 1>, scalar_prefetch = 0 : i64, scratch_operands = 0 : i64, tpu.core_type = #tpu.core_type<tc>, window_params = [{transform_indices = @transform_0, window_bounds = array<i64: 28, 8, 28>}, {pipeline_mode = #tpu.pipeline_mode<synchronous>, transform_indices = @transform_1, window_bounds = array<i64: 5, 28, 768>}, {pipeline_mode = #tpu.pipeline_mode<synchronous>, transform_indices = @transform_2, window_bounds = array<i64: 1, 768>}, {pipeline_mode = #tpu.pipeline_mode<synchronous>, transform_indices = @transform_3, window_bounds = array<i64: 4608, 128>}, {pipeline_mode = #tpu.pipeline_mode<synchronous>, transform_indices = @transform_4, window_bounds = array<i64: 1, 128>}, {pipeline_mode = #tpu.pipeline_mode<synchronous>, transform_indices = @transform_5, window_bounds = array<i64: 128, 128>}, {pipeline_mode = #tpu.pipeline_mode<synchronous>, transform_indices = @transform_6, window_bounds = array<i64: 1, 128>}, {transform_indices = @transform_7, window_bounds = array<i64: 8, 128>}]} {
    %c0 = arith.constant 0 : index
    %c0_0 = arith.constant 0 : index
    %c0_1 = arith.constant 0 : index
    %0 = vector.load %arg1[%c0, %c0_0, %c0_1] : memref<28x8x28xf32, #tpu.memory_space<vmem>>, vector<28x8x28xf32>
    %c0_2 = arith.constant 0 : index
    %c0_3 = arith.constant 0 : index
    %c0_4 = arith.constant 0 : index
    %1 = vector.load %arg2[%c0_2, %c0_3, %c0_4] : memref<5x28x768xf32, #tpu.memory_space<vmem>>, vector<5x28x768xf32>
    %2 = vector.extract_strided_slice %0 {offsets = [0, 0, 0], sizes = [24, 8, 28], strides = [1, 1, 1]} : vector<28x8x28xf32> to vector<24x8x28xf32>
    %3 = vector.shape_cast %2 : vector<24x8x28xf32> to vector<192x28xf32>
    %4 = vector.extract_strided_slice %1 {offsets = [0, 0, 0], sizes = [1, 28, 768], strides = [1, 1, 1]} : vector<5x28x768xf32> to vector<1x28x768xf32>
    %5 = vector.shape_cast %4 : vector<1x28x768xf32> to vector<28x768xf32>
    %cst = arith.constant dense<0.000000e+00> : vector<192x768xf32>
    %6 = tpu.matmul %3, %5, %cst {dimension_numbers = #tpu.dot_dimension_numbers<[1], [0], [0], [1], [0, 0, 1, 1], [], []>} : vector<192x28xf32>, vector<28x768xf32>, vector<192x768xf32> -> vector<192x768xf32>
    %7 = vector.extract_strided_slice %0 {offsets = [1, 0, 0], sizes = [24, 8, 28], strides = [1, 1, 1]} : vector<28x8x28xf32> to vector<24x8x28xf32>
    %8 = vector.shape_cast %7 : vector<24x8x28xf32> to vector<192x28xf32>
    %9 = vector.extract_strided_slice %1 {offsets = [1, 0, 0], sizes = [1, 28, 768], strides = [1, 1, 1]} : vector<5x28x768xf32> to vector<1x28x768xf32>
    %10 = vector.shape_cast %9 : vector<1x28x768xf32> to vector<28x768xf32>
    %cst_5 = arith.constant dense<0.000000e+00> : vector<192x768xf32>
    %11 = tpu.matmul %8, %10, %cst_5 {dimension_numbers = #tpu.dot_dimension_numbers<[1], [0], [0], [1], [0, 0, 1, 1], [], []>} : vector<192x28xf32>, vector<28x768xf32>, vector<192x768xf32> -> vector<192x768xf32>
    %12 = arith.addf %6, %11 : vector<192x768xf32>
    %13 = vector.extract_strided_slice %0 {offsets = [2, 0, 0], sizes = [24, 8, 28], strides = [1, 1, 1]} : vector<28x8x28xf32> to vector<24x8x28xf32>
    %14 = vector.shape_cast %13 : vector<24x8x28xf32> to vector<192x28xf32>
    %15 = vector.extract_strided_slice %1 {offsets = [2, 0, 0], sizes = [1, 28, 768], strides = [1, 1, 1]} : vector<5x28x768xf32> to vector<1x28x768xf32>
    %16 = vector.shape_cast %15 : vector<1x28x768xf32> to vector<28x768xf32>
    %cst_6 = arith.constant dense<0.000000e+00> : vector<192x768xf32>
    %17 = tpu.matmul %14, %16, %cst_6 {dimension_numbers = #tpu.dot_dimension_numbers<[1], [0], [0], [1], [0, 0, 1, 1], [], []>} : vector<192x28xf32>, vector<28x768xf32>, vector<192x768xf32> -> vector<192x768xf32>
    %18 = arith.addf %12, %17 : vector<192x768xf32>
    %19 = vector.extract_strided_slice %0 {offsets = [3, 0, 0], sizes = [24, 8, 28], strides = [1, 1, 1]} : vector<28x8x28xf32> to vector<24x8x28xf32>
    %20 = vector.shape_cast %19 : vector<24x8x28xf32> to vector<192x28xf32>
    %21 = vector.extract_strided_slice %1 {offsets = [3, 0, 0], sizes = [1, 28, 768], strides = [1, 1, 1]} : vector<5x28x768xf32> to vector<1x28x768xf32>
    %22 = vector.shape_cast %21 : vector<1x28x768xf32> to vector<28x768xf32>
    %cst_7 = arith.constant dense<0.000000e+00> : vector<192x768xf32>
    %23 = tpu.matmul %20, %22, %cst_7 {dimension_numbers = #tpu.dot_dimension_numbers<[1], [0], [0], [1], [0, 0, 1, 1], [], []>} : vector<192x28xf32>, vector<28x768xf32>, vector<192x768xf32> -> vector<192x768xf32>
    %24 = arith.addf %18, %23 : vector<192x768xf32>
    %25 = vector.extract_strided_slice %0 {offsets = [4, 0, 0], sizes = [24, 8, 28], strides = [1, 1, 1]} : vector<28x8x28xf32> to vector<24x8x28xf32>
    %26 = vector.shape_cast %25 : vector<24x8x28xf32> to vector<192x28xf32>
    %27 = vector.extract_strided_slice %1 {offsets = [4, 0, 0], sizes = [1, 28, 768], strides = [1, 1, 1]} : vector<5x28x768xf32> to vector<1x28x768xf32>
    %28 = vector.shape_cast %27 : vector<1x28x768xf32> to vector<28x768xf32>
    %cst_8 = arith.constant dense<0.000000e+00> : vector<192x768xf32>
    %29 = tpu.matmul %26, %28, %cst_8 {dimension_numbers = #tpu.dot_dimension_numbers<[1], [0], [0], [1], [0, 0, 1, 1], [], []>} : vector<192x28xf32>, vector<28x768xf32>, vector<192x768xf32> -> vector<192x768xf32>
    %30 = arith.addf %24, %29 : vector<192x768xf32>
    %c0_9 = arith.constant 0 : index
    %c0_10 = arith.constant 0 : index
    %31 = vector.load %arg3[%c0_9, %c0_10] : memref<1x768xf32, #tpu.memory_space<vmem>>, vector<1x768xf32>
    %32 = vector.broadcast %31 : vector<1x768xf32> to vector<192x768xf32>
    %33 = arith.addf %30, %32 : vector<192x768xf32>
    %cst_11 = arith.constant 0.000000e+00 : f32
    %34 = vector.broadcast %cst_11 : f32 to vector<192x768xf32>
    %35 = arith.maximumf %33, %34 : vector<192x768xf32>
    %36 = vector.extract_strided_slice %35 {offsets = [0, 0], sizes = [192, 384], strides = [1, 1]} : vector<192x768xf32> to vector<192x384xf32>
    %37 = vector.extract_strided_slice %35 {offsets = [0, 384], sizes = [192, 384], strides = [1, 1]} : vector<192x768xf32> to vector<192x384xf32>
    %38 = arith.maximumf %36, %37 : vector<192x384xf32>
    %39 = vector.extract_strided_slice %38 {offsets = [0, 0], sizes = [8, 384], strides = [1, 1]} : vector<192x384xf32> to vector<8x384xf32>
    %40 = vector.extract_strided_slice %38 {offsets = [8, 0], sizes = [8, 384], strides = [1, 1]} : vector<192x384xf32> to vector<8x384xf32>
    %41 = arith.maximumf %39, %40 : vector<8x384xf32>
    %42 = vector.extract_strided_slice %38 {offsets = [16, 0], sizes = [8, 384], strides = [1, 1]} : vector<192x384xf32> to vector<8x384xf32>
    %43 = vector.extract_strided_slice %38 {offsets = [24, 0], sizes = [8, 384], strides = [1, 1]} : vector<192x384xf32> to vector<8x384xf32>
    %44 = arith.maximumf %42, %43 : vector<8x384xf32>
    %45 = vector.extract_strided_slice %38 {offsets = [32, 0], sizes = [8, 384], strides = [1, 1]} : vector<192x384xf32> to vector<8x384xf32>
    %46 = vector.extract_strided_slice %38 {offsets = [40, 0], sizes = [8, 384], strides = [1, 1]} : vector<192x384xf32> to vector<8x384xf32>
    %47 = arith.maximumf %45, %46 : vector<8x384xf32>
    %48 = vector.extract_strided_slice %38 {offsets = [48, 0], sizes = [8, 384], strides = [1, 1]} : vector<192x384xf32> to vector<8x384xf32>
    %49 = vector.extract_strided_slice %38 {offsets = [56, 0], sizes = [8, 384], strides = [1, 1]} : vector<192x384xf32> to vector<8x384xf32>
    %50 = arith.maximumf %48, %49 : vector<8x384xf32>
    %51 = vector.extract_strided_slice %38 {offsets = [64, 0], sizes = [8, 384], strides = [1, 1]} : vector<192x384xf32> to vector<8x384xf32>
    %52 = vector.extract_strided_slice %38 {offsets = [72, 0], sizes = [8, 384], strides = [1, 1]} : vector<192x384xf32> to vector<8x384xf32>
    %53 = arith.maximumf %51, %52 : vector<8x384xf32>
    %54 = vector.extract_strided_slice %38 {offsets = [80, 0], sizes = [8, 384], strides = [1, 1]} : vector<192x384xf32> to vector<8x384xf32>
    %55 = vector.extract_strided_slice %38 {offsets = [88, 0], sizes = [8, 384], strides = [1, 1]} : vector<192x384xf32> to vector<8x384xf32>
    %56 = arith.maximumf %54, %55 : vector<8x384xf32>
    %57 = vector.extract_strided_slice %38 {offsets = [96, 0], sizes = [8, 384], strides = [1, 1]} : vector<192x384xf32> to vector<8x384xf32>
    %58 = vector.extract_strided_slice %38 {offsets = [104, 0], sizes = [8, 384], strides = [1, 1]} : vector<192x384xf32> to vector<8x384xf32>
    %59 = arith.maximumf %57, %58 : vector<8x384xf32>
    %60 = vector.extract_strided_slice %38 {offsets = [112, 0], sizes = [8, 384], strides = [1, 1]} : vector<192x384xf32> to vector<8x384xf32>
    %61 = vector.extract_strided_slice %38 {offsets = [120, 0], sizes = [8, 384], strides = [1, 1]} : vector<192x384xf32> to vector<8x384xf32>
    %62 = arith.maximumf %60, %61 : vector<8x384xf32>
    %63 = vector.extract_strided_slice %38 {offsets = [128, 0], sizes = [8, 384], strides = [1, 1]} : vector<192x384xf32> to vector<8x384xf32>
    %64 = vector.extract_strided_slice %38 {offsets = [136, 0], sizes = [8, 384], strides = [1, 1]} : vector<192x384xf32> to vector<8x384xf32>
    %65 = arith.maximumf %63, %64 : vector<8x384xf32>
    %66 = vector.extract_strided_slice %38 {offsets = [144, 0], sizes = [8, 384], strides = [1, 1]} : vector<192x384xf32> to vector<8x384xf32>
    %67 = vector.extract_strided_slice %38 {offsets = [152, 0], sizes = [8, 384], strides = [1, 1]} : vector<192x384xf32> to vector<8x384xf32>
    %68 = arith.maximumf %66, %67 : vector<8x384xf32>
    %69 = vector.extract_strided_slice %38 {offsets = [160, 0], sizes = [8, 384], strides = [1, 1]} : vector<192x384xf32> to vector<8x384xf32>
    %70 = vector.extract_strided_slice %38 {offsets = [168, 0], sizes = [8, 384], strides = [1, 1]} : vector<192x384xf32> to vector<8x384xf32>
    %71 = arith.maximumf %69, %70 : vector<8x384xf32>
    %72 = vector.extract_strided_slice %38 {offsets = [176, 0], sizes = [8, 384], strides = [1, 1]} : vector<192x384xf32> to vector<8x384xf32>
    %73 = vector.extract_strided_slice %38 {offsets = [184, 0], sizes = [8, 384], strides = [1, 1]} : vector<192x384xf32> to vector<8x384xf32>
    %74 = arith.maximumf %72, %73 : vector<8x384xf32>
    %75 = tpu.concatenate %41, %44, %47, %50, %53, %56, %59, %62, %65, %68, %71, %74 in 1 : vector<8x384xf32>, vector<8x384xf32>, vector<8x384xf32>, vector<8x384xf32>, vector<8x384xf32>, vector<8x384xf32>, vector<8x384xf32>, vector<8x384xf32>, vector<8x384xf32>, vector<8x384xf32>, vector<8x384xf32>, vector<8x384xf32> -> vector<8x4608xf32>
    %c0_12 = arith.constant 0 : index
    %c0_13 = arith.constant 0 : index
    %76 = vector.load %arg4[%c0_12, %c0_13] : memref<4608x128xf32, #tpu.memory_space<vmem>>, vector<4608x128xf32>
    %cst_14 = arith.constant dense<0.000000e+00> : vector<8x128xf32>
    %77 = tpu.matmul %75, %76, %cst_14 {dimension_numbers = #tpu.dot_dimension_numbers<[1], [0], [0], [1], [0, 0, 1, 1], [], []>} : vector<8x4608xf32>, vector<4608x128xf32>, vector<8x128xf32> -> vector<8x128xf32>
    %c0_15 = arith.constant 0 : index
    %c0_16 = arith.constant 0 : index
    %78 = vector.load %arg5[%c0_15, %c0_16] : memref<1x128xf32, #tpu.memory_space<vmem>>, vector<1x128xf32>
    %79 = vector.broadcast %78 : vector<1x128xf32> to vector<8x128xf32>
    %80 = arith.addf %77, %79 : vector<8x128xf32>
    %cst_17 = arith.constant 0.000000e+00 : f32
    %81 = vector.broadcast %cst_17 : f32 to vector<8x128xf32>
    %82 = arith.maximumf %80, %81 : vector<8x128xf32>
    %c0_18 = arith.constant 0 : index
    %c0_19 = arith.constant 0 : index
    %83 = vector.load %arg6[%c0_18, %c0_19] : memref<128x128xf32, #tpu.memory_space<vmem>>, vector<128x128xf32>
    %cst_20 = arith.constant dense<0.000000e+00> : vector<8x128xf32>
    %84 = tpu.matmul %82, %83, %cst_20 {dimension_numbers = #tpu.dot_dimension_numbers<[1], [0], [0], [1], [0, 0, 1, 1], [], []>} : vector<8x128xf32>, vector<128x128xf32>, vector<8x128xf32> -> vector<8x128xf32>
    %c0_21 = arith.constant 0 : index
    %c0_22 = arith.constant 0 : index
    %85 = vector.load %arg7[%c0_21, %c0_22] : memref<1x128xf32, #tpu.memory_space<vmem>>, vector<1x128xf32>
    %86 = vector.broadcast %85 : vector<1x128xf32> to vector<8x128xf32>
    %87 = arith.addf %84, %86 : vector<8x128xf32>
    %c0_23 = arith.constant 0 : index
    %c0_24 = arith.constant 0 : index
    %88 = vector.load %arg8[%c0_23, %c0_24] : memref<8x128xf32, #tpu.memory_space<vmem>>, vector<8x128xf32>
    tpu.vector_store %arg8[%c0_23, %c0_24], %87 {strides = array<i32>} : memref<8x128xf32, #tpu.memory_space<vmem>>, vector<8x128xf32>,
    return
  }
  func.func @transform_0(%arg0: i32) -> (i32, i32, i32) {
    %c0_i32 = arith.constant 0 : i32
    %c0_i32_0 = arith.constant 0 : i32
    %c0_i32_1 = arith.constant 0 : i32
    return %c0_i32, %arg0, %c0_i32_0 : i32, i32, i32
  }
  func.func @transform_1(%arg0: i32) -> (i32, i32, i32) {
    %c0_i32 = arith.constant 0 : i32
    %c0_i32_0 = arith.constant 0 : i32
    %c0_i32_1 = arith.constant 0 : i32
    %c0_i32_2 = arith.constant 0 : i32
    return %c0_i32, %c0_i32_0, %c0_i32_1 : i32, i32, i32
  }
  func.func @transform_2(%arg0: i32) -> (i32, i32) {
    %c0_i32 = arith.constant 0 : i32
    %c0_i32_0 = arith.constant 0 : i32
    %c0_i32_1 = arith.constant 0 : i32
    return %c0_i32, %c0_i32_0 : i32, i32
  }
  func.func @transform_3(%arg0: i32) -> (i32, i32) {
    %c0_i32 = arith.constant 0 : i32
    %c0_i32_0 = arith.constant 0 : i32
    %c0_i32_1 = arith.constant 0 : i32
    return %c0_i32, %c0_i32_0 : i32, i32
  }
  func.func @transform_4(%arg0: i32) -> (i32, i32) {
    %c0_i32 = arith.constant 0 : i32
    %c0_i32_0 = arith.constant 0 : i32
    %c0_i32_1 = arith.constant 0 : i32
    return %c0_i32, %c0_i32_0 : i32, i32
  }
  func.func @transform_5(%arg0: i32) -> (i32, i32) {
    %c0_i32 = arith.constant 0 : i32
    %c0_i32_0 = arith.constant 0 : i32
    %c0_i32_1 = arith.constant 0 : i32
    return %c0_i32, %c0_i32_0 : i32, i32
  }
  func.func @transform_6(%arg0: i32) -> (i32, i32) {
    %c0_i32 = arith.constant 0 : i32
    %c0_i32_0 = arith.constant 0 : i32
    %c0_i32_1 = arith.constant 0 : i32
    return %c0_i32, %c0_i32_0 : i32, i32
  }
  func.func @transform_7(%arg0: i32) -> (i32, i32) {
    %c0_i32 = arith.constant 0 : i32
    %c0_i32_0 = arith.constant 0 : i32
    return %arg0, %c0_i32 : i32, i32
  }
}

</mosaic_0001>

<llo_original>
// kernel: convnet_forward.1
$region0: #{convnet_forward.1}
  #allocation0 [shape = 'u32[]', space=smem, size = 0x4, offset = 0x4, fixed_abs, tag = 'smem constant byte address 0x4 - core index']
  #allocation1 [shape = 'u32[144,128]{1,0:T(1,128)}', space=vmem, size = 0x12000, scoped, tag = 'internal scratch']
  %s0 = inlined_call_operand.vmem [shape: f32[28,8,28], index: 0, kind: input, shape index: {}]
  %s1 = inlined_call_operand.hbm [shape: f32[5,28,768], index: 1, kind: input, shape index: {}]
  %s2 = inlined_call_operand.hbm [shape: f32[1,768], index: 2, kind: input, shape index: {}]
  %s3 = inlined_call_operand.hbm [shape: f32[4608,128], index: 3, kind: input, shape index: {}]
  %s4 = inlined_call_operand.hbm [shape: f32[1,128], index: 4, kind: input, shape index: {}]
  %s5 = inlined_call_operand.hbm [shape: f32[128,128], index: 5, kind: input, shape index: {}]
  %s6 = inlined_call_operand.hbm [shape: f32[1,128], index: 6, kind: input, shape index: {}]
  %s7 = inlined_call_operand.vmem [shape: f32[8,128], index: 7, kind: output, shape index: {}]
  %s8 = sld [smem:[#allocation0]]
  $region62: #{convnet_forward.1} parent=0
    _
  %s10 = ssub.s32 1, %s8
  %s11 = scalar_select 0, %s10, %s8
  $region1: #{convnet_forward.1} parent=0
    #allocation2 [shape = 'u8[491520]{0}', space=vmem, size = 0x78000, scoped, tag = 'input window, operand 1, single buffered']
    #allocation3 [shape = 's32[1]{0}', space=sflag, size = 0x4, scoped, tag = 'scoped memory for convnet_forward.1']
    #allocation4 [shape = 'u8[3072]{0}', space=vmem, size = 0xc00, scoped, tag = 'input window, operand 2, single buffered']
    #allocation5 [shape = 's32[1]{0}', space=sflag, size = 0x4, scoped, tag = 'scoped memory for convnet_forward.1']
    #allocation6 [shape = 'u8[2359296]{0}', space=vmem, size = 0x240000, scoped, tag = 'input window, operand 3, single buffered']
    #allocation7 [shape = 'u8[512]{0}', space=vmem, size = 0x400, scoped, tag = 'input window, operand 4, single buffered']
    #allocation8 [shape = 's32[1]{0}', space=sflag, size = 0x4, scoped, tag = 'scoped memory for convnet_forward.1']
    #allocation9 [shape = 'u8[65536]{0}', space=vmem, size = 0x10000, scoped, tag = 'input window, operand 5, single buffered']
    #allocation10 [shape = 'u8[512]{0}', space=vmem, size = 0x400, scoped, tag = 'input window, operand 6, single buffered']
    #allocation11 [shape = 's32[1]{0}', space=sflag, size = 0x4, scoped, tag = 'scoped memory for convnet_forward.1']
    %12 = vsyncpa [#allocation3], 0
    %13 = vsyncpa [#allocation5], 0
    %14 = vsyncpa [#allocation8], 0
    %15 = vsyncpa [#allocation11], 0
    // Predicated region
    $region2: #{convnet_forward.1} parent=1 // pred_check
      _
    $region3: #{convnet_forward.1} parent=1 // pred_check_branch
      %17 = sbr.rel (0) target = $region5
    $region4: #{convnet_forward.1} parent=1 // pred_region
      _
    $region5: #{convnet_forward.1} parent=1 // pred_fallthru
      _
    // Predicated region
    $region6: #{convnet_forward.1} parent=1 // pred_check
      _
    $region7: #{convnet_forward.1} parent=1 // pred_check_branch
      %19 = sbr.rel (0) target = $region9
    $region8: #{convnet_forward.1} parent=1 // pred_region
      %s21 = ssub.s32 15360, 15360
      %22 = vsyncadd [#allocation3], %s21
      %s23 = sshll.u32 [#allocation2], 4
      %s24 = int_to_ptr.vmem [resolvable:$true] %s23
      %29 = dma.hbm_to_vmem [thread:$0]  %s1, 15360, %s24, [#allocation3], 768, 768, 48
    $region9: #{convnet_forward.1} parent=1 // pred_fallthru
      _
    // Predicated region
    $region10: #{convnet_forward.1} parent=1 // pred_check
      _
    $region11: #{convnet_forward.1} parent=1 // pred_check_branch
      %31 = sbr.rel (0) target = $region13
    $region12: #{convnet_forward.1} parent=1 // pred_region
      %s33 = ssub.s32 96, 96
      %34 = vsyncadd [#allocation5], %s33
      %s36 = sshll.u32 [#allocation4], 4
      %s37 = int_to_ptr.vmem [resolvable:$true] %s36
      %39 = dma.hbm_to_vmem [thread:$0]  %s2, 96, %s37, [#allocation5]
    $region13: #{convnet_forward.1} parent=1 // pred_fallthru
      _
    // Predicated region
    $region14: #{convnet_forward.1} parent=1 // pred_check
      _
    $region15: #{convnet_forward.1} parent=1 // pred_check_branch
      %41 = sbr.rel (0) target = $region17
    $region16: #{convnet_forward.1} parent=1 // pred_region
      %s43 = ssub.s32 73728, 73728
      %44 = vsyncadd [#allocation5], %s43
      %s45 = sshll.u32 [#allocation6], 4
      %s46 = int_to_ptr.vmem [resolvable:$true] %s45
      %51 = dma.hbm_to_vmem [thread:$0]  %s3, 73728, %s46, [#allocation5], 128, 128, 8
    $region17: #{convnet_forward.1} parent=1 // pred_fallthru
      _
    // Predicated region
    $region18: #{convnet_forward.1} parent=1 // pred_check
      _
    $region19: #{convnet_forward.1} parent=1 // pred_check_branch
      %53 = sbr.rel (0) target = $region21
    $region20: #{convnet_forward.1} parent=1 // pred_region
      %s55 = ssub.s32 16, 16
      %56 = vsyncadd [#allocation8], %s55
      %s58 = sshll.u32 [#allocation7], 4
      %s59 = int_to_ptr.vmem [resolvable:$true] %s58
      %61 = dma.hbm_to_vmem [thread:$0]  %s4, 16, %s59, [#allocation8]
    $region21: #{convnet_forward.1} parent=1 // pred_fallthru
      _
    // Predicated region
    $region22: #{convnet_forward.1} parent=1 // pred_check
      _
    $region23: #{convnet_forward.1} parent=1 // pred_check_branch
      %63 = sbr.rel (0) target = $region25
    $region24: #{convnet_forward.1} parent=1 // pred_region
      %s65 = ssub.s32 2048, 2048
      %66 = vsyncadd [#allocation8], %s65
      %s67 = sshll.u32 [#allocation9], 4
      %s68 = int_to_ptr.vmem [resolvable:$true] %s67
      %73 = dma.hbm_to_vmem [thread:$0]  %s5, 2048, %s68, [#allocation8], 128, 128, 8
    $region25: #{convnet_forward.1} parent=1 // pred_fallthru
      _
    // Predicated region
    $region26: #{convnet_forward.1} parent=1 // pred_check
      _
    $region27: #{convnet_forward.1} parent=1 // pred_check_branch
      %75 = sbr.rel (0) target = $region29
    $region28: #{convnet_forward.1} parent=1 // pred_region
      %s77 = ssub.s32 16, 16
      %78 = vsyncadd [#allocation11], %s77
      %s80 = sshll.u32 [#allocation10], 4
      %s81 = int_to_ptr.vmem [resolvable:$true] %s80
      %83 = dma.hbm_to_vmem [thread:$0]  %s6, 16, %s81, [#allocation11]
    $region29: #{convnet_forward.1} parent=1 // pred_fallthru
      _
    // Predicated region
    $region30: #{convnet_forward.1} parent=1 // pred_check
      _
    $region31: #{convnet_forward.1} parent=1 // pred_check_branch
      %85 = sbr.rel (0) target = $region33
    $region32: #{convnet_forward.1} parent=1 // pred_region
      %86 = dma.done [#allocation3], 15360
    $region33: #{convnet_forward.1} parent=1 // pred_fallthru
      _
    // Predicated region
    $region34: #{convnet_forward.1} parent=1 // pred_check
      _
    $region35: #{convnet_forward.1} parent=1 // pred_check_branch
      %88 = sbr.rel (0) target = $region37
    $region36: #{convnet_forward.1} parent=1 // pred_region
      %89 = dma.done [#allocation5], 96
    $region37: #{convnet_forward.1} parent=1 // pred_fallthru
      _
    // Predicated region
    $region38: #{convnet_forward.1} parent=1 // pred_check
      _
    $region39: #{convnet_forward.1} parent=1 // pred_check_branch
      %91 = sbr.rel (0) target = $region41
    $region40: #{convnet_forward.1} parent=1 // pred_region
      %92 = dma.done [#allocation5], 73728
    $region41: #{convnet_forward.1} parent=1 // pred_fallthru
      _
    // Predicated region
    $region42: #{convnet_forward.1} parent=1 // pred_check
      _
    $region43: #{convnet_forward.1} parent=1 // pred_check_branch
      %94 = sbr.rel (0) target = $region45
    $region44: #{convnet_forward.1} parent=1 // pred_region
      %95 = dma.done [#allocation8], 16
    $region45: #{convnet_forward.1} parent=1 // pred_fallthru
      _
    // Predicated region
    $region46: #{convnet_forward.1} parent=1 // pred_check
      _
    $region47: #{convnet_forward.1} parent=1 // pred_check_branch
      %97 = sbr.rel (0) target = $region49
    $region48: #{convnet_forward.1} parent=1 // pred_region
      %98 = dma.done [#allocation8], 2048
    $region49: #{convnet_forward.1} parent=1 // pred_fallthru
      _
    // Predicated region
    $region50: #{convnet_forward.1} parent=1 // pred_check
      _
    $region51: #{convnet_forward.1} parent=1 // pred_check_branch
      %100 = sbr.rel (0) target = $region53
    $region52: #{convnet_forward.1} parent=1 // pred_region
      %101 = dma.done [#allocation11], 16
    $region53: #{convnet_forward.1} parent=1 // pred_fallthru
      _
    %v102 = vld [vmem:[%s0] sm:$0xff]
    %v103 = vld [vmem:[%s0 + $0x8] sm:$0xff]
    %v104 = vld [vmem:[%s0 + $0x10] sm:$0xff]
    %v105 = vld [vmem:[%s0 + $0x18] sm:$0xff]
    %v106 = vld [vmem:[%s0 + $0x20] sm:$0xff]
    %v107 = vld [vmem:[%s0 + $0x28] sm:$0xff]
    %v108 = vld [vmem:[%s0 + $0x30] sm:$0xff]
    %v109 = vld [vmem:[%s0 + $0x38] sm:$0xff]
    %v110 = vld [vmem:[%s0 + $0x40] sm:$0xff]
    %v111 = vld [vmem:[%s0 + $0x48] sm:$0xff]
    %v112 = vld [vmem:[%s0 + $0x50] sm:$0xff]
    %v113 = vld [vmem:[%s0 + $0x58] sm:$0xff]
    %v114 = vld [vmem:[%s0 + $0x60] sm:$0xff]
    %v115 = vld [vmem:[%s0 + $0x68] sm:$0xff]
    %v116 = vld [vmem:[%s0 + $0x70] sm:$0xff]
    %v117 = vld [vmem:[%s0 + $0x78] sm:$0xff]
    %v118 = vld [vmem:[%s0 + $0x80] sm:$0xff]
    %v119 = vld [vmem:[%s0 + $0x88] sm:$0xff]
    %v120 = vld [vmem:[%s0 + $0x90] sm:$0xff]
    %v121 = vld [vmem:[%s0 + $0x98] sm:$0xff]
    %v122 = vld [vmem:[%s0 + $0xa0] sm:$0xff]
    %v123 = vld [vmem:[%s0 + $0xa8] sm:$0xff]
    %v124 = vld [vmem:[%s0 + $0xb0] sm:$0xff]
    %v125 = vld [vmem:[%s0 + $0xb8] sm:$0xff]
    %v126 = vld [vmem:[%s0 + $0xc0] sm:$0xff]
    %v127 = vld [vmem:[%s0 + $0xc8] sm:$0xff]
    %v128 = vld [vmem:[%s0 + $0xd0] sm:$0xff]
    %v129 = vld [vmem:[%s0 + $0xd8] sm:$0xff]
    %v130 = vld [vmem:[#allocation2] sm:$0xff]
    %v131 = vld [vmem:[#allocation2 + $0x8] sm:$0xff]
    %v132 = vld [vmem:[#allocation2 + $0x10] sm:$0xff]
    %v133 = vld [vmem:[#allocation2 + $0x18] sm:$0xff]
    %v134 = vld [vmem:[#allocation2 + $0x20] sm:$0xff]
    %v135 = vld [vmem:[#allocation2 + $0x28] sm:$0xff]
    %v136 = vld [vmem:[#allocation2 + $0x30] sm:$0xff]
    %v137 = vld [vmem:[#allocation2 + $0x38] sm:$0xff]
    %v138 = vld [vmem:[#allocation2 + $0x40] sm:$0xff]
    %v139 = vld [vmem:[#allocation2 + $0x48] sm:$0xff]
    %v140 = vld [vmem:[#allocation2 + $0x50] sm:$0xff]
    %v141 = vld [vmem:[#allocation2 + $0x58] sm:$0xff]
    %v142 = vld [vmem:[#allocation2 + $0x60] sm:$0xff]
    %v143 = vld [vmem:[#allocation2 + $0x68] sm:$0xff]
    %v144 = vld [vmem:[#allocation2 + $0x70] sm:$0xff]
    %v145 = vld [vmem:[#allocation2 + $0x78] sm:$0xff]
    %v146 = vld [vmem:[#allocation2 + $0x80] sm:$0xff]
    %v147 = vld [vmem:[#allocation2 + $0x88] sm:$0xff]
    %v148 = vld [vmem:[#allocation2 + $0x90] sm:$0xf]
    %v149 = vld [vmem:[#allocation2 + $0x98] sm:$0xf]
    %v150 = vld [vmem:[#allocation2 + $0xa0] sm:$0xf]
    %v151 = vld [vmem:[#allocation2 + $0xa8] sm:$0xf]
    %v152 = vld [vmem:[#allocation2 + $0xb0] sm:$0xf]
    %v153 = vld [vmem:[#allocation2 + $0xb8] sm:$0xf]
    %v154 = vld [vmem:[#allocation2 + $0xc0] sm:$0xff]
    %v155 = vld [vmem:[#allocation2 + $0xc8] sm:$0xff]
    %v156 = vld [vmem:[#allocation2 + $0xd0] sm:$0xff]
    %v157 = vld [vmem:[#allocation2 + $0xd8] sm:$0xff]
    %v158 = vld [vmem:[#allocation2 + $0xe0] sm:$0xff]
    %v159 = vld [vmem:[#allocation2 + $0xe8] sm:$0xff]
    %v160 = vld [vmem:[#allocation2 + $0xf0] sm:$0xff]
    %v161 = vld [vmem:[#allocation2 + $0xf8] sm:$0xff]
    %v162 = vld [vmem:[#allocation2 + $0x100] sm:$0xff]
    %v163 = vld [vmem:[#allocation2 + $0x108] sm:$0xff]
    %v164 = vld [vmem:[#allocation2 + $0x110] sm:$0xff]
    %v165 = vld [vmem:[#allocation2 + $0x118] sm:$0xff]
    %v166 = vld [vmem:[#allocation2 + $0x120] sm:$0xff]
    %v167 = vld [vmem:[#allocation2 + $0x128] sm:$0xff]
    %v168 = vld [vmem:[#allocation2 + $0x130] sm:$0xff]
    %v169 = vld [vmem:[#allocation2 + $0x138] sm:$0xff]
    %v170 = vld [vmem:[#allocation2 + $0x140] sm:$0xff]
    %v171 = vld [vmem:[#allocation2 + $0x148] sm:$0xff]
    %v172 = vld [vmem:[#allocation2 + $0x150] sm:$0xf]
    %v173 = vld [vmem:[#allocation2 + $0x158] sm:$0xf]
    %v174 = vld [vmem:[#allocation2 + $0x160] sm:$0xf]
    %v175 = vld [vmem:[#allocation2 + $0x168] sm:$0xf]
    %v176 = vld [vmem:[#allocation2 + $0x170] sm:$0xf]
    %v177 = vld [vmem:[#allocation2 + $0x178] sm:$0xf]
    %v178 = vld [vmem:[#allocation2 + $0x180] sm:$0xff]
    %v179 = vld [vmem:[#allocation2 + $0x188] sm:$0xff]
    %v180 = vld [vmem:[#allocation2 + $0x190] sm:$0xff]
    %v181 = vld [vmem:[#allocation2 + $0x198] sm:$0xff]
    %v182 = vld [vmem:[#allocation2 + $0x1a0] sm:$0xff]
    %v183 = vld [vmem:[#allocation2 + $0x1a8] sm:$0xff]
    %v184 = vld [vmem:[#allocation2 + $0x1b0] sm:$0xff]
    %v185 = vld [vmem:[#allocation2 + $0x1b8] sm:$0xff]
    %v186 = vld [vmem:[#allocation2 + $0x1c0] sm:$0xff]
    %v187 = vld [vmem:[#allocation2 + $0x1c8] sm:$0xff]
    %v188 = vld [vmem:[#allocation2 + $0x1d0] sm:$0xff]
    %v189 = vld [vmem:[#allocation2 + $0x1d8] sm:$0xff]
    %v190 = vld [vmem:[#allocation2 + $0x1e0] sm:$0xff]
    %v191 = vld [vmem:[#allocation2 + $0x1e8] sm:$0xff]
    %v192 = vld [vmem:[#allocation2 + $0x1f0] sm:$0xff]
    %v193 = vld [vmem:[#allocation2 + $0x1f8] sm:$0xff]
    %v194 = vld [vmem:[#allocation2 + $0x200] sm:$0xff]
    %v195 = vld [vmem:[#allocation2 + $0x208] sm:$0xff]
    %v196 = vld [vmem:[#allocation2 + $0x210] sm:$0xf]
    %v197 = vld [vmem:[#allocation2 + $0x218] sm:$0xf]
    %v198 = vld [vmem:[#allocation2 + $0x220] sm:$0xf]
    %v199 = vld [vmem:[#allocation2 + $0x228] sm:$0xf]
    %v200 = vld [vmem:[#allocation2 + $0x230] sm:$0xf]
    %v201 = vld [vmem:[#allocation2 + $0x238] sm:$0xf]
    %v202 = vld [vmem:[#allocation2 + $0x240] sm:$0xff]
    %v203 = vld [vmem:[#allocation2 + $0x248] sm:$0xff]
    %v204 = vld [vmem:[#allocation2 + $0x250] sm:$0xff]
    %v205 = vld [vmem:[#allocation2 + $0x258] sm:$0xff]
    %v206 = vld [vmem:[#allocation2 + $0x260] sm:$0xff]
    %v207 = vld [vmem:[#allocation2 + $0x268] sm:$0xff]
    %v208 = vld [vmem:[#allocation2 + $0x270] sm:$0xff]
    %v209 = vld [vmem:[#allocation2 + $0x278] sm:$0xff]
    %v210 = vld [vmem:[#allocation2 + $0x280] sm:$0xff]
    %v211 = vld [vmem:[#allocation2 + $0x288] sm:$0xff]
    %v212 = vld [vmem:[#allocation2 + $0x290] sm:$0xff]
    %v213 = vld [vmem:[#allocation2 + $0x298] sm:$0xff]
    %v214 = vld [vmem:[#allocation2 + $0x2a0] sm:$0xff]
    %v215 = vld [vmem:[#allocation2 + $0x2a8] sm:$0xff]
    %v216 = vld [vmem:[#allocation2 + $0x2b0] sm:$0xff]
    %v217 = vld [vmem:[#allocation2 + $0x2b8] sm:$0xff]
    %v218 = vld [vmem:[#allocation2 + $0x2c0] sm:$0xff]
    %v219 = vld [vmem:[#allocation2 + $0x2c8] sm:$0xff]
    %v220 = vld [vmem:[#allocation2 + $0x2d0] sm:$0xf]
    %v221 = vld [vmem:[#allocation2 + $0x2d8] sm:$0xf]
    %v222 = vld [vmem:[#allocation2 + $0x2e0] sm:$0xf]
    %v223 = vld [vmem:[#allocation2 + $0x2e8] sm:$0xf]
    %v224 = vld [vmem:[#allocation2 + $0x2f0] sm:$0xf]
    %v225 = vld [vmem:[#allocation2 + $0x2f8] sm:$0xf]
    %v226 = vld [vmem:[#allocation2 + $0x300] sm:$0xff]
    %v227 = vld [vmem:[#allocation2 + $0x308] sm:$0xff]
    %v228 = vld [vmem:[#allocation2 + $0x310] sm:$0xff]
    %v229 = vld [vmem:[#allocation2 + $0x318] sm:$0xff]
    %v230 = vld [vmem:[#allocation2 + $0x320] sm:$0xff]
    %v231 = vld [vmem:[#allocation2 + $0x328] sm:$0xff]
    %v232 = vld [vmem:[#allocation2 + $0x330] sm:$0xff]
    %v233 = vld [vmem:[#allocation2 + $0x338] sm:$0xff]
    %v234 = vld [vmem:[#allocation2 + $0x340] sm:$0xff]
    %v235 = vld [vmem:[#allocation2 + $0x348] sm:$0xff]
    %v236 = vld [vmem:[#allocation2 + $0x350] sm:$0xff]
    %v237 = vld [vmem:[#allocation2 + $0x358] sm:$0xff]
    %v238 = vld [vmem:[#allocation2 + $0x360] sm:$0xff]
    %v239 = vld [vmem:[#allocation2 + $0x368] sm:$0xff]
    %v240 = vld [vmem:[#allocation2 + $0x370] sm:$0xff]
    %v241 = vld [vmem:[#allocation2 + $0x378] sm:$0xff]
    %v242 = vld [vmem:[#allocation2 + $0x380] sm:$0xff]
    %v243 = vld [vmem:[#allocation2 + $0x388] sm:$0xff]
    %v244 = vld [vmem:[#allocation2 + $0x390] sm:$0xf]
    %v245 = vld [vmem:[#allocation2 + $0x398] sm:$0xf]
    %v246 = vld [vmem:[#allocation2 + $0x3a0] sm:$0xf]
    %v247 = vld [vmem:[#allocation2 + $0x3a8] sm:$0xf]
    %v248 = vld [vmem:[#allocation2 + $0x3b0] sm:$0xf]
    %v249 = vld [vmem:[#allocation2 + $0x3b8] sm:$0xf]
    %vm250 = vcmask 228352
    %v252 = vsel %vm250, %v103, 0
    %v255 = vsel %vm250, %v104, 0
    %v258 = vsel %vm250, %v105, 0
    %v261 = vsel %vm250, %v106, 0
    %v264 = vsel %vm250, %v107, 0
    %v267 = vsel %vm250, %v108, 0
    %v270 = vsel %vm250, %v109, 0
    %v273 = vsel %vm250, %v110, 0
    %v276 = vsel %vm250, %v111, 0
    %v279 = vsel %vm250, %v112, 0
    %v282 = vsel %vm250, %v113, 0
    %v285 = vsel %vm250, %v114, 0
    %v288 = vsel %vm250, %v115, 0
    %v291 = vsel %vm250, %v116, 0
    %v294 = vsel %vm250, %v117, 0
    %v297 = vsel %vm250, %v118, 0
    %v300 = vsel %vm250, %v119, 0
    %v303 = vsel %vm250, %v120, 0
    %v306 = vsel %vm250, %v121, 0
    %v309 = vsel %vm250, %v122, 0
    %v312 = vsel %vm250, %v123, 0
    %v315 = vsel %vm250, %v124, 0
    %v318 = vsel %vm250, %v125, 0
    %v321 = vsel %vm250, %v126, 0
    %vm323 = vcmask 1043456
    %v325 = vsel %vm323, %v172, 0
    %v328 = vsel %vm323, %v173, 0
    %v331 = vsel %vm323, %v174, 0
    %v334 = vsel %vm323, %v175, 0
    %v337 = vsel %vm323, %v176, 0
    %v340 = vsel %vm323, %v177, 0
    %342 = vmatprep.subr.mxu0 0.0
    %343 = vmatpush1.msra.mxu0 0.0
    %344 = vmatprep.subr.mxu0 0.0
    %345 = vmatpush1.msra.mxu0 0.0
    %346 = vmatprep.subr.mxu0 0.0
    %347 = vmatpush1.msra.mxu0 0.0
    %348 = vmatprep.subr.mxu0 0.0
    %349 = vmatpush1.msra.mxu0 0.0
    %350 = vmatprep.subr.mxu0 0.0
    %351 = vmatpush1.msra.mxu0 0.0
    %352 = vmatprep.subr.mxu0 0.0
    %353 = vmatpush1.msra.mxu0 0.0
    %354 = vmatprep.subr.mxu0 0.0
    %355 = vmatpush1.msra.mxu0 0.0
    %356 = vmatprep.subr.mxu0 0.0
    %357 = vmatpush1.msra.mxu0 0.0
    %358 = vmatprep.subr.mxu0 0.0
    %359 = vmatpush1.msra.mxu0 0.0
    %360 = vmatprep.subr.mxu0 0.0
    %361 = vmatpush1.msra.mxu0 0.0
    %362 = vmatprep.subr.mxu0 0.0
    %363 = vmatpush1.msra.mxu0 0.0
    %364 = vmatprep.subr.mxu0 0.0
    %365 = vmatpush1.msra.mxu0 0.0
    %366 = vmatprep.subr.mxu0 %v328
    %367 = vmatpush1.msra.mxu0 %v325
    %368 = vmatprep.subr.mxu0 %v167
    %369 = vmatpush1.msra.mxu0 %v166
    %370 = vmatprep.subr.mxu0 %v161
    %371 = vmatpush1.msra.mxu0 %v160
    %372 = vmatprep.subr.mxu0 %v155
    %373 = vmatpush1.msra.mxu0 %v154
    %374 = vmatprep.subr.mxu0 0.0
    %375 = vmatpush2.msra.mxu0 0.0
    %376 = vmatprep.subr.mxu0 0.0
    %377 = vmatpush2.msra.mxu0 0.0
    %378 = vmatprep.subr.mxu0 0.0
    %379 = vmatpush2.msra.mxu0 0.0
    %380 = vmatprep.subr.mxu0 0.0
    %381 = vmatpush2.msra.mxu0 0.0
    %382 = vmatprep.subr.mxu0 0.0
    %383 = vmatpush2.msra.mxu0 0.0
    %384 = vmatprep.subr.mxu0 0.0
    %385 = vmatpush2.msra.mxu0 0.0
    %386 = vmatprep.subr.mxu0 0.0
    %387 = vmatpush2.msra.mxu0 0.0
    %388 = vmatprep.subr.mxu0 0.0
    %389 = vmatpush2.msra.mxu0 0.0
    %390 = vmatprep.subr.mxu0 0.0
    %391 = vmatpush2.msra.mxu0 0.0
    %392 = vmatprep.subr.mxu0 0.0
    %393 = vmatpush2.msra.mxu0 0.0
    %394 = vmatprep.subr.mxu0 0.0
    %395 = vmatpush2.msra.mxu0 0.0
    %396 = vmatprep.subr.mxu0 0.0
    %397 = vmatpush2.msra.mxu0 0.0
    %398 = vmatprep.subr.mxu0 0.0
    %399 = vmatpush2.msra.mxu0 0.0
    %400 = vmatprep.subr.mxu0 0.0
    %401 = vmatpush2.msra.mxu0 0.0
    %402 = vmatprep.subr.mxu0 0.0
    %403 = vmatpush2.msra.mxu0 0.0
    %404 = vmatprep.subr.mxu0 0.0
    %405 = vmatpush2.msra.mxu0 0.0
    %406 = vmatprep.mubr.f32.mxu0 0.0
    %407 = vmatmul.mubr.f32.gmra.mxu0 %v252
    %v408 = vpop.f32.mrf.mxu0
    %v409 = vadd.f32 0.0, %v408
    %v410 = vpop.f32.mrf.mxu0
    %v411 = vadd.f32 0.0, %v410
    %412 = vmatprep.mubr.f32.mxu0 0.0
    %413 = vmatmul.mubr.f32.gmra.mxu0 %v255
    %v414 = vpop.f32.mrf.mxu0
    %v415 = vadd.f32 0.0, %v414
    %v416 = vpop.f32.mrf.mxu0
    %v417 = vadd.f32 0.0, %v416
    %418 = vmatprep.mubr.f32.mxu0 0.0
    %419 = vmatmul.mubr.f32.gmra.mxu0 %v258
    %v420 = vpop.f32.mrf.mxu0
    %v421 = vadd.f32 0.0, %v420
    %v422 = vpop.f32.mrf.mxu0
    %v423 = vadd.f32 0.0, %v422
    %424 = vmatprep.mubr.f32.mxu0 0.0
    %425 = vmatmul.mubr.f32.gmra.mxu0 %v261
    %v426 = vpop.f32.mrf.mxu0
    %v427 = vadd.f32 0.0, %v426
    %v428 = vpop.f32.mrf.mxu0
    %v429 = vadd.f32 0.0, %v428
    %430 = vmatprep.mubr.f32.mxu0 0.0
    %431 = vmatmul.mubr.f32.gmra.mxu0 %v264
    %v432 = vpop.f32.mrf.mxu0
    %v433 = vadd.f32 0.0, %v432
    %v434 = vpop.f32.mrf.mxu0
    %v435 = vadd.f32 0.0, %v434
    %436 = vmatprep.mubr.f32.mxu0 0.0
    %437 = vmatmul.mubr.f32.gmra.mxu0 %v267
    %v438 = vpop.f32.mrf.mxu0
    %v439 = vadd.f32 0.0, %v438
    %v440 = vpop.f32.mrf.mxu0
    %v441 = vadd.f32 0.0, %v440
    %442 = vmatprep.mubr.f32.mxu0 0.0
    %443 = vmatmul.mubr.f32.gmra.mxu0 %v270
    %v444 = vpop.f32.mrf.mxu0
    %v445 = vadd.f32 0.0, %v444
    %v446 = vpop.f32.mrf.mxu0
    %v447 = vadd.f32 0.0, %v446
    %448 = vmatprep.mubr.f32.mxu0 0.0
    %449 = vmatmul.mubr.f32.gmra.mxu0 %v273
    %v450 = vpop.f32.mrf.mxu0
    %v451 = vadd.f32 0.0, %v450
    %v452 = vpop.f32.mrf.mxu0
    %v453 = vadd.f32 0.0, %v452
    %454 = vmatprep.mubr.f32.mxu0 0.0
    %455 = vmatmul.mubr.f32.gmra.mxu0 %v276
    %v456 = vpop.f32.mrf.mxu0
    %v457 = vadd.f32 0.0, %v456
    %v458 = vpop.f32.mrf.mxu0
    %v459 = vadd.f32 0.0, %v458
    %460 = vmatprep.mubr.f32.mxu0 0.0
    %461 = vmatmul.mubr.f32.gmra.mxu0 %v279
    %v462 = vpop.f32.mrf.mxu0
    %v463 = vadd.f32 0.0, %v462
    %v464 = vpop.f32.mrf.mxu0
    %v465 = vadd.f32 0.0, %v464
    %466 = vmatprep.mubr.f32.mxu0 0.0
    %467 = vmatmul.mubr.f32.gmra.mxu0 %v282
    %v468 = vpop.f32.mrf.mxu0
    %v469 = vadd.f32 0.0, %v468
    %v470 = vpop.f32.mrf.mxu0
    %v471 = vadd.f32 0.0, %v470
    %472 = vmatprep.mubr.f32.mxu0 0.0
    %473 = vmatmul.mubr.f32.gmra.mxu0 %v285
    %v474 = vpop.f32.mrf.mxu0
    %v475 = vadd.f32 0.0, %v474
    %v476 = vpop.f32.mrf.mxu0
    %v477 = vadd.f32 0.0, %v476
    %478 = vmatprep.mubr.f32.mxu0 0.0
    %479 = vmatmul.mubr.f32.gmra.mxu0 %v288
    %v480 = vpop.f32.mrf.mxu0
    %v481 = vadd.f32 0.0, %v480
    %v482 = vpop.f32.mrf.mxu0
    %v483 = vadd.f32 0.0, %v482
    %484 = vmatprep.mubr.f32.mxu0 0.0
    %485 = vmatmul.mubr.f32.gmra.mxu0 %v291
    %v486 = vpop.f32.mrf.mxu0
    %v487 = vadd.f32 0.0, %v486
    %v488 = vpop.f32.mrf.mxu0
    %v489 = vadd.f32 0.0, %v488
    %490 = vmatprep.mubr.f32.mxu0 0.0
    %491 = vmatmul.mubr.f32.gmra.mxu0 %v294
    %v492 = vpop.f32.mrf.mxu0
    %v493 = vadd.f32 0.0, %v492
    %v494 = vpop.f32.mrf.mxu0
    %v495 = vadd.f32 0.0, %v494
    %496 = vmatprep.mubr.f32.mxu0 0.0
    %497 = vmatmul.mubr.f32.gmra.mxu0 %v297
    %v498 = vpop.f32.mrf.mxu0
    %v499 = vadd.f32 0.0, %v498
    %v500 = vpop.f32.mrf.mxu0
    %v501 = vadd.f32 0.0, %v500
    %502 = vmatprep.mubr.f32.mxu0 0.0
    %503 = vmatmul.mubr.f32.gmra.mxu0 %v300
    %v504 = vpop.f32.mrf.mxu0
    %v505 = vadd.f32 0.0, %v504
    %v506 = vpop.f32.mrf.mxu0
    %v507 = vadd.f32 0.0, %v506
    %508 = vmatprep.mubr.f32.mxu0 0.0
    %509 = vmatmul.mubr.f32.gmra.mxu0 %v303
    %v510 = vpop.f32.mrf.mxu0
    %v511 = vadd.f32 0.0, %v510
    %v512 = vpop.f32.mrf.mxu0
    %v513 = vadd.f32 0.0, %v512
    %514 = vmatprep.mubr.f32.mxu0 0.0
    %515 = vmatmul.mubr.f32.gmra.mxu0 %v306
    %v516 = vpop.f32.mrf.mxu0
    %v517 = vadd.f32 0.0, %v516
    %v518 = vpop.f32.mrf.mxu0
    %v519 = vadd.f32 0.0, %v518
    %520 = vmatprep.mubr.f32.mxu0 0.0
    %521 = vmatmul.mubr.f32.gmra.mxu0 %v309
    %v522 = vpop.f32.mrf.mxu0
    %v523 = vadd.f32 0.0, %v522
    %v524 = vpop.f32.mrf.mxu0
    %v525 = vadd.f32 0.0, %v524
    %526 = vmatprep.mubr.f32.mxu0 0.0
    %527 = vmatmul.mubr.f32.gmra.mxu0 %v312
    %v528 = vpop.f32.mrf.mxu0
    %v529 = vadd.f32 0.0, %v528
    %v530 = vpop.f32.mrf.mxu0
    %v531 = vadd.f32 0.0, %v530
    %532 = vmatprep.mubr.f32.mxu0 0.0
    %533 = vmatmul.mubr.f32.gmra.mxu0 %v315
    %v534 = vpop.f32.mrf.mxu0
    %v535 = vadd.f32 0.0, %v534
    %v536 = vpop.f32.mrf.mxu0
    %v537 = vadd.f32 0.0, %v536
    %538 = vmatprep.mubr.f32.mxu0 0.0
    %539 = vmatmul.mubr.f32.gmra.mxu0 %v318
    %v540 = vpop.f32.mrf.mxu0
    %v541 = vadd.f32 0.0, %v540
    %v542 = vpop.f32.mrf.mxu0
    %v543 = vadd.f32 0.0, %v542
    %544 = vmatprep.mubr.f32.mxu0 0.0
    %545 = vmatmul.mubr.f32.gmra.mxu0 %v321
    %v546 = vpop.f32.mrf.mxu0
    %v547 = vadd.f32 0.0, %v546
    %v548 = vpop.f32.mrf.mxu0
    %v549 = vadd.f32 0.0, %v548
    %550 = vdwg.mxu0
    %551 = vmatprep.subr.mxu0 0.0
    %552 = vmatpush1.msra.mxu0 0.0
    %553 = vmatprep.subr.mxu0 0.0
    %554 = vmatpush1.msra.mxu0 0.0
    %555 = vmatprep.subr.mxu0 0.0
    %556 = vmatpush1.msra.mxu0 0.0
    %557 = vmatprep.subr.mxu0 0.0
    %558 = vmatpush1.msra.mxu0 0.0
    %559 = vmatprep.subr.mxu0 0.0
    %560 = vmatpush1.msra.mxu0 0.0
    %561 = vmatprep.subr.mxu0 0.0
    %562 = vmatpush1.msra.mxu0 0.0
    %563 = vmatprep.subr.mxu0 0.0
    %564 = vmatpush1.msra.mxu0 0.0
    %565 = vmatprep.subr.mxu0 0.0
    %566 = vmatpush1.msra.mxu0 0.0
    %567 = vmatprep.subr.mxu0 0.0
    %568 = vmatpush1.msra.mxu0 0.0
    %569 = vmatprep.subr.mxu0 0.0
    %570 = vmatpush1.msra.mxu0 0.0
    %571 = vmatprep.subr.mxu0 0.0
    %572 = vmatpush1.msra.mxu0 0.0
    %573 = vmatprep.subr.mxu0 0.0
    %574 = vmatpush1.msra.mxu0 0.0
    %575 = vmatprep.subr.mxu0 %v334
    %576 = vmatpush1.msra.mxu0 %v331
    %577 = vmatprep.subr.mxu0 %v169
    %578 = vmatpush1.msra.mxu0 %v168
    %579 = vmatprep.subr.mxu0 %v163
    %580 = vmatpush1.msra.mxu0 %v162
    %581 = vmatprep.subr.mxu0 %v157
    %582 = vmatpush1.msra.mxu0 %v156
    %583 = vmatprep.subr.mxu0 0.0
    %584 = vmatpush2.msra.mxu0 0.0
    %585 = vmatprep.subr.mxu0 0.0
    %586 = vmatpush2.msra.mxu0 0.0
    %587 = vmatprep.subr.mxu0 0.0
    %588 = vmatpush2.msra.mxu0 0.0
    %589 = vmatprep.subr.mxu0 0.0
    %590 = vmatpush2.msra.mxu0 0.0
    %591 = vmatprep.subr.mxu0 0.0
    %592 = vmatpush2.msra.mxu0 0.0
    %593 = vmatprep.subr.mxu0 0.0
    %594 = vmatpush2.msra.mxu0 0.0
    %595 = vmatprep.subr.mxu0 0.0
    %596 = vmatpush2.msra.mxu0 0.0
    %597 = vmatprep.subr.mxu0 0.0
    %598 = vmatpush2.msra.mxu0 0.0
    %599 = vmatprep.subr.mxu0 0.0
    %600 = vmatpush2.msra.mxu0 0.0
    %601 = vmatprep.subr.mxu0 0.0
    %602 = vmatpush2.msra.mxu0 0.0
    %603 = vmatprep.subr.mxu0 0.0
    %604 = vmatpush2.msra.mxu0 0.0
    %605 = vmatprep.subr.mxu0 0.0
    %606 = vmatpush2.msra.mxu0 0.0
    %607 = vmatprep.subr.mxu0 0.0
    %608 = vmatpush2.msra.mxu0 0.0
    %609 = vmatprep.subr.mxu0 0.0
    %610 = vmatpush2.msra.mxu0 0.0
    %611 = vmatprep.subr.mxu0 0.0
    %612 = vmatpush2.msra.mxu0 0.0
    %613 = vmatprep.subr.mxu0 0.0
    %614 = vmatpush2.msra.mxu0 0.0
    %615 = vmatprep.mubr.f32.mxu0 0.0
    %616 = vmatmul.mubr.f32.gmra.mxu0 %v252
    %v617 = vpop.f32.mrf.mxu0
    %v618 = vadd.f32 0.0, %v617
    %v619 = vpop.f32.mrf.mxu0
    %v620 = vadd.f32 0.0, %v619
    %621 = vmatprep.mubr.f32.mxu0 0.0
    %622 = vmatmul.mubr.f32.gmra.mxu0 %v255
    %v623 = vpop.f32.mrf.mxu0
    %v624 = vadd.f32 0.0, %v623
    %v625 = vpop.f32.mrf.mxu0
    %v626 = vadd.f32 0.0, %v625
    %627 = vmatprep.mubr.f32.mxu0 0.0
    %628 = vmatmul.mubr.f32.gmra.mxu0 %v258
    %v629 = vpop.f32.mrf.mxu0
    %v630 = vadd.f32 0.0, %v629
    %v631 = vpop.f32.mrf.mxu0
    %v632 = vadd.f32 0.0, %v631
    %633 = vmatprep.mubr.f32.mxu0 0.0
    %634 = vmatmul.mubr.f32.gmra.mxu0 %v261
    %v635 = vpop.f32.mrf.mxu0
    %v636 = vadd.f32 0.0, %v635
    %v637 = vpop.f32.mrf.mxu0
    %v638 = vadd.f32 0.0, %v637
    %639 = vmatprep.mubr.f32.mxu0 0.0
    %640 = vmatmul.mubr.f32.gmra.mxu0 %v264
    %v641 = vpop.f32.mrf.mxu0
    %v642 = vadd.f32 0.0, %v641
    %v643 = vpop.f32.mrf.mxu0
    %v644 = vadd.f32 0.0, %v643
    %645 = vmatprep.mubr.f32.mxu0 0.0
    %646 = vmatmul.mubr.f32.gmra.mxu0 %v267
    %v647 = vpop.f32.mrf.mxu0
    %v648 = vadd.f32 0.0, %v647
    %v649 = vpop.f32.mrf.mxu0
    %v650 = vadd.f32 0.0, %v649
    %651 = vmatprep.mubr.f32.mxu0 0.0
    %652 = vmatmul.mubr.f32.gmra.mxu0 %v270
    %v653 = vpop.f32.mrf.mxu0
    %v654 = vadd.f32 0.0, %v653
    %v655 = vpop.f32.mrf.mxu0
    %v656 = vadd.f32 0.0, %v655
    %657 = vmatprep.mubr.f32.mxu0 0.0
    %658 = vmatmul.mubr.f32.gmra.mxu0 %v273
    %v659 = vpop.f32.mrf.mxu0
    %v660 = vadd.f32 0.0, %v659
    %v661 = vpop.f32.mrf.mxu0
    %v662 = vadd.f32 0.0, %v661
    %663 = vmatprep.mubr.f32.mxu0 0.0
    %664 = vmatmul.mubr.f32.gmra.mxu0 %v276
    %v665 = vpop.f32.mrf.mxu0
    %v666 = vadd.f32 0.0, %v665
    %v667 = vpop.f32.mrf.mxu0
    %v668 = vadd.f32 0.0, %v667
    %669 = vmatprep.mubr.f32.mxu0 0.0
    %670 = vmatmul.mubr.f32.gmra.mxu0 %v279
    %v671 = vpop.f32.mrf.mxu0
    %v672 = vadd.f32 0.0, %v671
    %v673 = vpop.f32.mrf.mxu0
    %v674 = vadd.f32 0.0, %v673
    %675 = vmatprep.mubr.f32.mxu0 0.0
    %676 = vmatmul.mubr.f32.gmra.mxu0 %v282
    %v677 = vpop.f32.mrf.mxu0
    %v678 = vadd.f32 0.0, %v677
    %v679 = vpop.f32.mrf.mxu0
    %v680 = vadd.f32 0.0, %v679
    %681 = vmatprep.mubr.f32.mxu0 0.0
    %682 = vmatmul.mubr.f32.gmra.mxu0 %v285
    %v683 = vpop.f32.mrf.mxu0
    %v684 = vadd.f32 0.0, %v683
    %v685 = vpop.f32.mrf.mxu0
    %v686 = vadd.f32 0.0, %v685
    %687 = vmatprep.mubr.f32.mxu0 0.0
    %688 = vmatmul.mubr.f32.gmra.mxu0 %v288
    %v689 = vpop.f32.mrf.mxu0
    %v690 = vadd.f32 0.0, %v689
    %v691 = vpop.f32.mrf.mxu0
    %v692 = vadd.f32 0.0, %v691
    %693 = vmatprep.mubr.f32.mxu0 0.0
    %694 = vmatmul.mubr.f32.gmra.mxu0 %v291
    %v695 = vpop.f32.mrf.mxu0
    %v696 = vadd.f32 0.0, %v695
    %v697 = vpop.f32.mrf.mxu0
    %v698 = vadd.f32 0.0, %v697
    %699 = vmatprep.mubr.f32.mxu0 0.0
    %700 = vmatmul.mubr.f32.gmra.mxu0 %v294
    %v701 = vpop.f32.mrf.mxu0
    %v702 = vadd.f32 0.0, %v701
    %v703 = vpop.f32.mrf.mxu0
    %v704 = vadd.f32 0.0, %v703
    %705 = vmatprep.mubr.f32.mxu0 0.0
    %706 = vmatmul.mubr.f32.gmra.mxu0 %v297
    %v707 = vpop.f32.mrf.mxu0
    %v708 = vadd.f32 0.0, %v707
    %v709 = vpop.f32.mrf.mxu0
    %v710 = vadd.f32 0.0, %v709
    %711 = vmatprep.mubr.f32.mxu0 0.0
    %712 = vmatmul.mubr.f32.gmra.mxu0 %v300
    %v713 = vpop.f32.mrf.mxu0
    %v714 = vadd.f32 0.0, %v713
    %v715 = vpop.f32.mrf.mxu0
    %v716 = vadd.f32 0.0, %v715
    %717 = vmatprep.mubr.f32.mxu0 0.0
    %718 = vmatmul.mubr.f32.gmra.mxu0 %v303
    %v719 = vpop.f32.mrf.mxu0
    %v720 = vadd.f32 0.0, %v719
    %v721 = vpop.f32.mrf.mxu0
    %v722 = vadd.f32 0.0, %v721
    %723 = vmatprep.mubr.f32.mxu0 0.0
    %724 = vmatmul.mubr.f32.gmra.mxu0 %v306
    %v725 = vpop.f32.mrf.mxu0
    %v726 = vadd.f32 0.0, %v725
    %v727 = vpop.f32.mrf.mxu0
    %v728 = vadd.f32 0.0, %v727
    %729 = vmatprep.mubr.f32.mxu0 0.0
    %730 = vmatmul.mubr.f32.gmra.mxu0 %v309
    %v731 = vpop.f32.mrf.mxu0
    %v732 = vadd.f32 0.0, %v731
    %v733 = vpop.f32.mrf.mxu0
    %v734 = vadd.f32 0.0, %v733
    %735 = vmatprep.mubr.f32.mxu0 0.0
    %736 = vmatmul.mubr.f32.gmra.mxu0 %v312
    %v737 = vpop.f32.mrf.mxu0
    %v738 = vadd.f32 0.0, %v737
    %v739 = vpop.f32.mrf.mxu0
    %v740 = vadd.f32 0.0, %v739
    %741 = vmatprep.mubr.f32.mxu0 0.0
    %742 = vmatmul.mubr.f32.gmra.mxu0 %v315
    %v743 = vpop.f32.mrf.mxu0
    %v744 = vadd.f32 0.0, %v743
    %v745 = vpop.f32.mrf.mxu0
    %v746 = vadd.f32 0.0, %v745
    %747 = vmatprep.mubr.f32.mxu0 0.0
    %748 = vmatmul.mubr.f32.gmra.mxu0 %v318
    %v749 = vpop.f32.mrf.mxu0
    %v750 = vadd.f32 0.0, %v749
    %v751 = vpop.f32.mrf.mxu0
    %v752 = vadd.f32 0.0, %v751
    %753 = vmatprep.mubr.f32.mxu0 0.0
    %754 = vmatmul.mubr.f32.gmra.mxu0 %v321
    %v755 = vpop.f32.mrf.mxu0
    %v756 = vadd.f32 0.0, %v755
    %v757 = vpop.f32.mrf.mxu0
    %v758 = vadd.f32 0.0, %v757
    %759 = vdwg.mxu0
    %760 = vmatprep.subr.mxu0 0.0
    %761 = vmatpush1.msra.mxu0 0.0
    %762 = vmatprep.subr.mxu0 0.0
    %763 = vmatpush1.msra.mxu0 0.0
    %764 = vmatprep.subr.mxu0 0.0
    %765 = vmatpush1.msra.mxu0 0.0
    %766 = vmatprep.subr.mxu0 0.0
    %767 = vmatpush1.msra.mxu0 0.0
    %768 = vmatprep.subr.mxu0 0.0
    %769 = vmatpush1.msra.mxu0 0.0
    %770 = vmatprep.subr.mxu0 0.0
    %771 = vmatpush1.msra.mxu0 0.0
    %772 = vmatprep.subr.mxu0 0.0
    %773 = vmatpush1.msra.mxu0 0.0
    %774 = vmatprep.subr.mxu0 0.0
    %775 = vmatpush1.msra.mxu0 0.0
    %776 = vmatprep.subr.mxu0 0.0
    %777 = vmatpush1.msra.mxu0 0.0
    %778 = vmatprep.subr.mxu0 0.0
    %779 = vmatpush1.msra.mxu0 0.0
    %780 = vmatprep.subr.mxu0 0.0
    %781 = vmatpush1.msra.mxu0 0.0
    %782 = vmatprep.subr.mxu0 0.0
    %783 = vmatpush1.msra.mxu0 0.0
    %784 = vmatprep.subr.mxu0 %v340
    %785 = vmatpush1.msra.mxu0 %v337
    %786 = vmatprep.subr.mxu0 %v171
    %787 = vmatpush1.msra.mxu0 %v170
    %788 = vmatprep.subr.mxu0 %v165
    %789 = vmatpush1.msra.mxu0 %v164
    %790 = vmatprep.subr.mxu0 %v159
    %791 = vmatpush1.msra.mxu0 %v158
    %792 = vmatprep.subr.mxu0 0.0
    %793 = vmatpush2.msra.mxu0 0.0
    %794 = vmatprep.subr.mxu0 0.0
    %795 = vmatpush2.msra.mxu0 0.0
    %796 = vmatprep.subr.mxu0 0.0
    %797 = vmatpush2.msra.mxu0 0.0
    %798 = vmatprep.subr.mxu0 0.0
    %799 = vmatpush2.msra.mxu0 0.0
    %800 = vmatprep.subr.mxu0 0.0
    %801 = vmatpush2.msra.mxu0 0.0
    %802 = vmatprep.subr.mxu0 0.0
    %803 = vmatpush2.msra.mxu0 0.0
    %804 = vmatprep.subr.mxu0 0.0
    %805 = vmatpush2.msra.mxu0 0.0
    %806 = vmatprep.subr.mxu0 0.0
    %807 = vmatpush2.msra.mxu0 0.0
    %808 = vmatprep.subr.mxu0 0.0
    %809 = vmatpush2.msra.mxu0 0.0
    %810 = vmatprep.subr.mxu0 0.0
    %811 = vmatpush2.msra.mxu0 0.0
    %812 = vmatprep.subr.mxu0 0.0
    %813 = vmatpush2.msra.mxu0 0.0
    %814 = vmatprep.subr.mxu0 0.0
    %815 = vmatpush2.msra.mxu0 0.0
    %816 = vmatprep.subr.mxu0 0.0
    %817 = vmatpush2.msra.mxu0 0.0
    %818 = vmatprep.subr.mxu0 0.0
    %819 = vmatpush2.msra.mxu0 0.0
    %820 = vmatprep.subr.mxu0 0.0
    %821 = vmatpush2.msra.mxu0 0.0
    %822 = vmatprep.subr.mxu0 0.0
    %823 = vmatpush2.msra.mxu0 0.0
    %824 = vmatprep.mubr.f32.mxu0 0.0
    %825 = vmatmul.mubr.f32.gmra.mxu0 %v252
    %v826 = vpop.f32.mrf.mxu0
    %v827 = vadd.f32 0.0, %v826
    %v828 = vpop.f32.mrf.mxu0
    %v829 = vadd.f32 0.0, %v828
    %830 = vmatprep.mubr.f32.mxu0 0.0
    %831 = vmatmul.mubr.f32.gmra.mxu0 %v255
    %v832 = vpop.f32.mrf.mxu0
    %v833 = vadd.f32 0.0, %v832
    %v834 = vpop.f32.mrf.mxu0
    %v835 = vadd.f32 0.0, %v834
    %836 = vmatprep.mubr.f32.mxu0 0.0
    %837 = vmatmul.mubr.f32.gmra.mxu0 %v258
    %v838 = vpop.f32.mrf.mxu0
    %v839 = vadd.f32 0.0, %v838
    %v840 = vpop.f32.mrf.mxu0
    %v841 = vadd.f32 0.0, %v840
    %842 = vmatprep.mubr.f32.mxu0 0.0
    %843 = vmatmul.mubr.f32.gmra.mxu0 %v261
    %v844 = vpop.f32.mrf.mxu0
    %v845 = vadd.f32 0.0, %v844
    %v846 = vpop.f32.mrf.mxu0
    %v847 = vadd.f32 0.0, %v846
    %848 = vmatprep.mubr.f32.mxu0 0.0
    %849 = vmatmul.mubr.f32.gmra.mxu0 %v264
    %v850 = vpop.f32.mrf.mxu0
    %v851 = vadd.f32 0.0, %v850
    %v852 = vpop.f32.mrf.mxu0
    %v853 = vadd.f32 0.0, %v852
    %854 = vmatprep.mubr.f32.mxu0 0.0
    %855 = vmatmul.mubr.f32.gmra.mxu0 %v267
    %v856 = vpop.f32.mrf.mxu0
    %v857 = vadd.f32 0.0, %v856
    %v858 = vpop.f32.mrf.mxu0
    %v859 = vadd.f32 0.0, %v858
    %860 = vmatprep.mubr.f32.mxu0 0.0
    %861 = vmatmul.mubr.f32.gmra.mxu0 %v270
    %v862 = vpop.f32.mrf.mxu0
    %v863 = vadd.f32 0.0, %v862
    %v864 = vpop.f32.mrf.mxu0
    %v865 = vadd.f32 0.0, %v864
    %866 = vmatprep.mubr.f32.mxu0 0.0
    %867 = vmatmul.mubr.f32.gmra.mxu0 %v273
    %v868 = vpop.f32.mrf.mxu0
    %v869 = vadd.f32 0.0, %v868
    %v870 = vpop.f32.mrf.mxu0
    %v871 = vadd.f32 0.0, %v870
    %872 = vmatprep.mubr.f32.mxu0 0.0
    %873 = vmatmul.mubr.f32.gmra.mxu0 %v276
    %v874 = vpop.f32.mrf.mxu0
    %v875 = vadd.f32 0.0, %v874
    %v876 = vpop.f32.mrf.mxu0
    %v877 = vadd.f32 0.0, %v876
    %878 = vmatprep.mubr.f32.mxu0 0.0
    %879 = vmatmul.mubr.f32.gmra.mxu0 %v279
    %v880 = vpop.f32.mrf.mxu0
    %v881 = vadd.f32 0.0, %v880
    %v882 = vpop.f32.mrf.mxu0
    %v883 = vadd.f32 0.0, %v882
    %884 = vmatprep.mubr.f32.mxu0 0.0
    %885 = vmatmul.mubr.f32.gmra.mxu0 %v282
    %v886 = vpop.f32.mrf.mxu0
    %v887 = vadd.f32 0.0, %v886
    %v888 = vpop.f32.mrf.mxu0
    %v889 = vadd.f32 0.0, %v888
    %890 = vmatprep.mubr.f32.mxu0 0.0
    %891 = vmatmul.mubr.f32.gmra.mxu0 %v285
    %v892 = vpop.f32.mrf.mxu0
    %v893 = vadd.f32 0.0, %v892
    %v894 = vpop.f32.mrf.mxu0
    %v895 = vadd.f32 0.0, %v894
    %896 = vmatprep.mubr.f32.mxu0 0.0
    %897 = vmatmul.mubr.f32.gmra.mxu0 %v288
    %v898 = vpop.f32.mrf.mxu0
    %v899 = vadd.f32 0.0, %v898
    %v900 = vpop.f32.mrf.mxu0
    %v901 = vadd.f32 0.0, %v900
    %902 = vmatprep.mubr.f32.mxu0 0.0
    %903 = vmatmul.mubr.f32.gmra.mxu0 %v291
    %v904 = vpop.f32.mrf.mxu0
    %v905 = vadd.f32 0.0, %v904
    %v906 = vpop.f32.mrf.mxu0
    %v907 = vadd.f32 0.0, %v906
    %908 = vmatprep.mubr.f32.mxu0 0.0
    %909 = vmatmul.mubr.f32.gmra.mxu0 %v294
    %v910 = vpop.f32.mrf.mxu0
    %v911 = vadd.f32 0.0, %v910
    %v912 = vpop.f32.mrf.mxu0
    %v913 = vadd.f32 0.0, %v912
    %914 = vmatprep.mubr.f32.mxu0 0.0
    %915 = vmatmul.mubr.f32.gmra.mxu0 %v297
    %v916 = vpop.f32.mrf.mxu0
    %v917 = vadd.f32 0.0, %v916
    %v918 = vpop.f32.mrf.mxu0
    %v919 = vadd.f32 0.0, %v918
    %920 = vmatprep.mubr.f32.mxu0 0.0
    %921 = vmatmul.mubr.f32.gmra.mxu0 %v300
    %v922 = vpop.f32.mrf.mxu0
    %v923 = vadd.f32 0.0, %v922
    %v924 = vpop.f32.mrf.mxu0
    %v925 = vadd.f32 0.0, %v924
    %926 = vmatprep.mubr.f32.mxu0 0.0
    %927 = vmatmul.mubr.f32.gmra.mxu0 %v303
    %v928 = vpop.f32.mrf.mxu0
    %v929 = vadd.f32 0.0, %v928
    %v930 = vpop.f32.mrf.mxu0
    %v931 = vadd.f32 0.0, %v930
    %932 = vmatprep.mubr.f32.mxu0 0.0
    %933 = vmatmul.mubr.f32.gmra.mxu0 %v306
    %v934 = vpop.f32.mrf.mxu0
    %v935 = vadd.f32 0.0, %v934
    %v936 = vpop.f32.mrf.mxu0
    %v937 = vadd.f32 0.0, %v936
    %938 = vmatprep.mubr.f32.mxu0 0.0
    %939 = vmatmul.mubr.f32.gmra.mxu0 %v309
    %v940 = vpop.f32.mrf.mxu0
    %v941 = vadd.f32 0.0, %v940
    %v942 = vpop.f32.mrf.mxu0
    %v943 = vadd.f32 0.0, %v942
    %944 = vmatprep.mubr.f32.mxu0 0.0
    %945 = vmatmul.mubr.f32.gmra.mxu0 %v312
    %v946 = vpop.f32.mrf.mxu0
    %v947 = vadd.f32 0.0, %v946
    %v948 = vpop.f32.mrf.mxu0
    %v949 = vadd.f32 0.0, %v948
    %950 = vmatprep.mubr.f32.mxu0 0.0
    %951 = vmatmul.mubr.f32.gmra.mxu0 %v315
    %v952 = vpop.f32.mrf.mxu0
    %v953 = vadd.f32 0.0, %v952
    %v954 = vpop.f32.mrf.mxu0
    %v955 = vadd.f32 0.0, %v954
    %956 = vmatprep.mubr.f32.mxu0 0.0
    %957 = vmatmul.mubr.f32.gmra.mxu0 %v318
    %v958 = vpop.f32.mrf.mxu0
    %v959 = vadd.f32 0.0, %v958
    %v960 = vpop.f32.mrf.mxu0
    %v961 = vadd.f32 0.0, %v960
    %962 = vmatprep.mubr.f32.mxu0 0.0
    %963 = vmatmul.mubr.f32.gmra.mxu0 %v321
    %v964 = vpop.f32.mrf.mxu0
    %v965 = vadd.f32 0.0, %v964
    %v966 = vpop.f32.mrf.mxu0
    %v967 = vadd.f32 0.0, %v966
    %968 = vdwg.mxu0
    %v970 = vsel %vm250, %v102, 0
    %v973 = vsel %vm323, %v148, 0
    %v976 = vsel %vm323, %v149, 0
    %v979 = vsel %vm323, %v150, 0
    %v982 = vsel %vm323, %v151, 0
    %v985 = vsel %vm323, %v152, 0
    %v988 = vsel %vm323, %v153, 0
    %990 = vmatprep.subr.mxu0 0.0
    %991 = vmatpush1.msra.mxu0 0.0
    %992 = vmatprep.subr.mxu0 0.0
    %993 = vmatpush1.msra.mxu0 0.0
    %994 = vmatprep.subr.mxu0 0.0
    %995 = vmatpush1.msra.mxu0 0.0
    %996 = vmatprep.subr.mxu0 0.0
    %997 = vmatpush1.msra.mxu0 0.0
    %998 = vmatprep.subr.mxu0 0.0
    %999 = vmatpush1.msra.mxu0 0.0
    %1000 = vmatprep.subr.mxu0 0.0
    %1001 = vmatpush1.msra.mxu0 0.0
    %1002 = vmatprep.subr.mxu0 0.0
    %1003 = vmatpush1.msra.mxu0 0.0
    %1004 = vmatprep.subr.mxu0 0.0
    %1005 = vmatpush1.msra.mxu0 0.0
    %1006 = vmatprep.subr.mxu0 0.0
    %1007 = vmatpush1.msra.mxu0 0.0
    %1008 = vmatprep.subr.mxu0 0.0
    %1009 = vmatpush1.msra.mxu0 0.0
    %1010 = vmatprep.subr.mxu0 0.0
    %1011 = vmatpush1.msra.mxu0 0.0
    %1012 = vmatprep.subr.mxu0 0.0
    %1013 = vmatpush1.msra.mxu0 0.0
    %1014 = vmatprep.subr.mxu0 %v976
    %1015 = vmatpush1.msra.mxu0 %v973
    %1016 = vmatprep.subr.mxu0 %v143
    %1017 = vmatpush1.msra.mxu0 %v142
    %1018 = vmatprep.subr.mxu0 %v137
    %1019 = vmatpush1.msra.mxu0 %v136
    %1020 = vmatprep.subr.mxu0 %v131
    %1021 = vmatpush1.msra.mxu0 %v130
    %1022 = vmatprep.subr.mxu0 0.0
    %1023 = vmatpush2.msra.mxu0 0.0
    %1024 = vmatprep.subr.mxu0 0.0
    %1025 = vmatpush2.msra.mxu0 0.0
    %1026 = vmatprep.subr.mxu0 0.0
    %1027 = vmatpush2.msra.mxu0 0.0
    %1028 = vmatprep.subr.mxu0 0.0
    %1029 = vmatpush2.msra.mxu0 0.0
    %1030 = vmatprep.subr.mxu0 0.0
    %1031 = vmatpush2.msra.mxu0 0.0
    %1032 = vmatprep.subr.mxu0 0.0
    %1033 = vmatpush2.msra.mxu0 0.0
    %1034 = vmatprep.subr.mxu0 0.0
    %1035 = vmatpush2.msra.mxu0 0.0
    %1036 = vmatprep.subr.mxu0 0.0
    %1037 = vmatpush2.msra.mxu0 0.0
    %1038 = vmatprep.subr.mxu0 0.0
    %1039 = vmatpush2.msra.mxu0 0.0
    %1040 = vmatprep.subr.mxu0 0.0
    %1041 = vmatpush2.msra.mxu0 0.0
    %1042 = vmatprep.subr.mxu0 0.0
    %1043 = vmatpush2.msra.mxu0 0.0
    %1044 = vmatprep.subr.mxu0 0.0
    %1045 = vmatpush2.msra.mxu0 0.0
    %1046 = vmatprep.subr.mxu0 0.0
    %1047 = vmatpush2.msra.mxu0 0.0
    %1048 = vmatprep.subr.mxu0 0.0
    %1049 = vmatpush2.msra.mxu0 0.0
    %1050 = vmatprep.subr.mxu0 0.0
    %1051 = vmatpush2.msra.mxu0 0.0
    %1052 = vmatprep.subr.mxu0 0.0
    %1053 = vmatpush2.msra.mxu0 0.0
    %1054 = vmatprep.mubr.f32.mxu0 0.0
    %1055 = vmatmul.mubr.f32.gmra.mxu0 %v970
    %v1056 = vpop.f32.mrf.mxu0
    %v1057 = vadd.f32 %v409, %v1056
    %v1058 = vpop.f32.mrf.mxu0
    %v1059 = vadd.f32 %v411, %v1058
    %1060 = vmatprep.mubr.f32.mxu0 0.0
    %1061 = vmatmul.mubr.f32.gmra.mxu0 %v252
    %v1062 = vpop.f32.mrf.mxu0
    %v1063 = vadd.f32 %v415, %v1062
    %v1064 = vpop.f32.mrf.mxu0
    %v1065 = vadd.f32 %v417, %v1064
    %1066 = vmatprep.mubr.f32.mxu0 0.0
    %1067 = vmatmul.mubr.f32.gmra.mxu0 %v255
    %v1068 = vpop.f32.mrf.mxu0
    %v1069 = vadd.f32 %v421, %v1068
    %v1070 = vpop.f32.mrf.mxu0
    %v1071 = vadd.f32 %v423, %v1070
    %1072 = vmatprep.mubr.f32.mxu0 0.0
    %1073 = vmatmul.mubr.f32.gmra.mxu0 %v258
    %v1074 = vpop.f32.mrf.mxu0
    %v1075 = vadd.f32 %v427, %v1074
    %v1076 = vpop.f32.mrf.mxu0
    %v1077 = vadd.f32 %v429, %v1076
    %1078 = vmatprep.mubr.f32.mxu0 0.0
    %1079 = vmatmul.mubr.f32.gmra.mxu0 %v261
    %v1080 = vpop.f32.mrf.mxu0
    %v1081 = vadd.f32 %v433, %v1080
    %v1082 = vpop.f32.mrf.mxu0
    %v1083 = vadd.f32 %v435, %v1082
    %1084 = vmatprep.mubr.f32.mxu0 0.0
    %1085 = vmatmul.mubr.f32.gmra.mxu0 %v264
    %v1086 = vpop.f32.mrf.mxu0
    %v1087 = vadd.f32 %v439, %v1086
    %v1088 = vpop.f32.mrf.mxu0
    %v1089 = vadd.f32 %v441, %v1088
    %1090 = vmatprep.mubr.f32.mxu0 0.0
    %1091 = vmatmul.mubr.f32.gmra.mxu0 %v267
    %v1092 = vpop.f32.mrf.mxu0
    %v1093 = vadd.f32 %v445, %v1092
    %v1094 = vpop.f32.mrf.mxu0
    %v1095 = vadd.f32 %v447, %v1094
    %1096 = vmatprep.mubr.f32.mxu0 0.0
    %1097 = vmatmul.mubr.f32.gmra.mxu0 %v270
    %v1098 = vpop.f32.mrf.mxu0
    %v1099 = vadd.f32 %v451, %v1098
    %v1100 = vpop.f32.mrf.mxu0
    %v1101 = vadd.f32 %v453, %v1100
    %1102 = vmatprep.mubr.f32.mxu0 0.0
    %1103 = vmatmul.mubr.f32.gmra.mxu0 %v273
    %v1104 = vpop.f32.mrf.mxu0
    %v1105 = vadd.f32 %v457, %v1104
    %v1106 = vpop.f32.mrf.mxu0
    %v1107 = vadd.f32 %v459, %v1106
    %1108 = vmatprep.mubr.f32.mxu0 0.0
    %1109 = vmatmul.mubr.f32.gmra.mxu0 %v276
    %v1110 = vpop.f32.mrf.mxu0
    %v1111 = vadd.f32 %v463, %v1110
    %v1112 = vpop.f32.mrf.mxu0
    %v1113 = vadd.f32 %v465, %v1112
    %1114 = vmatprep.mubr.f32.mxu0 0.0
    %1115 = vmatmul.mubr.f32.gmra.mxu0 %v279
    %v1116 = vpop.f32.mrf.mxu0
    %v1117 = vadd.f32 %v469, %v1116
    %v1118 = vpop.f32.mrf.mxu0
    %v1119 = vadd.f32 %v471, %v1118
    %1120 = vmatprep.mubr.f32.mxu0 0.0
    %1121 = vmatmul.mubr.f32.gmra.mxu0 %v282
    %v1122 = vpop.f32.mrf.mxu0
    %v1123 = vadd.f32 %v475, %v1122
    %v1124 = vpop.f32.mrf.mxu0
    %v1125 = vadd.f32 %v477, %v1124
    %1126 = vmatprep.mubr.f32.mxu0 0.0
    %1127 = vmatmul.mubr.f32.gmra.mxu0 %v285
    %v1128 = vpop.f32.mrf.mxu0
    %v1129 = vadd.f32 %v481, %v1128
    %v1130 = vpop.f32.mrf.mxu0
    %v1131 = vadd.f32 %v483, %v1130
    %1132 = vmatprep.mubr.f32.mxu0 0.0
    %1133 = vmatmul.mubr.f32.gmra.mxu0 %v288
    %v1134 = vpop.f32.mrf.mxu0
    %v1135 = vadd.f32 %v487, %v1134
    %v1136 = vpop.f32.mrf.mxu0
    %v1137 = vadd.f32 %v489, %v1136
    %1138 = vmatprep.mubr.f32.mxu0 0.0
    %1139 = vmatmul.mubr.f32.gmra.mxu0 %v291
    %v1140 = vpop.f32.mrf.mxu0
    %v1141 = vadd.f32 %v493, %v1140
    %v1142 = vpop.f32.mrf.mxu0
    %v1143 = vadd.f32 %v495, %v1142
    %1144 = vmatprep.mubr.f32.mxu0 0.0
    %1145 = vmatmul.mubr.f32.gmra.mxu0 %v294
    %v1146 = vpop.f32.mrf.mxu0
    %v1147 = vadd.f32 %v499, %v1146
    %v1148 = vpop.f32.mrf.mxu0
    %v1149 = vadd.f32 %v501, %v1148
    %1150 = vmatprep.mubr.f32.mxu0 0.0
    %1151 = vmatmul.mubr.f32.gmra.mxu0 %v297
    %v1152 = vpop.f32.mrf.mxu0
    %v1153 = vadd.f32 %v505, %v1152
    %v1154 = vpop.f32.mrf.mxu0
    %v1155 = vadd.f32 %v507, %v1154
    %1156 = vmatprep.mubr.f32.mxu0 0.0
    %1157 = vmatmul.mubr.f32.gmra.mxu0 %v300
    %v1158 = vpop.f32.mrf.mxu0
    %v1159 = vadd.f32 %v511, %v1158
    %v1160 = vpop.f32.mrf.mxu0
    %v1161 = vadd.f32 %v513, %v1160
    %1162 = vmatprep.mubr.f32.mxu0 0.0
    %1163 = vmatmul.mubr.f32.gmra.mxu0 %v303
    %v1164 = vpop.f32.mrf.mxu0
    %v1165 = vadd.f32 %v517, %v1164
    %v1166 = vpop.f32.mrf.mxu0
    %v1167 = vadd.f32 %v519, %v1166
    %1168 = vmatprep.mubr.f32.mxu0 0.0
    %1169 = vmatmul.mubr.f32.gmra.mxu0 %v306
    %v1170 = vpop.f32.mrf.mxu0
    %v1171 = vadd.f32 %v523, %v1170
    %v1172 = vpop.f32.mrf.mxu0
    %v1173 = vadd.f32 %v525, %v1172
    %1174 = vmatprep.mubr.f32.mxu0 0.0
    %1175 = vmatmul.mubr.f32.gmra.mxu0 %v309
    %v1176 = vpop.f32.mrf.mxu0
    %v1177 = vadd.f32 %v529, %v1176
    %v1178 = vpop.f32.mrf.mxu0
    %v1179 = vadd.f32 %v531, %v1178
    %1180 = vmatprep.mubr.f32.mxu0 0.0
    %1181 = vmatmul.mubr.f32.gmra.mxu0 %v312
    %v1182 = vpop.f32.mrf.mxu0
    %v1183 = vadd.f32 %v535, %v1182
    %v1184 = vpop.f32.mrf.mxu0
    %v1185 = vadd.f32 %v537, %v1184
    %1186 = vmatprep.mubr.f32.mxu0 0.0
    %1187 = vmatmul.mubr.f32.gmra.mxu0 %v315
    %v1188 = vpop.f32.mrf.mxu0
    %v1189 = vadd.f32 %v541, %v1188
    %v1190 = vpop.f32.mrf.mxu0
    %v1191 = vadd.f32 %v543, %v1190
    %1192 = vmatprep.mubr.f32.mxu0 0.0
    %1193 = vmatmul.mubr.f32.gmra.mxu0 %v318
    %v1194 = vpop.f32.mrf.mxu0
    %v1195 = vadd.f32 %v547, %v1194
    %v1196 = vpop.f32.mrf.mxu0
    %v1197 = vadd.f32 %v549, %v1196
    %1198 = vdwg.mxu0
    %1199 = vmatprep.subr.mxu0 0.0
    %1200 = vmatpush1.msra.mxu0 0.0
    %1201 = vmatprep.subr.mxu0 0.0
    %1202 = vmatpush1.msra.mxu0 0.0
    %1203 = vmatprep.subr.mxu0 0.0
    %1204 = vmatpush1.msra.mxu0 0.0
    %1205 = vmatprep.subr.mxu0 0.0
    %1206 = vmatpush1.msra.mxu0 0.0
    %1207 = vmatprep.subr.mxu0 0.0
    %1208 = vmatpush1.msra.mxu0 0.0
    %1209 = vmatprep.subr.mxu0 0.0
    %1210 = vmatpush1.msra.mxu0 0.0
    %1211 = vmatprep.subr.mxu0 0.0
    %1212 = vmatpush1.msra.mxu0 0.0
    %1213 = vmatprep.subr.mxu0 0.0
    %1214 = vmatpush1.msra.mxu0 0.0
    %1215 = vmatprep.subr.mxu0 0.0
    %1216 = vmatpush1.msra.mxu0 0.0
    %1217 = vmatprep.subr.mxu0 0.0
    %1218 = vmatpush1.msra.mxu0 0.0
    %1219 = vmatprep.subr.mxu0 0.0
    %1220 = vmatpush1.msra.mxu0 0.0
    %1221 = vmatprep.subr.mxu0 0.0
    %1222 = vmatpush1.msra.mxu0 0.0
    %1223 = vmatprep.subr.mxu0 %v982
    %1224 = vmatpush1.msra.mxu0 %v979
    %1225 = vmatprep.subr.mxu0 %v145
    %1226 = vmatpush1.msra.mxu0 %v144
    %1227 = vmatprep.subr.mxu0 %v139
    %1228 = vmatpush1.msra.mxu0 %v138
    %1229 = vmatprep.subr.mxu0 %v133
    %1230 = vmatpush1.msra.mxu0 %v132
    %1231 = vmatprep.subr.mxu0 0.0
    %1232 = vmatpush2.msra.mxu0 0.0
    %1233 = vmatprep.subr.mxu0 0.0
    %1234 = vmatpush2.msra.mxu0 0.0
    %1235 = vmatprep.subr.mxu0 0.0
    %1236 = vmatpush2.msra.mxu0 0.0
    %1237 = vmatprep.subr.mxu0 0.0
    %1238 = vmatpush2.msra.mxu0 0.0
    %1239 = vmatprep.subr.mxu0 0.0
    %1240 = vmatpush2.msra.mxu0 0.0
    %1241 = vmatprep.subr.mxu0 0.0
    %1242 = vmatpush2.msra.mxu0 0.0
    %1243 = vmatprep.subr.mxu0 0.0
    %1244 = vmatpush2.msra.mxu0 0.0
    %1245 = vmatprep.subr.mxu0 0.0
    %1246 = vmatpush2.msra.mxu0 0.0
    %1247 = vmatprep.subr.mxu0 0.0
    %1248 = vmatpush2.msra.mxu0 0.0
    %1249 = vmatprep.subr.mxu0 0.0
    %1250 = vmatpush2.msra.mxu0 0.0
    %1251 = vmatprep.subr.mxu0 0.0
    %1252 = vmatpush2.msra.mxu0 0.0
    %1253 = vmatprep.subr.mxu0 0.0
    %1254 = vmatpush2.msra.mxu0 0.0
    %1255 = vmatprep.subr.mxu0 0.0
    %1256 = vmatpush2.msra.mxu0 0.0
    %1257 = vmatprep.subr.mxu0 0.0
    %1258 = vmatpush2.msra.mxu0 0.0
    %1259 = vmatprep.subr.mxu0 0.0
    %1260 = vmatpush2.msra.mxu0 0.0
    %1261 = vmatprep.subr.mxu0 0.0
    %1262 = vmatpush2.msra.mxu0 0.0
    %1263 = vmatprep.mubr.f32.mxu0 0.0
    %1264 = vmatmul.mubr.f32.gmra.mxu0 %v970
    %v1265 = vpop.f32.mrf.mxu0
    %v1266 = vadd.f32 %v618, %v1265
    %v1267 = vpop.f32.mrf.mxu0
    %v1268 = vadd.f32 %v620, %v1267
    %1269 = vmatprep.mubr.f32.mxu0 0.0
    %1270 = vmatmul.mubr.f32.gmra.mxu0 %v252
    %v1271 = vpop.f32.mrf.mxu0
    %v1272 = vadd.f32 %v624, %v1271
    %v1273 = vpop.f32.mrf.mxu0
    %v1274 = vadd.f32 %v626, %v1273
    %1275 = vmatprep.mubr.f32.mxu0 0.0
    %1276 = vmatmul.mubr.f32.gmra.mxu0 %v255
    %v1277 = vpop.f32.mrf.mxu0
    %v1278 = vadd.f32 %v630, %v1277
    %v1279 = vpop.f32.mrf.mxu0
    %v1280 = vadd.f32 %v632, %v1279
    %1281 = vmatprep.mubr.f32.mxu0 0.0
    %1282 = vmatmul.mubr.f32.gmra.mxu0 %v258
    %v1283 = vpop.f32.mrf.mxu0
    %v1284 = vadd.f32 %v636, %v1283
    %v1285 = vpop.f32.mrf.mxu0
    %v1286 = vadd.f32 %v638, %v1285
    %1287 = vmatprep.mubr.f32.mxu0 0.0
    %1288 = vmatmul.mubr.f32.gmra.mxu0 %v261
    %v1289 = vpop.f32.mrf.mxu0
    %v1290 = vadd.f32 %v642, %v1289
    %v1291 = vpop.f32.mrf.mxu0
    %v1292 = vadd.f32 %v644, %v1291
    %1293 = vmatprep.mubr.f32.mxu0 0.0
    %1294 = vmatmul.mubr.f32.gmra.mxu0 %v264
    %v1295 = vpop.f32.mrf.mxu0
    %v1296 = vadd.f32 %v648, %v1295
    %v1297 = vpop.f32.mrf.mxu0
    %v1298 = vadd.f32 %v650, %v1297
    %1299 = vmatprep.mubr.f32.mxu0 0.0
    %1300 = vmatmul.mubr.f32.gmra.mxu0 %v267
    %v1301 = vpop.f32.mrf.mxu0
    %v1302 = vadd.f32 %v654, %v1301
    %v1303 = vpop.f32.mrf.mxu0
    %v1304 = vadd.f32 %v656, %v1303
    %1305 = vmatprep.mubr.f32.mxu0 0.0
    %1306 = vmatmul.mubr.f32.gmra.mxu0 %v270
    %v1307 = vpop.f32.mrf.mxu0
    %v1308 = vadd.f32 %v660, %v1307
    %v1309 = vpop.f32.mrf.mxu0
    %v1310 = vadd.f32 %v662, %v1309
    %1311 = vmatprep.mubr.f32.mxu0 0.0
    %1312 = vmatmul.mubr.f32.gmra.mxu0 %v273
    %v1313 = vpop.f32.mrf.mxu0
    %v1314 = vadd.f32 %v666, %v1313
    %v1315 = vpop.f32.mrf.mxu0
    %v1316 = vadd.f32 %v668, %v1315
    %1317 = vmatprep.mubr.f32.mxu0 0.0
    %1318 = vmatmul.mubr.f32.gmra.mxu0 %v276
    %v1319 = vpop.f32.mrf.mxu0
    %v1320 = vadd.f32 %v672, %v1319
    %v1321 = vpop.f32.mrf.mxu0
    %v1322 = vadd.f32 %v674, %v1321
    %1323 = vmatprep.mubr.f32.mxu0 0.0
    %1324 = vmatmul.mubr.f32.gmra.mxu0 %v279
    %v1325 = vpop.f32.mrf.mxu0
    %v1326 = vadd.f32 %v678, %v1325
    %v1327 = vpop.f32.mrf.mxu0
    %v1328 = vadd.f32 %v680, %v1327
    %1329 = vmatprep.mubr.f32.mxu0 0.0
    %1330 = vmatmul.mubr.f32.gmra.mxu0 %v282
    %v1331 = vpop.f32.mrf.mxu0
    %v1332 = vadd.f32 %v684, %v1331
    %v1333 = vpop.f32.mrf.mxu0
    %v1334 = vadd.f32 %v686, %v1333
    %1335 = vmatprep.mubr.f32.mxu0 0.0
    %1336 = vmatmul.mubr.f32.gmra.mxu0 %v285
    %v1337 = vpop.f32.mrf.mxu0
    %v1338 = vadd.f32 %v690, %v1337
    %v1339 = vpop.f32.mrf.mxu0
    %v1340 = vadd.f32 %v692, %v1339
    %1341 = vmatprep.mubr.f32.mxu0 0.0
    %1342 = vmatmul.mubr.f32.gmra.mxu0 %v288
    %v1343 = vpop.f32.mrf.mxu0
    %v1344 = vadd.f32 %v696, %v1343
    %v1345 = vpop.f32.mrf.mxu0
    %v1346 = vadd.f32 %v698, %v1345
    %1347 = vmatprep.mubr.f32.mxu0 0.0
    %1348 = vmatmul.mubr.f32.gmra.mxu0 %v291
    %v1349 = vpop.f32.mrf.mxu0
    %v1350 = vadd.f32 %v702, %v1349
    %v1351 = vpop.f32.mrf.mxu0
    %v1352 = vadd.f32 %v704, %v1351
    %1353 = vmatprep.mubr.f32.mxu0 0.0
    %1354 = vmatmul.mubr.f32.gmra.mxu0 %v294
    %v1355 = vpop.f32.mrf.mxu0
    %v1356 = vadd.f32 %v708, %v1355
    %v1357 = vpop.f32.mrf.mxu0
    %v1358 = vadd.f32 %v710, %v1357
    %1359 = vmatprep.mubr.f32.mxu0 0.0
    %1360 = vmatmul.mubr.f32.gmra.mxu0 %v297
    %v1361 = vpop.f32.mrf.mxu0
    %v1362 = vadd.f32 %v714, %v1361
    %v1363 = vpop.f32.mrf.mxu0
    %v1364 = vadd.f32 %v716, %v1363
    %1365 = vmatprep.mubr.f32.mxu0 0.0
    %1366 = vmatmul.mubr.f32.gmra.mxu0 %v300
    %v1367 = vpop.f32.mrf.mxu0
    %v1368 = vadd.f32 %v720, %v1367
    %v1369 = vpop.f32.mrf.mxu0
    %v1370 = vadd.f32 %v722, %v1369
    %1371 = vmatprep.mubr.f32.mxu0 0.0
    %1372 = vmatmul.mubr.f32.gmra.mxu0 %v303
    %v1373 = vpop.f32.mrf.mxu0
    %v1374 = vadd.f32 %v726, %v1373
    %v1375 = vpop.f32.mrf.mxu0
    %v1376 = vadd.f32 %v728, %v1375
    %1377 = vmatprep.mubr.f32.mxu0 0.0
    %1378 = vmatmul.mubr.f32.gmra.mxu0 %v306
    %v1379 = vpop.f32.mrf.mxu0
    %v1380 = vadd.f32 %v732, %v1379
    %v1381 = vpop.f32.mrf.mxu0
    %v1382 = vadd.f32 %v734, %v1381
    %1383 = vmatprep.mubr.f32.mxu0 0.0
    %1384 = vmatmul.mubr.f32.gmra.mxu0 %v309
    %v1385 = vpop.f32.mrf.mxu0
    %v1386 = vadd.f32 %v738, %v1385
    %v1387 = vpop.f32.mrf.mxu0
    %v1388 = vadd.f32 %v740, %v1387
    %1389 = vmatprep.mubr.f32.mxu0 0.0
    %1390 = vmatmul.mubr.f32.gmra.mxu0 %v312
    %v1391 = vpop.f32.mrf.mxu0
    %v1392 = vadd.f32 %v744, %v1391
    %v1393 = vpop.f32.mrf.mxu0
    %v1394 = vadd.f32 %v746, %v1393
    %1395 = vmatprep.mubr.f32.mxu0 0.0
    %1396 = vmatmul.mubr.f32.gmra.mxu0 %v315
    %v1397 = vpop.f32.mrf.mxu0
    %v1398 = vadd.f32 %v750, %v1397
    %v1399 = vpop.f32.mrf.mxu0
    %v1400 = vadd.f32 %v752, %v1399
    %1401 = vmatprep.mubr.f32.mxu0 0.0
    %1402 = vmatmul.mubr.f32.gmra.mxu0 %v318
    %v1403 = vpop.f32.mrf.mxu0
    %v1404 = vadd.f32 %v756, %v1403
    %v1405 = vpop.f32.mrf.mxu0
    %v1406 = vadd.f32 %v758, %v1405
    %1407 = vdwg.mxu0
    %1408 = vmatprep.subr.mxu0 0.0
    %1409 = vmatpush1.msra.mxu0 0.0
    %1410 = vmatprep.subr.mxu0 0.0
    %1411 = vmatpush1.msra.mxu0 0.0
    %1412 = vmatprep.subr.mxu0 0.0
    %1413 = vmatpush1.msra.mxu0 0.0
    %1414 = vmatprep.subr.mxu0 0.0
    %1415 = vmatpush1.msra.mxu0 0.0
    %1416 = vmatprep.subr.mxu0 0.0
    %1417 = vmatpush1.msra.mxu0 0.0
    %1418 = vmatprep.subr.mxu0 0.0
    %1419 = vmatpush1.msra.mxu0 0.0
    %1420 = vmatprep.subr.mxu0 0.0
    %1421 = vmatpush1.msra.mxu0 0.0
    %1422 = vmatprep.subr.mxu0 0.0
    %1423 = vmatpush1.msra.mxu0 0.0
    %1424 = vmatprep.subr.mxu0 0.0
    %1425 = vmatpush1.msra.mxu0 0.0
    %1426 = vmatprep.subr.mxu0 0.0
    %1427 = vmatpush1.msra.mxu0 0.0
    %1428 = vmatprep.subr.mxu0 0.0
    %1429 = vmatpush1.msra.mxu0 0.0
    %1430 = vmatprep.subr.mxu0 0.0
    %1431 = vmatpush1.msra.mxu0 0.0
    %1432 = vmatprep.subr.mxu0 %v988
    %1433 = vmatpush1.msra.mxu0 %v985
    %1434 = vmatprep.subr.mxu0 %v147
    %1435 = vmatpush1.msra.mxu0 %v146
    %1436 = vmatprep.subr.mxu0 %v141
    %1437 = vmatpush1.msra.mxu0 %v140
    %1438 = vmatprep.subr.mxu0 %v135
    %1439 = vmatpush1.msra.mxu0 %v134
    %1440 = vmatprep.subr.mxu0 0.0
    %1441 = vmatpush2.msra.mxu0 0.0
    %1442 = vmatprep.subr.mxu0 0.0
    %1443 = vmatpush2.msra.mxu0 0.0
    %1444 = vmatprep.subr.mxu0 0.0
    %1445 = vmatpush2.msra.mxu0 0.0
    %1446 = vmatprep.subr.mxu0 0.0
    %1447 = vmatpush2.msra.mxu0 0.0
    %1448 = vmatprep.subr.mxu0 0.0
    %1449 = vmatpush2.msra.mxu0 0.0
    %1450 = vmatprep.subr.mxu0 0.0
    %1451 = vmatpush2.msra.mxu0 0.0
    %1452 = vmatprep.subr.mxu0 0.0
    %1453 = vmatpush2.msra.mxu0 0.0
    %1454 = vmatprep.subr.mxu0 0.0
    %1455 = vmatpush2.msra.mxu0 0.0
    %1456 = vmatprep.subr.mxu0 0.0
    %1457 = vmatpush2.msra.mxu0 0.0
    %1458 = vmatprep.subr.mxu0 0.0
    %1459 = vmatpush2.msra.mxu0 0.0
    %1460 = vmatprep.subr.mxu0 0.0
    %1461 = vmatpush2.msra.mxu0 0.0
    %1462 = vmatprep.subr.mxu0 0.0
    %1463 = vmatpush2.msra.mxu0 0.0
    %1464 = vmatprep.subr.mxu0 0.0
    %1465 = vmatpush2.msra.mxu0 0.0
    %1466 = vmatprep.subr.mxu0 0.0
    %1467 = vmatpush2.msra.mxu0 0.0
    %1468 = vmatprep.subr.mxu0 0.0
    %1469 = vmatpush2.msra.mxu0 0.0
    %1470 = vmatprep.subr.mxu0 0.0
    %1471 = vmatpush2.msra.mxu0 0.0
    %1472 = vmatprep.mubr.f32.mxu0 0.0
    %1473 = vmatmul.mubr.f32.gmra.mxu0 %v970
    %v1474 = vpop.f32.mrf.mxu0
    %v1475 = vadd.f32 %v827, %v1474
    %v1476 = vpop.f32.mrf.mxu0
    %v1477 = vadd.f32 %v829, %v1476
    %1478 = vmatprep.mubr.f32.mxu0 0.0
    %1479 = vmatmul.mubr.f32.gmra.mxu0 %v252
    %v1480 = vpop.f32.mrf.mxu0
    %v1481 = vadd.f32 %v833, %v1480
    %v1482 = vpop.f32.mrf.mxu0
    %v1483 = vadd.f32 %v835, %v1482
    %1484 = vmatprep.mubr.f32.mxu0 0.0
    %1485 = vmatmul.mubr.f32.gmra.mxu0 %v255
    %v1486 = vpop.f32.mrf.mxu0
    %v1487 = vadd.f32 %v839, %v1486
    %v1488 = vpop.f32.mrf.mxu0
    %v1489 = vadd.f32 %v841, %v1488
    %1490 = vmatprep.mubr.f32.mxu0 0.0
    %1491 = vmatmul.mubr.f32.gmra.mxu0 %v258
    %v1492 = vpop.f32.mrf.mxu0
    %v1493 = vadd.f32 %v845, %v1492
    %v1494 = vpop.f32.mrf.mxu0
    %v1495 = vadd.f32 %v847, %v1494
    %1496 = vmatprep.mubr.f32.mxu0 0.0
    %1497 = vmatmul.mubr.f32.gmra.mxu0 %v261
    %v1498 = vpop.f32.mrf.mxu0
    %v1499 = vadd.f32 %v851, %v1498
    %v1500 = vpop.f32.mrf.mxu0
    %v1501 = vadd.f32 %v853, %v1500
    %1502 = vmatprep.mubr.f32.mxu0 0.0
    %1503 = vmatmul.mubr.f32.gmra.mxu0 %v264
    %v1504 = vpop.f32.mrf.mxu0
    %v1505 = vadd.f32 %v857, %v1504
    %v1506 = vpop.f32.mrf.mxu0
    %v1507 = vadd.f32 %v859, %v1506
    %1508 = vmatprep.mubr.f32.mxu0 0.0
    %1509 = vmatmul.mubr.f32.gmra.mxu0 %v267
    %v1510 = vpop.f32.mrf.mxu0
    %v1511 = vadd.f32 %v863, %v1510
    %v1512 = vpop.f32.mrf.mxu0
    %v1513 = vadd.f32 %v865, %v1512
    %1514 = vmatprep.mubr.f32.mxu0 0.0
    %1515 = vmatmul.mubr.f32.gmra.mxu0 %v270
    %v1516 = vpop.f32.mrf.mxu0
    %v1517 = vadd.f32 %v869, %v1516
    %v1518 = vpop.f32.mrf.mxu0
    %v1519 = vadd.f32 %v871, %v1518
    %1520 = vmatprep.mubr.f32.mxu0 0.0
    %1521 = vmatmul.mubr.f32.gmra.mxu0 %v273
    %v1522 = vpop.f32.mrf.mxu0
    %v1523 = vadd.f32 %v875, %v1522
    %v1524 = vpop.f32.mrf.mxu0
    %v1525 = vadd.f32 %v877, %v1524
    %1526 = vmatprep.mubr.f32.mxu0 0.0
    %1527 = vmatmul.mubr.f32.gmra.mxu0 %v276
    %v1528 = vpop.f32.mrf.mxu0
    %v1529 = vadd.f32 %v881, %v1528
    %v1530 = vpop.f32.mrf.mxu0
    %v1531 = vadd.f32 %v883, %v1530
    %1532 = vmatprep.mubr.f32.mxu0 0.0
    %1533 = vmatmul.mubr.f32.gmra.mxu0 %v279
    %v1534 = vpop.f32.mrf.mxu0
    %v1535 = vadd.f32 %v887, %v1534
    %v1536 = vpop.f32.mrf.mxu0
    %v1537 = vadd.f32 %v889, %v1536
    %1538 = vmatprep.mubr.f32.mxu0 0.0
    %1539 = vmatmul.mubr.f32.gmra.mxu0 %v282
    %v1540 = vpop.f32.mrf.mxu0
    %v1541 = vadd.f32 %v893, %v1540
    %v1542 = vpop.f32.mrf.mxu0
    %v1543 = vadd.f32 %v895, %v1542
    %1544 = vmatprep.mubr.f32.mxu0 0.0
    %1545 = vmatmul.mubr.f32.gmra.mxu0 %v285
    %v1546 = vpop.f32.mrf.mxu0
    %v1547 = vadd.f32 %v899, %v1546
    %v1548 = vpop.f32.mrf.mxu0
    %v1549 = vadd.f32 %v901, %v1548
    %1550 = vmatprep.mubr.f32.mxu0 0.0
    %1551 = vmatmul.mubr.f32.gmra.mxu0 %v288
    %v1552 = vpop.f32.mrf.mxu0
    %v1553 = vadd.f32 %v905, %v1552
    %v1554 = vpop.f32.mrf.mxu0
    %v1555 = vadd.f32 %v907, %v1554
    %1556 = vmatprep.mubr.f32.mxu0 0.0
    %1557 = vmatmul.mubr.f32.gmra.mxu0 %v291
    %v1558 = vpop.f32.mrf.mxu0
    %v1559 = vadd.f32 %v911, %v1558
    %v1560 = vpop.f32.mrf.mxu0
    %v1561 = vadd.f32 %v913, %v1560
    %1562 = vmatprep.mubr.f32.mxu0 0.0
    %1563 = vmatmul.mubr.f32.gmra.mxu0 %v294
    %v1564 = vpop.f32.mrf.mxu0
    %v1565 = vadd.f32 %v917, %v1564
    %v1566 = vpop.f32.mrf.mxu0
    %v1567 = vadd.f32 %v919, %v1566
    %1568 = vmatprep.mubr.f32.mxu0 0.0
    %1569 = vmatmul.mubr.f32.gmra.mxu0 %v297
    %v1570 = vpop.f32.mrf.mxu0
    %v1571 = vadd.f32 %v923, %v1570
    %v1572 = vpop.f32.mrf.mxu0
    %v1573 = vadd.f32 %v925, %v1572
    %1574 = vmatprep.mubr.f32.mxu0 0.0
    %1575 = vmatmul.mubr.f32.gmra.mxu0 %v300
    %v1576 = vpop.f32.mrf.mxu0
    %v1577 = vadd.f32 %v929, %v1576
    %v1578 = vpop.f32.mrf.mxu0
    %v1579 = vadd.f32 %v931, %v1578
    %1580 = vmatprep.mubr.f32.mxu0 0.0
    %1581 = vmatmul.mubr.f32.gmra.mxu0 %v303
    %v1582 = vpop.f32.mrf.mxu0
    %v1583 = vadd.f32 %v935, %v1582
    %v1584 = vpop.f32.mrf.mxu0
    %v1585 = vadd.f32 %v937, %v1584
    %1586 = vmatprep.mubr.f32.mxu0 0.0
    %1587 = vmatmul.mubr.f32.gmra.mxu0 %v306
    %v1588 = vpop.f32.mrf.mxu0
    %v1589 = vadd.f32 %v941, %v1588
    %v1590 = vpop.f32.mrf.mxu0
    %v1591 = vadd.f32 %v943, %v1590
    %1592 = vmatprep.mubr.f32.mxu0 0.0
    %1593 = vmatmul.mubr.f32.gmra.mxu0 %v309
    %v1594 = vpop.f32.mrf.mxu0
    %v1595 = vadd.f32 %v947, %v1594
    %v1596 = vpop.f32.mrf.mxu0
    %v1597 = vadd.f32 %v949, %v1596
    %1598 = vmatprep.mubr.f32.mxu0 0.0
    %1599 = vmatmul.mubr.f32.gmra.mxu0 %v312
    %v1600 = vpop.f32.mrf.mxu0
    %v1601 = vadd.f32 %v953, %v1600
    %v1602 = vpop.f32.mrf.mxu0
    %v1603 = vadd.f32 %v955, %v1602
    %1604 = vmatprep.mubr.f32.mxu0 0.0
    %1605 = vmatmul.mubr.f32.gmra.mxu0 %v315
    %v1606 = vpop.f32.mrf.mxu0
    %v1607 = vadd.f32 %v959, %v1606
    %v1608 = vpop.f32.mrf.mxu0
    %v1609 = vadd.f32 %v961, %v1608
    %1610 = vmatprep.mubr.f32.mxu0 0.0
    %1611 = vmatmul.mubr.f32.gmra.mxu0 %v318
    %v1612 = vpop.f32.mrf.mxu0
    %v1613 = vadd.f32 %v965, %v1612
    %v1614 = vpop.f32.mrf.mxu0
    %v1615 = vadd.f32 %v967, %v1614
    %1616 = vdwg.mxu0
    %v1618 = vsel %vm250, %v127, 0
    %v1621 = vsel %vm323, %v196, 0
    %v1624 = vsel %vm323, %v197, 0
    %v1627 = vsel %vm323, %v198, 0
    %v1630 = vsel %vm323, %v199, 0
    %v1633 = vsel %vm323, %v200, 0
    %v1636 = vsel %vm323, %v201, 0
    %1638 = vmatprep.subr.mxu0 0.0
    %1639 = vmatpush1.msra.mxu0 0.0
    %1640 = vmatprep.subr.mxu0 0.0
    %1641 = vmatpush1.msra.mxu0 0.0
    %1642 = vmatprep.subr.mxu0 0.0
    %1643 = vmatpush1.msra.mxu0 0.0
    %1644 = vmatprep.subr.mxu0 0.0
    %1645 = vmatpush1.msra.mxu0 0.0
    %1646 = vmatprep.subr.mxu0 0.0
    %1647 = vmatpush1.msra.mxu0 0.0
    %1648 = vmatprep.subr.mxu0 0.0
    %1649 = vmatpush1.msra.mxu0 0.0
    %1650 = vmatprep.subr.mxu0 0.0
    %1651 = vmatpush1.msra.mxu0 0.0
    %1652 = vmatprep.subr.mxu0 0.0
    %1653 = vmatpush1.msra.mxu0 0.0
    %1654 = vmatprep.subr.mxu0 0.0
    %1655 = vmatpush1.msra.mxu0 0.0
    %1656 = vmatprep.subr.mxu0 0.0
    %1657 = vmatpush1.msra.mxu0 0.0
    %1658 = vmatprep.subr.mxu0 0.0
    %1659 = vmatpush1.msra.mxu0 0.0
    %1660 = vmatprep.subr.mxu0 0.0
    %1661 = vmatpush1.msra.mxu0 0.0
    %1662 = vmatprep.subr.mxu0 %v1624
    %1663 = vmatpush1.msra.mxu0 %v1621
    %1664 = vmatprep.subr.mxu0 %v191
    %1665 = vmatpush1.msra.mxu0 %v190
    %1666 = vmatprep.subr.mxu0 %v185
    %1667 = vmatpush1.msra.mxu0 %v184
    %1668 = vmatprep.subr.mxu0 %v179
    %1669 = vmatpush1.msra.mxu0 %v178
    %1670 = vmatprep.subr.mxu0 0.0
    %1671 = vmatpush2.msra.mxu0 0.0
    %1672 = vmatprep.subr.mxu0 0.0
    %1673 = vmatpush2.msra.mxu0 0.0
    %1674 = vmatprep.subr.mxu0 0.0
    %1675 = vmatpush2.msra.mxu0 0.0
    %1676 = vmatprep.subr.mxu0 0.0
    %1677 = vmatpush2.msra.mxu0 0.0
    %1678 = vmatprep.subr.mxu0 0.0
    %1679 = vmatpush2.msra.mxu0 0.0
    %1680 = vmatprep.subr.mxu0 0.0
    %1681 = vmatpush2.msra.mxu0 0.0
    %1682 = vmatprep.subr.mxu0 0.0
    %1683 = vmatpush2.msra.mxu0 0.0
    %1684 = vmatprep.subr.mxu0 0.0
    %1685 = vmatpush2.msra.mxu0 0.0
    %1686 = vmatprep.subr.mxu0 0.0
    %1687 = vmatpush2.msra.mxu0 0.0
    %1688 = vmatprep.subr.mxu0 0.0
    %1689 = vmatpush2.msra.mxu0 0.0
    %1690 = vmatprep.subr.mxu0 0.0
    %1691 = vmatpush2.msra.mxu0 0.0
    %1692 = vmatprep.subr.mxu0 0.0
    %1693 = vmatpush2.msra.mxu0 0.0
    %1694 = vmatprep.subr.mxu0 0.0
    %1695 = vmatpush2.msra.mxu0 0.0
    %1696 = vmatprep.subr.mxu0 0.0
    %1697 = vmatpush2.msra.mxu0 0.0
    %1698 = vmatprep.subr.mxu0 0.0
    %1699 = vmatpush2.msra.mxu0 0.0
    %1700 = vmatprep.subr.mxu0 0.0
    %1701 = vmatpush2.msra.mxu0 0.0
    %1702 = vmatprep.mubr.f32.mxu0 0.0
    %1703 = vmatmul.mubr.f32.gmra.mxu0 %v255
    %v1704 = vpop.f32.mrf.mxu0
    %v1705 = vadd.f32 0.0, %v1704
    %v1706 = vpop.f32.mrf.mxu0
    %v1707 = vadd.f32 0.0, %v1706
    %1708 = vmatprep.mubr.f32.mxu0 0.0
    %1709 = vmatmul.mubr.f32.gmra.mxu0 %v258
    %v1710 = vpop.f32.mrf.mxu0
    %v1711 = vadd.f32 0.0, %v1710
    %v1712 = vpop.f32.mrf.mxu0
    %v1713 = vadd.f32 0.0, %v1712
    %1714 = vmatprep.mubr.f32.mxu0 0.0
    %1715 = vmatmul.mubr.f32.gmra.mxu0 %v261
    %v1716 = vpop.f32.mrf.mxu0
    %v1717 = vadd.f32 0.0, %v1716
    %v1718 = vpop.f32.mrf.mxu0
    %v1719 = vadd.f32 0.0, %v1718
    %1720 = vmatprep.mubr.f32.mxu0 0.0
    %1721 = vmatmul.mubr.f32.gmra.mxu0 %v264
    %v1722 = vpop.f32.mrf.mxu0
    %v1723 = vadd.f32 0.0, %v1722
    %v1724 = vpop.f32.mrf.mxu0
    %v1725 = vadd.f32 0.0, %v1724
    %1726 = vmatprep.mubr.f32.mxu0 0.0
    %1727 = vmatmul.mubr.f32.gmra.mxu0 %v267
    %v1728 = vpop.f32.mrf.mxu0
    %v1729 = vadd.f32 0.0, %v1728
    %v1730 = vpop.f32.mrf.mxu0
    %v1731 = vadd.f32 0.0, %v1730
    %1732 = vmatprep.mubr.f32.mxu0 0.0
    %1733 = vmatmul.mubr.f32.gmra.mxu0 %v270
    %v1734 = vpop.f32.mrf.mxu0
    %v1735 = vadd.f32 0.0, %v1734
    %v1736 = vpop.f32.mrf.mxu0
    %v1737 = vadd.f32 0.0, %v1736
    %1738 = vmatprep.mubr.f32.mxu0 0.0
    %1739 = vmatmul.mubr.f32.gmra.mxu0 %v273
    %v1740 = vpop.f32.mrf.mxu0
    %v1741 = vadd.f32 0.0, %v1740
    %v1742 = vpop.f32.mrf.mxu0
    %v1743 = vadd.f32 0.0, %v1742
    %1744 = vmatprep.mubr.f32.mxu0 0.0
    %1745 = vmatmul.mubr.f32.gmra.mxu0 %v276
    %v1746 = vpop.f32.mrf.mxu0
    %v1747 = vadd.f32 0.0, %v1746
    %v1748 = vpop.f32.mrf.mxu0
    %v1749 = vadd.f32 0.0, %v1748
    %1750 = vmatprep.mubr.f32.mxu0 0.0
    %1751 = vmatmul.mubr.f32.gmra.mxu0 %v279
    %v1752 = vpop.f32.mrf.mxu0
    %v1753 = vadd.f32 0.0, %v1752
    %v1754 = vpop.f32.mrf.mxu0
    %v1755 = vadd.f32 0.0, %v1754
    %1756 = vmatprep.mubr.f32.mxu0 0.0
    %1757 = vmatmul.mubr.f32.gmra.mxu0 %v282
    %v1758 = vpop.f32.mrf.mxu0
    %v1759 = vadd.f32 0.0, %v1758
    %v1760 = vpop.f32.mrf.mxu0
    %v1761 = vadd.f32 0.0, %v1760
    %1762 = vmatprep.mubr.f32.mxu0 0.0
    %1763 = vmatmul.mubr.f32.gmra.mxu0 %v285
    %v1764 = vpop.f32.mrf.mxu0
    %v1765 = vadd.f32 0.0, %v1764
    %v1766 = vpop.f32.mrf.mxu0
    %v1767 = vadd.f32 0.0, %v1766
    %1768 = vmatprep.mubr.f32.mxu0 0.0
    %1769 = vmatmul.mubr.f32.gmra.mxu0 %v288
    %v1770 = vpop.f32.mrf.mxu0
    %v1771 = vadd.f32 0.0, %v1770
    %v1772 = vpop.f32.mrf.mxu0
    %v1773 = vadd.f32 0.0, %v1772
    %1774 = vmatprep.mubr.f32.mxu0 0.0
    %1775 = vmatmul.mubr.f32.gmra.mxu0 %v291
    %v1776 = vpop.f32.mrf.mxu0
    %v1777 = vadd.f32 0.0, %v1776
    %v1778 = vpop.f32.mrf.mxu0
    %v1779 = vadd.f32 0.0, %v1778
    %1780 = vmatprep.mubr.f32.mxu0 0.0
    %1781 = vmatmul.mubr.f32.gmra.mxu0 %v294
    %v1782 = vpop.f32.mrf.mxu0
    %v1783 = vadd.f32 0.0, %v1782
    %v1784 = vpop.f32.mrf.mxu0
    %v1785 = vadd.f32 0.0, %v1784
    %1786 = vmatprep.mubr.f32.mxu0 0.0
    %1787 = vmatmul.mubr.f32.gmra.mxu0 %v297
    %v1788 = vpop.f32.mrf.mxu0
    %v1789 = vadd.f32 0.0, %v1788
    %v1790 = vpop.f32.mrf.mxu0
    %v1791 = vadd.f32 0.0, %v1790
    %1792 = vmatprep.mubr.f32.mxu0 0.0
    %1793 = vmatmul.mubr.f32.gmra.mxu0 %v300
    %v1794 = vpop.f32.mrf.mxu0
    %v1795 = vadd.f32 0.0, %v1794
    %v1796 = vpop.f32.mrf.mxu0
    %v1797 = vadd.f32 0.0, %v1796
    %1798 = vmatprep.mubr.f32.mxu0 0.0
    %1799 = vmatmul.mubr.f32.gmra.mxu0 %v303
    %v1800 = vpop.f32.mrf.mxu0
    %v1801 = vadd.f32 0.0, %v1800
    %v1802 = vpop.f32.mrf.mxu0
    %v1803 = vadd.f32 0.0, %v1802
    %1804 = vmatprep.mubr.f32.mxu0 0.0
    %1805 = vmatmul.mubr.f32.gmra.mxu0 %v306
    %v1806 = vpop.f32.mrf.mxu0
    %v1807 = vadd.f32 0.0, %v1806
    %v1808 = vpop.f32.mrf.mxu0
    %v1809 = vadd.f32 0.0, %v1808
    %1810 = vmatprep.mubr.f32.mxu0 0.0
    %1811 = vmatmul.mubr.f32.gmra.mxu0 %v309
    %v1812 = vpop.f32.mrf.mxu0
    %v1813 = vadd.f32 0.0, %v1812
    %v1814 = vpop.f32.mrf.mxu0
    %v1815 = vadd.f32 0.0, %v1814
    %1816 = vmatprep.mubr.f32.mxu0 0.0
    %1817 = vmatmul.mubr.f32.gmra.mxu0 %v312
    %v1818 = vpop.f32.mrf.mxu0
    %v1819 = vadd.f32 0.0, %v1818
    %v1820 = vpop.f32.mrf.mxu0
    %v1821 = vadd.f32 0.0, %v1820
    %1822 = vmatprep.mubr.f32.mxu0 0.0
    %1823 = vmatmul.mubr.f32.gmra.mxu0 %v315
    %v1824 = vpop.f32.mrf.mxu0
    %v1825 = vadd.f32 0.0, %v1824
    %v1826 = vpop.f32.mrf.mxu0
    %v1827 = vadd.f32 0.0, %v1826
    %1828 = vmatprep.mubr.f32.mxu0 0.0
    %1829 = vmatmul.mubr.f32.gmra.mxu0 %v318
    %v1830 = vpop.f32.mrf.mxu0
    %v1831 = vadd.f32 0.0, %v1830
    %v1832 = vpop.f32.mrf.mxu0
    %v1833 = vadd.f32 0.0, %v1832
    %1834 = vmatprep.mubr.f32.mxu0 0.0
    %1835 = vmatmul.mubr.f32.gmra.mxu0 %v321
    %v1836 = vpop.f32.mrf.mxu0
    %v1837 = vadd.f32 0.0, %v1836
    %v1838 = vpop.f32.mrf.mxu0
    %v1839 = vadd.f32 0.0, %v1838
    %1840 = vmatprep.mubr.f32.mxu0 0.0
    %1841 = vmatmul.mubr.f32.gmra.mxu0 %v1618
    %v1842 = vpop.f32.mrf.mxu0
    %v1843 = vadd.f32 0.0, %v1842
    %v1844 = vpop.f32.mrf.mxu0
    %v1845 = vadd.f32 0.0, %v1844
    %1846 = vdwg.mxu0
    %1847 = vmatprep.subr.mxu0 0.0
    %1848 = vmatpush1.msra.mxu0 0.0
    %1849 = vmatprep.subr.mxu0 0.0
    %1850 = vmatpush1.msra.mxu0 0.0
    %1851 = vmatprep.subr.mxu0 0.0
    %1852 = vmatpush1.msra.mxu0 0.0
    %1853 = vmatprep.subr.mxu0 0.0
    %1854 = vmatpush1.msra.mxu0 0.0
    %1855 = vmatprep.subr.mxu0 0.0
    %1856 = vmatpush1.msra.mxu0 0.0
    %1857 = vmatprep.subr.mxu0 0.0
    %1858 = vmatpush1.msra.mxu0 0.0
    %1859 = vmatprep.subr.mxu0 0.0
    %1860 = vmatpush1.msra.mxu0 0.0
    %1861 = vmatprep.subr.mxu0 0.0
    %1862 = vmatpush1.msra.mxu0 0.0
    %1863 = vmatprep.subr.mxu0 0.0
    %1864 = vmatpush1.msra.mxu0 0.0
    %1865 = vmatprep.subr.mxu0 0.0
    %1866 = vmatpush1.msra.mxu0 0.0
    %1867 = vmatprep.subr.mxu0 0.0
    %1868 = vmatpush1.msra.mxu0 0.0
    %1869 = vmatprep.subr.mxu0 0.0
    %1870 = vmatpush1.msra.mxu0 0.0
    %1871 = vmatprep.subr.mxu0 %v1630
    %1872 = vmatpush1.msra.mxu0 %v1627
    %1873 = vmatprep.subr.mxu0 %v193
    %1874 = vmatpush1.msra.mxu0 %v192
    %1875 = vmatprep.subr.mxu0 %v187
    %1876 = vmatpush1.msra.mxu0 %v186
    %1877 = vmatprep.subr.mxu0 %v181
    %1878 = vmatpush1.msra.mxu0 %v180
    %1879 = vmatprep.subr.mxu0 0.0
    %1880 = vmatpush2.msra.mxu0 0.0
    %1881 = vmatprep.subr.mxu0 0.0
    %1882 = vmatpush2.msra.mxu0 0.0
    %1883 = vmatprep.subr.mxu0 0.0
    %1884 = vmatpush2.msra.mxu0 0.0
    %1885 = vmatprep.subr.mxu0 0.0
    %1886 = vmatpush2.msra.mxu0 0.0
    %1887 = vmatprep.subr.mxu0 0.0
    %1888 = vmatpush2.msra.mxu0 0.0
    %1889 = vmatprep.subr.mxu0 0.0
    %1890 = vmatpush2.msra.mxu0 0.0
    %1891 = vmatprep.subr.mxu0 0.0
    %1892 = vmatpush2.msra.mxu0 0.0
    %1893 = vmatprep.subr.mxu0 0.0
    %1894 = vmatpush2.msra.mxu0 0.0
    %1895 = vmatprep.subr.mxu0 0.0
    %1896 = vmatpush2.msra.mxu0 0.0
    %1897 = vmatprep.subr.mxu0 0.0
    %1898 = vmatpush2.msra.mxu0 0.0
    %1899 = vmatprep.subr.mxu0 0.0
    %1900 = vmatpush2.msra.mxu0 0.0
    %1901 = vmatprep.subr.mxu0 0.0
    %1902 = vmatpush2.msra.mxu0 0.0
    %1903 = vmatprep.subr.mxu0 0.0
    %1904 = vmatpush2.msra.mxu0 0.0
    %1905 = vmatprep.subr.mxu0 0.0
    %1906 = vmatpush2.msra.mxu0 0.0
    %1907 = vmatprep.subr.mxu0 0.0
    %1908 = vmatpush2.msra.mxu0 0.0
    %1909 = vmatprep.subr.mxu0 0.0
    %1910 = vmatpush2.msra.mxu0 0.0
    %1911 = vmatprep.mubr.f32.mxu0 0.0
    %1912 = vmatmul.mubr.f32.gmra.mxu0 %v255
    %v1913 = vpop.f32.mrf.mxu0
    %v1914 = vadd.f32 0.0, %v1913
    %v1915 = vpop.f32.mrf.mxu0
    %v1916 = vadd.f32 0.0, %v1915
    %1917 = vmatprep.mubr.f32.mxu0 0.0
    %1918 = vmatmul.mubr.f32.gmra.mxu0 %v258
    %v1919 = vpop.f32.mrf.mxu0
    %v1920 = vadd.f32 0.0, %v1919
    %v1921 = vpop.f32.mrf.mxu0
    %v1922 = vadd.f32 0.0, %v1921
    %1923 = vmatprep.mubr.f32.mxu0 0.0
    %1924 = vmatmul.mubr.f32.gmra.mxu0 %v261
    %v1925 = vpop.f32.mrf.mxu0
    %v1926 = vadd.f32 0.0, %v1925
    %v1927 = vpop.f32.mrf.mxu0
    %v1928 = vadd.f32 0.0, %v1927
    %1929 = vmatprep.mubr.f32.mxu0 0.0
    %1930 = vmatmul.mubr.f32.gmra.mxu0 %v264
    %v1931 = vpop.f32.mrf.mxu0
    %v1932 = vadd.f32 0.0, %v1931
    %v1933 = vpop.f32.mrf.mxu0
    %v1934 = vadd.f32 0.0, %v1933
    %1935 = vmatprep.mubr.f32.mxu0 0.0
    %1936 = vmatmul.mubr.f32.gmra.mxu0 %v267
    %v1937 = vpop.f32.mrf.mxu0
    %v1938 = vadd.f32 0.0, %v1937
    %v1939 = vpop.f32.mrf.mxu0
    %v1940 = vadd.f32 0.0, %v1939
    %1941 = vmatprep.mubr.f32.mxu0 0.0
    %1942 = vmatmul.mubr.f32.gmra.mxu0 %v270
    %v1943 = vpop.f32.mrf.mxu0
    %v1944 = vadd.f32 0.0, %v1943
    %v1945 = vpop.f32.mrf.mxu0
    %v1946 = vadd.f32 0.0, %v1945
    %1947 = vmatprep.mubr.f32.mxu0 0.0
    %1948 = vmatmul.mubr.f32.gmra.mxu0 %v273
    %v1949 = vpop.f32.mrf.mxu0
    %v1950 = vadd.f32 0.0, %v1949
    %v1951 = vpop.f32.mrf.mxu0
    %v1952 = vadd.f32 0.0, %v1951
    %1953 = vmatprep.mubr.f32.mxu0 0.0
    %1954 = vmatmul.mubr.f32.gmra.mxu0 %v276
    %v1955 = vpop.f32.mrf.mxu0
    %v1956 = vadd.f32 0.0, %v1955
    %v1957 = vpop.f32.mrf.mxu0
    %v1958 = vadd.f32 0.0, %v1957
    %1959 = vmatprep.mubr.f32.mxu0 0.0
    %1960 = vmatmul.mubr.f32.gmra.mxu0 %v279
    %v1961 = vpop.f32.mrf.mxu0
    %v1962 = vadd.f32 0.0, %v1961
    %v1963 = vpop.f32.mrf.mxu0
    %v1964 = vadd.f32 0.0, %v1963
    %1965 = vmatprep.mubr.f32.mxu0 0.0
    %1966 = vmatmul.mubr.f32.gmra.mxu0 %v282
    %v1967 = vpop.f32.mrf.mxu0
    %v1968 = vadd.f32 0.0, %v1967
    %v1969 = vpop.f32.mrf.mxu0
    %v1970 = vadd.f32 0.0, %v1969
    %1971 = vmatprep.mubr.f32.mxu0 0.0
    %1972 = vmatmul.mubr.f32.gmra.mxu0 %v285
    %v1973 = vpop.f32.mrf.mxu0
    %v1974 = vadd.f32 0.0, %v1973
    %v1975 = vpop.f32.mrf.mxu0
    %v1976 = vadd.f32 0.0, %v1975
    %1977 = vmatprep.mubr.f32.mxu0 0.0
    %1978 = vmatmul.mubr.f32.gmra.mxu0 %v288
    %v1979 = vpop.f32.mrf.mxu0
    %v1980 = vadd.f32 0.0, %v1979
    %v1981 = vpop.f32.mrf.mxu0
    %v1982 = vadd.f32 0.0, %v1981
    %1983 = vmatprep.mubr.f32.mxu0 0.0
    %1984 = vmatmul.mubr.f32.gmra.mxu0 %v291
    %v1985 = vpop.f32.mrf.mxu0
    %v1986 = vadd.f32 0.0, %v1985
    %v1987 = vpop.f32.mrf.mxu0
    %v1988 = vadd.f32 0.0, %v1987
    %1989 = vmatprep.mubr.f32.mxu0 0.0
    %1990 = vmatmul.mubr.f32.gmra.mxu0 %v294
    %v1991 = vpop.f32.mrf.mxu0
    %v1992 = vadd.f32 0.0, %v1991
    %v1993 = vpop.f32.mrf.mxu0
    %v1994 = vadd.f32 0.0, %v1993
    %1995 = vmatprep.mubr.f32.mxu0 0.0
    %1996 = vmatmul.mubr.f32.gmra.mxu0 %v297
    %v1997 = vpop.f32.mrf.mxu0
    %v1998 = vadd.f32 0.0, %v1997
    %v1999 = vpop.f32.mrf.mxu0
    %v2000 = vadd.f32 0.0, %v1999
    %2001 = vmatprep.mubr.f32.mxu0 0.0
    %2002 = vmatmul.mubr.f32.gmra.mxu0 %v300
    %v2003 = vpop.f32.mrf.mxu0
    %v2004 = vadd.f32 0.0, %v2003
    %v2005 = vpop.f32.mrf.mxu0
    %v2006 = vadd.f32 0.0, %v2005
    %2007 = vmatprep.mubr.f32.mxu0 0.0
    %2008 = vmatmul.mubr.f32.gmra.mxu0 %v303
    %v2009 = vpop.f32.mrf.mxu0
    %v2010 = vadd.f32 0.0, %v2009
    %v2011 = vpop.f32.mrf.mxu0
    %v2012 = vadd.f32 0.0, %v2011
    %2013 = vmatprep.mubr.f32.mxu0 0.0
    %2014 = vmatmul.mubr.f32.gmra.mxu0 %v306
    %v2015 = vpop.f32.mrf.mxu0
    %v2016 = vadd.f32 0.0, %v2015
    %v2017 = vpop.f32.mrf.mxu0
    %v2018 = vadd.f32 0.0, %v2017
    %2019 = vmatprep.mubr.f32.mxu0 0.0
    %2020 = vmatmul.mubr.f32.gmra.mxu0 %v309
    %v2021 = vpop.f32.mrf.mxu0
    %v2022 = vadd.f32 0.0, %v2021
    %v2023 = vpop.f32.mrf.mxu0
    %v2024 = vadd.f32 0.0, %v2023
    %2025 = vmatprep.mubr.f32.mxu0 0.0
    %2026 = vmatmul.mubr.f32.gmra.mxu0 %v312
    %v2027 = vpop.f32.mrf.mxu0
    %v2028 = vadd.f32 0.0, %v2027
    %v2029 = vpop.f32.mrf.mxu0
    %v2030 = vadd.f32 0.0, %v2029
    %2031 = vmatprep.mubr.f32.mxu0 0.0
    %2032 = vmatmul.mubr.f32.gmra.mxu0 %v315
    %v2033 = vpop.f32.mrf.mxu0
    %v2034 = vadd.f32 0.0, %v2033
    %v2035 = vpop.f32.mrf.mxu0
    %v2036 = vadd.f32 0.0, %v2035
    %2037 = vmatprep.mubr.f32.mxu0 0.0
    %2038 = vmatmul.mubr.f32.gmra.mxu0 %v318
    %v2039 = vpop.f32.mrf.mxu0
    %v2040 = vadd.f32 0.0, %v2039
    %v2041 = vpop.f32.mrf.mxu0
    %v2042 = vadd.f32 0.0, %v2041
    %2043 = vmatprep.mubr.f32.mxu0 0.0
    %2044 = vmatmul.mubr.f32.gmra.mxu0 %v321
    %v2045 = vpop.f32.mrf.mxu0
    %v2046 = vadd.f32 0.0, %v2045
    %v2047 = vpop.f32.mrf.mxu0
    %v2048 = vadd.f32 0.0, %v2047
    %2049 = vmatprep.mubr.f32.mxu0 0.0
    %2050 = vmatmul.mubr.f32.gmra.mxu0 %v1618
    %v2051 = vpop.f32.mrf.mxu0
    %v2052 = vadd.f32 0.0, %v2051
    %v2053 = vpop.f32.mrf.mxu0
    %v2054 = vadd.f32 0.0, %v2053
    %2055 = vdwg.mxu0
    %2056 = vmatprep.subr.mxu0 0.0
    %2057 = vmatpush1.msra.mxu0 0.0
    %2058 = vmatprep.subr.mxu0 0.0
    %2059 = vmatpush1.msra.mxu0 0.0
    %2060 = vmatprep.subr.mxu0 0.0
    %2061 = vmatpush1.msra.mxu0 0.0
    %2062 = vmatprep.subr.mxu0 0.0
    %2063 = vmatpush1.msra.mxu0 0.0
    %2064 = vmatprep.subr.mxu0 0.0
    %2065 = vmatpush1.msra.mxu0 0.0
    %2066 = vmatprep.subr.mxu0 0.0
    %2067 = vmatpush1.msra.mxu0 0.0
    %2068 = vmatprep.subr.mxu0 0.0
    %2069 = vmatpush1.msra.mxu0 0.0
    %2070 = vmatprep.subr.mxu0 0.0
    %2071 = vmatpush1.msra.mxu0 0.0
    %2072 = vmatprep.subr.mxu0 0.0
    %2073 = vmatpush1.msra.mxu0 0.0
    %2074 = vmatprep.subr.mxu0 0.0
    %2075 = vmatpush1.msra.mxu0 0.0
    %2076 = vmatprep.subr.mxu0 0.0
    %2077 = vmatpush1.msra.mxu0 0.0
    %2078 = vmatprep.subr.mxu0 0.0
    %2079 = vmatpush1.msra.mxu0 0.0
    %2080 = vmatprep.subr.mxu0 %v1636
    %2081 = vmatpush1.msra.mxu0 %v1633
    %2082 = vmatprep.subr.mxu0 %v195
    %2083 = vmatpush1.msra.mxu0 %v194
    %2084 = vmatprep.subr.mxu0 %v189
    %2085 = vmatpush1.msra.mxu0 %v188
    %2086 = vmatprep.subr.mxu0 %v183
    %2087 = vmatpush1.msra.mxu0 %v182
    %2088 = vmatprep.subr.mxu0 0.0
    %2089 = vmatpush2.msra.mxu0 0.0
    %2090 = vmatprep.subr.mxu0 0.0
    %2091 = vmatpush2.msra.mxu0 0.0
    %2092 = vmatprep.subr.mxu0 0.0
    %2093 = vmatpush2.msra.mxu0 0.0
    %2094 = vmatprep.subr.mxu0 0.0
    %2095 = vmatpush2.msra.mxu0 0.0
    %2096 = vmatprep.subr.mxu0 0.0
    %2097 = vmatpush2.msra.mxu0 0.0
    %2098 = vmatprep.subr.mxu0 0.0
    %2099 = vmatpush2.msra.mxu0 0.0
    %2100 = vmatprep.subr.mxu0 0.0
    %2101 = vmatpush2.msra.mxu0 0.0
    %2102 = vmatprep.subr.mxu0 0.0
    %2103 = vmatpush2.msra.mxu0 0.0
    %2104 = vmatprep.subr.mxu0 0.0
    %2105 = vmatpush2.msra.mxu0 0.0
    %2106 = vmatprep.subr.mxu0 0.0
    %2107 = vmatpush2.msra.mxu0 0.0
    %2108 = vmatprep.subr.mxu0 0.0
    %2109 = vmatpush2.msra.mxu0 0.0
    %2110 = vmatprep.subr.mxu0 0.0
    %2111 = vmatpush2.msra.mxu0 0.0
    %2112 = vmatprep.subr.mxu0 0.0
    %2113 = vmatpush2.msra.mxu0 0.0
    %2114 = vmatprep.subr.mxu0 0.0
    %2115 = vmatpush2.msra.mxu0 0.0
    %2116 = vmatprep.subr.mxu0 0.0
    %2117 = vmatpush2.msra.mxu0 0.0
    %2118 = vmatprep.subr.mxu0 0.0
    %2119 = vmatpush2.msra.mxu0 0.0
    %2120 = vmatprep.mubr.f32.mxu0 0.0
    %2121 = vmatmul.mubr.f32.gmra.mxu0 %v255
    %v2122 = vpop.f32.mrf.mxu0
    %v2123 = vadd.f32 0.0, %v2122
    %v2124 = vpop.f32.mrf.mxu0
    %v2125 = vadd.f32 0.0, %v2124
    %2126 = vmatprep.mubr.f32.mxu0 0.0
    %2127 = vmatmul.mubr.f32.gmra.mxu0 %v258
    %v2128 = vpop.f32.mrf.mxu0
    %v2129 = vadd.f32 0.0, %v2128
    %v2130 = vpop.f32.mrf.mxu0
    %v2131 = vadd.f32 0.0, %v2130
    %2132 = vmatprep.mubr.f32.mxu0 0.0
    %2133 = vmatmul.mubr.f32.gmra.mxu0 %v261
    %v2134 = vpop.f32.mrf.mxu0
    %v2135 = vadd.f32 0.0, %v2134
    %v2136 = vpop.f32.mrf.mxu0
    %v2137 = vadd.f32 0.0, %v2136
    %2138 = vmatprep.mubr.f32.mxu0 0.0
    %2139 = vmatmul.mubr.f32.gmra.mxu0 %v264
    %v2140 = vpop.f32.mrf.mxu0
    %v2141 = vadd.f32 0.0, %v2140
    %v2142 = vpop.f32.mrf.mxu0
    %v2143 = vadd.f32 0.0, %v2142
    %2144 = vmatprep.mubr.f32.mxu0 0.0
    %2145 = vmatmul.mubr.f32.gmra.mxu0 %v267
    %v2146 = vpop.f32.mrf.mxu0
    %v2147 = vadd.f32 0.0, %v2146
    %v2148 = vpop.f32.mrf.mxu0
    %v2149 = vadd.f32 0.0, %v2148
    %2150 = vmatprep.mubr.f32.mxu0 0.0
    %2151 = vmatmul.mubr.f32.gmra.mxu0 %v270
    %v2152 = vpop.f32.mrf.mxu0
    %v2153 = vadd.f32 0.0, %v2152
    %v2154 = vpop.f32.mrf.mxu0
    %v2155 = vadd.f32 0.0, %v2154
    %2156 = vmatprep.mubr.f32.mxu0 0.0
    %2157 = vmatmul.mubr.f32.gmra.mxu0 %v273
    %v2158 = vpop.f32.mrf.mxu0
    %v2159 = vadd.f32 0.0, %v2158
    %v2160 = vpop.f32.mrf.mxu0
    %v2161 = vadd.f32 0.0, %v2160
    %2162 = vmatprep.mubr.f32.mxu0 0.0
    %2163 = vmatmul.mubr.f32.gmra.mxu0 %v276
    %v2164 = vpop.f32.mrf.mxu0
    %v2165 = vadd.f32 0.0, %v2164
    %v2166 = vpop.f32.mrf.mxu0
    %v2167 = vadd.f32 0.0, %v2166
    %2168 = vmatprep.mubr.f32.mxu0 0.0
    %2169 = vmatmul.mubr.f32.gmra.mxu0 %v279
    %v2170 = vpop.f32.mrf.mxu0
    %v2171 = vadd.f32 0.0, %v2170
    %v2172 = vpop.f32.mrf.mxu0
    %v2173 = vadd.f32 0.0, %v2172
    %2174 = vmatprep.mubr.f32.mxu0 0.0
    %2175 = vmatmul.mubr.f32.gmra.mxu0 %v282
    %v2176 = vpop.f32.mrf.mxu0
    %v2177 = vadd.f32 0.0, %v2176
    %v2178 = vpop.f32.mrf.mxu0
    %v2179 = vadd.f32 0.0, %v2178
    %2180 = vmatprep.mubr.f32.mxu0 0.0
    %2181 = vmatmul.mubr.f32.gmra.mxu0 %v285
    %v2182 = vpop.f32.mrf.mxu0
    %v2183 = vadd.f32 0.0, %v2182
    %v2184 = vpop.f32.mrf.mxu0
    %v2185 = vadd.f32 0.0, %v2184
    %2186 = vmatprep.mubr.f32.mxu0 0.0
    %2187 = vmatmul.mubr.f32.gmra.mxu0 %v288
    %v2188 = vpop.f32.mrf.mxu0
    %v2189 = vadd.f32 0.0, %v2188
    %v2190 = vpop.f32.mrf.mxu0
    %v2191 = vadd.f32 0.0, %v2190
    %2192 = vmatprep.mubr.f32.mxu0 0.0
    %2193 = vmatmul.mubr.f32.gmra.mxu0 %v291
    %v2194 = vpop.f32.mrf.mxu0
    %v2195 = vadd.f32 0.0, %v2194
    %v2196 = vpop.f32.mrf.mxu0
    %v2197 = vadd.f32 0.0, %v2196
    %2198 = vmatprep.mubr.f32.mxu0 0.0
    %2199 = vmatmul.mubr.f32.gmra.mxu0 %v294
    %v2200 = vpop.f32.mrf.mxu0
    %v2201 = vadd.f32 0.0, %v2200
    %v2202 = vpop.f32.mrf.mxu0
    %v2203 = vadd.f32 0.0, %v2202
    %2204 = vmatprep.mubr.f32.mxu0 0.0
    %2205 = vmatmul.mubr.f32.gmra.mxu0 %v297
    %v2206 = vpop.f32.mrf.mxu0
    %v2207 = vadd.f32 0.0, %v2206
    %v2208 = vpop.f32.mrf.mxu0
    %v2209 = vadd.f32 0.0, %v2208
    %2210 = vmatprep.mubr.f32.mxu0 0.0
    %2211 = vmatmul.mubr.f32.gmra.mxu0 %v300
    %v2212 = vpop.f32.mrf.mxu0
    %v2213 = vadd.f32 0.0, %v2212
    %v2214 = vpop.f32.mrf.mxu0
    %v2215 = vadd.f32 0.0, %v2214
    %2216 = vmatprep.mubr.f32.mxu0 0.0
    %2217 = vmatmul.mubr.f32.gmra.mxu0 %v303
    %v2218 = vpop.f32.mrf.mxu0
    %v2219 = vadd.f32 0.0, %v2218
    %v2220 = vpop.f32.mrf.mxu0
    %v2221 = vadd.f32 0.0, %v2220
    %2222 = vmatprep.mubr.f32.mxu0 0.0
    %2223 = vmatmul.mubr.f32.gmra.mxu0 %v306
    %v2224 = vpop.f32.mrf.mxu0
    %v2225 = vadd.f32 0.0, %v2224
    %v2226 = vpop.f32.mrf.mxu0
    %v2227 = vadd.f32 0.0, %v2226
    %2228 = vmatprep.mubr.f32.mxu0 0.0
    %2229 = vmatmul.mubr.f32.gmra.mxu0 %v309
    %v2230 = vpop.f32.mrf.mxu0
    %v2231 = vadd.f32 0.0, %v2230
    %v2232 = vpop.f32.mrf.mxu0
    %v2233 = vadd.f32 0.0, %v2232
    %2234 = vmatprep.mubr.f32.mxu0 0.0
    %2235 = vmatmul.mubr.f32.gmra.mxu0 %v312
    %v2236 = vpop.f32.mrf.mxu0
    %v2237 = vadd.f32 0.0, %v2236
    %v2238 = vpop.f32.mrf.mxu0
    %v2239 = vadd.f32 0.0, %v2238
    %2240 = vmatprep.mubr.f32.mxu0 0.0
    %2241 = vmatmul.mubr.f32.gmra.mxu0 %v315
    %v2242 = vpop.f32.mrf.mxu0
    %v2243 = vadd.f32 0.0, %v2242
    %v2244 = vpop.f32.mrf.mxu0
    %v2245 = vadd.f32 0.0, %v2244
    %2246 = vmatprep.mubr.f32.mxu0 0.0
    %2247 = vmatmul.mubr.f32.gmra.mxu0 %v318
    %v2248 = vpop.f32.mrf.mxu0
    %v2249 = vadd.f32 0.0, %v2248
    %v2250 = vpop.f32.mrf.mxu0
    %v2251 = vadd.f32 0.0, %v2250
    %2252 = vmatprep.mubr.f32.mxu0 0.0
    %2253 = vmatmul.mubr.f32.gmra.mxu0 %v321
    %v2254 = vpop.f32.mrf.mxu0
    %v2255 = vadd.f32 0.0, %v2254
    %v2256 = vpop.f32.mrf.mxu0
    %v2257 = vadd.f32 0.0, %v2256
    %2258 = vmatprep.mubr.f32.mxu0 0.0
    %2259 = vmatmul.mubr.f32.gmra.mxu0 %v1618
    %v2260 = vpop.f32.mrf.mxu0
    %v2261 = vadd.f32 0.0, %v2260
    %v2262 = vpop.f32.mrf.mxu0
    %v2263 = vadd.f32 0.0, %v2262
    %2264 = vdwg.mxu0
    %v2265 = vadd.f32 %v1057, %v1705
    %v2266 = vadd.f32 %v1059, %v1707
    %v2267 = vadd.f32 %v1266, %v1914
    %v2268 = vadd.f32 %v1268, %v1916
    %v2269 = vadd.f32 %v1475, %v2123
    %v2270 = vadd.f32 %v1477, %v2125
    %v2271 = vadd.f32 %v1063, %v1711
    %v2272 = vadd.f32 %v1065, %v1713
    %v2273 = vadd.f32 %v1272, %v1920
    %v2274 = vadd.f32 %v1274, %v1922
    %v2275 = vadd.f32 %v1481, %v2129
    %v2276 = vadd.f32 %v1483, %v2131
    %v2277 = vadd.f32 %v1069, %v1717
    %v2278 = vadd.f32 %v1071, %v1719
    %v2279 = vadd.f32 %v1278, %v1926
    %v2280 = vadd.f32 %v1280, %v1928
    %v2281 = vadd.f32 %v1487, %v2135
    %v2282 = vadd.f32 %v1489, %v2137
    %v2283 = vadd.f32 %v1075, %v1723
    %v2284 = vadd.f32 %v1077, %v1725
    %v2285 = vadd.f32 %v1284, %v1932
    %v2286 = vadd.f32 %v1286, %v1934
    %v2287 = vadd.f32 %v1493, %v2141
    %v2288 = vadd.f32 %v1495, %v2143
    %v2289 = vadd.f32 %v1081, %v1729
    %v2290 = vadd.f32 %v1083, %v1731
    %v2291 = vadd.f32 %v1290, %v1938
    %v2292 = vadd.f32 %v1292, %v1940
    %v2293 = vadd.f32 %v1499, %v2147
    %v2294 = vadd.f32 %v1501, %v2149
    %v2295 = vadd.f32 %v1087, %v1735
    %v2296 = vadd.f32 %v1089, %v1737
    %v2297 = vadd.f32 %v1296, %v1944
    %v2298 = vadd.f32 %v1298, %v1946
    %v2299 = vadd.f32 %v1505, %v2153
    %v2300 = vadd.f32 %v1507, %v2155
    %v2301 = vadd.f32 %v1093, %v1741
    %v2302 = vadd.f32 %v1095, %v1743
    %v2303 = vadd.f32 %v1302, %v1950
    %v2304 = vadd.f32 %v1304, %v1952
    %v2305 = vadd.f32 %v1511, %v2159
    %v2306 = vadd.f32 %v1513, %v2161
    %v2307 = vadd.f32 %v1099, %v1747
    %v2308 = vadd.f32 %v1101, %v1749
    %v2309 = vadd.f32 %v1308, %v1956
    %v2310 = vadd.f32 %v1310, %v1958
    %v2311 = vadd.f32 %v1517, %v2165
    %v2312 = vadd.f32 %v1519, %v2167
    %v2313 = vadd.f32 %v1105, %v1753
    %v2314 = vadd.f32 %v1107, %v1755
    %v2315 = vadd.f32 %v1314, %v1962
    %v2316 = vadd.f32 %v1316, %v1964
    %v2317 = vadd.f32 %v1523, %v2171
    %v2318 = vadd.f32 %v1525, %v2173
    %v2319 = vadd.f32 %v1111, %v1759
    %v2320 = vadd.f32 %v1113, %v1761
    %v2321 = vadd.f32 %v1320, %v1968
    %v2322 = vadd.f32 %v1322, %v1970
    %v2323 = vadd.f32 %v1529, %v2177
    %v2324 = vadd.f32 %v1531, %v2179
    %v2325 = vadd.f32 %v1117, %v1765
    %v2326 = vadd.f32 %v1119, %v1767
    %v2327 = vadd.f32 %v1326, %v1974
    %v2328 = vadd.f32 %v1328, %v1976
    %v2329 = vadd.f32 %v1535, %v2183
    %v2330 = vadd.f32 %v1537, %v2185
    %v2331 = vadd.f32 %v1123, %v1771
    %v2332 = vadd.f32 %v1125, %v1773
    %v2333 = vadd.f32 %v1332, %v1980
    %v2334 = vadd.f32 %v1334, %v1982
    %v2335 = vadd.f32 %v1541, %v2189
    %v2336 = vadd.f32 %v1543, %v2191
    %v2337 = vadd.f32 %v1129, %v1777
    %v2338 = vadd.f32 %v1131, %v1779
    %v2339 = vadd.f32 %v1338, %v1986
    %v2340 = vadd.f32 %v1340, %v1988
    %v2341 = vadd.f32 %v1547, %v2195
    %v2342 = vadd.f32 %v1549, %v2197
    %v2343 = vadd.f32 %v1135, %v1783
    %v2344 = vadd.f32 %v1137, %v1785
    %v2345 = vadd.f32 %v1344, %v1992
    %v2346 = vadd.f32 %v1346, %v1994
    %v2347 = vadd.f32 %v1553, %v2201
    %v2348 = vadd.f32 %v1555, %v2203
    %v2349 = vadd.f32 %v1141, %v1789
    %v2350 = vadd.f32 %v1143, %v1791
    %v2351 = vadd.f32 %v1350, %v1998
    %v2352 = vadd.f32 %v1352, %v2000
    %v2353 = vadd.f32 %v1559, %v2207
    %v2354 = vadd.f32 %v1561, %v2209
    %v2355 = vadd.f32 %v1147, %v1795
    %v2356 = vadd.f32 %v1149, %v1797
    %v2357 = vadd.f32 %v1356, %v2004
    %v2358 = vadd.f32 %v1358, %v2006
    %v2359 = vadd.f32 %v1565, %v2213
    %v2360 = vadd.f32 %v1567, %v2215
    %v2361 = vadd.f32 %v1153, %v1801
    %v2362 = vadd.f32 %v1155, %v1803
    %v2363 = vadd.f32 %v1362, %v2010
    %v2364 = vadd.f32 %v1364, %v2012
    %v2365 = vadd.f32 %v1571, %v2219
    %v2366 = vadd.f32 %v1573, %v2221
    %v2367 = vadd.f32 %v1159, %v1807
    %v2368 = vadd.f32 %v1161, %v1809
    %v2369 = vadd.f32 %v1368, %v2016
    %v2370 = vadd.f32 %v1370, %v2018
    %v2371 = vadd.f32 %v1577, %v2225
    %v2372 = vadd.f32 %v1579, %v2227
    %v2373 = vadd.f32 %v1165, %v1813
    %v2374 = vadd.f32 %v1167, %v1815
    %v2375 = vadd.f32 %v1374, %v2022
    %v2376 = vadd.f32 %v1376, %v2024
    %v2377 = vadd.f32 %v1583, %v2231
    %v2378 = vadd.f32 %v1585, %v2233
    %v2379 = vadd.f32 %v1171, %v1819
    %v2380 = vadd.f32 %v1173, %v1821
    %v2381 = vadd.f32 %v1380, %v2028
    %v2382 = vadd.f32 %v1382, %v2030
    %v2383 = vadd.f32 %v1589, %v2237
    %v2384 = vadd.f32 %v1591, %v2239
    %v2385 = vadd.f32 %v1177, %v1825
    %v2386 = vadd.f32 %v1179, %v1827
    %v2387 = vadd.f32 %v1386, %v2034
    %v2388 = vadd.f32 %v1388, %v2036
    %v2389 = vadd.f32 %v1595, %v2243
    %v2390 = vadd.f32 %v1597, %v2245
    %v2391 = vadd.f32 %v1183, %v1831
    %v2392 = vadd.f32 %v1185, %v1833
    %v2393 = vadd.f32 %v1392, %v2040
    %v2394 = vadd.f32 %v1394, %v2042
    %v2395 = vadd.f32 %v1601, %v2249
    %v2396 = vadd.f32 %v1603, %v2251
    %v2397 = vadd.f32 %v1189, %v1837
    %v2398 = vadd.f32 %v1191, %v1839
    %v2399 = vadd.f32 %v1398, %v2046
    %v2400 = vadd.f32 %v1400, %v2048
    %v2401 = vadd.f32 %v1607, %v2255
    %v2402 = vadd.f32 %v1609, %v2257
    %v2403 = vadd.f32 %v1195, %v1843
    %v2404 = vadd.f32 %v1197, %v1845
    %v2405 = vadd.f32 %v1404, %v2052
    %v2406 = vadd.f32 %v1406, %v2054
    %v2407 = vadd.f32 %v1613, %v2261
    %v2408 = vadd.f32 %v1615, %v2263
    %v2410 = vsel %vm250, %v128, 0
    %v2413 = vsel %vm323, %v220, 0
    %v2416 = vsel %vm323, %v221, 0
    %v2419 = vsel %vm323, %v222, 0
    %v2422 = vsel %vm323, %v223, 0
    %v2425 = vsel %vm323, %v224, 0
    %v2428 = vsel %vm323, %v225, 0
    %2430 = vmatprep.subr.mxu0 0.0
    %2431 = vmatpush1.msra.mxu0 0.0
    %2432 = vmatprep.subr.mxu0 0.0
    %2433 = vmatpush1.msra.mxu0 0.0
    %2434 = vmatprep.subr.mxu0 0.0
    %2435 = vmatpush1.msra.mxu0 0.0
    %2436 = vmatprep.subr.mxu0 0.0
    %2437 = vmatpush1.msra.mxu0 0.0
    %2438 = vmatprep.subr.mxu0 0.0
    %2439 = vmatpush1.msra.mxu0 0.0
    %2440 = vmatprep.subr.mxu0 0.0
    %2441 = vmatpush1.msra.mxu0 0.0
    %2442 = vmatprep.subr.mxu0 0.0
    %2443 = vmatpush1.msra.mxu0 0.0
    %2444 = vmatprep.subr.mxu0 0.0
    %2445 = vmatpush1.msra.mxu0 0.0
    %2446 = vmatprep.subr.mxu0 0.0
    %2447 = vmatpush1.msra.mxu0 0.0
    %2448 = vmatprep.subr.mxu0 0.0
    %2449 = vmatpush1.msra.mxu0 0.0
    %2450 = vmatprep.subr.mxu0 0.0
    %2451 = vmatpush1.msra.mxu0 0.0
    %2452 = vmatprep.subr.mxu0 0.0
    %2453 = vmatpush1.msra.mxu0 0.0
    %2454 = vmatprep.subr.mxu0 %v2416
    %2455 = vmatpush1.msra.mxu0 %v2413
    %2456 = vmatprep.subr.mxu0 %v215
    %2457 = vmatpush1.msra.mxu0 %v214
    %2458 = vmatprep.subr.mxu0 %v209
    %2459 = vmatpush1.msra.mxu0 %v208
    %2460 = vmatprep.subr.mxu0 %v203
    %2461 = vmatpush1.msra.mxu0 %v202
    %2462 = vmatprep.subr.mxu0 0.0
    %2463 = vmatpush2.msra.mxu0 0.0
    %2464 = vmatprep.subr.mxu0 0.0
    %2465 = vmatpush2.msra.mxu0 0.0
    %2466 = vmatprep.subr.mxu0 0.0
    %2467 = vmatpush2.msra.mxu0 0.0
    %2468 = vmatprep.subr.mxu0 0.0
    %2469 = vmatpush2.msra.mxu0 0.0
    %2470 = vmatprep.subr.mxu0 0.0
    %2471 = vmatpush2.msra.mxu0 0.0
    %2472 = vmatprep.subr.mxu0 0.0
    %2473 = vmatpush2.msra.mxu0 0.0
    %2474 = vmatprep.subr.mxu0 0.0
    %2475 = vmatpush2.msra.mxu0 0.0
    %2476 = vmatprep.subr.mxu0 0.0
    %2477 = vmatpush2.msra.mxu0 0.0
    %2478 = vmatprep.subr.mxu0 0.0
    %2479 = vmatpush2.msra.mxu0 0.0
    %2480 = vmatprep.subr.mxu0 0.0
    %2481 = vmatpush2.msra.mxu0 0.0
    %2482 = vmatprep.subr.mxu0 0.0
    %2483 = vmatpush2.msra.mxu0 0.0
    %2484 = vmatprep.subr.mxu0 0.0
    %2485 = vmatpush2.msra.mxu0 0.0
    %2486 = vmatprep.subr.mxu0 0.0
    %2487 = vmatpush2.msra.mxu0 0.0
    %2488 = vmatprep.subr.mxu0 0.0
    %2489 = vmatpush2.msra.mxu0 0.0
    %2490 = vmatprep.subr.mxu0 0.0
    %2491 = vmatpush2.msra.mxu0 0.0
    %2492 = vmatprep.subr.mxu0 0.0
    %2493 = vmatpush2.msra.mxu0 0.0
    %2494 = vmatprep.mubr.f32.mxu0 0.0
    %2495 = vmatmul.mubr.f32.gmra.mxu0 %v258
    %v2496 = vpop.f32.mrf.mxu0
    %v2497 = vadd.f32 0.0, %v2496
    %v2498 = vpop.f32.mrf.mxu0
    %v2499 = vadd.f32 0.0, %v2498
    %2500 = vmatprep.mubr.f32.mxu0 0.0
    %2501 = vmatmul.mubr.f32.gmra.mxu0 %v261
    %v2502 = vpop.f32.mrf.mxu0
    %v2503 = vadd.f32 0.0, %v2502
    %v2504 = vpop.f32.mrf.mxu0
    %v2505 = vadd.f32 0.0, %v2504
    %2506 = vmatprep.mubr.f32.mxu0 0.0
    %2507 = vmatmul.mubr.f32.gmra.mxu0 %v264
    %v2508 = vpop.f32.mrf.mxu0
    %v2509 = vadd.f32 0.0, %v2508
    %v2510 = vpop.f32.mrf.mxu0
    %v2511 = vadd.f32 0.0, %v2510
    %2512 = vmatprep.mubr.f32.mxu0 0.0
    %2513 = vmatmul.mubr.f32.gmra.mxu0 %v267
    %v2514 = vpop.f32.mrf.mxu0
    %v2515 = vadd.f32 0.0, %v2514
    %v2516 = vpop.f32.mrf.mxu0
    %v2517 = vadd.f32 0.0, %v2516
    %2518 = vmatprep.mubr.f32.mxu0 0.0
    %2519 = vmatmul.mubr.f32.gmra.mxu0 %v270
    %v2520 = vpop.f32.mrf.mxu0
    %v2521 = vadd.f32 0.0, %v2520
    %v2522 = vpop.f32.mrf.mxu0
    %v2523 = vadd.f32 0.0, %v2522
    %2524 = vmatprep.mubr.f32.mxu0 0.0
    %2525 = vmatmul.mubr.f32.gmra.mxu0 %v273
    %v2526 = vpop.f32.mrf.mxu0
    %v2527 = vadd.f32 0.0, %v2526
    %v2528 = vpop.f32.mrf.mxu0
    %v2529 = vadd.f32 0.0, %v2528
    %2530 = vmatprep.mubr.f32.mxu0 0.0
    %2531 = vmatmul.mubr.f32.gmra.mxu0 %v276
    %v2532 = vpop.f32.mrf.mxu0
    %v2533 = vadd.f32 0.0, %v2532
    %v2534 = vpop.f32.mrf.mxu0
    %v2535 = vadd.f32 0.0, %v2534
    %2536 = vmatprep.mubr.f32.mxu0 0.0
    %2537 = vmatmul.mubr.f32.gmra.mxu0 %v279
    %v2538 = vpop.f32.mrf.mxu0
    %v2539 = vadd.f32 0.0, %v2538
    %v2540 = vpop.f32.mrf.mxu0
    %v2541 = vadd.f32 0.0, %v2540
    %2542 = vmatprep.mubr.f32.mxu0 0.0
    %2543 = vmatmul.mubr.f32.gmra.mxu0 %v282
    %v2544 = vpop.f32.mrf.mxu0
    %v2545 = vadd.f32 0.0, %v2544
    %v2546 = vpop.f32.mrf.mxu0
    %v2547 = vadd.f32 0.0, %v2546
    %2548 = vmatprep.mubr.f32.mxu0 0.0
    %2549 = vmatmul.mubr.f32.gmra.mxu0 %v285
    %v2550 = vpop.f32.mrf.mxu0
    %v2551 = vadd.f32 0.0, %v2550
    %v2552 = vpop.f32.mrf.mxu0
    %v2553 = vadd.f32 0.0, %v2552
    %2554 = vmatprep.mubr.f32.mxu0 0.0
    %2555 = vmatmul.mubr.f32.gmra.mxu0 %v288
    %v2556 = vpop.f32.mrf.mxu0
    %v2557 = vadd.f32 0.0, %v2556
    %v2558 = vpop.f32.mrf.mxu0
    %v2559 = vadd.f32 0.0, %v2558
    %2560 = vmatprep.mubr.f32.mxu0 0.0
    %2561 = vmatmul.mubr.f32.gmra.mxu0 %v291
    %v2562 = vpop.f32.mrf.mxu0
    %v2563 = vadd.f32 0.0, %v2562
    %v2564 = vpop.f32.mrf.mxu0
    %v2565 = vadd.f32 0.0, %v2564
    %2566 = vmatprep.mubr.f32.mxu0 0.0
    %2567 = vmatmul.mubr.f32.gmra.mxu0 %v294
    %v2568 = vpop.f32.mrf.mxu0
    %v2569 = vadd.f32 0.0, %v2568
    %v2570 = vpop.f32.mrf.mxu0
    %v2571 = vadd.f32 0.0, %v2570
    %2572 = vmatprep.mubr.f32.mxu0 0.0
    %2573 = vmatmul.mubr.f32.gmra.mxu0 %v297
    %v2574 = vpop.f32.mrf.mxu0
    %v2575 = vadd.f32 0.0, %v2574
    %v2576 = vpop.f32.mrf.mxu0
    %v2577 = vadd.f32 0.0, %v2576
    %2578 = vmatprep.mubr.f32.mxu0 0.0
    %2579 = vmatmul.mubr.f32.gmra.mxu0 %v300
    %v2580 = vpop.f32.mrf.mxu0
    %v2581 = vadd.f32 0.0, %v2580
    %v2582 = vpop.f32.mrf.mxu0
    %v2583 = vadd.f32 0.0, %v2582
    %2584 = vmatprep.mubr.f32.mxu0 0.0
    %2585 = vmatmul.mubr.f32.gmra.mxu0 %v303
    %v2586 = vpop.f32.mrf.mxu0
    %v2587 = vadd.f32 0.0, %v2586
    %v2588 = vpop.f32.mrf.mxu0
    %v2589 = vadd.f32 0.0, %v2588
    %2590 = vmatprep.mubr.f32.mxu0 0.0
    %2591 = vmatmul.mubr.f32.gmra.mxu0 %v306
    %v2592 = vpop.f32.mrf.mxu0
    %v2593 = vadd.f32 0.0, %v2592
    %v2594 = vpop.f32.mrf.mxu0
    %v2595 = vadd.f32 0.0, %v2594
    %2596 = vmatprep.mubr.f32.mxu0 0.0
    %2597 = vmatmul.mubr.f32.gmra.mxu0 %v309
    %v2598 = vpop.f32.mrf.mxu0
    %v2599 = vadd.f32 0.0, %v2598
    %v2600 = vpop.f32.mrf.mxu0
    %v2601 = vadd.f32 0.0, %v2600
    %2602 = vmatprep.mubr.f32.mxu0 0.0
    %2603 = vmatmul.mubr.f32.gmra.mxu0 %v312
    %v2604 = vpop.f32.mrf.mxu0
    %v2605 = vadd.f32 0.0, %v2604
    %v2606 = vpop.f32.mrf.mxu0
    %v2607 = vadd.f32 0.0, %v2606
    %2608 = vmatprep.mubr.f32.mxu0 0.0
    %2609 = vmatmul.mubr.f32.gmra.mxu0 %v315
    %v2610 = vpop.f32.mrf.mxu0
    %v2611 = vadd.f32 0.0, %v2610
    %v2612 = vpop.f32.mrf.mxu0
    %v2613 = vadd.f32 0.0, %v2612
    %2614 = vmatprep.mubr.f32.mxu0 0.0
    %2615 = vmatmul.mubr.f32.gmra.mxu0 %v318
    %v2616 = vpop.f32.mrf.mxu0
    %v2617 = vadd.f32 0.0, %v2616
    %v2618 = vpop.f32.mrf.mxu0
    %v2619 = vadd.f32 0.0, %v2618
    %2620 = vmatprep.mubr.f32.mxu0 0.0
    %2621 = vmatmul.mubr.f32.gmra.mxu0 %v321
    %v2622 = vpop.f32.mrf.mxu0
    %v2623 = vadd.f32 0.0, %v2622
    %v2624 = vpop.f32.mrf.mxu0
    %v2625 = vadd.f32 0.0, %v2624
    %2626 = vmatprep.mubr.f32.mxu0 0.0
    %2627 = vmatmul.mubr.f32.gmra.mxu0 %v1618
    %v2628 = vpop.f32.mrf.mxu0
    %v2629 = vadd.f32 0.0, %v2628
    %v2630 = vpop.f32.mrf.mxu0
    %v2631 = vadd.f32 0.0, %v2630
    %2632 = vmatprep.mubr.f32.mxu0 0.0
    %2633 = vmatmul.mubr.f32.gmra.mxu0 %v2410
    %v2634 = vpop.f32.mrf.mxu0
    %v2635 = vadd.f32 0.0, %v2634
    %v2636 = vpop.f32.mrf.mxu0
    %v2637 = vadd.f32 0.0, %v2636
    %2638 = vdwg.mxu0
    %2639 = vmatprep.subr.mxu0 0.0
    %2640 = vmatpush1.msra.mxu0 0.0
    %2641 = vmatprep.subr.mxu0 0.0
    %2642 = vmatpush1.msra.mxu0 0.0
    %2643 = vmatprep.subr.mxu0 0.0
    %2644 = vmatpush1.msra.mxu0 0.0
    %2645 = vmatprep.subr.mxu0 0.0
    %2646 = vmatpush1.msra.mxu0 0.0
    %2647 = vmatprep.subr.mxu0 0.0
    %2648 = vmatpush1.msra.mxu0 0.0
    %2649 = vmatprep.subr.mxu0 0.0
    %2650 = vmatpush1.msra.mxu0 0.0
    %2651 = vmatprep.subr.mxu0 0.0
    %2652 = vmatpush1.msra.mxu0 0.0
    %2653 = vmatprep.subr.mxu0 0.0
    %2654 = vmatpush1.msra.mxu0 0.0
    %2655 = vmatprep.subr.mxu0 0.0
    %2656 = vmatpush1.msra.mxu0 0.0
    %2657 = vmatprep.subr.mxu0 0.0
    %2658 = vmatpush1.msra.mxu0 0.0
    %2659 = vmatprep.subr.mxu0 0.0
    %2660 = vmatpush1.msra.mxu0 0.0
    %2661 = vmatprep.subr.mxu0 0.0
    %2662 = vmatpush1.msra.mxu0 0.0
    %2663 = vmatprep.subr.mxu0 %v2422
    %2664 = vmatpush1.msra.mxu0 %v2419
    %2665 = vmatprep.subr.mxu0 %v217
    %2666 = vmatpush1.msra.mxu0 %v216
    %2667 = vmatprep.subr.mxu0 %v211
    %2668 = vmatpush1.msra.mxu0 %v210
    %2669 = vmatprep.subr.mxu0 %v205
    %2670 = vmatpush1.msra.mxu0 %v204
    %2671 = vmatprep.subr.mxu0 0.0
    %2672 = vmatpush2.msra.mxu0 0.0
    %2673 = vmatprep.subr.mxu0 0.0
    %2674 = vmatpush2.msra.mxu0 0.0
    %2675 = vmatprep.subr.mxu0 0.0
    %2676 = vmatpush2.msra.mxu0 0.0
    %2677 = vmatprep.subr.mxu0 0.0
    %2678 = vmatpush2.msra.mxu0 0.0
    %2679 = vmatprep.subr.mxu0 0.0
    %2680 = vmatpush2.msra.mxu0 0.0
    %2681 = vmatprep.subr.mxu0 0.0
    %2682 = vmatpush2.msra.mxu0 0.0
    %2683 = vmatprep.subr.mxu0 0.0
    %2684 = vmatpush2.msra.mxu0 0.0
    %2685 = vmatprep.subr.mxu0 0.0
    %2686 = vmatpush2.msra.mxu0 0.0
    %2687 = vmatprep.subr.mxu0 0.0
    %2688 = vmatpush2.msra.mxu0 0.0
    %2689 = vmatprep.subr.mxu0 0.0
    %2690 = vmatpush2.msra.mxu0 0.0
    %2691 = vmatprep.subr.mxu0 0.0
    %2692 = vmatpush2.msra.mxu0 0.0
    %2693 = vmatprep.subr.mxu0 0.0
    %2694 = vmatpush2.msra.mxu0 0.0
    %2695 = vmatprep.subr.mxu0 0.0
    %2696 = vmatpush2.msra.mxu0 0.0
    %2697 = vmatprep.subr.mxu0 0.0
    %2698 = vmatpush2.msra.mxu0 0.0
    %2699 = vmatprep.subr.mxu0 0.0
    %2700 = vmatpush2.msra.mxu0 0.0
    %2701 = vmatprep.subr.mxu0 0.0
    %2702 = vmatpush2.msra.mxu0 0.0
    %2703 = vmatprep.mubr.f32.mxu0 0.0
    %2704 = vmatmul.mubr.f32.gmra.mxu0 %v258
    %v2705 = vpop.f32.mrf.mxu0
    %v2706 = vadd.f32 0.0, %v2705
    %v2707 = vpop.f32.mrf.mxu0
    %v2708 = vadd.f32 0.0, %v2707
    %2709 = vmatprep.mubr.f32.mxu0 0.0
    %2710 = vmatmul.mubr.f32.gmra.mxu0 %v261
    %v2711 = vpop.f32.mrf.mxu0
    %v2712 = vadd.f32 0.0, %v2711
    %v2713 = vpop.f32.mrf.mxu0
    %v2714 = vadd.f32 0.0, %v2713
    %2715 = vmatprep.mubr.f32.mxu0 0.0
    %2716 = vmatmul.mubr.f32.gmra.mxu0 %v264
    %v2717 = vpop.f32.mrf.mxu0
    %v2718 = vadd.f32 0.0, %v2717
    %v2719 = vpop.f32.mrf.mxu0
    %v2720 = vadd.f32 0.0, %v2719
    %2721 = vmatprep.mubr.f32.mxu0 0.0
    %2722 = vmatmul.mubr.f32.gmra.mxu0 %v267
    %v2723 = vpop.f32.mrf.mxu0
    %v2724 = vadd.f32 0.0, %v2723
    %v2725 = vpop.f32.mrf.mxu0
    %v2726 = vadd.f32 0.0, %v2725
    %2727 = vmatprep.mubr.f32.mxu0 0.0
    %2728 = vmatmul.mubr.f32.gmra.mxu0 %v270
    %v2729 = vpop.f32.mrf.mxu0
    %v2730 = vadd.f32 0.0, %v2729
    %v2731 = vpop.f32.mrf.mxu0
    %v2732 = vadd.f32 0.0, %v2731
    %2733 = vmatprep.mubr.f32.mxu0 0.0
    %2734 = vmatmul.mubr.f32.gmra.mxu0 %v273
    %v2735 = vpop.f32.mrf.mxu0
    %v2736 = vadd.f32 0.0, %v2735
    %v2737 = vpop.f32.mrf.mxu0
    %v2738 = vadd.f32 0.0, %v2737
    %2739 = vmatprep.mubr.f32.mxu0 0.0
    %2740 = vmatmul.mubr.f32.gmra.mxu0 %v276
    %v2741 = vpop.f32.mrf.mxu0
    %v2742 = vadd.f32 0.0, %v2741
    %v2743 = vpop.f32.mrf.mxu0
    %v2744 = vadd.f32 0.0, %v2743
    %2745 = vmatprep.mubr.f32.mxu0 0.0
    %2746 = vmatmul.mubr.f32.gmra.mxu0 %v279
    %v2747 = vpop.f32.mrf.mxu0
    %v2748 = vadd.f32 0.0, %v2747
    %v2749 = vpop.f32.mrf.mxu0
    %v2750 = vadd.f32 0.0, %v2749
    %2751 = vmatprep.mubr.f32.mxu0 0.0
    %2752 = vmatmul.mubr.f32.gmra.mxu0 %v282
    %v2753 = vpop.f32.mrf.mxu0
    %v2754 = vadd.f32 0.0, %v2753
    %v2755 = vpop.f32.mrf.mxu0
    %v2756 = vadd.f32 0.0, %v2755
    %2757 = vmatprep.mubr.f32.mxu0 0.0
    %2758 = vmatmul.mubr.f32.gmra.mxu0 %v285
    %v2759 = vpop.f32.mrf.mxu0
    %v2760 = vadd.f32 0.0, %v2759
    %v2761 = vpop.f32.mrf.mxu0
    %v2762 = vadd.f32 0.0, %v2761
    %2763 = vmatprep.mubr.f32.mxu0 0.0
    %2764 = vmatmul.mubr.f32.gmra.mxu0 %v288
    %v2765 = vpop.f32.mrf.mxu0
    %v2766 = vadd.f32 0.0, %v2765
    %v2767 = vpop.f32.mrf.mxu0
    %v2768 = vadd.f32 0.0, %v2767
    %2769 = vmatprep.mubr.f32.mxu0 0.0
    %2770 = vmatmul.mubr.f32.gmra.mxu0 %v291
    %v2771 = vpop.f32.mrf.mxu0
    %v2772 = vadd.f32 0.0, %v2771
    %v2773 = vpop.f32.mrf.mxu0
    %v2774 = vadd.f32 0.0, %v2773
    %2775 = vmatprep.mubr.f32.mxu0 0.0
    %2776 = vmatmul.mubr.f32.gmra.mxu0 %v294
    %v2777 = vpop.f32.mrf.mxu0
    %v2778 = vadd.f32 0.0, %v2777
    %v2779 = vpop.f32.mrf.mxu0
    %v2780 = vadd.f32 0.0, %v2779
    %2781 = vmatprep.mubr.f32.mxu0 0.0
    %2782 = vmatmul.mubr.f32.gmra.mxu0 %v297
    %v2783 = vpop.f32.mrf.mxu0
    %v2784 = vadd.f32 0.0, %v2783
    %v2785 = vpop.f32.mrf.mxu0
    %v2786 = vadd.f32 0.0, %v2785
    %2787 = vmatprep.mubr.f32.mxu0 0.0
    %2788 = vmatmul.mubr.f32.gmra.mxu0 %v300
    %v2789 = vpop.f32.mrf.mxu0
    %v2790 = vadd.f32 0.0, %v2789
    %v2791 = vpop.f32.mrf.mxu0
    %v2792 = vadd.f32 0.0, %v2791
    %2793 = vmatprep.mubr.f32.mxu0 0.0
    %2794 = vmatmul.mubr.f32.gmra.mxu0 %v303
    %v2795 = vpop.f32.mrf.mxu0
    %v2796 = vadd.f32 0.0, %v2795
    %v2797 = vpop.f32.mrf.mxu0
    %v2798 = vadd.f32 0.0, %v2797
    %2799 = vmatprep.mubr.f32.mxu0 0.0
    %2800 = vmatmul.mubr.f32.gmra.mxu0 %v306
    %v2801 = vpop.f32.mrf.mxu0
    %v2802 = vadd.f32 0.0, %v2801
    %v2803 = vpop.f32.mrf.mxu0
    %v2804 = vadd.f32 0.0, %v2803
    %2805 = vmatprep.mubr.f32.mxu0 0.0
    %2806 = vmatmul.mubr.f32.gmra.mxu0 %v309
    %v2807 = vpop.f32.mrf.mxu0
    %v2808 = vadd.f32 0.0, %v2807
    %v2809 = vpop.f32.mrf.mxu0
    %v2810 = vadd.f32 0.0, %v2809
    %2811 = vmatprep.mubr.f32.mxu0 0.0
    %2812 = vmatmul.mubr.f32.gmra.mxu0 %v312
    %v2813 = vpop.f32.mrf.mxu0
    %v2814 = vadd.f32 0.0, %v2813
    %v2815 = vpop.f32.mrf.mxu0
    %v2816 = vadd.f32 0.0, %v2815
    %2817 = vmatprep.mubr.f32.mxu0 0.0
    %2818 = vmatmul.mubr.f32.gmra.mxu0 %v315
    %v2819 = vpop.f32.mrf.mxu0
    %v2820 = vadd.f32 0.0, %v2819
    %v2821 = vpop.f32.mrf.mxu0
    %v2822 = vadd.f32 0.0, %v2821
    %2823 = vmatprep.mubr.f32.mxu0 0.0
    %2824 = vmatmul.mubr.f32.gmra.mxu0 %v318
    %v2825 = vpop.f32.mrf.mxu0
    %v2826 = vadd.f32 0.0, %v2825
    %v2827 = vpop.f32.mrf.mxu0
    %v2828 = vadd.f32 0.0, %v2827
    %2829 = vmatprep.mubr.f32.mxu0 0.0
    %2830 = vmatmul.mubr.f32.gmra.mxu0 %v321
    %v2831 = vpop.f32.mrf.mxu0
    %v2832 = vadd.f32 0.0, %v2831
    %v2833 = vpop.f32.mrf.mxu0
    %v2834 = vadd.f32 0.0, %v2833
    %2835 = vmatprep.mubr.f32.mxu0 0.0
    %2836 = vmatmul.mubr.f32.gmra.mxu0 %v1618
    %v2837 = vpop.f32.mrf.mxu0
    %v2838 = vadd.f32 0.0, %v2837
    %v2839 = vpop.f32.mrf.mxu0
    %v2840 = vadd.f32 0.0, %v2839
    %2841 = vmatprep.mubr.f32.mxu0 0.0
    %2842 = vmatmul.mubr.f32.gmra.mxu0 %v2410
    %v2843 = vpop.f32.mrf.mxu0
    %v2844 = vadd.f32 0.0, %v2843
    %v2845 = vpop.f32.mrf.mxu0
    %v2846 = vadd.f32 0.0, %v2845
    %2847 = vdwg.mxu0
    %2848 = vmatprep.subr.mxu0 0.0
    %2849 = vmatpush1.msra.mxu0 0.0
    %2850 = vmatprep.subr.mxu0 0.0
    %2851 = vmatpush1.msra.mxu0 0.0
    %2852 = vmatprep.subr.mxu0 0.0
    %2853 = vmatpush1.msra.mxu0 0.0
    %2854 = vmatprep.subr.mxu0 0.0
    %2855 = vmatpush1.msra.mxu0 0.0
    %2856 = vmatprep.subr.mxu0 0.0
    %2857 = vmatpush1.msra.mxu0 0.0
    %2858 = vmatprep.subr.mxu0 0.0
    %2859 = vmatpush1.msra.mxu0 0.0
    %2860 = vmatprep.subr.mxu0 0.0
    %2861 = vmatpush1.msra.mxu0 0.0
    %2862 = vmatprep.subr.mxu0 0.0
    %2863 = vmatpush1.msra.mxu0 0.0
    %2864 = vmatprep.subr.mxu0 0.0
    %2865 = vmatpush1.msra.mxu0 0.0
    %2866 = vmatprep.subr.mxu0 0.0
    %2867 = vmatpush1.msra.mxu0 0.0
    %2868 = vmatprep.subr.mxu0 0.0
    %2869 = vmatpush1.msra.mxu0 0.0
    %2870 = vmatprep.subr.mxu0 0.0
    %2871 = vmatpush1.msra.mxu0 0.0
    %2872 = vmatprep.subr.mxu0 %v2428
    %2873 = vmatpush1.msra.mxu0 %v2425
    %2874 = vmatprep.subr.mxu0 %v219
    %2875 = vmatpush1.msra.mxu0 %v218
    %2876 = vmatprep.subr.mxu0 %v213
    %2877 = vmatpush1.msra.mxu0 %v212
    %2878 = vmatprep.subr.mxu0 %v207
    %2879 = vmatpush1.msra.mxu0 %v206
    %2880 = vmatprep.subr.mxu0 0.0
    %2881 = vmatpush2.msra.mxu0 0.0
    %2882 = vmatprep.subr.mxu0 0.0
    %2883 = vmatpush2.msra.mxu0 0.0
    %2884 = vmatprep.subr.mxu0 0.0
    %2885 = vmatpush2.msra.mxu0 0.0
    %2886 = vmatprep.subr.mxu0 0.0
    %2887 = vmatpush2.msra.mxu0 0.0
    %2888 = vmatprep.subr.mxu0 0.0
    %2889 = vmatpush2.msra.mxu0 0.0
    %2890 = vmatprep.subr.mxu0 0.0
    %2891 = vmatpush2.msra.mxu0 0.0
    %2892 = vmatprep.subr.mxu0 0.0
    %2893 = vmatpush2.msra.mxu0 0.0
    %2894 = vmatprep.subr.mxu0 0.0
    %2895 = vmatpush2.msra.mxu0 0.0
    %2896 = vmatprep.subr.mxu0 0.0
    %2897 = vmatpush2.msra.mxu0 0.0
    %2898 = vmatprep.subr.mxu0 0.0
    %2899 = vmatpush2.msra.mxu0 0.0
    %2900 = vmatprep.subr.mxu0 0.0
    %2901 = vmatpush2.msra.mxu0 0.0
    %2902 = vmatprep.subr.mxu0 0.0
    %2903 = vmatpush2.msra.mxu0 0.0
    %2904 = vmatprep.subr.mxu0 0.0
    %2905 = vmatpush2.msra.mxu0 0.0
    %2906 = vmatprep.subr.mxu0 0.0
    %2907 = vmatpush2.msra.mxu0 0.0
    %2908 = vmatprep.subr.mxu0 0.0
    %2909 = vmatpush2.msra.mxu0 0.0
    %2910 = vmatprep.subr.mxu0 0.0
    %2911 = vmatpush2.msra.mxu0 0.0
    %2912 = vmatprep.mubr.f32.mxu0 0.0
    %2913 = vmatmul.mubr.f32.gmra.mxu0 %v258
    %v2914 = vpop.f32.mrf.mxu0
    %v2915 = vadd.f32 0.0, %v2914
    %v2916 = vpop.f32.mrf.mxu0
    %v2917 = vadd.f32 0.0, %v2916
    %2918 = vmatprep.mubr.f32.mxu0 0.0
    %2919 = vmatmul.mubr.f32.gmra.mxu0 %v261
    %v2920 = vpop.f32.mrf.mxu0
    %v2921 = vadd.f32 0.0, %v2920
    %v2922 = vpop.f32.mrf.mxu0
    %v2923 = vadd.f32 0.0, %v2922
    %2924 = vmatprep.mubr.f32.mxu0 0.0
    %2925 = vmatmul.mubr.f32.gmra.mxu0 %v264
    %v2926 = vpop.f32.mrf.mxu0
    %v2927 = vadd.f32 0.0, %v2926
    %v2928 = vpop.f32.mrf.mxu0
    %v2929 = vadd.f32 0.0, %v2928
    %2930 = vmatprep.mubr.f32.mxu0 0.0
    %2931 = vmatmul.mubr.f32.gmra.mxu0 %v267
    %v2932 = vpop.f32.mrf.mxu0
    %v2933 = vadd.f32 0.0, %v2932
    %v2934 = vpop.f32.mrf.mxu0
    %v2935 = vadd.f32 0.0, %v2934
    %2936 = vmatprep.mubr.f32.mxu0 0.0
    %2937 = vmatmul.mubr.f32.gmra.mxu0 %v270
    %v2938 = vpop.f32.mrf.mxu0
    %v2939 = vadd.f32 0.0, %v2938
    %v2940 = vpop.f32.mrf.mxu0
    %v2941 = vadd.f32 0.0, %v2940
    %2942 = vmatprep.mubr.f32.mxu0 0.0
    %2943 = vmatmul.mubr.f32.gmra.mxu0 %v273
    %v2944 = vpop.f32.mrf.mxu0
    %v2945 = vadd.f32 0.0, %v2944
    %v2946 = vpop.f32.mrf.mxu0
    %v2947 = vadd.f32 0.0, %v2946
    %2948 = vmatprep.mubr.f32.mxu0 0.0
    %2949 = vmatmul.mubr.f32.gmra.mxu0 %v276
    %v2950 = vpop.f32.mrf.mxu0
    %v2951 = vadd.f32 0.0, %v2950
    %v2952 = vpop.f32.mrf.mxu0
    %v2953 = vadd.f32 0.0, %v2952
    %2954 = vmatprep.mubr.f32.mxu0 0.0
    %2955 = vmatmul.mubr.f32.gmra.mxu0 %v279
    %v2956 = vpop.f32.mrf.mxu0
    %v2957 = vadd.f32 0.0, %v2956
    %v2958 = vpop.f32.mrf.mxu0
    %v2959 = vadd.f32 0.0, %v2958
    %2960 = vmatprep.mubr.f32.mxu0 0.0
    %2961 = vmatmul.mubr.f32.gmra.mxu0 %v282
    %v2962 = vpop.f32.mrf.mxu0
    %v2963 = vadd.f32 0.0, %v2962
    %v2964 = vpop.f32.mrf.mxu0
    %v2965 = vadd.f32 0.0, %v2964
    %2966 = vmatprep.mubr.f32.mxu0 0.0
    %2967 = vmatmul.mubr.f32.gmra.mxu0 %v285
    %v2968 = vpop.f32.mrf.mxu0
    %v2969 = vadd.f32 0.0, %v2968
    %v2970 = vpop.f32.mrf.mxu0
    %v2971 = vadd.f32 0.0, %v2970
    %2972 = vmatprep.mubr.f32.mxu0 0.0
    %2973 = vmatmul.mubr.f32.gmra.mxu0 %v288
    %v2974 = vpop.f32.mrf.mxu0
    %v2975 = vadd.f32 0.0, %v2974
    %v2976 = vpop.f32.mrf.mxu0
    %v2977 = vadd.f32 0.0, %v2976
    %2978 = vmatprep.mubr.f32.mxu0 0.0
    %2979 = vmatmul.mubr.f32.gmra.mxu0 %v291
    %v2980 = vpop.f32.mrf.mxu0
    %v2981 = vadd.f32 0.0, %v2980
    %v2982 = vpop.f32.mrf.mxu0
    %v2983 = vadd.f32 0.0, %v2982
    %2984 = vmatprep.mubr.f32.mxu0 0.0
    %2985 = vmatmul.mubr.f32.gmra.mxu0 %v294
    %v2986 = vpop.f32.mrf.mxu0
    %v2987 = vadd.f32 0.0, %v2986
    %v2988 = vpop.f32.mrf.mxu0
    %v2989 = vadd.f32 0.0, %v2988
    %2990 = vmatprep.mubr.f32.mxu0 0.0
    %2991 = vmatmul.mubr.f32.gmra.mxu0 %v297
    %v2992 = vpop.f32.mrf.mxu0
    %v2993 = vadd.f32 0.0, %v2992
    %v2994 = vpop.f32.mrf.mxu0
    %v2995 = vadd.f32 0.0, %v2994
    %2996 = vmatprep.mubr.f32.mxu0 0.0
    %2997 = vmatmul.mubr.f32.gmra.mxu0 %v300
    %v2998 = vpop.f32.mrf.mxu0
    %v2999 = vadd.f32 0.0, %v2998
    %v3000 = vpop.f32.mrf.mxu0
    %v3001 = vadd.f32 0.0, %v3000
    %3002 = vmatprep.mubr.f32.mxu0 0.0
    %3003 = vmatmul.mubr.f32.gmra.mxu0 %v303
    %v3004 = vpop.f32.mrf.mxu0
    %v3005 = vadd.f32 0.0, %v3004
    %v3006 = vpop.f32.mrf.mxu0
    %v3007 = vadd.f32 0.0, %v3006
    %3008 = vmatprep.mubr.f32.mxu0 0.0
    %3009 = vmatmul.mubr.f32.gmra.mxu0 %v306
    %v3010 = vpop.f32.mrf.mxu0
    %v3011 = vadd.f32 0.0, %v3010
    %v3012 = vpop.f32.mrf.mxu0
    %v3013 = vadd.f32 0.0, %v3012
    %3014 = vmatprep.mubr.f32.mxu0 0.0
    %3015 = vmatmul.mubr.f32.gmra.mxu0 %v309
    %v3016 = vpop.f32.mrf.mxu0
    %v3017 = vadd.f32 0.0, %v3016
    %v3018 = vpop.f32.mrf.mxu0
    %v3019 = vadd.f32 0.0, %v3018
    %3020 = vmatprep.mubr.f32.mxu0 0.0
    %3021 = vmatmul.mubr.f32.gmra.mxu0 %v312
    %v3022 = vpop.f32.mrf.mxu0
    %v3023 = vadd.f32 0.0, %v3022
    %v3024 = vpop.f32.mrf.mxu0
    %v3025 = vadd.f32 0.0, %v3024
    %3026 = vmatprep.mubr.f32.mxu0 0.0
    %3027 = vmatmul.mubr.f32.gmra.mxu0 %v315
    %v3028 = vpop.f32.mrf.mxu0
    %v3029 = vadd.f32 0.0, %v3028
    %v3030 = vpop.f32.mrf.mxu0
    %v3031 = vadd.f32 0.0, %v3030
    %3032 = vmatprep.mubr.f32.mxu0 0.0
    %3033 = vmatmul.mubr.f32.gmra.mxu0 %v318
    %v3034 = vpop.f32.mrf.mxu0
    %v3035 = vadd.f32 0.0, %v3034
    %v3036 = vpop.f32.mrf.mxu0
    %v3037 = vadd.f32 0.0, %v3036
    %3038 = vmatprep.mubr.f32.mxu0 0.0
    %3039 = vmatmul.mubr.f32.gmra.mxu0 %v321
    %v3040 = vpop.f32.mrf.mxu0
    %v3041 = vadd.f32 0.0, %v3040
    %v3042 = vpop.f32.mrf.mxu0
    %v3043 = vadd.f32 0.0, %v3042
    %3044 = vmatprep.mubr.f32.mxu0 0.0
    %3045 = vmatmul.mubr.f32.gmra.mxu0 %v1618
    %v3046 = vpop.f32.mrf.mxu0
    %v3047 = vadd.f32 0.0, %v3046
    %v3048 = vpop.f32.mrf.mxu0
    %v3049 = vadd.f32 0.0, %v3048
    %3050 = vmatprep.mubr.f32.mxu0 0.0
    %3051 = vmatmul.mubr.f32.gmra.mxu0 %v2410
    %v3052 = vpop.f32.mrf.mxu0
    %v3053 = vadd.f32 0.0, %v3052
    %v3054 = vpop.f32.mrf.mxu0
    %v3055 = vadd.f32 0.0, %v3054
    %3056 = vdwg.mxu0
    %v3057 = vadd.f32 %v2265, %v2497
    %v3058 = vadd.f32 %v2266, %v2499
    %v3059 = vadd.f32 %v2267, %v2706
    %v3060 = vadd.f32 %v2268, %v2708
    %v3061 = vadd.f32 %v2269, %v2915
    %v3062 = vadd.f32 %v2270, %v2917
    %v3063 = vadd.f32 %v2271, %v2503
    %v3064 = vadd.f32 %v2272, %v2505
    %v3065 = vadd.f32 %v2273, %v2712
    %v3066 = vadd.f32 %v2274, %v2714
    %v3067 = vadd.f32 %v2275, %v2921
    %v3068 = vadd.f32 %v2276, %v2923
    %v3069 = vadd.f32 %v2277, %v2509
    %v3070 = vadd.f32 %v2278, %v2511
    %v3071 = vadd.f32 %v2279, %v2718
    %v3072 = vadd.f32 %v2280, %v2720
    %v3073 = vadd.f32 %v2281, %v2927
    %v3074 = vadd.f32 %v2282, %v2929
    %v3075 = vadd.f32 %v2283, %v2515
    %v3076 = vadd.f32 %v2284, %v2517
    %v3077 = vadd.f32 %v2285, %v2724
    %v3078 = vadd.f32 %v2286, %v2726
    %v3079 = vadd.f32 %v2287, %v2933
    %v3080 = vadd.f32 %v2288, %v2935
    %v3081 = vadd.f32 %v2289, %v2521
    %v3082 = vadd.f32 %v2290, %v2523
    %v3083 = vadd.f32 %v2291, %v2730
    %v3084 = vadd.f32 %v2292, %v2732
    %v3085 = vadd.f32 %v2293, %v2939
    %v3086 = vadd.f32 %v2294, %v2941
    %v3087 = vadd.f32 %v2295, %v2527
    %v3088 = vadd.f32 %v2296, %v2529
    %v3089 = vadd.f32 %v2297, %v2736
    %v3090 = vadd.f32 %v2298, %v2738
    %v3091 = vadd.f32 %v2299, %v2945
    %v3092 = vadd.f32 %v2300, %v2947
    %v3093 = vadd.f32 %v2301, %v2533
    %v3094 = vadd.f32 %v2302, %v2535
    %v3095 = vadd.f32 %v2303, %v2742
    %v3096 = vadd.f32 %v2304, %v2744
    %v3097 = vadd.f32 %v2305, %v2951
    %v3098 = vadd.f32 %v2306, %v2953
    %v3099 = vadd.f32 %v2307, %v2539
    %v3100 = vadd.f32 %v2308, %v2541
    %v3101 = vadd.f32 %v2309, %v2748
    %v3102 = vadd.f32 %v2310, %v2750
    %v3103 = vadd.f32 %v2311, %v2957
    %v3104 = vadd.f32 %v2312, %v2959
    %v3105 = vadd.f32 %v2313, %v2545
    %v3106 = vadd.f32 %v2314, %v2547
    %v3107 = vadd.f32 %v2315, %v2754
    %v3108 = vadd.f32 %v2316, %v2756
    %v3109 = vadd.f32 %v2317, %v2963
    %v3110 = vadd.f32 %v2318, %v2965
    %v3111 = vadd.f32 %v2319, %v2551
    %v3112 = vadd.f32 %v2320, %v2553
    %v3113 = vadd.f32 %v2321, %v2760
    %v3114 = vadd.f32 %v2322, %v2762
    %v3115 = vadd.f32 %v2323, %v2969
    %v3116 = vadd.f32 %v2324, %v2971
    %v3117 = vadd.f32 %v2325, %v2557
    %v3118 = vadd.f32 %v2326, %v2559
    %v3119 = vadd.f32 %v2327, %v2766
    %v3120 = vadd.f32 %v2328, %v2768
    %v3121 = vadd.f32 %v2329, %v2975
    %v3122 = vadd.f32 %v2330, %v2977
    %v3123 = vadd.f32 %v2331, %v2563
    %v3124 = vadd.f32 %v2332, %v2565
    %v3125 = vadd.f32 %v2333, %v2772
    %v3126 = vadd.f32 %v2334, %v2774
    %v3127 = vadd.f32 %v2335, %v2981
    %v3128 = vadd.f32 %v2336, %v2983
    %v3129 = vadd.f32 %v2337, %v2569
    %v3130 = vadd.f32 %v2338, %v2571
    %v3131 = vadd.f32 %v2339, %v2778
    %v3132 = vadd.f32 %v2340, %v2780
    %v3133 = vadd.f32 %v2341, %v2987
    %v3134 = vadd.f32 %v2342, %v2989
    %v3135 = vadd.f32 %v2343, %v2575
    %v3136 = vadd.f32 %v2344, %v2577
    %v3137 = vadd.f32 %v2345, %v2784
    %v3138 = vadd.f32 %v2346, %v2786
    %v3139 = vadd.f32 %v2347, %v2993
    %v3140 = vadd.f32 %v2348, %v2995
    %v3141 = vadd.f32 %v2349, %v2581
    %v3142 = vadd.f32 %v2350, %v2583
    %v3143 = vadd.f32 %v2351, %v2790
    %v3144 = vadd.f32 %v2352, %v2792
    %v3145 = vadd.f32 %v2353, %v2999
    %v3146 = vadd.f32 %v2354, %v3001
    %v3147 = vadd.f32 %v2355, %v2587
    %v3148 = vadd.f32 %v2356, %v2589
    %v3149 = vadd.f32 %v2357, %v2796
    %v3150 = vadd.f32 %v2358, %v2798
    %v3151 = vadd.f32 %v2359, %v3005
    %v3152 = vadd.f32 %v2360, %v3007
    %v3153 = vadd.f32 %v2361, %v2593
    %v3154 = vadd.f32 %v2362, %v2595
    %v3155 = vadd.f32 %v2363, %v2802
    %v3156 = vadd.f32 %v2364, %v2804
    %v3157 = vadd.f32 %v2365, %v3011
    %v3158 = vadd.f32 %v2366, %v3013
    %v3159 = vadd.f32 %v2367, %v2599
    %v3160 = vadd.f32 %v2368, %v2601
    %v3161 = vadd.f32 %v2369, %v2808
    %v3162 = vadd.f32 %v2370, %v2810
    %v3163 = vadd.f32 %v2371, %v3017
    %v3164 = vadd.f32 %v2372, %v3019
    %v3165 = vadd.f32 %v2373, %v2605
    %v3166 = vadd.f32 %v2374, %v2607
    %v3167 = vadd.f32 %v2375, %v2814
    %v3168 = vadd.f32 %v2376, %v2816
    %v3169 = vadd.f32 %v2377, %v3023
    %v3170 = vadd.f32 %v2378, %v3025
    %v3171 = vadd.f32 %v2379, %v2611
    %v3172 = vadd.f32 %v2380, %v2613
    %v3173 = vadd.f32 %v2381, %v2820
    %v3174 = vadd.f32 %v2382, %v2822
    %v3175 = vadd.f32 %v2383, %v3029
    %v3176 = vadd.f32 %v2384, %v3031
    %v3177 = vadd.f32 %v2385, %v2617
    %v3178 = vadd.f32 %v2386, %v2619
    %v3179 = vadd.f32 %v2387, %v2826
    %v3180 = vadd.f32 %v2388, %v2828
    %v3181 = vadd.f32 %v2389, %v3035
    %v3182 = vadd.f32 %v2390, %v3037
    %v3183 = vadd.f32 %v2391, %v2623
    %v3184 = vadd.f32 %v2392, %v2625
    %v3185 = vadd.f32 %v2393, %v2832
    %v3186 = vadd.f32 %v2394, %v2834
    %v3187 = vadd.f32 %v2395, %v3041
    %v3188 = vadd.f32 %v2396, %v3043
    %v3189 = vadd.f32 %v2397, %v2629
    %v3190 = vadd.f32 %v2398, %v2631
    %v3191 = vadd.f32 %v2399, %v2838
    %v3192 = vadd.f32 %v2400, %v2840
    %v3193 = vadd.f32 %v2401, %v3047
    %v3194 = vadd.f32 %v2402, %v3049
    %v3195 = vadd.f32 %v2403, %v2635
    %v3196 = vadd.f32 %v2404, %v2637
    %v3197 = vadd.f32 %v2405, %v2844
    %v3198 = vadd.f32 %v2406, %v2846
    %v3199 = vadd.f32 %v2407, %v3053
    %v3200 = vadd.f32 %v2408, %v3055
    %v3202 = vsel %vm250, %v129, 0
    %v3205 = vsel %vm323, %v244, 0
    %v3208 = vsel %vm323, %v245, 0
    %v3211 = vsel %vm323, %v246, 0
    %v3214 = vsel %vm323, %v247, 0
    %v3217 = vsel %vm323, %v248, 0
    %v3220 = vsel %vm323, %v249, 0
    %3222 = vmatprep.subr.mxu0 0.0
    %3223 = vmatpush1.msra.mxu0 0.0
    %3224 = vmatprep.subr.mxu0 0.0
    %3225 = vmatpush1.msra.mxu0 0.0
    %3226 = vmatprep.subr.mxu0 0.0
    %3227 = vmatpush1.msra.mxu0 0.0
    %3228 = vmatprep.subr.mxu0 0.0
    %3229 = vmatpush1.msra.mxu0 0.0
    %3230 = vmatprep.subr.mxu0 0.0
    %3231 = vmatpush1.msra.mxu0 0.0
    %3232 = vmatprep.subr.mxu0 0.0
    %3233 = vmatpush1.msra.mxu0 0.0
    %3234 = vmatprep.subr.mxu0 0.0
    %3235 = vmatpush1.msra.mxu0 0.0
    %3236 = vmatprep.subr.mxu0 0.0
    %3237 = vmatpush1.msra.mxu0 0.0
    %3238 = vmatprep.subr.mxu0 0.0
    %3239 = vmatpush1.msra.mxu0 0.0
    %3240 = vmatprep.subr.mxu0 0.0
    %3241 = vmatpush1.msra.mxu0 0.0
    %3242 = vmatprep.subr.mxu0 0.0
    %3243 = vmatpush1.msra.mxu0 0.0
    %3244 = vmatprep.subr.mxu0 0.0
    %3245 = vmatpush1.msra.mxu0 0.0
    %3246 = vmatprep.subr.mxu0 %v3208
    %3247 = vmatpush1.msra.mxu0 %v3205
    %3248 = vmatprep.subr.mxu0 %v239
    %3249 = vmatpush1.msra.mxu0 %v238
    %3250 = vmatprep.subr.mxu0 %v233
    %3251 = vmatpush1.msra.mxu0 %v232
    %3252 = vmatprep.subr.mxu0 %v227
    %3253 = vmatpush1.msra.mxu0 %v226
    %3254 = vmatprep.subr.mxu0 0.0
    %3255 = vmatpush2.msra.mxu0 0.0
    %3256 = vmatprep.subr.mxu0 0.0
    %3257 = vmatpush2.msra.mxu0 0.0
    %3258 = vmatprep.subr.mxu0 0.0
    %3259 = vmatpush2.msra.mxu0 0.0
    %3260 = vmatprep.subr.mxu0 0.0
    %3261 = vmatpush2.msra.mxu0 0.0
    %3262 = vmatprep.subr.mxu0 0.0
    %3263 = vmatpush2.msra.mxu0 0.0
    %3264 = vmatprep.subr.mxu0 0.0
    %3265 = vmatpush2.msra.mxu0 0.0
    %3266 = vmatprep.subr.mxu0 0.0
    %3267 = vmatpush2.msra.mxu0 0.0
    %3268 = vmatprep.subr.mxu0 0.0
    %3269 = vmatpush2.msra.mxu0 0.0
    %3270 = vmatprep.subr.mxu0 0.0
    %3271 = vmatpush2.msra.mxu0 0.0
    %3272 = vmatprep.subr.mxu0 0.0
    %3273 = vmatpush2.msra.mxu0 0.0
    %3274 = vmatprep.subr.mxu0 0.0
    %3275 = vmatpush2.msra.mxu0 0.0
    %3276 = vmatprep.subr.mxu0 0.0
    %3277 = vmatpush2.msra.mxu0 0.0
    %3278 = vmatprep.subr.mxu0 0.0
    %3279 = vmatpush2.msra.mxu0 0.0
    %3280 = vmatprep.subr.mxu0 0.0
    %3281 = vmatpush2.msra.mxu0 0.0
    %3282 = vmatprep.subr.mxu0 0.0
    %3283 = vmatpush2.msra.mxu0 0.0
    %3284 = vmatprep.subr.mxu0 0.0
    %3285 = vmatpush2.msra.mxu0 0.0
    %3286 = vmatprep.mubr.f32.mxu0 0.0
    %3287 = vmatmul.mubr.f32.gmra.mxu0 %v261
    %v3288 = vpop.f32.mrf.mxu0
    %v3289 = vadd.f32 0.0, %v3288
    %v3290 = vpop.f32.mrf.mxu0
    %v3291 = vadd.f32 0.0, %v3290
    %3292 = vmatprep.mubr.f32.mxu0 0.0
    %3293 = vmatmul.mubr.f32.gmra.mxu0 %v264
    %v3294 = vpop.f32.mrf.mxu0
    %v3295 = vadd.f32 0.0, %v3294
    %v3296 = vpop.f32.mrf.mxu0
    %v3297 = vadd.f32 0.0, %v3296
    %3298 = vmatprep.mubr.f32.mxu0 0.0
    %3299 = vmatmul.mubr.f32.gmra.mxu0 %v267
    %v3300 = vpop.f32.mrf.mxu0
    %v3301 = vadd.f32 0.0, %v3300
    %v3302 = vpop.f32.mrf.mxu0
    %v3303 = vadd.f32 0.0, %v3302
    %3304 = vmatprep.mubr.f32.mxu0 0.0
    %3305 = vmatmul.mubr.f32.gmra.mxu0 %v270
    %v3306 = vpop.f32.mrf.mxu0
    %v3307 = vadd.f32 0.0, %v3306
    %v3308 = vpop.f32.mrf.mxu0
    %v3309 = vadd.f32 0.0, %v3308
    %3310 = vmatprep.mubr.f32.mxu0 0.0
    %3311 = vmatmul.mubr.f32.gmra.mxu0 %v273
    %v3312 = vpop.f32.mrf.mxu0
    %v3313 = vadd.f32 0.0, %v3312
    %v3314 = vpop.f32.mrf.mxu0
    %v3315 = vadd.f32 0.0, %v3314
    %3316 = vmatprep.mubr.f32.mxu0 0.0
    %3317 = vmatmul.mubr.f32.gmra.mxu0 %v276
    %v3318 = vpop.f32.mrf.mxu0
    %v3319 = vadd.f32 0.0, %v3318
    %v3320 = vpop.f32.mrf.mxu0
    %v3321 = vadd.f32 0.0, %v3320
    %3322 = vmatprep.mubr.f32.mxu0 0.0
    %3323 = vmatmul.mubr.f32.gmra.mxu0 %v279
    %v3324 = vpop.f32.mrf.mxu0
    %v3325 = vadd.f32 0.0, %v3324
    %v3326 = vpop.f32.mrf.mxu0
    %v3327 = vadd.f32 0.0, %v3326
    %3328 = vmatprep.mubr.f32.mxu0 0.0
    %3329 = vmatmul.mubr.f32.gmra.mxu0 %v282
    %v3330 = vpop.f32.mrf.mxu0
    %v3331 = vadd.f32 0.0, %v3330
    %v3332 = vpop.f32.mrf.mxu0
    %v3333 = vadd.f32 0.0, %v3332
    %3334 = vmatprep.mubr.f32.mxu0 0.0
    %3335 = vmatmul.mubr.f32.gmra.mxu0 %v285
    %v3336 = vpop.f32.mrf.mxu0
    %v3337 = vadd.f32 0.0, %v3336
    %v3338 = vpop.f32.mrf.mxu0
    %v3339 = vadd.f32 0.0, %v3338
    %3340 = vmatprep.mubr.f32.mxu0 0.0
    %3341 = vmatmul.mubr.f32.gmra.mxu0 %v288
    %v3342 = vpop.f32.mrf.mxu0
    %v3343 = vadd.f32 0.0, %v3342
    %v3344 = vpop.f32.mrf.mxu0
    %v3345 = vadd.f32 0.0, %v3344
    %3346 = vmatprep.mubr.f32.mxu0 0.0
    %3347 = vmatmul.mubr.f32.gmra.mxu0 %v291
    %v3348 = vpop.f32.mrf.mxu0
    %v3349 = vadd.f32 0.0, %v3348
    %v3350 = vpop.f32.mrf.mxu0
    %v3351 = vadd.f32 0.0, %v3350
    %3352 = vmatprep.mubr.f32.mxu0 0.0
    %3353 = vmatmul.mubr.f32.gmra.mxu0 %v294
    %v3354 = vpop.f32.mrf.mxu0
    %v3355 = vadd.f32 0.0, %v3354
    %v3356 = vpop.f32.mrf.mxu0
    %v3357 = vadd.f32 0.0, %v3356
    %3358 = vmatprep.mubr.f32.mxu0 0.0
    %3359 = vmatmul.mubr.f32.gmra.mxu0 %v297
    %v3360 = vpop.f32.mrf.mxu0
    %v3361 = vadd.f32 0.0, %v3360
    %v3362 = vpop.f32.mrf.mxu0
    %v3363 = vadd.f32 0.0, %v3362
    %3364 = vmatprep.mubr.f32.mxu0 0.0
    %3365 = vmatmul.mubr.f32.gmra.mxu0 %v300
    %v3366 = vpop.f32.mrf.mxu0
    %v3367 = vadd.f32 0.0, %v3366
    %v3368 = vpop.f32.mrf.mxu0
    %v3369 = vadd.f32 0.0, %v3368
    %3370 = vmatprep.mubr.f32.mxu0 0.0
    %3371 = vmatmul.mubr.f32.gmra.mxu0 %v303
    %v3372 = vpop.f32.mrf.mxu0
    %v3373 = vadd.f32 0.0, %v3372
    %v3374 = vpop.f32.mrf.mxu0
    %v3375 = vadd.f32 0.0, %v3374
    %3376 = vmatprep.mubr.f32.mxu0 0.0
    %3377 = vmatmul.mubr.f32.gmra.mxu0 %v306
    %v3378 = vpop.f32.mrf.mxu0
    %v3379 = vadd.f32 0.0, %v3378
    %v3380 = vpop.f32.mrf.mxu0
    %v3381 = vadd.f32 0.0, %v3380
    %3382 = vmatprep.mubr.f32.mxu0 0.0
    %3383 = vmatmul.mubr.f32.gmra.mxu0 %v309
    %v3384 = vpop.f32.mrf.mxu0
    %v3385 = vadd.f32 0.0, %v3384
    %v3386 = vpop.f32.mrf.mxu0
    %v3387 = vadd.f32 0.0, %v3386
    %3388 = vmatprep.mubr.f32.mxu0 0.0
    %3389 = vmatmul.mubr.f32.gmra.mxu0 %v312
    %v3390 = vpop.f32.mrf.mxu0
    %v3391 = vadd.f32 0.0, %v3390
    %v3392 = vpop.f32.mrf.mxu0
    %v3393 = vadd.f32 0.0, %v3392
    %3394 = vmatprep.mubr.f32.mxu0 0.0
    %3395 = vmatmul.mubr.f32.gmra.mxu0 %v315
    %v3396 = vpop.f32.mrf.mxu0
    %v3397 = vadd.f32 0.0, %v3396
    %v3398 = vpop.f32.mrf.mxu0
    %v3399 = vadd.f32 0.0, %v3398
    %3400 = vmatprep.mubr.f32.mxu0 0.0
    %3401 = vmatmul.mubr.f32.gmra.mxu0 %v318
    %v3402 = vpop.f32.mrf.mxu0
    %v3403 = vadd.f32 0.0, %v3402
    %v3404 = vpop.f32.mrf.mxu0
    %v3405 = vadd.f32 0.0, %v3404
    %3406 = vmatprep.mubr.f32.mxu0 0.0
    %3407 = vmatmul.mubr.f32.gmra.mxu0 %v321
    %v3408 = vpop.f32.mrf.mxu0
    %v3409 = vadd.f32 0.0, %v3408
    %v3410 = vpop.f32.mrf.mxu0
    %v3411 = vadd.f32 0.0, %v3410
    %3412 = vmatprep.mubr.f32.mxu0 0.0
    %3413 = vmatmul.mubr.f32.gmra.mxu0 %v1618
    %v3414 = vpop.f32.mrf.mxu0
    %v3415 = vadd.f32 0.0, %v3414
    %v3416 = vpop.f32.mrf.mxu0
    %v3417 = vadd.f32 0.0, %v3416
    %3418 = vmatprep.mubr.f32.mxu0 0.0
    %3419 = vmatmul.mubr.f32.gmra.mxu0 %v2410
    %v3420 = vpop.f32.mrf.mxu0
    %v3421 = vadd.f32 0.0, %v3420
    %v3422 = vpop.f32.mrf.mxu0
    %v3423 = vadd.f32 0.0, %v3422
    %3424 = vmatprep.mubr.f32.mxu0 0.0
    %3425 = vmatmul.mubr.f32.gmra.mxu0 %v3202
    %v3426 = vpop.f32.mrf.mxu0
    %v3427 = vadd.f32 0.0, %v3426
    %v3428 = vpop.f32.mrf.mxu0
    %v3429 = vadd.f32 0.0, %v3428
    %3430 = vdwg.mxu0
    %3431 = vmatprep.subr.mxu0 0.0
    %3432 = vmatpush1.msra.mxu0 0.0
    %3433 = vmatprep.subr.mxu0 0.0
    %3434 = vmatpush1.msra.mxu0 0.0
    %3435 = vmatprep.subr.mxu0 0.0
    %3436 = vmatpush1.msra.mxu0 0.0
    %3437 = vmatprep.subr.mxu0 0.0
    %3438 = vmatpush1.msra.mxu0 0.0
    %3439 = vmatprep.subr.mxu0 0.0
    %3440 = vmatpush1.msra.mxu0 0.0
    %3441 = vmatprep.subr.mxu0 0.0
    %3442 = vmatpush1.msra.mxu0 0.0
    %3443 = vmatprep.subr.mxu0 0.0
    %3444 = vmatpush1.msra.mxu0 0.0
    %3445 = vmatprep.subr.mxu0 0.0
    %3446 = vmatpush1.msra.mxu0 0.0
    %3447 = vmatprep.subr.mxu0 0.0
    %3448 = vmatpush1.msra.mxu0 0.0
    %3449 = vmatprep.subr.mxu0 0.0
    %3450 = vmatpush1.msra.mxu0 0.0
    %3451 = vmatprep.subr.mxu0 0.0
    %3452 = vmatpush1.msra.mxu0 0.0
    %3453 = vmatprep.subr.mxu0 0.0
    %3454 = vmatpush1.msra.mxu0 0.0
    %3455 = vmatprep.subr.mxu0 %v3214
    %3456 = vmatpush1.msra.mxu0 %v3211
    %3457 = vmatprep.subr.mxu0 %v241
    %3458 = vmatpush1.msra.mxu0 %v240
    %3459 = vmatprep.subr.mxu0 %v235
    %3460 = vmatpush1.msra.mxu0 %v234
    %3461 = vmatprep.subr.mxu0 %v229
    %3462 = vmatpush1.msra.mxu0 %v228
    %3463 = vmatprep.subr.mxu0 0.0
    %3464 = vmatpush2.msra.mxu0 0.0
    %3465 = vmatprep.subr.mxu0 0.0
    %3466 = vmatpush2.msra.mxu0 0.0
    %3467 = vmatprep.subr.mxu0 0.0
    %3468 = vmatpush2.msra.mxu0 0.0
    %3469 = vmatprep.subr.mxu0 0.0
    %3470 = vmatpush2.msra.mxu0 0.0
    %3471 = vmatprep.subr.mxu0 0.0
    %3472 = vmatpush2.msra.mxu0 0.0
    %3473 = vmatprep.subr.mxu0 0.0
    %3474 = vmatpush2.msra.mxu0 0.0
    %3475 = vmatprep.subr.mxu0 0.0
    %3476 = vmatpush2.msra.mxu0 0.0
    %3477 = vmatprep.subr.mxu0 0.0
    %3478 = vmatpush2.msra.mxu0 0.0
    %3479 = vmatprep.subr.mxu0 0.0
    %3480 = vmatpush2.msra.mxu0 0.0
    %3481 = vmatprep.subr.mxu0 0.0
    %3482 = vmatpush2.msra.mxu0 0.0
    %3483 = vmatprep.subr.mxu0 0.0
    %3484 = vmatpush2.msra.mxu0 0.0
    %3485 = vmatprep.subr.mxu0 0.0
    %3486 = vmatpush2.msra.mxu0 0.0
    %3487 = vmatprep.subr.mxu0 0.0
    %3488 = vmatpush2.msra.mxu0 0.0
    %3489 = vmatprep.subr.mxu0 0.0
    %3490 = vmatpush2.msra.mxu0 0.0
    %3491 = vmatprep.subr.mxu0 0.0
    %3492 = vmatpush2.msra.mxu0 0.0
    %3493 = vmatprep.subr.mxu0 0.0
    %3494 = vmatpush2.msra.mxu0 0.0
    %3495 = vmatprep.mubr.f32.mxu0 0.0
    %3496 = vmatmul.mubr.f32.gmra.mxu0 %v261
    %v3497 = vpop.f32.mrf.mxu0
    %v3498 = vadd.f32 0.0, %v3497
    %v3499 = vpop.f32.mrf.mxu0
    %v3500 = vadd.f32 0.0, %v3499
    %3501 = vmatprep.mubr.f32.mxu0 0.0
    %3502 = vmatmul.mubr.f32.gmra.mxu0 %v264
    %v3503 = vpop.f32.mrf.mxu0
    %v3504 = vadd.f32 0.0, %v3503
    %v3505 = vpop.f32.mrf.mxu0
    %v3506 = vadd.f32 0.0, %v3505
    %3507 = vmatprep.mubr.f32.mxu0 0.0
    %3508 = vmatmul.mubr.f32.gmra.mxu0 %v267
    %v3509 = vpop.f32.mrf.mxu0
    %v3510 = vadd.f32 0.0, %v3509
    %v3511 = vpop.f32.mrf.mxu0
    %v3512 = vadd.f32 0.0, %v3511
    %3513 = vmatprep.mubr.f32.mxu0 0.0
    %3514 = vmatmul.mubr.f32.gmra.mxu0 %v270
    %v3515 = vpop.f32.mrf.mxu0
    %v3516 = vadd.f32 0.0, %v3515
    %v3517 = vpop.f32.mrf.mxu0
    %v3518 = vadd.f32 0.0, %v3517
    %3519 = vmatprep.mubr.f32.mxu0 0.0
    %3520 = vmatmul.mubr.f32.gmra.mxu0 %v273
    %v3521 = vpop.f32.mrf.mxu0
    %v3522 = vadd.f32 0.0, %v3521
    %v3523 = vpop.f32.mrf.mxu0
    %v3524 = vadd.f32 0.0, %v3523
    %3525 = vmatprep.mubr.f32.mxu0 0.0
    %3526 = vmatmul.mubr.f32.gmra.mxu0 %v276
    %v3527 = vpop.f32.mrf.mxu0
    %v3528 = vadd.f32 0.0, %v3527
    %v3529 = vpop.f32.mrf.mxu0
    %v3530 = vadd.f32 0.0, %v3529
    %3531 = vmatprep.mubr.f32.mxu0 0.0
    %3532 = vmatmul.mubr.f32.gmra.mxu0 %v279
    %v3533 = vpop.f32.mrf.mxu0
    %v3534 = vadd.f32 0.0, %v3533
    %v3535 = vpop.f32.mrf.mxu0
    %v3536 = vadd.f32 0.0, %v3535
    %3537 = vmatprep.mubr.f32.mxu0 0.0
    %3538 = vmatmul.mubr.f32.gmra.mxu0 %v282
    %v3539 = vpop.f32.mrf.mxu0
    %v3540 = vadd.f32 0.0, %v3539
    %v3541 = vpop.f32.mrf.mxu0
    %v3542 = vadd.f32 0.0, %v3541
    %3543 = vmatprep.mubr.f32.mxu0 0.0
    %3544 = vmatmul.mubr.f32.gmra.mxu0 %v285
    %v3545 = vpop.f32.mrf.mxu0
    %v3546 = vadd.f32 0.0, %v3545
    %v3547 = vpop.f32.mrf.mxu0
    %v3548 = vadd.f32 0.0, %v3547
    %3549 = vmatprep.mubr.f32.mxu0 0.0
    %3550 = vmatmul.mubr.f32.gmra.mxu0 %v288
    %v3551 = vpop.f32.mrf.mxu0
    %v3552 = vadd.f32 0.0, %v3551
    %v3553 = vpop.f32.mrf.mxu0
    %v3554 = vadd.f32 0.0, %v3553
    %3555 = vmatprep.mubr.f32.mxu0 0.0
    %3556 = vmatmul.mubr.f32.gmra.mxu0 %v291
    %v3557 = vpop.f32.mrf.mxu0
    %v3558 = vadd.f32 0.0, %v3557
    %v3559 = vpop.f32.mrf.mxu0
    %v3560 = vadd.f32 0.0, %v3559
    %3561 = vmatprep.mubr.f32.mxu0 0.0
    %3562 = vmatmul.mubr.f32.gmra.mxu0 %v294
    %v3563 = vpop.f32.mrf.mxu0
    %v3564 = vadd.f32 0.0, %v3563
    %v3565 = vpop.f32.mrf.mxu0
    %v3566 = vadd.f32 0.0, %v3565
    %3567 = vmatprep.mubr.f32.mxu0 0.0
    %3568 = vmatmul.mubr.f32.gmra.mxu0 %v297
    %v3569 = vpop.f32.mrf.mxu0
    %v3570 = vadd.f32 0.0, %v3569
    %v3571 = vpop.f32.mrf.mxu0
    %v3572 = vadd.f32 0.0, %v3571
    %3573 = vmatprep.mubr.f32.mxu0 0.0
    %3574 = vmatmul.mubr.f32.gmra.mxu0 %v300
    %v3575 = vpop.f32.mrf.mxu0
    %v3576 = vadd.f32 0.0, %v3575
    %v3577 = vpop.f32.mrf.mxu0
    %v3578 = vadd.f32 0.0, %v3577
    %3579 = vmatprep.mubr.f32.mxu0 0.0
    %3580 = vmatmul.mubr.f32.gmra.mxu0 %v303
    %v3581 = vpop.f32.mrf.mxu0
    %v3582 = vadd.f32 0.0, %v3581
    %v3583 = vpop.f32.mrf.mxu0
    %v3584 = vadd.f32 0.0, %v3583
    %3585 = vmatprep.mubr.f32.mxu0 0.0
    %3586 = vmatmul.mubr.f32.gmra.mxu0 %v306
    %v3587 = vpop.f32.mrf.mxu0
    %v3588 = vadd.f32 0.0, %v3587
    %v3589 = vpop.f32.mrf.mxu0
    %v3590 = vadd.f32 0.0, %v3589
    %3591 = vmatprep.mubr.f32.mxu0 0.0
    %3592 = vmatmul.mubr.f32.gmra.mxu0 %v309
    %v3593 = vpop.f32.mrf.mxu0
    %v3594 = vadd.f32 0.0, %v3593
    %v3595 = vpop.f32.mrf.mxu0
    %v3596 = vadd.f32 0.0, %v3595
    %3597 = vmatprep.mubr.f32.mxu0 0.0
    %3598 = vmatmul.mubr.f32.gmra.mxu0 %v312
    %v3599 = vpop.f32.mrf.mxu0
    %v3600 = vadd.f32 0.0, %v3599
    %v3601 = vpop.f32.mrf.mxu0
    %v3602 = vadd.f32 0.0, %v3601
    %3603 = vmatprep.mubr.f32.mxu0 0.0
    %3604 = vmatmul.mubr.f32.gmra.mxu0 %v315
    %v3605 = vpop.f32.mrf.mxu0
    %v3606 = vadd.f32 0.0, %v3605
    %v3607 = vpop.f32.mrf.mxu0
    %v3608 = vadd.f32 0.0, %v3607
    %3609 = vmatprep.mubr.f32.mxu0 0.0
    %3610 = vmatmul.mubr.f32.gmra.mxu0 %v318
    %v3611 = vpop.f32.mrf.mxu0
    %v3612 = vadd.f32 0.0, %v3611
    %v3613 = vpop.f32.mrf.mxu0
    %v3614 = vadd.f32 0.0, %v3613
    %3615 = vmatprep.mubr.f32.mxu0 0.0
    %3616 = vmatmul.mubr.f32.gmra.mxu0 %v321
    %v3617 = vpop.f32.mrf.mxu0
    %v3618 = vadd.f32 0.0, %v3617
    %v3619 = vpop.f32.mrf.mxu0
    %v3620 = vadd.f32 0.0, %v3619
    %3621 = vmatprep.mubr.f32.mxu0 0.0
    %3622 = vmatmul.mubr.f32.gmra.mxu0 %v1618
    %v3623 = vpop.f32.mrf.mxu0
    %v3624 = vadd.f32 0.0, %v3623
    %v3625 = vpop.f32.mrf.mxu0
    %v3626 = vadd.f32 0.0, %v3625
    %3627 = vmatprep.mubr.f32.mxu0 0.0
    %3628 = vmatmul.mubr.f32.gmra.mxu0 %v2410
    %v3629 = vpop.f32.mrf.mxu0
    %v3630 = vadd.f32 0.0, %v3629
    %v3631 = vpop.f32.mrf.mxu0
    %v3632 = vadd.f32 0.0, %v3631
    %3633 = vmatprep.mubr.f32.mxu0 0.0
    %3634 = vmatmul.mubr.f32.gmra.mxu0 %v3202
    %v3635 = vpop.f32.mrf.mxu0
    %v3636 = vadd.f32 0.0, %v3635
    %v3637 = vpop.f32.mrf.mxu0
    %v3638 = vadd.f32 0.0, %v3637
    %3639 = vdwg.mxu0
    %3640 = vmatprep.subr.mxu0 0.0
    %3641 = vmatpush1.msra.mxu0 0.0
    %3642 = vmatprep.subr.mxu0 0.0
    %3643 = vmatpush1.msra.mxu0 0.0
    %3644 = vmatprep.subr.mxu0 0.0
    %3645 = vmatpush1.msra.mxu0 0.0
    %3646 = vmatprep.subr.mxu0 0.0
    %3647 = vmatpush1.msra.mxu0 0.0
    %3648 = vmatprep.subr.mxu0 0.0
    %3649 = vmatpush1.msra.mxu0 0.0
    %3650 = vmatprep.subr.mxu0 0.0
    %3651 = vmatpush1.msra.mxu0 0.0
    %3652 = vmatprep.subr.mxu0 0.0
    %3653 = vmatpush1.msra.mxu0 0.0
    %3654 = vmatprep.subr.mxu0 0.0
    %3655 = vmatpush1.msra.mxu0 0.0
    %3656 = vmatprep.subr.mxu0 0.0
    %3657 = vmatpush1.msra.mxu0 0.0
    %3658 = vmatprep.subr.mxu0 0.0
    %3659 = vmatpush1.msra.mxu0 0.0
    %3660 = vmatprep.subr.mxu0 0.0
    %3661 = vmatpush1.msra.mxu0 0.0
    %3662 = vmatprep.subr.mxu0 0.0
    %3663 = vmatpush1.msra.mxu0 0.0
    %3664 = vmatprep.subr.mxu0 %v3220
    %3665 = vmatpush1.msra.mxu0 %v3217
    %3666 = vmatprep.subr.mxu0 %v243
    %3667 = vmatpush1.msra.mxu0 %v242
    %3668 = vmatprep.subr.mxu0 %v237
    %3669 = vmatpush1.msra.mxu0 %v236
    %3670 = vmatprep.subr.mxu0 %v231
    %3671 = vmatpush1.msra.mxu0 %v230
    %3672 = vmatprep.subr.mxu0 0.0
    %3673 = vmatpush2.msra.mxu0 0.0
    %3674 = vmatprep.subr.mxu0 0.0
    %3675 = vmatpush2.msra.mxu0 0.0
    %3676 = vmatprep.subr.mxu0 0.0
    %3677 = vmatpush2.msra.mxu0 0.0
    %3678 = vmatprep.subr.mxu0 0.0
    %3679 = vmatpush2.msra.mxu0 0.0
    %3680 = vmatprep.subr.mxu0 0.0
    %3681 = vmatpush2.msra.mxu0 0.0
    %3682 = vmatprep.subr.mxu0 0.0
    %3683 = vmatpush2.msra.mxu0 0.0
    %3684 = vmatprep.subr.mxu0 0.0
    %3685 = vmatpush2.msra.mxu0 0.0
    %3686 = vmatprep.subr.mxu0 0.0
    %3687 = vmatpush2.msra.mxu0 0.0
    %3688 = vmatprep.subr.mxu0 0.0
    %3689 = vmatpush2.msra.mxu0 0.0
    %3690 = vmatprep.subr.mxu0 0.0
    %3691 = vmatpush2.msra.mxu0 0.0
    %3692 = vmatprep.subr.mxu0 0.0
    %3693 = vmatpush2.msra.mxu0 0.0
    %3694 = vmatprep.subr.mxu0 0.0
    %3695 = vmatpush2.msra.mxu0 0.0
    %3696 = vmatprep.subr.mxu0 0.0
    %3697 = vmatpush2.msra.mxu0 0.0
    %3698 = vmatprep.subr.mxu0 0.0
    %3699 = vmatpush2.msra.mxu0 0.0
    %3700 = vmatprep.subr.mxu0 0.0
    %3701 = vmatpush2.msra.mxu0 0.0
    %3702 = vmatprep.subr.mxu0 0.0
    %3703 = vmatpush2.msra.mxu0 0.0
    %3704 = vmatprep.mubr.f32.mxu0 0.0
    %3705 = vmatmul.mubr.f32.gmra.mxu0 %v261
    %v3706 = vpop.f32.mrf.mxu0
    %v3707 = vadd.f32 0.0, %v3706
    %v3708 = vpop.f32.mrf.mxu0
    %v3709 = vadd.f32 0.0, %v3708
    %3710 = vmatprep.mubr.f32.mxu0 0.0
    %3711 = vmatmul.mubr.f32.gmra.mxu0 %v264
    %v3712 = vpop.f32.mrf.mxu0
    %v3713 = vadd.f32 0.0, %v3712
    %v3714 = vpop.f32.mrf.mxu0
    %v3715 = vadd.f32 0.0, %v3714
    %3716 = vmatprep.mubr.f32.mxu0 0.0
    %3717 = vmatmul.mubr.f32.gmra.mxu0 %v267
    %v3718 = vpop.f32.mrf.mxu0
    %v3719 = vadd.f32 0.0, %v3718
    %v3720 = vpop.f32.mrf.mxu0
    %v3721 = vadd.f32 0.0, %v3720
    %3722 = vmatprep.mubr.f32.mxu0 0.0
    %3723 = vmatmul.mubr.f32.gmra.mxu0 %v270
    %v3724 = vpop.f32.mrf.mxu0
    %v3725 = vadd.f32 0.0, %v3724
    %v3726 = vpop.f32.mrf.mxu0
    %v3727 = vadd.f32 0.0, %v3726
    %3728 = vmatprep.mubr.f32.mxu0 0.0
    %3729 = vmatmul.mubr.f32.gmra.mxu0 %v273
    %v3730 = vpop.f32.mrf.mxu0
    %v3731 = vadd.f32 0.0, %v3730
    %v3732 = vpop.f32.mrf.mxu0
    %v3733 = vadd.f32 0.0, %v3732
    %3734 = vmatprep.mubr.f32.mxu0 0.0
    %3735 = vmatmul.mubr.f32.gmra.mxu0 %v276
    %v3736 = vpop.f32.mrf.mxu0
    %v3737 = vadd.f32 0.0, %v3736
    %v3738 = vpop.f32.mrf.mxu0
    %v3739 = vadd.f32 0.0, %v3738
    %3740 = vmatprep.mubr.f32.mxu0 0.0
    %3741 = vmatmul.mubr.f32.gmra.mxu0 %v279
    %v3742 = vpop.f32.mrf.mxu0
    %v3743 = vadd.f32 0.0, %v3742
    %v3744 = vpop.f32.mrf.mxu0
    %v3745 = vadd.f32 0.0, %v3744
    %3746 = vmatprep.mubr.f32.mxu0 0.0
    %3747 = vmatmul.mubr.f32.gmra.mxu0 %v282
    %v3748 = vpop.f32.mrf.mxu0
    %v3749 = vadd.f32 0.0, %v3748
    %v3750 = vpop.f32.mrf.mxu0
    %v3751 = vadd.f32 0.0, %v3750
    %3752 = vmatprep.mubr.f32.mxu0 0.0
    %3753 = vmatmul.mubr.f32.gmra.mxu0 %v285
    %v3754 = vpop.f32.mrf.mxu0
    %v3755 = vadd.f32 0.0, %v3754
    %v3756 = vpop.f32.mrf.mxu0
    %v3757 = vadd.f32 0.0, %v3756
    %3758 = vmatprep.mubr.f32.mxu0 0.0
    %3759 = vmatmul.mubr.f32.gmra.mxu0 %v288
    %v3760 = vpop.f32.mrf.mxu0
    %v3761 = vadd.f32 0.0, %v3760
    %v3762 = vpop.f32.mrf.mxu0
    %v3763 = vadd.f32 0.0, %v3762
    %3764 = vmatprep.mubr.f32.mxu0 0.0
    %3765 = vmatmul.mubr.f32.gmra.mxu0 %v291
    %v3766 = vpop.f32.mrf.mxu0
    %v3767 = vadd.f32 0.0, %v3766
    %v3768 = vpop.f32.mrf.mxu0
    %v3769 = vadd.f32 0.0, %v3768
    %3770 = vmatprep.mubr.f32.mxu0 0.0
    %3771 = vmatmul.mubr.f32.gmra.mxu0 %v294
    %v3772 = vpop.f32.mrf.mxu0
    %v3773 = vadd.f32 0.0, %v3772
    %v3774 = vpop.f32.mrf.mxu0
    %v3775 = vadd.f32 0.0, %v3774
    %3776 = vmatprep.mubr.f32.mxu0 0.0
    %3777 = vmatmul.mubr.f32.gmra.mxu0 %v297
    %v3778 = vpop.f32.mrf.mxu0
    %v3779 = vadd.f32 0.0, %v3778
    %v3780 = vpop.f32.mrf.mxu0
    %v3781 = vadd.f32 0.0, %v3780
    %3782 = vmatprep.mubr.f32.mxu0 0.0
    %3783 = vmatmul.mubr.f32.gmra.mxu0 %v300
    %v3784 = vpop.f32.mrf.mxu0
    %v3785 = vadd.f32 0.0, %v3784
    %v3786 = vpop.f32.mrf.mxu0
    %v3787 = vadd.f32 0.0, %v3786
    %3788 = vmatprep.mubr.f32.mxu0 0.0
    %3789 = vmatmul.mubr.f32.gmra.mxu0 %v303
    %v3790 = vpop.f32.mrf.mxu0
    %v3791 = vadd.f32 0.0, %v3790
    %v3792 = vpop.f32.mrf.mxu0
    %v3793 = vadd.f32 0.0, %v3792
    %3794 = vmatprep.mubr.f32.mxu0 0.0
    %3795 = vmatmul.mubr.f32.gmra.mxu0 %v306
    %v3796 = vpop.f32.mrf.mxu0
    %v3797 = vadd.f32 0.0, %v3796
    %v3798 = vpop.f32.mrf.mxu0
    %v3799 = vadd.f32 0.0, %v3798
    %3800 = vmatprep.mubr.f32.mxu0 0.0
    %3801 = vmatmul.mubr.f32.gmra.mxu0 %v309
    %v3802 = vpop.f32.mrf.mxu0
    %v3803 = vadd.f32 0.0, %v3802
    %v3804 = vpop.f32.mrf.mxu0
    %v3805 = vadd.f32 0.0, %v3804
    %3806 = vmatprep.mubr.f32.mxu0 0.0
    %3807 = vmatmul.mubr.f32.gmra.mxu0 %v312
    %v3808 = vpop.f32.mrf.mxu0
    %v3809 = vadd.f32 0.0, %v3808
    %v3810 = vpop.f32.mrf.mxu0
    %v3811 = vadd.f32 0.0, %v3810
    %3812 = vmatprep.mubr.f32.mxu0 0.0
    %3813 = vmatmul.mubr.f32.gmra.mxu0 %v315
    %v3814 = vpop.f32.mrf.mxu0
    %v3815 = vadd.f32 0.0, %v3814
    %v3816 = vpop.f32.mrf.mxu0
    %v3817 = vadd.f32 0.0, %v3816
    %3818 = vmatprep.mubr.f32.mxu0 0.0
    %3819 = vmatmul.mubr.f32.gmra.mxu0 %v318
    %v3820 = vpop.f32.mrf.mxu0
    %v3821 = vadd.f32 0.0, %v3820
    %v3822 = vpop.f32.mrf.mxu0
    %v3823 = vadd.f32 0.0, %v3822
    %3824 = vmatprep.mubr.f32.mxu0 0.0
    %3825 = vmatmul.mubr.f32.gmra.mxu0 %v321
    %v3826 = vpop.f32.mrf.mxu0
    %v3827 = vadd.f32 0.0, %v3826
    %v3828 = vpop.f32.mrf.mxu0
    %v3829 = vadd.f32 0.0, %v3828
    %3830 = vmatprep.mubr.f32.mxu0 0.0
    %3831 = vmatmul.mubr.f32.gmra.mxu0 %v1618
    %v3832 = vpop.f32.mrf.mxu0
    %v3833 = vadd.f32 0.0, %v3832
    %v3834 = vpop.f32.mrf.mxu0
    %v3835 = vadd.f32 0.0, %v3834
    %3836 = vmatprep.mubr.f32.mxu0 0.0
    %3837 = vmatmul.mubr.f32.gmra.mxu0 %v2410
    %v3838 = vpop.f32.mrf.mxu0
    %v3839 = vadd.f32 0.0, %v3838
    %v3840 = vpop.f32.mrf.mxu0
    %v3841 = vadd.f32 0.0, %v3840
    %3842 = vmatprep.mubr.f32.mxu0 0.0
    %3843 = vmatmul.mubr.f32.gmra.mxu0 %v3202
    %v3844 = vpop.f32.mrf.mxu0
    %v3845 = vadd.f32 0.0, %v3844
    %v3846 = vpop.f32.mrf.mxu0
    %v3847 = vadd.f32 0.0, %v3846
    %3848 = vdwg.mxu0
    %v3849 = vadd.f32 %v3057, %v3289
    %v3850 = vadd.f32 %v3058, %v3291
    %v3851 = vadd.f32 %v3059, %v3498
    %v3852 = vadd.f32 %v3060, %v3500
    %v3853 = vadd.f32 %v3061, %v3707
    %v3854 = vadd.f32 %v3062, %v3709
    %v3855 = vadd.f32 %v3063, %v3295
    %v3856 = vadd.f32 %v3064, %v3297
    %v3857 = vadd.f32 %v3065, %v3504
    %v3858 = vadd.f32 %v3066, %v3506
    %v3859 = vadd.f32 %v3067, %v3713
    %v3860 = vadd.f32 %v3068, %v3715
    %v3861 = vadd.f32 %v3069, %v3301
    %v3862 = vadd.f32 %v3070, %v3303
    %v3863 = vadd.f32 %v3071, %v3510
    %v3864 = vadd.f32 %v3072, %v3512
    %v3865 = vadd.f32 %v3073, %v3719
    %v3866 = vadd.f32 %v3074, %v3721
    %v3867 = vadd.f32 %v3075, %v3307
    %v3868 = vadd.f32 %v3076, %v3309
    %v3869 = vadd.f32 %v3077, %v3516
    %v3870 = vadd.f32 %v3078, %v3518
    %v3871 = vadd.f32 %v3079, %v3725
    %v3872 = vadd.f32 %v3080, %v3727
    %v3873 = vadd.f32 %v3081, %v3313
    %v3874 = vadd.f32 %v3082, %v3315
    %v3875 = vadd.f32 %v3083, %v3522
    %v3876 = vadd.f32 %v3084, %v3524
    %v3877 = vadd.f32 %v3085, %v3731
    %v3878 = vadd.f32 %v3086, %v3733
    %v3879 = vadd.f32 %v3087, %v3319
    %v3880 = vadd.f32 %v3088, %v3321
    %v3881 = vadd.f32 %v3089, %v3528
    %v3882 = vadd.f32 %v3090, %v3530
    %v3883 = vadd.f32 %v3091, %v3737
    %v3884 = vadd.f32 %v3092, %v3739
    %v3885 = vadd.f32 %v3093, %v3325
    %v3886 = vadd.f32 %v3094, %v3327
    %v3887 = vadd.f32 %v3095, %v3534
    %v3888 = vadd.f32 %v3096, %v3536
    %v3889 = vadd.f32 %v3097, %v3743
    %v3890 = vadd.f32 %v3098, %v3745
    %v3891 = vadd.f32 %v3099, %v3331
    %v3892 = vadd.f32 %v3100, %v3333
    %v3893 = vadd.f32 %v3101, %v3540
    %v3894 = vadd.f32 %v3102, %v3542
    %v3895 = vadd.f32 %v3103, %v3749
    %v3896 = vadd.f32 %v3104, %v3751
    %v3897 = vadd.f32 %v3105, %v3337
    %v3898 = vadd.f32 %v3106, %v3339
    %v3899 = vadd.f32 %v3107, %v3546
    %v3900 = vadd.f32 %v3108, %v3548
    %v3901 = vadd.f32 %v3109, %v3755
    %v3902 = vadd.f32 %v3110, %v3757
    %v3903 = vadd.f32 %v3111, %v3343
    %v3904 = vadd.f32 %v3112, %v3345
    %v3905 = vadd.f32 %v3113, %v3552
    %v3906 = vadd.f32 %v3114, %v3554
    %v3907 = vadd.f32 %v3115, %v3761
    %v3908 = vadd.f32 %v3116, %v3763
    %v3909 = vadd.f32 %v3117, %v3349
    %v3910 = vadd.f32 %v3118, %v3351
    %v3911 = vadd.f32 %v3119, %v3558
    %v3912 = vadd.f32 %v3120, %v3560
    %v3913 = vadd.f32 %v3121, %v3767
    %v3914 = vadd.f32 %v3122, %v3769
    %v3915 = vadd.f32 %v3123, %v3355
    %v3916 = vadd.f32 %v3124, %v3357
    %v3917 = vadd.f32 %v3125, %v3564
    %v3918 = vadd.f32 %v3126, %v3566
    %v3919 = vadd.f32 %v3127, %v3773
    %v3920 = vadd.f32 %v3128, %v3775
    %v3921 = vadd.f32 %v3129, %v3361
    %v3922 = vadd.f32 %v3130, %v3363
    %v3923 = vadd.f32 %v3131, %v3570
    %v3924 = vadd.f32 %v3132, %v3572
    %v3925 = vadd.f32 %v3133, %v3779
    %v3926 = vadd.f32 %v3134, %v3781
    %v3927 = vadd.f32 %v3135, %v3367
    %v3928 = vadd.f32 %v3136, %v3369
    %v3929 = vadd.f32 %v3137, %v3576
    %v3930 = vadd.f32 %v3138, %v3578
    %v3931 = vadd.f32 %v3139, %v3785
    %v3932 = vadd.f32 %v3140, %v3787
    %v3933 = vadd.f32 %v3141, %v3373
    %v3934 = vadd.f32 %v3142, %v3375
    %v3935 = vadd.f32 %v3143, %v3582
    %v3936 = vadd.f32 %v3144, %v3584
    %v3937 = vadd.f32 %v3145, %v3791
    %v3938 = vadd.f32 %v3146, %v3793
    %v3939 = vadd.f32 %v3147, %v3379
    %v3940 = vadd.f32 %v3148, %v3381
    %v3941 = vadd.f32 %v3149, %v3588
    %v3942 = vadd.f32 %v3150, %v3590
    %v3943 = vadd.f32 %v3151, %v3797
    %v3944 = vadd.f32 %v3152, %v3799
    %v3945 = vadd.f32 %v3153, %v3385
    %v3946 = vadd.f32 %v3154, %v3387
    %v3947 = vadd.f32 %v3155, %v3594
    %v3948 = vadd.f32 %v3156, %v3596
    %v3949 = vadd.f32 %v3157, %v3803
    %v3950 = vadd.f32 %v3158, %v3805
    %v3951 = vadd.f32 %v3159, %v3391
    %v3952 = vadd.f32 %v3160, %v3393
    %v3953 = vadd.f32 %v3161, %v3600
    %v3954 = vadd.f32 %v3162, %v3602
    %v3955 = vadd.f32 %v3163, %v3809
    %v3956 = vadd.f32 %v3164, %v3811
    %v3957 = vadd.f32 %v3165, %v3397
    %v3958 = vadd.f32 %v3166, %v3399
    %v3959 = vadd.f32 %v3167, %v3606
    %v3960 = vadd.f32 %v3168, %v3608
    %v3961 = vadd.f32 %v3169, %v3815
    %v3962 = vadd.f32 %v3170, %v3817
    %v3963 = vadd.f32 %v3171, %v3403
    %v3964 = vadd.f32 %v3172, %v3405
    %v3965 = vadd.f32 %v3173, %v3612
    %v3966 = vadd.f32 %v3174, %v3614
    %v3967 = vadd.f32 %v3175, %v3821
    %v3968 = vadd.f32 %v3176, %v3823
    %v3969 = vadd.f32 %v3177, %v3409
    %v3970 = vadd.f32 %v3178, %v3411
    %v3971 = vadd.f32 %v3179, %v3618
    %v3972 = vadd.f32 %v3180, %v3620
    %v3973 = vadd.f32 %v3181, %v3827
    %v3974 = vadd.f32 %v3182, %v3829
    %v3975 = vadd.f32 %v3183, %v3415
    %v3976 = vadd.f32 %v3184, %v3417
    %v3977 = vadd.f32 %v3185, %v3624
    %v3978 = vadd.f32 %v3186, %v3626
    %v3979 = vadd.f32 %v3187, %v3833
    %v3980 = vadd.f32 %v3188, %v3835
    %v3981 = vadd.f32 %v3189, %v3421
    %v3982 = vadd.f32 %v3190, %v3423
    %v3983 = vadd.f32 %v3191, %v3630
    %v3984 = vadd.f32 %v3192, %v3632
    %v3985 = vadd.f32 %v3193, %v3839
    %v3986 = vadd.f32 %v3194, %v3841
    %v3987 = vadd.f32 %v3195, %v3427
    %v3988 = vadd.f32 %v3196, %v3429
    %v3989 = vadd.f32 %v3197, %v3636
    %v3990 = vadd.f32 %v3198, %v3638
    %v3991 = vadd.f32 %v3199, %v3845
    %v3992 = vadd.f32 %v3200, %v3847
    %v3993 = vld [vmem:[#allocation4] sm:$0x3f]
    %v3995 = vlaneseq
    %v3996 = vshrl.u32 %v3995, 7
    %v3997 = vsub.s32 0, %v3996
    %v3998 = vrot.slane %v3993, %v3997
    %v3999 = vlaneseq
    %v4000 = vshrl.u32 %v3999, 7
    %v4001 = vsub.s32 1, %v4000
    %v4002 = vrot.slane %v3993, %v4001
    %v4003 = vlaneseq
    %v4004 = vshrl.u32 %v4003, 7
    %v4005 = vsub.s32 2, %v4004
    %v4006 = vrot.slane %v3993, %v4005
    %v4007 = vlaneseq
    %v4008 = vshrl.u32 %v4007, 7
    %v4009 = vsub.s32 3, %v4008
    %v4010 = vrot.slane %v3993, %v4009
    %v4011 = vlaneseq
    %v4012 = vshrl.u32 %v4011, 7
    %v4013 = vsub.s32 4, %v4012
    %v4014 = vrot.slane %v3993, %v4013
    %v4015 = vlaneseq
    %v4016 = vshrl.u32 %v4015, 7
    %v4017 = vsub.s32 5, %v4016
    %v4018 = vrot.slane %v3993, %v4017
    %v4025 = vadd.f32 %v3849, %v3998
    %v4026 = vadd.f32 %v3850, %v4002
    %v4027 = vadd.f32 %v3851, %v4006
    %v4028 = vadd.f32 %v3852, %v4010
    %v4029 = vadd.f32 %v3853, %v4014
    %v4030 = vadd.f32 %v3854, %v4018
    %v4031 = vadd.f32 %v3855, %v3998
    %v4032 = vadd.f32 %v3856, %v4002
    %v4033 = vadd.f32 %v3857, %v4006
    %v4034 = vadd.f32 %v3858, %v4010
    %v4035 = vadd.f32 %v3859, %v4014
    %v4036 = vadd.f32 %v3860, %v4018
    %v4037 = vadd.f32 %v3861, %v3998
    %v4038 = vadd.f32 %v3862, %v4002
    %v4039 = vadd.f32 %v3863, %v4006
    %v4040 = vadd.f32 %v3864, %v4010
    %v4041 = vadd.f32 %v3865, %v4014
    %v4042 = vadd.f32 %v3866, %v4018
    %v4043 = vadd.f32 %v3867, %v3998
    %v4044 = vadd.f32 %v3868, %v4002
    %v4045 = vadd.f32 %v3869, %v4006
    %v4046 = vadd.f32 %v3870, %v4010
    %v4047 = vadd.f32 %v3871, %v4014
    %v4048 = vadd.f32 %v3872, %v4018
    %v4049 = vadd.f32 %v3873, %v3998
    %v4050 = vadd.f32 %v3874, %v4002
    %v4051 = vadd.f32 %v3875, %v4006
    %v4052 = vadd.f32 %v3876, %v4010
    %v4053 = vadd.f32 %v3877, %v4014
    %v4054 = vadd.f32 %v3878, %v4018
    %v4055 = vadd.f32 %v3879, %v3998
    %v4056 = vadd.f32 %v3880, %v4002
    %v4057 = vadd.f32 %v3881, %v4006
    %v4058 = vadd.f32 %v3882, %v4010
    %v4059 = vadd.f32 %v3883, %v4014
    %v4060 = vadd.f32 %v3884, %v4018
    %v4061 = vadd.f32 %v3885, %v3998
    %v4062 = vadd.f32 %v3886, %v4002
    %v4063 = vadd.f32 %v3887, %v4006
    %v4064 = vadd.f32 %v3888, %v4010
    %v4065 = vadd.f32 %v3889, %v4014
    %v4066 = vadd.f32 %v3890, %v4018
    %v4067 = vadd.f32 %v3891, %v3998
    %v4068 = vadd.f32 %v3892, %v4002
    %v4069 = vadd.f32 %v3893, %v4006
    %v4070 = vadd.f32 %v3894, %v4010
    %v4071 = vadd.f32 %v3895, %v4014
    %v4072 = vadd.f32 %v3896, %v4018
    %v4073 = vadd.f32 %v3897, %v3998
    %v4074 = vadd.f32 %v3898, %v4002
    %v4075 = vadd.f32 %v3899, %v4006
    %v4076 = vadd.f32 %v3900, %v4010
    %v4077 = vadd.f32 %v3901, %v4014
    %v4078 = vadd.f32 %v3902, %v4018
    %v4079 = vadd.f32 %v3903, %v3998
    %v4080 = vadd.f32 %v3904, %v4002
    %v4081 = vadd.f32 %v3905, %v4006
    %v4082 = vadd.f32 %v3906, %v4010
    %v4083 = vadd.f32 %v3907, %v4014
    %v4084 = vadd.f32 %v3908, %v4018
    %v4085 = vadd.f32 %v3909, %v3998
    %v4086 = vadd.f32 %v3910, %v4002
    %v4087 = vadd.f32 %v3911, %v4006
    %v4088 = vadd.f32 %v3912, %v4010
    %v4089 = vadd.f32 %v3913, %v4014
    %v4090 = vadd.f32 %v3914, %v4018
    %v4091 = vadd.f32 %v3915, %v3998
    %v4092 = vadd.f32 %v3916, %v4002
    %v4093 = vadd.f32 %v3917, %v4006
    %v4094 = vadd.f32 %v3918, %v4010
    %v4095 = vadd.f32 %v3919, %v4014
    %v4096 = vadd.f32 %v3920, %v4018
    %v4097 = vadd.f32 %v3921, %v3998
    %v4098 = vadd.f32 %v3922, %v4002
    %v4099 = vadd.f32 %v3923, %v4006
    %v4100 = vadd.f32 %v3924, %v4010
    %v4101 = vadd.f32 %v3925, %v4014
    %v4102 = vadd.f32 %v3926, %v4018
    %v4103 = vadd.f32 %v3927, %v3998
    %v4104 = vadd.f32 %v3928, %v4002
    %v4105 = vadd.f32 %v3929, %v4006
    %v4106 = vadd.f32 %v3930, %v4010
    %v4107 = vadd.f32 %v3931, %v4014
    %v4108 = vadd.f32 %v3932, %v4018
    %v4109 = vadd.f32 %v3933, %v3998
    %v4110 = vadd.f32 %v3934, %v4002
    %v4111 = vadd.f32 %v3935, %v4006
    %v4112 = vadd.f32 %v3936, %v4010
    %v4113 = vadd.f32 %v3937, %v4014
    %v4114 = vadd.f32 %v3938, %v4018
    %v4115 = vadd.f32 %v3939, %v3998
    %v4116 = vadd.f32 %v3940, %v4002
    %v4117 = vadd.f32 %v3941, %v4006
    %v4118 = vadd.f32 %v3942, %v4010
    %v4119 = vadd.f32 %v3943, %v4014
    %v4120 = vadd.f32 %v3944, %v4018
    %v4121 = vadd.f32 %v3945, %v3998
    %v4122 = vadd.f32 %v3946, %v4002
    %v4123 = vadd.f32 %v3947, %v4006
    %v4124 = vadd.f32 %v3948, %v4010
    %v4125 = vadd.f32 %v3949, %v4014
    %v4126 = vadd.f32 %v3950, %v4018
    %v4127 = vadd.f32 %v3951, %v3998
    %v4128 = vadd.f32 %v3952, %v4002
    %v4129 = vadd.f32 %v3953, %v4006
    %v4130 = vadd.f32 %v3954, %v4010
    %v4131 = vadd.f32 %v3955, %v4014
    %v4132 = vadd.f32 %v3956, %v4018
    %v4133 = vadd.f32 %v3957, %v3998
    %v4134 = vadd.f32 %v3958, %v4002
    %v4135 = vadd.f32 %v3959, %v4006
    %v4136 = vadd.f32 %v3960, %v4010
    %v4137 = vadd.f32 %v3961, %v4014
    %v4138 = vadd.f32 %v3962, %v4018
    %v4139 = vadd.f32 %v3963, %v3998
    %v4140 = vadd.f32 %v3964, %v4002
    %v4141 = vadd.f32 %v3965, %v4006
    %v4142 = vadd.f32 %v3966, %v4010
    %v4143 = vadd.f32 %v3967, %v4014
    %v4144 = vadd.f32 %v3968, %v4018
    %v4145 = vadd.f32 %v3969, %v3998
    %v4146 = vadd.f32 %v3970, %v4002
    %v4147 = vadd.f32 %v3971, %v4006
    %v4148 = vadd.f32 %v3972, %v4010
    %v4149 = vadd.f32 %v3973, %v4014
    %v4150 = vadd.f32 %v3974, %v4018
    %v4151 = vadd.f32 %v3975, %v3998
    %v4152 = vadd.f32 %v3976, %v4002
    %v4153 = vadd.f32 %v3977, %v4006
    %v4154 = vadd.f32 %v3978, %v4010
    %v4155 = vadd.f32 %v3979, %v4014
    %v4156 = vadd.f32 %v3980, %v4018
    %v4157 = vadd.f32 %v3981, %v3998
    %v4158 = vadd.f32 %v3982, %v4002
    %v4159 = vadd.f32 %v3983, %v4006
    %v4160 = vadd.f32 %v3984, %v4010
    %v4161 = vadd.f32 %v3985, %v4014
    %v4162 = vadd.f32 %v3986, %v4018
    %v4163 = vadd.f32 %v3987, %v3998
    %v4164 = vadd.f32 %v3988, %v4002
    %v4165 = vadd.f32 %v3989, %v4006
    %v4166 = vadd.f32 %v3990, %v4010
    %v4167 = vadd.f32 %v3991, %v4014
    %v4168 = vadd.f32 %v3992, %v4018
    %v4169 = vmax.f32 %v4025, 0.0
    %v4170 = vmax.f32 %v4026, 0.0
    %v4171 = vmax.f32 %v4027, 0.0
    %v4172 = vmax.f32 %v4028, 0.0
    %v4173 = vmax.f32 %v4029, 0.0
    %v4174 = vmax.f32 %v4030, 0.0
    %v4175 = vmax.f32 %v4031, 0.0
    %v4176 = vmax.f32 %v4032, 0.0
    %v4177 = vmax.f32 %v4033, 0.0
    %v4178 = vmax.f32 %v4034, 0.0
    %v4179 = vmax.f32 %v4035, 0.0
    %v4180 = vmax.f32 %v4036, 0.0
    %v4181 = vmax.f32 %v4037, 0.0
    %v4182 = vmax.f32 %v4038, 0.0
    %v4183 = vmax.f32 %v4039, 0.0
    %v4184 = vmax.f32 %v4040, 0.0
    %v4185 = vmax.f32 %v4041, 0.0
    %v4186 = vmax.f32 %v4042, 0.0
    %v4187 = vmax.f32 %v4043, 0.0
    %v4188 = vmax.f32 %v4044, 0.0
    %v4189 = vmax.f32 %v4045, 0.0
    %v4190 = vmax.f32 %v4046, 0.0
    %v4191 = vmax.f32 %v4047, 0.0
    %v4192 = vmax.f32 %v4048, 0.0
    %v4193 = vmax.f32 %v4049, 0.0
    %v4194 = vmax.f32 %v4050, 0.0
    %v4195 = vmax.f32 %v4051, 0.0
    %v4196 = vmax.f32 %v4052, 0.0
    %v4197 = vmax.f32 %v4053, 0.0
    %v4198 = vmax.f32 %v4054, 0.0
    %v4199 = vmax.f32 %v4055, 0.0
    %v4200 = vmax.f32 %v4056, 0.0
    %v4201 = vmax.f32 %v4057, 0.0
    %v4202 = vmax.f32 %v4058, 0.0
    %v4203 = vmax.f32 %v4059, 0.0
    %v4204 = vmax.f32 %v4060, 0.0
    %v4205 = vmax.f32 %v4061, 0.0
    %v4206 = vmax.f32 %v4062, 0.0
    %v4207 = vmax.f32 %v4063, 0.0
    %v4208 = vmax.f32 %v4064, 0.0
    %v4209 = vmax.f32 %v4065, 0.0
    %v4210 = vmax.f32 %v4066, 0.0
    %v4211 = vmax.f32 %v4067, 0.0
    %v4212 = vmax.f32 %v4068, 0.0
    %v4213 = vmax.f32 %v4069, 0.0
    %v4214 = vmax.f32 %v4070, 0.0
    %v4215 = vmax.f32 %v4071, 0.0
    %v4216 = vmax.f32 %v4072, 0.0
    %v4217 = vmax.f32 %v4073, 0.0
    %v4218 = vmax.f32 %v4074, 0.0
    %v4219 = vmax.f32 %v4075, 0.0
    %v4220 = vmax.f32 %v4076, 0.0
    %v4221 = vmax.f32 %v4077, 0.0
    %v4222 = vmax.f32 %v4078, 0.0
    %v4223 = vmax.f32 %v4079, 0.0
    %v4224 = vmax.f32 %v4080, 0.0
    %v4225 = vmax.f32 %v4081, 0.0
    %v4226 = vmax.f32 %v4082, 0.0
    %v4227 = vmax.f32 %v4083, 0.0
    %v4228 = vmax.f32 %v4084, 0.0
    %v4229 = vmax.f32 %v4085, 0.0
    %v4230 = vmax.f32 %v4086, 0.0
    %v4231 = vmax.f32 %v4087, 0.0
    %v4232 = vmax.f32 %v4088, 0.0
    %v4233 = vmax.f32 %v4089, 0.0
    %v4234 = vmax.f32 %v4090, 0.0
    %v4235 = vmax.f32 %v4091, 0.0
    %v4236 = vmax.f32 %v4092, 0.0
    %v4237 = vmax.f32 %v4093, 0.0
    %v4238 = vmax.f32 %v4094, 0.0
    %v4239 = vmax.f32 %v4095, 0.0
    %v4240 = vmax.f32 %v4096, 0.0
    %v4241 = vmax.f32 %v4097, 0.0
    %v4242 = vmax.f32 %v4098, 0.0
    %v4243 = vmax.f32 %v4099, 0.0
    %v4244 = vmax.f32 %v4100, 0.0
    %v4245 = vmax.f32 %v4101, 0.0
    %v4246 = vmax.f32 %v4102, 0.0
    %v4247 = vmax.f32 %v4103, 0.0
    %v4248 = vmax.f32 %v4104, 0.0
    %v4249 = vmax.f32 %v4105, 0.0
    %v4250 = vmax.f32 %v4106, 0.0
    %v4251 = vmax.f32 %v4107, 0.0
    %v4252 = vmax.f32 %v4108, 0.0
    %v4253 = vmax.f32 %v4109, 0.0
    %v4254 = vmax.f32 %v4110, 0.0
    %v4255 = vmax.f32 %v4111, 0.0
    %v4256 = vmax.f32 %v4112, 0.0
    %v4257 = vmax.f32 %v4113, 0.0
    %v4258 = vmax.f32 %v4114, 0.0
    %v4259 = vmax.f32 %v4115, 0.0
    %v4260 = vmax.f32 %v4116, 0.0
    %v4261 = vmax.f32 %v4117, 0.0
    %v4262 = vmax.f32 %v4118, 0.0
    %v4263 = vmax.f32 %v4119, 0.0
    %v4264 = vmax.f32 %v4120, 0.0
    %v4265 = vmax.f32 %v4121, 0.0
    %v4266 = vmax.f32 %v4122, 0.0
    %v4267 = vmax.f32 %v4123, 0.0
    %v4268 = vmax.f32 %v4124, 0.0
    %v4269 = vmax.f32 %v4125, 0.0
    %v4270 = vmax.f32 %v4126, 0.0
    %v4271 = vmax.f32 %v4127, 0.0
    %v4272 = vmax.f32 %v4128, 0.0
    %v4273 = vmax.f32 %v4129, 0.0
    %v4274 = vmax.f32 %v4130, 0.0
    %v4275 = vmax.f32 %v4131, 0.0
    %v4276 = vmax.f32 %v4132, 0.0
    %v4277 = vmax.f32 %v4133, 0.0
    %v4278 = vmax.f32 %v4134, 0.0
    %v4279 = vmax.f32 %v4135, 0.0
    %v4280 = vmax.f32 %v4136, 0.0
    %v4281 = vmax.f32 %v4137, 0.0
    %v4282 = vmax.f32 %v4138, 0.0
    %v4283 = vmax.f32 %v4139, 0.0
    %v4284 = vmax.f32 %v4140, 0.0
    %v4285 = vmax.f32 %v4141, 0.0
    %v4286 = vmax.f32 %v4142, 0.0
    %v4287 = vmax.f32 %v4143, 0.0
    %v4288 = vmax.f32 %v4144, 0.0
    %v4289 = vmax.f32 %v4145, 0.0
    %v4290 = vmax.f32 %v4146, 0.0
    %v4291 = vmax.f32 %v4147, 0.0
    %v4292 = vmax.f32 %v4148, 0.0
    %v4293 = vmax.f32 %v4149, 0.0
    %v4294 = vmax.f32 %v4150, 0.0
    %v4295 = vmax.f32 %v4151, 0.0
    %v4296 = vmax.f32 %v4152, 0.0
    %v4297 = vmax.f32 %v4153, 0.0
    %v4298 = vmax.f32 %v4154, 0.0
    %v4299 = vmax.f32 %v4155, 0.0
    %v4300 = vmax.f32 %v4156, 0.0
    %v4301 = vmax.f32 %v4157, 0.0
    %v4302 = vmax.f32 %v4158, 0.0
    %v4303 = vmax.f32 %v4159, 0.0
    %v4304 = vmax.f32 %v4160, 0.0
    %v4305 = vmax.f32 %v4161, 0.0
    %v4306 = vmax.f32 %v4162, 0.0
    %v4307 = vmax.f32 %v4163, 0.0
    %v4308 = vmax.f32 %v4164, 0.0
    %v4309 = vmax.f32 %v4165, 0.0
    %v4310 = vmax.f32 %v4166, 0.0
    %v4311 = vmax.f32 %v4167, 0.0
    %v4312 = vmax.f32 %v4168, 0.0
    %v4313 = vmax.f32 %v4169, %v4172
    %v4314 = vmax.f32 %v4170, %v4173
    %v4315 = vmax.f32 %v4171, %v4174
    %v4316 = vmax.f32 %v4175, %v4178
    %v4317 = vmax.f32 %v4176, %v4179
    %v4318 = vmax.f32 %v4177, %v4180
    %v4319 = vmax.f32 %v4181, %v4184
    %v4320 = vmax.f32 %v4182, %v4185
    %v4321 = vmax.f32 %v4183, %v4186
    %v4322 = vmax.f32 %v4187, %v4190
    %v4323 = vmax.f32 %v4188, %v4191
    %v4324 = vmax.f32 %v4189, %v4192
    %v4325 = vmax.f32 %v4193, %v4196
    %v4326 = vmax.f32 %v4194, %v4197
    %v4327 = vmax.f32 %v4195, %v4198
    %v4328 = vmax.f32 %v4199, %v4202
    %v4329 = vmax.f32 %v4200, %v4203
    %v4330 = vmax.f32 %v4201, %v4204
    %v4331 = vmax.f32 %v4205, %v4208
    %v4332 = vmax.f32 %v4206, %v4209
    %v4333 = vmax.f32 %v4207, %v4210
    %v4334 = vmax.f32 %v4211, %v4214
    %v4335 = vmax.f32 %v4212, %v4215
    %v4336 = vmax.f32 %v4213, %v4216
    %v4337 = vmax.f32 %v4217, %v4220
    %v4338 = vmax.f32 %v4218, %v4221
    %v4339 = vmax.f32 %v4219, %v4222
    %v4340 = vmax.f32 %v4223, %v4226
    %v4341 = vmax.f32 %v4224, %v4227
    %v4342 = vmax.f32 %v4225, %v4228
    %v4343 = vmax.f32 %v4229, %v4232
    %v4344 = vmax.f32 %v4230, %v4233
    %v4345 = vmax.f32 %v4231, %v4234
    %v4346 = vmax.f32 %v4235, %v4238
    %v4347 = vmax.f32 %v4236, %v4239
    %v4348 = vmax.f32 %v4237, %v4240
    %v4349 = vmax.f32 %v4241, %v4244
    %v4350 = vmax.f32 %v4242, %v4245
    %v4351 = vmax.f32 %v4243, %v4246
    %v4352 = vmax.f32 %v4247, %v4250
    %v4353 = vmax.f32 %v4248, %v4251
    %v4354 = vmax.f32 %v4249, %v4252
    %v4355 = vmax.f32 %v4253, %v4256
    %v4356 = vmax.f32 %v4254, %v4257
    %v4357 = vmax.f32 %v4255, %v4258
    %v4358 = vmax.f32 %v4259, %v4262
    %v4359 = vmax.f32 %v4260, %v4263
    %v4360 = vmax.f32 %v4261, %v4264
    %v4361 = vmax.f32 %v4265, %v4268
    %v4362 = vmax.f32 %v4266, %v4269
    %v4363 = vmax.f32 %v4267, %v4270
    %v4364 = vmax.f32 %v4271, %v4274
    %v4365 = vmax.f32 %v4272, %v4275
    %v4366 = vmax.f32 %v4273, %v4276
    %v4367 = vmax.f32 %v4277, %v4280
    %v4368 = vmax.f32 %v4278, %v4281
    %v4369 = vmax.f32 %v4279, %v4282
    %v4370 = vmax.f32 %v4283, %v4286
    %v4371 = vmax.f32 %v4284, %v4287
    %v4372 = vmax.f32 %v4285, %v4288
    %v4373 = vmax.f32 %v4289, %v4292
    %v4374 = vmax.f32 %v4290, %v4293
    %v4375 = vmax.f32 %v4291, %v4294
    %v4376 = vmax.f32 %v4295, %v4298
    %v4377 = vmax.f32 %v4296, %v4299
    %v4378 = vmax.f32 %v4297, %v4300
    %v4379 = vmax.f32 %v4301, %v4304
    %v4380 = vmax.f32 %v4302, %v4305
    %v4381 = vmax.f32 %v4303, %v4306
    %v4382 = vmax.f32 %v4307, %v4310
    %v4383 = vmax.f32 %v4308, %v4311
    %v4384 = vmax.f32 %v4309, %v4312
    %v4385 = vmax.f32 %v4313, %v4316
    %v4386 = vmax.f32 %v4314, %v4317
    %v4387 = vmax.f32 %v4315, %v4318
    %v4388 = vmax.f32 %v4319, %v4322
    %v4389 = vmax.f32 %v4320, %v4323
    %v4390 = vmax.f32 %v4321, %v4324
    %v4391 = vmax.f32 %v4325, %v4328
    %v4392 = vmax.f32 %v4326, %v4329
    %v4393 = vmax.f32 %v4327, %v4330
    %v4394 = vmax.f32 %v4331, %v4334
    %v4395 = vmax.f32 %v4332, %v4335
    %v4396 = vmax.f32 %v4333, %v4336
    %v4397 = vmax.f32 %v4337, %v4340
    %v4398 = vmax.f32 %v4338, %v4341
    %v4399 = vmax.f32 %v4339, %v4342
    %v4400 = vmax.f32 %v4343, %v4346
    %v4401 = vmax.f32 %v4344, %v4347
    %v4402 = vmax.f32 %v4345, %v4348
    %v4403 = vmax.f32 %v4349, %v4352
    %v4404 = vmax.f32 %v4350, %v4353
    %v4405 = vmax.f32 %v4351, %v4354
    %v4406 = vmax.f32 %v4355, %v4358
    %v4407 = vmax.f32 %v4356, %v4359
    %v4408 = vmax.f32 %v4357, %v4360
    %v4409 = vmax.f32 %v4361, %v4364
    %v4410 = vmax.f32 %v4362, %v4365
    %v4411 = vmax.f32 %v4363, %v4366
    %v4412 = vmax.f32 %v4367, %v4370
    %v4413 = vmax.f32 %v4368, %v4371
    %v4414 = vmax.f32 %v4369, %v4372
    %v4415 = vmax.f32 %v4373, %v4376
    %v4416 = vmax.f32 %v4374, %v4377
    %v4417 = vmax.f32 %v4375, %v4378
    %v4418 = vmax.f32 %v4379, %v4382
    %v4419 = vmax.f32 %v4380, %v4383
    %v4420 = vmax.f32 %v4381, %v4384
    %v4421 = vld [vmem:[#allocation6] sm:$0xff]
    %v4422 = vld [vmem:[#allocation6 + $0x8] sm:$0xff]
    %v4423 = vld [vmem:[#allocation6 + $0x10] sm:$0xff]
    %v4424 = vld [vmem:[#allocation6 + $0x18] sm:$0xff]
    %v4425 = vld [vmem:[#allocation6 + $0x20] sm:$0xff]
    %v4426 = vld [vmem:[#allocation6 + $0x28] sm:$0xff]
    %v4427 = vld [vmem:[#allocation6 + $0x30] sm:$0xff]
    %v4428 = vld [vmem:[#allocation6 + $0x38] sm:$0xff]
    %v4429 = vld [vmem:[#allocation6 + $0x40] sm:$0xff]
    %v4430 = vld [vmem:[#allocation6 + $0x48] sm:$0xff]
    %v4431 = vld [vmem:[#allocation6 + $0x50] sm:$0xff]
    %v4432 = vld [vmem:[#allocation6 + $0x58] sm:$0xff]
    %v4433 = vld [vmem:[#allocation6 + $0x60] sm:$0xff]
    %v4434 = vld [vmem:[#allocation6 + $0x68] sm:$0xff]
    %v4435 = vld [vmem:[#allocation6 + $0x70] sm:$0xff]
    %v4436 = vld [vmem:[#allocation6 + $0x78] sm:$0xff]
    %v4437 = vld [vmem:[#allocation6 + $0x80] sm:$0xff]
    %v4438 = vld [vmem:[#allocation6 + $0x88] sm:$0xff]
    %v4439 = vld [vmem:[#allocation6 + $0x90] sm:$0xff]
    %v4440 = vld [vmem:[#allocation6 + $0x98] sm:$0xff]
    %v4441 = vld [vmem:[#allocation6 + $0xa0] sm:$0xff]
    %v4442 = vld [vmem:[#allocation6 + $0xa8] sm:$0xff]
    %v4443 = vld [vmem:[#allocation6 + $0xb0] sm:$0xff]
    %v4444 = vld [vmem:[#allocation6 + $0xb8] sm:$0xff]
    %v4445 = vld [vmem:[#allocation6 + $0xc0] sm:$0xff]
    %v4446 = vld [vmem:[#allocation6 + $0xc8] sm:$0xff]
    %v4447 = vld [vmem:[#allocation6 + $0xd0] sm:$0xff]
    %v4448 = vld [vmem:[#allocation6 + $0xd8] sm:$0xff]
    %v4449 = vld [vmem:[#allocation6 + $0xe0] sm:$0xff]
    %v4450 = vld [vmem:[#allocation6 + $0xe8] sm:$0xff]
    %v4451 = vld [vmem:[#allocation6 + $0xf0] sm:$0xff]
    %v4452 = vld [vmem:[#allocation6 + $0xf8] sm:$0xff]
    %v4453 = vld [vmem:[#allocation6 + $0x100] sm:$0xff]
    %v4454 = vld [vmem:[#allocation6 + $0x108] sm:$0xff]
    %v4455 = vld [vmem:[#allocation6 + $0x110] sm:$0xff]
    %v4456 = vld [vmem:[#allocation6 + $0x118] sm:$0xff]
    %v4457 = vld [vmem:[#allocation6 + $0x120] sm:$0xff]
    %v4458 = vld [vmem:[#allocation6 + $0x128] sm:$0xff]
    %v4459 = vld [vmem:[#allocation6 + $0x130] sm:$0xff]
    %v4460 = vld [vmem:[#allocation6 + $0x138] sm:$0xff]
    %v4461 = vld [vmem:[#allocation6 + $0x140] sm:$0xff]
    %v4462 = vld [vmem:[#allocation6 + $0x148] sm:$0xff]
    %v4463 = vld [vmem:[#allocation6 + $0x150] sm:$0xff]
    %v4464 = vld [vmem:[#allocation6 + $0x158] sm:$0xff]
    %v4465 = vld [vmem:[#allocation6 + $0x160] sm:$0xff]
    %v4466 = vld [vmem:[#allocation6 + $0x168] sm:$0xff]
    %v4467 = vld [vmem:[#allocation6 + $0x170] sm:$0xff]
    %v4468 = vld [vmem:[#allocation6 + $0x178] sm:$0xff]
    %v4469 = vld [vmem:[#allocation6 + $0x180] sm:$0xff]
    %v4470 = vld [vmem:[#allocation6 + $0x188] sm:$0xff]
    %v4471 = vld [vmem:[#allocation6 + $0x190] sm:$0xff]
    %v4472 = vld [vmem:[#allocation6 + $0x198] sm:$0xff]
    %v4473 = vld [vmem:[#allocation6 + $0x1a0] sm:$0xff]
    %v4474 = vld [vmem:[#allocation6 + $0x1a8] sm:$0xff]
    %v4475 = vld [vmem:[#allocation6 + $0x1b0] sm:$0xff]
    %v4476 = vld [vmem:[#allocation6 + $0x1b8] sm:$0xff]
    %v4477 = vld [vmem:[#allocation6 + $0x1c0] sm:$0xff]
    %v4478 = vld [vmem:[#allocation6 + $0x1c8] sm:$0xff]
    %v4479 = vld [vmem:[#allocation6 + $0x1d0] sm:$0xff]
    %v4480 = vld [vmem:[#allocation6 + $0x1d8] sm:$0xff]
    %v4481 = vld [vmem:[#allocation6 + $0x1e0] sm:$0xff]
    %v4482 = vld [vmem:[#allocation6 + $0x1e8] sm:$0xff]
    %v4483 = vld [vmem:[#allocation6 + $0x1f0] sm:$0xff]
    %v4484 = vld [vmem:[#allocation6 + $0x1f8] sm:$0xff]
    %v4485 = vld [vmem:[#allocation6 + $0x200] sm:$0xff]
    %v4486 = vld [vmem:[#allocation6 + $0x208] sm:$0xff]
    %v4487 = vld [vmem:[#allocation6 + $0x210] sm:$0xff]
    %v4488 = vld [vmem:[#allocation6 + $0x218] sm:$0xff]
    %v4489 = vld [vmem:[#allocation6 + $0x220] sm:$0xff]
    %v4490 = vld [vmem:[#allocation6 + $0x228] sm:$0xff]
    %v4491 = vld [vmem:[#allocation6 + $0x230] sm:$0xff]
    %v4492 = vld [vmem:[#allocation6 + $0x238] sm:$0xff]
    %v4493 = vld [vmem:[#allocation6 + $0x240] sm:$0xff]
    %v4494 = vld [vmem:[#allocation6 + $0x248] sm:$0xff]
    %v4495 = vld [vmem:[#allocation6 + $0x250] sm:$0xff]
    %v4496 = vld [vmem:[#allocation6 + $0x258] sm:$0xff]
    %v4497 = vld [vmem:[#allocation6 + $0x260] sm:$0xff]
    %v4498 = vld [vmem:[#allocation6 + $0x268] sm:$0xff]
    %v4499 = vld [vmem:[#allocation6 + $0x270] sm:$0xff]
    %v4500 = vld [vmem:[#allocation6 + $0x278] sm:$0xff]
    %v4501 = vld [vmem:[#allocation6 + $0x280] sm:$0xff]
    %v4502 = vld [vmem:[#allocation6 + $0x288] sm:$0xff]
    %v4503 = vld [vmem:[#allocation6 + $0x290] sm:$0xff]
    %v4504 = vld [vmem:[#allocation6 + $0x298] sm:$0xff]
    %v4505 = vld [vmem:[#allocation6 + $0x2a0] sm:$0xff]
    %v4506 = vld [vmem:[#allocation6 + $0x2a8] sm:$0xff]
    %v4507 = vld [vmem:[#allocation6 + $0x2b0] sm:$0xff]
    %v4508 = vld [vmem:[#allocation6 + $0x2b8] sm:$0xff]
    %v4509 = vld [vmem:[#allocation6 + $0x2c0] sm:$0xff]
    %v4510 = vld [vmem:[#allocation6 + $0x2c8] sm:$0xff]
    %v4511 = vld [vmem:[#allocation6 + $0x2d0] sm:$0xff]
    %v4512 = vld [vmem:[#allocation6 + $0x2d8] sm:$0xff]
    %v4513 = vld [vmem:[#allocation6 + $0x2e0] sm:$0xff]
    %v4514 = vld [vmem:[#allocation6 + $0x2e8] sm:$0xff]
    %v4515 = vld [vmem:[#allocation6 + $0x2f0] sm:$0xff]
    %v4516 = vld [vmem:[#allocation6 + $0x2f8] sm:$0xff]
    %v4517 = vld [vmem:[#allocation6 + $0x300] sm:$0xff]
    %v4518 = vld [vmem:[#allocation6 + $0x308] sm:$0xff]
    %v4519 = vld [vmem:[#allocation6 + $0x310] sm:$0xff]
    %v4520 = vld [vmem:[#allocation6 + $0x318] sm:$0xff]
    %v4521 = vld [vmem:[#allocation6 + $0x320] sm:$0xff]
    %v4522 = vld [vmem:[#allocation6 + $0x328] sm:$0xff]
    %v4523 = vld [vmem:[#allocation6 + $0x330] sm:$0xff]
    %v4524 = vld [vmem:[#allocation6 + $0x338] sm:$0xff]
    %v4525 = vld [vmem:[#allocation6 + $0x340] sm:$0xff]
    %v4526 = vld [vmem:[#allocation6 + $0x348] sm:$0xff]
    %v4527 = vld [vmem:[#allocation6 + $0x350] sm:$0xff]
    %v4528 = vld [vmem:[#allocation6 + $0x358] sm:$0xff]
    %v4529 = vld [vmem:[#allocation6 + $0x360] sm:$0xff]
    %v4530 = vld [vmem:[#allocation6 + $0x368] sm:$0xff]
    %v4531 = vld [vmem:[#allocation6 + $0x370] sm:$0xff]
    %v4532 = vld [vmem:[#allocation6 + $0x378] sm:$0xff]
    %v4533 = vld [vmem:[#allocation6 + $0x380] sm:$0xff]
    %v4534 = vld [vmem:[#allocation6 + $0x388] sm:$0xff]
    %v4535 = vld [vmem:[#allocation6 + $0x390] sm:$0xff]
    %v4536 = vld [vmem:[#allocation6 + $0x398] sm:$0xff]
    %v4537 = vld [vmem:[#allocation6 + $0x3a0] sm:$0xff]
    %v4538 = vld [vmem:[#allocation6 + $0x3a8] sm:$0xff]
    %v4539 = vld [vmem:[#allocation6 + $0x3b0] sm:$0xff]
    %v4540 = vld [vmem:[#allocation6 + $0x3b8] sm:$0xff]
    %v4541 = vld [vmem:[#allocation6 + $0x3c0] sm:$0xff]
    %v4542 = vld [vmem:[#allocation6 + $0x3c8] sm:$0xff]
    %v4543 = vld [vmem:[#allocation6 + $0x3d0] sm:$0xff]
    %v4544 = vld [vmem:[#allocation6 + $0x3d8] sm:$0xff]
    %v4545 = vld [vmem:[#allocation6 + $0x3e0] sm:$0xff]
    %v4546 = vld [vmem:[#allocation6 + $0x3e8] sm:$0xff]
    %v4547 = vld [vmem:[#allocation6 + $0x3f0] sm:$0xff]
    %v4548 = vld [vmem:[#allocation6 + $0x3f8] sm:$0xff]
    %v4549 = vld [vmem:[#allocation6 + $0x400] sm:$0xff]
    %v4550 = vld [vmem:[#allocation6 + $0x408] sm:$0xff]
    %v4551 = vld [vmem:[#allocation6 + $0x410] sm:$0xff]
    %v4552 = vld [vmem:[#allocation6 + $0x418] sm:$0xff]
    %v4553 = vld [vmem:[#allocation6 + $0x420] sm:$0xff]
    %v4554 = vld [vmem:[#allocation6 + $0x428] sm:$0xff]
    %v4555 = vld [vmem:[#allocation6 + $0x430] sm:$0xff]
    %v4556 = vld [vmem:[#allocation6 + $0x438] sm:$0xff]
    %v4557 = vld [vmem:[#allocation6 + $0x440] sm:$0xff]
    %v4558 = vld [vmem:[#allocation6 + $0x448] sm:$0xff]
    %v4559 = vld [vmem:[#allocation6 + $0x450] sm:$0xff]
    %v4560 = vld [vmem:[#allocation6 + $0x458] sm:$0xff]
    %v4561 = vld [vmem:[#allocation6 + $0x460] sm:$0xff]
    %v4562 = vld [vmem:[#allocation6 + $0x468] sm:$0xff]
    %v4563 = vld [vmem:[#allocation6 + $0x470] sm:$0xff]
    %v4564 = vld [vmem:[#allocation6 + $0x478] sm:$0xff]
    %v4565 = vld [vmem:[#allocation6 + $0x480] sm:$0xff]
    %v4566 = vld [vmem:[#allocation6 + $0x488] sm:$0xff]
    %v4567 = vld [vmem:[#allocation6 + $0x490] sm:$0xff]
    %v4568 = vld [vmem:[#allocation6 + $0x498] sm:$0xff]
    %v4569 = vld [vmem:[#allocation6 + $0x4a0] sm:$0xff]
    %v4570 = vld [vmem:[#allocation6 + $0x4a8] sm:$0xff]
    %v4571 = vld [vmem:[#allocation6 + $0x4b0] sm:$0xff]
    %v4572 = vld [vmem:[#allocation6 + $0x4b8] sm:$0xff]
    %v4573 = vld [vmem:[#allocation6 + $0x4c0] sm:$0xff]
    %v4574 = vld [vmem:[#allocation6 + $0x4c8] sm:$0xff]
    %v4575 = vld [vmem:[#allocation6 + $0x4d0] sm:$0xff]
    %v4576 = vld [vmem:[#allocation6 + $0x4d8] sm:$0xff]
    %v4577 = vld [vmem:[#allocation6 + $0x4e0] sm:$0xff]
    %v4578 = vld [vmem:[#allocation6 + $0x4e8] sm:$0xff]
    %v4579 = vld [vmem:[#allocation6 + $0x4f0] sm:$0xff]
    %v4580 = vld [vmem:[#allocation6 + $0x4f8] sm:$0xff]
    %v4581 = vld [vmem:[#allocation6 + $0x500] sm:$0xff]
    %v4582 = vld [vmem:[#allocation6 + $0x508] sm:$0xff]
    %v4583 = vld [vmem:[#allocation6 + $0x510] sm:$0xff]
    %v4584 = vld [vmem:[#allocation6 + $0x518] sm:$0xff]
    %v4585 = vld [vmem:[#allocation6 + $0x520] sm:$0xff]
    %v4586 = vld [vmem:[#allocation6 + $0x528] sm:$0xff]
    %v4587 = vld [vmem:[#allocation6 + $0x530] sm:$0xff]
    %v4588 = vld [vmem:[#allocation6 + $0x538] sm:$0xff]
    %v4589 = vld [vmem:[#allocation6 + $0x540] sm:$0xff]
    %v4590 = vld [vmem:[#allocation6 + $0x548] sm:$0xff]
    %v4591 = vld [vmem:[#allocation6 + $0x550] sm:$0xff]
    %v4592 = vld [vmem:[#allocation6 + $0x558] sm:$0xff]
    %v4593 = vld [vmem:[#allocation6 + $0x560] sm:$0xff]
    %v4594 = vld [vmem:[#allocation6 + $0x568] sm:$0xff]
    %v4595 = vld [vmem:[#allocation6 + $0x570] sm:$0xff]
    %v4596 = vld [vmem:[#allocation6 + $0x578] sm:$0xff]
    %v4597 = vld [vmem:[#allocation6 + $0x580] sm:$0xff]
    %v4598 = vld [vmem:[#allocation6 + $0x588] sm:$0xff]
    %v4599 = vld [vmem:[#allocation6 + $0x590] sm:$0xff]
    %v4600 = vld [vmem:[#allocation6 + $0x598] sm:$0xff]
    %v4601 = vld [vmem:[#allocation6 + $0x5a0] sm:$0xff]
    %v4602 = vld [vmem:[#allocation6 + $0x5a8] sm:$0xff]
    %v4603 = vld [vmem:[#allocation6 + $0x5b0] sm:$0xff]
    %v4604 = vld [vmem:[#allocation6 + $0x5b8] sm:$0xff]
    %v4605 = vld [vmem:[#allocation6 + $0x5c0] sm:$0xff]
    %v4606 = vld [vmem:[#allocation6 + $0x5c8] sm:$0xff]
    %v4607 = vld [vmem:[#allocation6 + $0x5d0] sm:$0xff]
    %v4608 = vld [vmem:[#allocation6 + $0x5d8] sm:$0xff]
    %v4609 = vld [vmem:[#allocation6 + $0x5e0] sm:$0xff]
    %v4610 = vld [vmem:[#allocation6 + $0x5e8] sm:$0xff]
    %v4611 = vld [vmem:[#allocation6 + $0x5f0] sm:$0xff]
    %v4612 = vld [vmem:[#allocation6 + $0x5f8] sm:$0xff]
    %v4613 = vld [vmem:[#allocation6 + $0x600] sm:$0xff]
    %v4614 = vld [vmem:[#allocation6 + $0x608] sm:$0xff]
    %v4615 = vld [vmem:[#allocation6 + $0x610] sm:$0xff]
    %v4616 = vld [vmem:[#allocation6 + $0x618] sm:$0xff]
    %v4617 = vld [vmem:[#allocation6 + $0x620] sm:$0xff]
    %v4618 = vld [vmem:[#allocation6 + $0x628] sm:$0xff]
    %v4619 = vld [vmem:[#allocation6 + $0x630] sm:$0xff]
    %v4620 = vld [vmem:[#allocation6 + $0x638] sm:$0xff]
    %v4621 = vld [vmem:[#allocation6 + $0x640] sm:$0xff]
    %v4622 = vld [vmem:[#allocation6 + $0x648] sm:$0xff]
    %v4623 = vld [vmem:[#allocation6 + $0x650] sm:$0xff]
    %v4624 = vld [vmem:[#allocation6 + $0x658] sm:$0xff]
    %v4625 = vld [vmem:[#allocation6 + $0x660] sm:$0xff]
    %v4626 = vld [vmem:[#allocation6 + $0x668] sm:$0xff]
    %v4627 = vld [vmem:[#allocation6 + $0x670] sm:$0xff]
    %v4628 = vld [vmem:[#allocation6 + $0x678] sm:$0xff]
    %v4629 = vld [vmem:[#allocation6 + $0x680] sm:$0xff]
    %v4630 = vld [vmem:[#allocation6 + $0x688] sm:$0xff]
    %v4631 = vld [vmem:[#allocation6 + $0x690] sm:$0xff]
    %v4632 = vld [vmem:[#allocation6 + $0x698] sm:$0xff]
    %v4633 = vld [vmem:[#allocation6 + $0x6a0] sm:$0xff]
    %v4634 = vld [vmem:[#allocation6 + $0x6a8] sm:$0xff]
    %v4635 = vld [vmem:[#allocation6 + $0x6b0] sm:$0xff]
    %v4636 = vld [vmem:[#allocation6 + $0x6b8] sm:$0xff]
    %v4637 = vld [vmem:[#allocation6 + $0x6c0] sm:$0xff]
    %v4638 = vld [vmem:[#allocation6 + $0x6c8] sm:$0xff]
    %v4639 = vld [vmem:[#allocation6 + $0x6d0] sm:$0xff]
    %v4640 = vld [vmem:[#allocation6 + $0x6d8] sm:$0xff]
    %v4641 = vld [vmem:[#allocation6 + $0x6e0] sm:$0xff]
    %v4642 = vld [vmem:[#allocation6 + $0x6e8] sm:$0xff]
    %v4643 = vld [vmem:[#allocation6 + $0x6f0] sm:$0xff]
    %v4644 = vld [vmem:[#allocation6 + $0x6f8] sm:$0xff]
    %v4645 = vld [vmem:[#allocation6 + $0x700] sm:$0xff]
    %v4646 = vld [vmem:[#allocation6 + $0x708] sm:$0xff]
    %v4647 = vld [vmem:[#allocation6 + $0x710] sm:$0xff]
    %v4648 = vld [vmem:[#allocation6 + $0x718] sm:$0xff]
    %v4649 = vld [vmem:[#allocation6 + $0x720] sm:$0xff]
    %v4650 = vld [vmem:[#allocation6 + $0x728] sm:$0xff]
    %v4651 = vld [vmem:[#allocation6 + $0x730] sm:$0xff]
    %v4652 = vld [vmem:[#allocation6 + $0x738] sm:$0xff]
    %v4653 = vld [vmem:[#allocation6 + $0x740] sm:$0xff]
    %v4654 = vld [vmem:[#allocation6 + $0x748] sm:$0xff]
    %v4655 = vld [vmem:[#allocation6 + $0x750] sm:$0xff]
    %v4656 = vld [vmem:[#allocation6 + $0x758] sm:$0xff]
    %v4657 = vld [vmem:[#allocation6 + $0x760] sm:$0xff]
    %v4658 = vld [vmem:[#allocation6 + $0x768] sm:$0xff]
    %v4659 = vld [vmem:[#allocation6 + $0x770] sm:$0xff]
    %v4660 = vld [vmem:[#allocation6 + $0x778] sm:$0xff]
    %v4661 = vld [vmem:[#allocation6 + $0x780] sm:$0xff]
    %v4662 = vld [vmem:[#allocation6 + $0x788] sm:$0xff]
    %v4663 = vld [vmem:[#allocation6 + $0x790] sm:$0xff]
    %v4664 = vld [vmem:[#allocation6 + $0x798] sm:$0xff]
    %v4665 = vld [vmem:[#allocation6 + $0x7a0] sm:$0xff]
    %v4666 = vld [vmem:[#allocation6 + $0x7a8] sm:$0xff]
    %v4667 = vld [vmem:[#allocation6 + $0x7b0] sm:$0xff]
    %v4668 = vld [vmem:[#allocation6 + $0x7b8] sm:$0xff]
    %v4669 = vld [vmem:[#allocation6 + $0x7c0] sm:$0xff]
    %v4670 = vld [vmem:[#allocation6 + $0x7c8] sm:$0xff]
    %v4671 = vld [vmem:[#allocation6 + $0x7d0] sm:$0xff]
    %v4672 = vld [vmem:[#allocation6 + $0x7d8] sm:$0xff]
    %v4673 = vld [vmem:[#allocation6 + $0x7e0] sm:$0xff]
    %v4674 = vld [vmem:[#allocation6 + $0x7e8] sm:$0xff]
    %v4675 = vld [vmem:[#allocation6 + $0x7f0] sm:$0xff]
    %v4676 = vld [vmem:[#allocation6 + $0x7f8] sm:$0xff]
    %v4677 = vld [vmem:[#allocation6 + $0x800] sm:$0xff]
    %v4678 = vld [vmem:[#allocation6 + $0x808] sm:$0xff]
    %v4679 = vld [vmem:[#allocation6 + $0x810] sm:$0xff]
    %v4680 = vld [vmem:[#allocation6 + $0x818] sm:$0xff]
    %v4681 = vld [vmem:[#allocation6 + $0x820] sm:$0xff]
    %v4682 = vld [vmem:[#allocation6 + $0x828] sm:$0xff]
    %v4683 = vld [vmem:[#allocation6 + $0x830] sm:$0xff]
    %v4684 = vld [vmem:[#allocation6 + $0x838] sm:$0xff]
    %v4685 = vld [vmem:[#allocation6 + $0x840] sm:$0xff]
    %v4686 = vld [vmem:[#allocation6 + $0x848] sm:$0xff]
    %v4687 = vld [vmem:[#allocation6 + $0x850] sm:$0xff]
    %v4688 = vld [vmem:[#allocation6 + $0x858] sm:$0xff]
    %v4689 = vld [vmem:[#allocation6 + $0x860] sm:$0xff]
    %v4690 = vld [vmem:[#allocation6 + $0x868] sm:$0xff]
    %v4691 = vld [vmem:[#allocation6 + $0x870] sm:$0xff]
    %v4692 = vld [vmem:[#allocation6 + $0x878] sm:$0xff]
    %v4693 = vld [vmem:[#allocation6 + $0x880] sm:$0xff]
    %v4694 = vld [vmem:[#allocation6 + $0x888] sm:$0xff]
    %v4695 = vld [vmem:[#allocation6 + $0x890] sm:$0xff]
    %v4696 = vld [vmem:[#allocation6 + $0x898] sm:$0xff]
    %v4697 = vld [vmem:[#allocation6 + $0x8a0] sm:$0xff]
    %v4698 = vld [vmem:[#allocation6 + $0x8a8] sm:$0xff]
    %v4699 = vld [vmem:[#allocation6 + $0x8b0] sm:$0xff]
    %v4700 = vld [vmem:[#allocation6 + $0x8b8] sm:$0xff]
    %v4701 = vld [vmem:[#allocation6 + $0x8c0] sm:$0xff]
    %v4702 = vld [vmem:[#allocation6 + $0x8c8] sm:$0xff]
    %v4703 = vld [vmem:[#allocation6 + $0x8d0] sm:$0xff]
    %v4704 = vld [vmem:[#allocation6 + $0x8d8] sm:$0xff]
    %v4705 = vld [vmem:[#allocation6 + $0x8e0] sm:$0xff]
    %v4706 = vld [vmem:[#allocation6 + $0x8e8] sm:$0xff]
    %v4707 = vld [vmem:[#allocation6 + $0x8f0] sm:$0xff]
    %v4708 = vld [vmem:[#allocation6 + $0x8f8] sm:$0xff]
    %v4709 = vld [vmem:[#allocation6 + $0x900] sm:$0xff]
    %v4710 = vld [vmem:[#allocation6 + $0x908] sm:$0xff]
    %v4711 = vld [vmem:[#allocation6 + $0x910] sm:$0xff]
    %v4712 = vld [vmem:[#allocation6 + $0x918] sm:$0xff]
    %v4713 = vld [vmem:[#allocation6 + $0x920] sm:$0xff]
    %v4714 = vld [vmem:[#allocation6 + $0x928] sm:$0xff]
    %v4715 = vld [vmem:[#allocation6 + $0x930] sm:$0xff]
    %v4716 = vld [vmem:[#allocation6 + $0x938] sm:$0xff]
    %v4717 = vld [vmem:[#allocation6 + $0x940] sm:$0xff]
    %v4718 = vld [vmem:[#allocation6 + $0x948] sm:$0xff]
    %v4719 = vld [vmem:[#allocation6 + $0x950] sm:$0xff]
    %v4720 = vld [vmem:[#allocation6 + $0x958] sm:$0xff]
    %v4721 = vld [vmem:[#allocation6 + $0x960] sm:$0xff]
    %v4722 = vld [vmem:[#allocation6 + $0x968] sm:$0xff]
    %v4723 = vld [vmem:[#allocation6 + $0x970] sm:$0xff]
    %v4724 = vld [vmem:[#allocation6 + $0x978] sm:$0xff]
    %v4725 = vld [vmem:[#allocation6 + $0x980] sm:$0xff]
    %v4726 = vld [vmem:[#allocation6 + $0x988] sm:$0xff]
    %v4727 = vld [vmem:[#allocation6 + $0x990] sm:$0xff]
    %v4728 = vld [vmem:[#allocation6 + $0x998] sm:$0xff]
    %v4729 = vld [vmem:[#allocation6 + $0x9a0] sm:$0xff]
    %v4730 = vld [vmem:[#allocation6 + $0x9a8] sm:$0xff]
    %v4731 = vld [vmem:[#allocation6 + $0x9b0] sm:$0xff]
    %v4732 = vld [vmem:[#allocation6 + $0x9b8] sm:$0xff]
    %v4733 = vld [vmem:[#allocation6 + $0x9c0] sm:$0xff]
    %v4734 = vld [vmem:[#allocation6 + $0x9c8] sm:$0xff]
    %v4735 = vld [vmem:[#allocation6 + $0x9d0] sm:$0xff]
    %v4736 = vld [vmem:[#allocation6 + $0x9d8] sm:$0xff]
    %v4737 = vld [vmem:[#allocation6 + $0x9e0] sm:$0xff]
    %v4738 = vld [vmem:[#allocation6 + $0x9e8] sm:$0xff]
    %v4739 = vld [vmem:[#allocation6 + $0x9f0] sm:$0xff]
    %v4740 = vld [vmem:[#allocation6 + $0x9f8] sm:$0xff]
    %v4741 = vld [vmem:[#allocation6 + $0xa00] sm:$0xff]
    %v4742 = vld [vmem:[#allocation6 + $0xa08] sm:$0xff]
    %v4743 = vld [vmem:[#allocation6 + $0xa10] sm:$0xff]
    %v4744 = vld [vmem:[#allocation6 + $0xa18] sm:$0xff]
    %v4745 = vld [vmem:[#allocation6 + $0xa20] sm:$0xff]
    %v4746 = vld [vmem:[#allocation6 + $0xa28] sm:$0xff]
    %v4747 = vld [vmem:[#allocation6 + $0xa30] sm:$0xff]
    %v4748 = vld [vmem:[#allocation6 + $0xa38] sm:$0xff]
    %v4749 = vld [vmem:[#allocation6 + $0xa40] sm:$0xff]
    %v4750 = vld [vmem:[#allocation6 + $0xa48] sm:$0xff]
    %v4751 = vld [vmem:[#allocation6 + $0xa50] sm:$0xff]
    %v4752 = vld [vmem:[#allocation6 + $0xa58] sm:$0xff]
    %v4753 = vld [vmem:[#allocation6 + $0xa60] sm:$0xff]
    %v4754 = vld [vmem:[#allocation6 + $0xa68] sm:$0xff]
    %v4755 = vld [vmem:[#allocation6 + $0xa70] sm:$0xff]
    %v4756 = vld [vmem:[#allocation6 + $0xa78] sm:$0xff]
    %v4757 = vld [vmem:[#allocation6 + $0xa80] sm:$0xff]
    %v4758 = vld [vmem:[#allocation6 + $0xa88] sm:$0xff]
    %v4759 = vld [vmem:[#allocation6 + $0xa90] sm:$0xff]
    %v4760 = vld [vmem:[#allocation6 + $0xa98] sm:$0xff]
    %v4761 = vld [vmem:[#allocation6 + $0xaa0] sm:$0xff]
    %v4762 = vld [vmem:[#allocation6 + $0xaa8] sm:$0xff]
    %v4763 = vld [vmem:[#allocation6 + $0xab0] sm:$0xff]
    %v4764 = vld [vmem:[#allocation6 + $0xab8] sm:$0xff]
    %v4765 = vld [vmem:[#allocation6 + $0xac0] sm:$0xff]
    %v4766 = vld [vmem:[#allocation6 + $0xac8] sm:$0xff]
    %v4767 = vld [vmem:[#allocation6 + $0xad0] sm:$0xff]
    %v4768 = vld [vmem:[#allocation6 + $0xad8] sm:$0xff]
    %v4769 = vld [vmem:[#allocation6 + $0xae0] sm:$0xff]
    %v4770 = vld [vmem:[#allocation6 + $0xae8] sm:$0xff]
    %v4771 = vld [vmem:[#allocation6 + $0xaf0] sm:$0xff]
    %v4772 = vld [vmem:[#allocation6 + $0xaf8] sm:$0xff]
    %v4773 = vld [vmem:[#allocation6 + $0xb00] sm:$0xff]
    %v4774 = vld [vmem:[#allocation6 + $0xb08] sm:$0xff]
    %v4775 = vld [vmem:[#allocation6 + $0xb10] sm:$0xff]
    %v4776 = vld [vmem:[#allocation6 + $0xb18] sm:$0xff]
    %v4777 = vld [vmem:[#allocation6 + $0xb20] sm:$0xff]
    %v4778 = vld [vmem:[#allocation6 + $0xb28] sm:$0xff]
    %v4779 = vld [vmem:[#allocation6 + $0xb30] sm:$0xff]
    %v4780 = vld [vmem:[#allocation6 + $0xb38] sm:$0xff]
    %v4781 = vld [vmem:[#allocation6 + $0xb40] sm:$0xff]
    %v4782 = vld [vmem:[#allocation6 + $0xb48] sm:$0xff]
    %v4783 = vld [vmem:[#allocation6 + $0xb50] sm:$0xff]
    %v4784 = vld [vmem:[#allocation6 + $0xb58] sm:$0xff]
    %v4785 = vld [vmem:[#allocation6 + $0xb60] sm:$0xff]
    %v4786 = vld [vmem:[#allocation6 + $0xb68] sm:$0xff]
    %v4787 = vld [vmem:[#allocation6 + $0xb70] sm:$0xff]
    %v4788 = vld [vmem:[#allocation6 + $0xb78] sm:$0xff]
    %v4789 = vld [vmem:[#allocation6 + $0xb80] sm:$0xff]
    %v4790 = vld [vmem:[#allocation6 + $0xb88] sm:$0xff]
    %v4791 = vld [vmem:[#allocation6 + $0xb90] sm:$0xff]
    %v4792 = vld [vmem:[#allocation6 + $0xb98] sm:$0xff]
    %v4793 = vld [vmem:[#allocation6 + $0xba0] sm:$0xff]
    %v4794 = vld [vmem:[#allocation6 + $0xba8] sm:$0xff]
    %v4795 = vld [vmem:[#allocation6 + $0xbb0] sm:$0xff]
    %v4796 = vld [vmem:[#allocation6 + $0xbb8] sm:$0xff]
    %v4797 = vld [vmem:[#allocation6 + $0xbc0] sm:$0xff]
    %v4798 = vld [vmem:[#allocation6 + $0xbc8] sm:$0xff]
    %v4799 = vld [vmem:[#allocation6 + $0xbd0] sm:$0xff]
    %v4800 = vld [vmem:[#allocation6 + $0xbd8] sm:$0xff]
    %v4801 = vld [vmem:[#allocation6 + $0xbe0] sm:$0xff]
    %v4802 = vld [vmem:[#allocation6 + $0xbe8] sm:$0xff]
    %v4803 = vld [vmem:[#allocation6 + $0xbf0] sm:$0xff]
    %v4804 = vld [vmem:[#allocation6 + $0xbf8] sm:$0xff]
    %v4805 = vld [vmem:[#allocation6 + $0xc00] sm:$0xff]
    %v4806 = vld [vmem:[#allocation6 + $0xc08] sm:$0xff]
    %v4807 = vld [vmem:[#allocation6 + $0xc10] sm:$0xff]
    %v4808 = vld [vmem:[#allocation6 + $0xc18] sm:$0xff]
    %v4809 = vld [vmem:[#allocation6 + $0xc20] sm:$0xff]
    %v4810 = vld [vmem:[#allocation6 + $0xc28] sm:$0xff]
    %v4811 = vld [vmem:[#allocation6 + $0xc30] sm:$0xff]
    %v4812 = vld [vmem:[#allocation6 + $0xc38] sm:$0xff]
    %v4813 = vld [vmem:[#allocation6 + $0xc40] sm:$0xff]
    %v4814 = vld [vmem:[#allocation6 + $0xc48] sm:$0xff]
    %v4815 = vld [vmem:[#allocation6 + $0xc50] sm:$0xff]
    %v4816 = vld [vmem:[#allocation6 + $0xc58] sm:$0xff]
    %v4817 = vld [vmem:[#allocation6 + $0xc60] sm:$0xff]
    %v4818 = vld [vmem:[#allocation6 + $0xc68] sm:$0xff]
    %v4819 = vld [vmem:[#allocation6 + $0xc70] sm:$0xff]
    %v4820 = vld [vmem:[#allocation6 + $0xc78] sm:$0xff]
    %v4821 = vld [vmem:[#allocation6 + $0xc80] sm:$0xff]
    %v4822 = vld [vmem:[#allocation6 + $0xc88] sm:$0xff]
    %v4823 = vld [vmem:[#allocation6 + $0xc90] sm:$0xff]
    %v4824 = vld [vmem:[#allocation6 + $0xc98] sm:$0xff]
    %v4825 = vld [vmem:[#allocation6 + $0xca0] sm:$0xff]
    %v4826 = vld [vmem:[#allocation6 + $0xca8] sm:$0xff]
    %v4827 = vld [vmem:[#allocation6 + $0xcb0] sm:$0xff]
    %v4828 = vld [vmem:[#allocation6 + $0xcb8] sm:$0xff]
    %v4829 = vld [vmem:[#allocation6 + $0xcc0] sm:$0xff]
    %v4830 = vld [vmem:[#allocation6 + $0xcc8] sm:$0xff]
    %v4831 = vld [vmem:[#allocation6 + $0xcd0] sm:$0xff]
    %v4832 = vld [vmem:[#allocation6 + $0xcd8] sm:$0xff]
    %v4833 = vld [vmem:[#allocation6 + $0xce0] sm:$0xff]
    %v4834 = vld [vmem:[#allocation6 + $0xce8] sm:$0xff]
    %v4835 = vld [vmem:[#allocation6 + $0xcf0] sm:$0xff]
    %v4836 = vld [vmem:[#allocation6 + $0xcf8] sm:$0xff]
    %v4837 = vld [vmem:[#allocation6 + $0xd00] sm:$0xff]
    %v4838 = vld [vmem:[#allocation6 + $0xd08] sm:$0xff]
    %v4839 = vld [vmem:[#allocation6 + $0xd10] sm:$0xff]
    %v4840 = vld [vmem:[#allocation6 + $0xd18] sm:$0xff]
    %v4841 = vld [vmem:[#allocation6 + $0xd20] sm:$0xff]
    %v4842 = vld [vmem:[#allocation6 + $0xd28] sm:$0xff]
    %v4843 = vld [vmem:[#allocation6 + $0xd30] sm:$0xff]
    %v4844 = vld [vmem:[#allocation6 + $0xd38] sm:$0xff]
    %v4845 = vld [vmem:[#allocation6 + $0xd40] sm:$0xff]
    %v4846 = vld [vmem:[#allocation6 + $0xd48] sm:$0xff]
    %v4847 = vld [vmem:[#allocation6 + $0xd50] sm:$0xff]
    %v4848 = vld [vmem:[#allocation6 + $0xd58] sm:$0xff]
    %v4849 = vld [vmem:[#allocation6 + $0xd60] sm:$0xff]
    %v4850 = vld [vmem:[#allocation6 + $0xd68] sm:$0xff]
    %v4851 = vld [vmem:[#allocation6 + $0xd70] sm:$0xff]
    %v4852 = vld [vmem:[#allocation6 + $0xd78] sm:$0xff]
    %v4853 = vld [vmem:[#allocation6 + $0xd80] sm:$0xff]
    %v4854 = vld [vmem:[#allocation6 + $0xd88] sm:$0xff]
    %v4855 = vld [vmem:[#allocation6 + $0xd90] sm:$0xff]
    %v4856 = vld [vmem:[#allocation6 + $0xd98] sm:$0xff]
    %v4857 = vld [vmem:[#allocation6 + $0xda0] sm:$0xff]
    %v4858 = vld [vmem:[#allocation6 + $0xda8] sm:$0xff]
    %v4859 = vld [vmem:[#allocation6 + $0xdb0] sm:$0xff]
    %v4860 = vld [vmem:[#allocation6 + $0xdb8] sm:$0xff]
    %v4861 = vld [vmem:[#allocation6 + $0xdc0] sm:$0xff]
    %v4862 = vld [vmem:[#allocation6 + $0xdc8] sm:$0xff]
    %v4863 = vld [vmem:[#allocation6 + $0xdd0] sm:$0xff]
    %v4864 = vld [vmem:[#allocation6 + $0xdd8] sm:$0xff]
    %v4865 = vld [vmem:[#allocation6 + $0xde0] sm:$0xff]
    %v4866 = vld [vmem:[#allocation6 + $0xde8] sm:$0xff]
    %v4867 = vld [vmem:[#allocation6 + $0xdf0] sm:$0xff]
    %v4868 = vld [vmem:[#allocation6 + $0xdf8] sm:$0xff]
    %v4869 = vld [vmem:[#allocation6 + $0xe00] sm:$0xff]
    %v4870 = vld [vmem:[#allocation6 + $0xe08] sm:$0xff]
    %v4871 = vld [vmem:[#allocation6 + $0xe10] sm:$0xff]
    %v4872 = vld [vmem:[#allocation6 + $0xe18] sm:$0xff]
    %v4873 = vld [vmem:[#allocation6 + $0xe20] sm:$0xff]
    %v4874 = vld [vmem:[#allocation6 + $0xe28] sm:$0xff]
    %v4875 = vld [vmem:[#allocation6 + $0xe30] sm:$0xff]
    %v4876 = vld [vmem:[#allocation6 + $0xe38] sm:$0xff]
    %v4877 = vld [vmem:[#allocation6 + $0xe40] sm:$0xff]
    %v4878 = vld [vmem:[#allocation6 + $0xe48] sm:$0xff]
    %v4879 = vld [vmem:[#allocation6 + $0xe50] sm:$0xff]
    %v4880 = vld [vmem:[#allocation6 + $0xe58] sm:$0xff]
    %v4881 = vld [vmem:[#allocation6 + $0xe60] sm:$0xff]
    %v4882 = vld [vmem:[#allocation6 + $0xe68] sm:$0xff]
    %v4883 = vld [vmem:[#allocation6 + $0xe70] sm:$0xff]
    %v4884 = vld [vmem:[#allocation6 + $0xe78] sm:$0xff]
    %v4885 = vld [vmem:[#allocation6 + $0xe80] sm:$0xff]
    %v4886 = vld [vmem:[#allocation6 + $0xe88] sm:$0xff]
    %v4887 = vld [vmem:[#allocation6 + $0xe90] sm:$0xff]
    %v4888 = vld [vmem:[#allocation6 + $0xe98] sm:$0xff]
    %v4889 = vld [vmem:[#allocation6 + $0xea0] sm:$0xff]
    %v4890 = vld [vmem:[#allocation6 + $0xea8] sm:$0xff]
    %v4891 = vld [vmem:[#allocation6 + $0xeb0] sm:$0xff]
    %v4892 = vld [vmem:[#allocation6 + $0xeb8] sm:$0xff]
    %v4893 = vld [vmem:[#allocation6 + $0xec0] sm:$0xff]
    %v4894 = vld [vmem:[#allocation6 + $0xec8] sm:$0xff]
    %v4895 = vld [vmem:[#allocation6 + $0xed0] sm:$0xff]
    %v4896 = vld [vmem:[#allocation6 + $0xed8] sm:$0xff]
    %v4897 = vld [vmem:[#allocation6 + $0xee0] sm:$0xff]
    %v4898 = vld [vmem:[#allocation6 + $0xee8] sm:$0xff]
    %v4899 = vld [vmem:[#allocation6 + $0xef0] sm:$0xff]
    %v4900 = vld [vmem:[#allocation6 + $0xef8] sm:$0xff]
    %v4901 = vld [vmem:[#allocation6 + $0xf00] sm:$0xff]
    %v4902 = vld [vmem:[#allocation6 + $0xf08] sm:$0xff]
    %v4903 = vld [vmem:[#allocation6 + $0xf10] sm:$0xff]
    %v4904 = vld [vmem:[#allocation6 + $0xf18] sm:$0xff]
    %v4905 = vld [vmem:[#allocation6 + $0xf20] sm:$0xff]
    %v4906 = vld [vmem:[#allocation6 + $0xf28] sm:$0xff]
    %v4907 = vld [vmem:[#allocation6 + $0xf30] sm:$0xff]
    %v4908 = vld [vmem:[#allocation6 + $0xf38] sm:$0xff]
    %v4909 = vld [vmem:[#allocation6 + $0xf40] sm:$0xff]
    %v4910 = vld [vmem:[#allocation6 + $0xf48] sm:$0xff]
    %v4911 = vld [vmem:[#allocation6 + $0xf50] sm:$0xff]
    %v4912 = vld [vmem:[#allocation6 + $0xf58] sm:$0xff]
    %v4913 = vld [vmem:[#allocation6 + $0xf60] sm:$0xff]
    %v4914 = vld [vmem:[#allocation6 + $0xf68] sm:$0xff]
    %v4915 = vld [vmem:[#allocation6 + $0xf70] sm:$0xff]
    %v4916 = vld [vmem:[#allocation6 + $0xf78] sm:$0xff]
    %v4917 = vld [vmem:[#allocation6 + $0xf80] sm:$0xff]
    %v4918 = vld [vmem:[#allocation6 + $0xf88] sm:$0xff]
    %v4919 = vld [vmem:[#allocation6 + $0xf90] sm:$0xff]
    %v4920 = vld [vmem:[#allocation6 + $0xf98] sm:$0xff]
    %v4921 = vld [vmem:[#allocation6 + $0xfa0] sm:$0xff]
    %v4922 = vld [vmem:[#allocation6 + $0xfa8] sm:$0xff]
    %v4923 = vld [vmem:[#allocation6 + $0xfb0] sm:$0xff]
    %v4924 = vld [vmem:[#allocation6 + $0xfb8] sm:$0xff]
    %v4925 = vld [vmem:[#allocation6 + $0xfc0] sm:$0xff]
    %v4926 = vld [vmem:[#allocation6 + $0xfc8] sm:$0xff]
    %v4927 = vld [vmem:[#allocation6 + $0xfd0] sm:$0xff]
    %v4928 = vld [vmem:[#allocation6 + $0xfd8] sm:$0xff]
    %v4929 = vld [vmem:[#allocation6 + $0xfe0] sm:$0xff]
    %v4930 = vld [vmem:[#allocation6 + $0xfe8] sm:$0xff]
    %v4931 = vld [vmem:[#allocation6 + $0xff0] sm:$0xff]
    %v4932 = vld [vmem:[#allocation6 + $0xff8] sm:$0xff]
    %v4933 = vld [vmem:[#allocation6 + $0x1000] sm:$0xff]
    %v4934 = vld [vmem:[#allocation6 + $0x1008] sm:$0xff]
    %v4935 = vld [vmem:[#allocation6 + $0x1010] sm:$0xff]
    %v4936 = vld [vmem:[#allocation6 + $0x1018] sm:$0xff]
    %v4937 = vld [vmem:[#allocation6 + $0x1020] sm:$0xff]
    %v4938 = vld [vmem:[#allocation6 + $0x1028] sm:$0xff]
    %v4939 = vld [vmem:[#allocation6 + $0x1030] sm:$0xff]
    %v4940 = vld [vmem:[#allocation6 + $0x1038] sm:$0xff]
    %v4941 = vld [vmem:[#allocation6 + $0x1040] sm:$0xff]
    %v4942 = vld [vmem:[#allocation6 + $0x1048] sm:$0xff]
    %v4943 = vld [vmem:[#allocation6 + $0x1050] sm:$0xff]
    %v4944 = vld [vmem:[#allocation6 + $0x1058] sm:$0xff]
    %v4945 = vld [vmem:[#allocation6 + $0x1060] sm:$0xff]
    %v4946 = vld [vmem:[#allocation6 + $0x1068] sm:$0xff]
    %v4947 = vld [vmem:[#allocation6 + $0x1070] sm:$0xff]
    %v4948 = vld [vmem:[#allocation6 + $0x1078] sm:$0xff]
    %v4949 = vld [vmem:[#allocation6 + $0x1080] sm:$0xff]
    %v4950 = vld [vmem:[#allocation6 + $0x1088] sm:$0xff]
    %v4951 = vld [vmem:[#allocation6 + $0x1090] sm:$0xff]
    %v4952 = vld [vmem:[#allocation6 + $0x1098] sm:$0xff]
    %v4953 = vld [vmem:[#allocation6 + $0x10a0] sm:$0xff]
    %v4954 = vld [vmem:[#allocation6 + $0x10a8] sm:$0xff]
    %v4955 = vld [vmem:[#allocation6 + $0x10b0] sm:$0xff]
    %v4956 = vld [vmem:[#allocation6 + $0x10b8] sm:$0xff]
    %v4957 = vld [vmem:[#allocation6 + $0x10c0] sm:$0xff]
    %v4958 = vld [vmem:[#allocation6 + $0x10c8] sm:$0xff]
    %v4959 = vld [vmem:[#allocation6 + $0x10d0] sm:$0xff]
    %v4960 = vld [vmem:[#allocation6 + $0x10d8] sm:$0xff]
    %v4961 = vld [vmem:[#allocation6 + $0x10e0] sm:$0xff]
    %v4962 = vld [vmem:[#allocation6 + $0x10e8] sm:$0xff]
    %v4963 = vld [vmem:[#allocation6 + $0x10f0] sm:$0xff]
    %v4964 = vld [vmem:[#allocation6 + $0x10f8] sm:$0xff]
    %v4965 = vld [vmem:[#allocation6 + $0x1100] sm:$0xff]
    %v4966 = vld [vmem:[#allocation6 + $0x1108] sm:$0xff]
    %v4967 = vld [vmem:[#allocation6 + $0x1110] sm:$0xff]
    %v4968 = vld [vmem:[#allocation6 + $0x1118] sm:$0xff]
    %v4969 = vld [vmem:[#allocation6 + $0x1120] sm:$0xff]
    %v4970 = vld [vmem:[#allocation6 + $0x1128] sm:$0xff]
    %v4971 = vld [vmem:[#allocation6 + $0x1130] sm:$0xff]
    %v4972 = vld [vmem:[#allocation6 + $0x1138] sm:$0xff]
    %v4973 = vld [vmem:[#allocation6 + $0x1140] sm:$0xff]
    %v4974 = vld [vmem:[#allocation6 + $0x1148] sm:$0xff]
    %v4975 = vld [vmem:[#allocation6 + $0x1150] sm:$0xff]
    %v4976 = vld [vmem:[#allocation6 + $0x1158] sm:$0xff]
    %v4977 = vld [vmem:[#allocation6 + $0x1160] sm:$0xff]
    %v4978 = vld [vmem:[#allocation6 + $0x1168] sm:$0xff]
    %v4979 = vld [vmem:[#allocation6 + $0x1170] sm:$0xff]
    %v4980 = vld [vmem:[#allocation6 + $0x1178] sm:$0xff]
    %v4981 = vld [vmem:[#allocation6 + $0x1180] sm:$0xff]
    %v4982 = vld [vmem:[#allocation6 + $0x1188] sm:$0xff]
    %v4983 = vld [vmem:[#allocation6 + $0x1190] sm:$0xff]
    %v4984 = vld [vmem:[#allocation6 + $0x1198] sm:$0xff]
    %v4985 = vld [vmem:[#allocation6 + $0x11a0] sm:$0xff]
    %v4986 = vld [vmem:[#allocation6 + $0x11a8] sm:$0xff]
    %v4987 = vld [vmem:[#allocation6 + $0x11b0] sm:$0xff]
    %v4988 = vld [vmem:[#allocation6 + $0x11b8] sm:$0xff]
    %v4989 = vld [vmem:[#allocation6 + $0x11c0] sm:$0xff]
    %v4990 = vld [vmem:[#allocation6 + $0x11c8] sm:$0xff]
    %v4991 = vld [vmem:[#allocation6 + $0x11d0] sm:$0xff]
    %v4992 = vld [vmem:[#allocation6 + $0x11d8] sm:$0xff]
    %v4993 = vld [vmem:[#allocation6 + $0x11e0] sm:$0xff]
    %v4994 = vld [vmem:[#allocation6 + $0x11e8] sm:$0xff]
    %v4995 = vld [vmem:[#allocation6 + $0x11f0] sm:$0xff]
    %v4996 = vld [vmem:[#allocation6 + $0x11f8] sm:$0xff]
    %v4997 = vld [vmem:[#allocation7] sm:$0x1]
    %v4999 = vlaneseq
    %v5000 = vshrl.u32 %v4999, 7
    %v5001 = vsub.s32 0, %v5000
    %v5002 = vrot.slane %v4997, %v5001
    %5004 = vmatprep.subr.mxu0 0.0
    %5005 = vmatpush1.msra.mxu0 %v4436
    %5006 = vmatprep.subr.mxu0 0.0
    %5007 = vmatpush1.msra.mxu0 %v4435
    %5008 = vmatprep.subr.mxu0 0.0
    %5009 = vmatpush1.msra.mxu0 %v4434
    %5010 = vmatprep.subr.mxu0 0.0
    %5011 = vmatpush1.msra.mxu0 %v4433
    %5012 = vmatprep.subr.mxu0 0.0
    %5013 = vmatpush1.msra.mxu0 %v4432
    %5014 = vmatprep.subr.mxu0 0.0
    %5015 = vmatpush1.msra.mxu0 %v4431
    %5016 = vmatprep.subr.mxu0 0.0
    %5017 = vmatpush1.msra.mxu0 %v4430
    %5018 = vmatprep.subr.mxu0 0.0
    %5019 = vmatpush1.msra.mxu0 %v4429
    %5020 = vmatprep.subr.mxu0 0.0
    %5021 = vmatpush1.msra.mxu0 %v4428
    %5022 = vmatprep.subr.mxu0 0.0
    %5023 = vmatpush1.msra.mxu0 %v4427
    %5024 = vmatprep.subr.mxu0 0.0
    %5025 = vmatpush1.msra.mxu0 %v4426
    %5026 = vmatprep.subr.mxu0 0.0
    %5027 = vmatpush1.msra.mxu0 %v4425
    %5028 = vmatprep.subr.mxu0 0.0
    %5029 = vmatpush1.msra.mxu0 %v4424
    %5030 = vmatprep.subr.mxu0 0.0
    %5031 = vmatpush1.msra.mxu0 %v4423
    %5032 = vmatprep.subr.mxu0 0.0
    %5033 = vmatpush1.msra.mxu0 %v4422
    %5034 = vmatprep.subr.mxu0 0.0
    %5035 = vmatpush1.msra.mxu0 %v4421
    %5036 = vmatprep.subr.mxu0 0.0
    %5037 = vmatpush2.msra.mxu0 %v4452
    %5038 = vmatprep.subr.mxu0 0.0
    %5039 = vmatpush2.msra.mxu0 %v4451
    %5040 = vmatprep.subr.mxu0 0.0
    %5041 = vmatpush2.msra.mxu0 %v4450
    %5042 = vmatprep.subr.mxu0 0.0
    %5043 = vmatpush2.msra.mxu0 %v4449
    %5044 = vmatprep.subr.mxu0 0.0
    %5045 = vmatpush2.msra.mxu0 %v4448
    %5046 = vmatprep.subr.mxu0 0.0
    %5047 = vmatpush2.msra.mxu0 %v4447
    %5048 = vmatprep.subr.mxu0 0.0
    %5049 = vmatpush2.msra.mxu0 %v4446
    %5050 = vmatprep.subr.mxu0 0.0
    %5051 = vmatpush2.msra.mxu0 %v4445
    %5052 = vmatprep.subr.mxu0 0.0
    %5053 = vmatpush2.msra.mxu0 %v4444
    %5054 = vmatprep.subr.mxu0 0.0
    %5055 = vmatpush2.msra.mxu0 %v4443
    %5056 = vmatprep.subr.mxu0 0.0
    %5057 = vmatpush2.msra.mxu0 %v4442
    %5058 = vmatprep.subr.mxu0 0.0
    %5059 = vmatpush2.msra.mxu0 %v4441
    %5060 = vmatprep.subr.mxu0 0.0
    %5061 = vmatpush2.msra.mxu0 %v4440
    %5062 = vmatprep.subr.mxu0 0.0
    %5063 = vmatpush2.msra.mxu0 %v4439
    %5064 = vmatprep.subr.mxu0 0.0
    %5065 = vmatpush2.msra.mxu0 %v4438
    %5066 = vmatprep.subr.mxu0 0.0
    %5067 = vmatpush2.msra.mxu0 %v4437
    %5068 = vmatprep.mubr.f32.mxu0 %v4386
    %5069 = vmatmul.mubr.f32.gmra.mxu0 %v4385
    %v5070 = vpop.f32.mrf.mxu0
    %v5071 = vadd.f32 %v5002, %v5070
    %v5072 = vpop.f32.mrf.mxu0
    %5073 = vdwg.mxu0
    %5074 = vmatprep.subr.mxu0 0.0
    %5075 = vmatpush1.msra.mxu0 %v4468
    %5076 = vmatprep.subr.mxu0 0.0
    %5077 = vmatpush1.msra.mxu0 %v4467
    %5078 = vmatprep.subr.mxu0 0.0
    %5079 = vmatpush1.msra.mxu0 %v4466
    %5080 = vmatprep.subr.mxu0 0.0
    %5081 = vmatpush1.msra.mxu0 %v4465
    %5082 = vmatprep.subr.mxu0 0.0
    %5083 = vmatpush1.msra.mxu0 %v4464
    %5084 = vmatprep.subr.mxu0 0.0
    %5085 = vmatpush1.msra.mxu0 %v4463
    %5086 = vmatprep.subr.mxu0 0.0
    %5087 = vmatpush1.msra.mxu0 %v4462
    %5088 = vmatprep.subr.mxu0 0.0
    %5089 = vmatpush1.msra.mxu0 %v4461
    %5090 = vmatprep.subr.mxu0 0.0
    %5091 = vmatpush1.msra.mxu0 %v4460
    %5092 = vmatprep.subr.mxu0 0.0
    %5093 = vmatpush1.msra.mxu0 %v4459
    %5094 = vmatprep.subr.mxu0 0.0
    %5095 = vmatpush1.msra.mxu0 %v4458
    %5096 = vmatprep.subr.mxu0 0.0
    %5097 = vmatpush1.msra.mxu0 %v4457
    %5098 = vmatprep.subr.mxu0 0.0
    %5099 = vmatpush1.msra.mxu0 %v4456
    %5100 = vmatprep.subr.mxu0 0.0
    %5101 = vmatpush1.msra.mxu0 %v4455
    %5102 = vmatprep.subr.mxu0 0.0
    %5103 = vmatpush1.msra.mxu0 %v4454
    %5104 = vmatprep.subr.mxu0 0.0
    %5105 = vmatpush1.msra.mxu0 %v4453
    %5106 = vmatprep.subr.mxu0 0.0
    %5107 = vmatpush2.msra.mxu0 %v4484
    %5108 = vmatprep.subr.mxu0 0.0
    %5109 = vmatpush2.msra.mxu0 %v4483
    %5110 = vmatprep.subr.mxu0 0.0
    %5111 = vmatpush2.msra.mxu0 %v4482
    %5112 = vmatprep.subr.mxu0 0.0
    %5113 = vmatpush2.msra.mxu0 %v4481
    %5114 = vmatprep.subr.mxu0 0.0
    %5115 = vmatpush2.msra.mxu0 %v4480
    %5116 = vmatprep.subr.mxu0 0.0
    %5117 = vmatpush2.msra.mxu0 %v4479
    %5118 = vmatprep.subr.mxu0 0.0
    %5119 = vmatpush2.msra.mxu0 %v4478
    %5120 = vmatprep.subr.mxu0 0.0
    %5121 = vmatpush2.msra.mxu0 %v4477
    %5122 = vmatprep.subr.mxu0 0.0
    %5123 = vmatpush2.msra.mxu0 %v4476
    %5124 = vmatprep.subr.mxu0 0.0
    %5125 = vmatpush2.msra.mxu0 %v4475
    %5126 = vmatprep.subr.mxu0 0.0
    %5127 = vmatpush2.msra.mxu0 %v4474
    %5128 = vmatprep.subr.mxu0 0.0
    %5129 = vmatpush2.msra.mxu0 %v4473
    %5130 = vmatprep.subr.mxu0 0.0
    %5131 = vmatpush2.msra.mxu0 %v4472
    %5132 = vmatprep.subr.mxu0 0.0
    %5133 = vmatpush2.msra.mxu0 %v4471
    %5134 = vmatprep.subr.mxu0 0.0
    %5135 = vmatpush2.msra.mxu0 %v4470
    %5136 = vmatprep.subr.mxu0 0.0
    %5137 = vmatpush2.msra.mxu0 %v4469
    %5138 = vmatprep.mubr.f32.mxu0 %v4388
    %5139 = vmatmul.mubr.f32.gmra.mxu0 %v4387
    %v5140 = vpop.f32.mrf.mxu0
    %v5141 = vadd.f32 %v5071, %v5140
    %v5142 = vpop.f32.mrf.mxu0
    %5143 = vdwg.mxu0
    %5144 = vmatprep.subr.mxu0 0.0
    %5145 = vmatpush1.msra.mxu0 %v4500
    %5146 = vmatprep.subr.mxu0 0.0
    %5147 = vmatpush1.msra.mxu0 %v4499
    %5148 = vmatprep.subr.mxu0 0.0
    %5149 = vmatpush1.msra.mxu0 %v4498
    %5150 = vmatprep.subr.mxu0 0.0
    %5151 = vmatpush1.msra.mxu0 %v4497
    %5152 = vmatprep.subr.mxu0 0.0
    %5153 = vmatpush1.msra.mxu0 %v4496
    %5154 = vmatprep.subr.mxu0 0.0
    %5155 = vmatpush1.msra.mxu0 %v4495
    %5156 = vmatprep.subr.mxu0 0.0
    %5157 = vmatpush1.msra.mxu0 %v4494
    %5158 = vmatprep.subr.mxu0 0.0
    %5159 = vmatpush1.msra.mxu0 %v4493
    %5160 = vmatprep.subr.mxu0 0.0
    %5161 = vmatpush1.msra.mxu0 %v4492
    %5162 = vmatprep.subr.mxu0 0.0
    %5163 = vmatpush1.msra.mxu0 %v4491
    %5164 = vmatprep.subr.mxu0 0.0
    %5165 = vmatpush1.msra.mxu0 %v4490
    %5166 = vmatprep.subr.mxu0 0.0
    %5167 = vmatpush1.msra.mxu0 %v4489
    %5168 = vmatprep.subr.mxu0 0.0
    %5169 = vmatpush1.msra.mxu0 %v4488
    %5170 = vmatprep.subr.mxu0 0.0
    %5171 = vmatpush1.msra.mxu0 %v4487
    %5172 = vmatprep.subr.mxu0 0.0
    %5173 = vmatpush1.msra.mxu0 %v4486
    %5174 = vmatprep.subr.mxu0 0.0
    %5175 = vmatpush1.msra.mxu0 %v4485
    %5176 = vmatprep.subr.mxu0 0.0
    %5177 = vmatpush2.msra.mxu0 %v4516
    %5178 = vmatprep.subr.mxu0 0.0
    %5179 = vmatpush2.msra.mxu0 %v4515
    %5180 = vmatprep.subr.mxu0 0.0
    %5181 = vmatpush2.msra.mxu0 %v4514
    %5182 = vmatprep.subr.mxu0 0.0
    %5183 = vmatpush2.msra.mxu0 %v4513
    %5184 = vmatprep.subr.mxu0 0.0
    %5185 = vmatpush2.msra.mxu0 %v4512
    %5186 = vmatprep.subr.mxu0 0.0
    %5187 = vmatpush2.msra.mxu0 %v4511
    %5188 = vmatprep.subr.mxu0 0.0
    %5189 = vmatpush2.msra.mxu0 %v4510
    %5190 = vmatprep.subr.mxu0 0.0
    %5191 = vmatpush2.msra.mxu0 %v4509
    %5192 = vmatprep.subr.mxu0 0.0
    %5193 = vmatpush2.msra.mxu0 %v4508
    %5194 = vmatprep.subr.mxu0 0.0
    %5195 = vmatpush2.msra.mxu0 %v4507
    %5196 = vmatprep.subr.mxu0 0.0
    %5197 = vmatpush2.msra.mxu0 %v4506
    %5198 = vmatprep.subr.mxu0 0.0
    %5199 = vmatpush2.msra.mxu0 %v4505
    %5200 = vmatprep.subr.mxu0 0.0
    %5201 = vmatpush2.msra.mxu0 %v4504
    %5202 = vmatprep.subr.mxu0 0.0
    %5203 = vmatpush2.msra.mxu0 %v4503
    %5204 = vmatprep.subr.mxu0 0.0
    %5205 = vmatpush2.msra.mxu0 %v4502
    %5206 = vmatprep.subr.mxu0 0.0
    %5207 = vmatpush2.msra.mxu0 %v4501
    %5208 = vmatprep.mubr.f32.mxu0 %v4390
    %5209 = vmatmul.mubr.f32.gmra.mxu0 %v4389
    %v5210 = vpop.f32.mrf.mxu0
    %v5211 = vadd.f32 %v5141, %v5210
    %v5212 = vpop.f32.mrf.mxu0
    %5213 = vdwg.mxu0
    %5214 = vmatprep.subr.mxu0 0.0
    %5215 = vmatpush1.msra.mxu0 %v4532
    %5216 = vmatprep.subr.mxu0 0.0
    %5217 = vmatpush1.msra.mxu0 %v4531
    %5218 = vmatprep.subr.mxu0 0.0
    %5219 = vmatpush1.msra.mxu0 %v4530
    %5220 = vmatprep.subr.mxu0 0.0
    %5221 = vmatpush1.msra.mxu0 %v4529
    %5222 = vmatprep.subr.mxu0 0.0
    %5223 = vmatpush1.msra.mxu0 %v4528
    %5224 = vmatprep.subr.mxu0 0.0
    %5225 = vmatpush1.msra.mxu0 %v4527
    %5226 = vmatprep.subr.mxu0 0.0
    %5227 = vmatpush1.msra.mxu0 %v4526
    %5228 = vmatprep.subr.mxu0 0.0
    %5229 = vmatpush1.msra.mxu0 %v4525
    %5230 = vmatprep.subr.mxu0 0.0
    %5231 = vmatpush1.msra.mxu0 %v4524
    %5232 = vmatprep.subr.mxu0 0.0
    %5233 = vmatpush1.msra.mxu0 %v4523
    %5234 = vmatprep.subr.mxu0 0.0
    %5235 = vmatpush1.msra.mxu0 %v4522
    %5236 = vmatprep.subr.mxu0 0.0
    %5237 = vmatpush1.msra.mxu0 %v4521
    %5238 = vmatprep.subr.mxu0 0.0
    %5239 = vmatpush1.msra.mxu0 %v4520
    %5240 = vmatprep.subr.mxu0 0.0
    %5241 = vmatpush1.msra.mxu0 %v4519
    %5242 = vmatprep.subr.mxu0 0.0
    %5243 = vmatpush1.msra.mxu0 %v4518
    %5244 = vmatprep.subr.mxu0 0.0
    %5245 = vmatpush1.msra.mxu0 %v4517
    %5246 = vmatprep.subr.mxu0 0.0
    %5247 = vmatpush2.msra.mxu0 %v4548
    %5248 = vmatprep.subr.mxu0 0.0
    %5249 = vmatpush2.msra.mxu0 %v4547
    %5250 = vmatprep.subr.mxu0 0.0
    %5251 = vmatpush2.msra.mxu0 %v4546
    %5252 = vmatprep.subr.mxu0 0.0
    %5253 = vmatpush2.msra.mxu0 %v4545
    %5254 = vmatprep.subr.mxu0 0.0
    %5255 = vmatpush2.msra.mxu0 %v4544
    %5256 = vmatprep.subr.mxu0 0.0
    %5257 = vmatpush2.msra.mxu0 %v4543
    %5258 = vmatprep.subr.mxu0 0.0
    %5259 = vmatpush2.msra.mxu0 %v4542
    %5260 = vmatprep.subr.mxu0 0.0
    %5261 = vmatpush2.msra.mxu0 %v4541
    %5262 = vmatprep.subr.mxu0 0.0
    %5263 = vmatpush2.msra.mxu0 %v4540
    %5264 = vmatprep.subr.mxu0 0.0
    %5265 = vmatpush2.msra.mxu0 %v4539
    %5266 = vmatprep.subr.mxu0 0.0
    %5267 = vmatpush2.msra.mxu0 %v4538
    %5268 = vmatprep.subr.mxu0 0.0
    %5269 = vmatpush2.msra.mxu0 %v4537
    %5270 = vmatprep.subr.mxu0 0.0
    %5271 = vmatpush2.msra.mxu0 %v4536
    %5272 = vmatprep.subr.mxu0 0.0
    %5273 = vmatpush2.msra.mxu0 %v4535
    %5274 = vmatprep.subr.mxu0 0.0
    %5275 = vmatpush2.msra.mxu0 %v4534
    %5276 = vmatprep.subr.mxu0 0.0
    %5277 = vmatpush2.msra.mxu0 %v4533
    %5278 = vmatprep.mubr.f32.mxu0 %v4392
    %5279 = vmatmul.mubr.f32.gmra.mxu0 %v4391
    %v5280 = vpop.f32.mrf.mxu0
    %v5281 = vadd.f32 %v5211, %v5280
    %v5282 = vpop.f32.mrf.mxu0
    %5283 = vdwg.mxu0
    %5284 = vmatprep.subr.mxu0 0.0
    %5285 = vmatpush1.msra.mxu0 %v4564
    %5286 = vmatprep.subr.mxu0 0.0
    %5287 = vmatpush1.msra.mxu0 %v4563
    %5288 = vmatprep.subr.mxu0 0.0
    %5289 = vmatpush1.msra.mxu0 %v4562
    %5290 = vmatprep.subr.mxu0 0.0
    %5291 = vmatpush1.msra.mxu0 %v4561
    %5292 = vmatprep.subr.mxu0 0.0
    %5293 = vmatpush1.msra.mxu0 %v4560
    %5294 = vmatprep.subr.mxu0 0.0
    %5295 = vmatpush1.msra.mxu0 %v4559
    %5296 = vmatprep.subr.mxu0 0.0
    %5297 = vmatpush1.msra.mxu0 %v4558
    %5298 = vmatprep.subr.mxu0 0.0
    %5299 = vmatpush1.msra.mxu0 %v4557
    %5300 = vmatprep.subr.mxu0 0.0
    %5301 = vmatpush1.msra.mxu0 %v4556
    %5302 = vmatprep.subr.mxu0 0.0
    %5303 = vmatpush1.msra.mxu0 %v4555
    %5304 = vmatprep.subr.mxu0 0.0
    %5305 = vmatpush1.msra.mxu0 %v4554
    %5306 = vmatprep.subr.mxu0 0.0
    %5307 = vmatpush1.msra.mxu0 %v4553
    %5308 = vmatprep.subr.mxu0 0.0
    %5309 = vmatpush1.msra.mxu0 %v4552
    %5310 = vmatprep.subr.mxu0 0.0
    %5311 = vmatpush1.msra.mxu0 %v4551
    %5312 = vmatprep.subr.mxu0 0.0
    %5313 = vmatpush1.msra.mxu0 %v4550
    %5314 = vmatprep.subr.mxu0 0.0
    %5315 = vmatpush1.msra.mxu0 %v4549
    %5316 = vmatprep.subr.mxu0 0.0
    %5317 = vmatpush2.msra.mxu0 %v4580
    %5318 = vmatprep.subr.mxu0 0.0
    %5319 = vmatpush2.msra.mxu0 %v4579
    %5320 = vmatprep.subr.mxu0 0.0
    %5321 = vmatpush2.msra.mxu0 %v4578
    %5322 = vmatprep.subr.mxu0 0.0
    %5323 = vmatpush2.msra.mxu0 %v4577
    %5324 = vmatprep.subr.mxu0 0.0
    %5325 = vmatpush2.msra.mxu0 %v4576
    %5326 = vmatprep.subr.mxu0 0.0
    %5327 = vmatpush2.msra.mxu0 %v4575
    %5328 = vmatprep.subr.mxu0 0.0
    %5329 = vmatpush2.msra.mxu0 %v4574
    %5330 = vmatprep.subr.mxu0 0.0
    %5331 = vmatpush2.msra.mxu0 %v4573
    %5332 = vmatprep.subr.mxu0 0.0
    %5333 = vmatpush2.msra.mxu0 %v4572
    %5334 = vmatprep.subr.mxu0 0.0
    %5335 = vmatpush2.msra.mxu0 %v4571
    %5336 = vmatprep.subr.mxu0 0.0
    %5337 = vmatpush2.msra.mxu0 %v4570
    %5338 = vmatprep.subr.mxu0 0.0
    %5339 = vmatpush2.msra.mxu0 %v4569
    %5340 = vmatprep.subr.mxu0 0.0
    %5341 = vmatpush2.msra.mxu0 %v4568
    %5342 = vmatprep.subr.mxu0 0.0
    %5343 = vmatpush2.msra.mxu0 %v4567
    %5344 = vmatprep.subr.mxu0 0.0
    %5345 = vmatpush2.msra.mxu0 %v4566
    %5346 = vmatprep.subr.mxu0 0.0
    %5347 = vmatpush2.msra.mxu0 %v4565
    %5348 = vmatprep.mubr.f32.mxu0 %v4394
    %5349 = vmatmul.mubr.f32.gmra.mxu0 %v4393
    %v5350 = vpop.f32.mrf.mxu0
    %v5351 = vadd.f32 %v5281, %v5350
    %v5352 = vpop.f32.mrf.mxu0
    %5353 = vdwg.mxu0
    %5354 = vmatprep.subr.mxu0 0.0
    %5355 = vmatpush1.msra.mxu0 %v4596
    %5356 = vmatprep.subr.mxu0 0.0
    %5357 = vmatpush1.msra.mxu0 %v4595
    %5358 = vmatprep.subr.mxu0 0.0
    %5359 = vmatpush1.msra.mxu0 %v4594
    %5360 = vmatprep.subr.mxu0 0.0
    %5361 = vmatpush1.msra.mxu0 %v4593
    %5362 = vmatprep.subr.mxu0 0.0
    %5363 = vmatpush1.msra.mxu0 %v4592
    %5364 = vmatprep.subr.mxu0 0.0
    %5365 = vmatpush1.msra.mxu0 %v4591
    %5366 = vmatprep.subr.mxu0 0.0
    %5367 = vmatpush1.msra.mxu0 %v4590
    %5368 = vmatprep.subr.mxu0 0.0
    %5369 = vmatpush1.msra.mxu0 %v4589
    %5370 = vmatprep.subr.mxu0 0.0
    %5371 = vmatpush1.msra.mxu0 %v4588
    %5372 = vmatprep.subr.mxu0 0.0
    %5373 = vmatpush1.msra.mxu0 %v4587
    %5374 = vmatprep.subr.mxu0 0.0
    %5375 = vmatpush1.msra.mxu0 %v4586
    %5376 = vmatprep.subr.mxu0 0.0
    %5377 = vmatpush1.msra.mxu0 %v4585
    %5378 = vmatprep.subr.mxu0 0.0
    %5379 = vmatpush1.msra.mxu0 %v4584
    %5380 = vmatprep.subr.mxu0 0.0
    %5381 = vmatpush1.msra.mxu0 %v4583
    %5382 = vmatprep.subr.mxu0 0.0
    %5383 = vmatpush1.msra.mxu0 %v4582
    %5384 = vmatprep.subr.mxu0 0.0
    %5385 = vmatpush1.msra.mxu0 %v4581
    %5386 = vmatprep.subr.mxu0 0.0
    %5387 = vmatpush2.msra.mxu0 %v4612
    %5388 = vmatprep.subr.mxu0 0.0
    %5389 = vmatpush2.msra.mxu0 %v4611
    %5390 = vmatprep.subr.mxu0 0.0
    %5391 = vmatpush2.msra.mxu0 %v4610
    %5392 = vmatprep.subr.mxu0 0.0
    %5393 = vmatpush2.msra.mxu0 %v4609
    %5394 = vmatprep.subr.mxu0 0.0
    %5395 = vmatpush2.msra.mxu0 %v4608
    %5396 = vmatprep.subr.mxu0 0.0
    %5397 = vmatpush2.msra.mxu0 %v4607
    %5398 = vmatprep.subr.mxu0 0.0
    %5399 = vmatpush2.msra.mxu0 %v4606
    %5400 = vmatprep.subr.mxu0 0.0
    %5401 = vmatpush2.msra.mxu0 %v4605
    %5402 = vmatprep.subr.mxu0 0.0
    %5403 = vmatpush2.msra.mxu0 %v4604
    %5404 = vmatprep.subr.mxu0 0.0
    %5405 = vmatpush2.msra.mxu0 %v4603
    %5406 = vmatprep.subr.mxu0 0.0
    %5407 = vmatpush2.msra.mxu0 %v4602
    %5408 = vmatprep.subr.mxu0 0.0
    %5409 = vmatpush2.msra.mxu0 %v4601
    %5410 = vmatprep.subr.mxu0 0.0
    %5411 = vmatpush2.msra.mxu0 %v4600
    %5412 = vmatprep.subr.mxu0 0.0
    %5413 = vmatpush2.msra.mxu0 %v4599
    %5414 = vmatprep.subr.mxu0 0.0
    %5415 = vmatpush2.msra.mxu0 %v4598
    %5416 = vmatprep.subr.mxu0 0.0
    %5417 = vmatpush2.msra.mxu0 %v4597
    %5418 = vmatprep.mubr.f32.mxu0 %v4396
    %5419 = vmatmul.mubr.f32.gmra.mxu0 %v4395
    %v5420 = vpop.f32.mrf.mxu0
    %v5421 = vadd.f32 %v5351, %v5420
    %v5422 = vpop.f32.mrf.mxu0
    %5423 = vdwg.mxu0
    %5424 = vmatprep.subr.mxu0 0.0
    %5425 = vmatpush1.msra.mxu0 %v4628
    %5426 = vmatprep.subr.mxu0 0.0
    %5427 = vmatpush1.msra.mxu0 %v4627
    %5428 = vmatprep.subr.mxu0 0.0
    %5429 = vmatpush1.msra.mxu0 %v4626
    %5430 = vmatprep.subr.mxu0 0.0
    %5431 = vmatpush1.msra.mxu0 %v4625
    %5432 = vmatprep.subr.mxu0 0.0
    %5433 = vmatpush1.msra.mxu0 %v4624
    %5434 = vmatprep.subr.mxu0 0.0
    %5435 = vmatpush1.msra.mxu0 %v4623
    %5436 = vmatprep.subr.mxu0 0.0
    %5437 = vmatpush1.msra.mxu0 %v4622
    %5438 = vmatprep.subr.mxu0 0.0
    %5439 = vmatpush1.msra.mxu0 %v4621
    %5440 = vmatprep.subr.mxu0 0.0
    %5441 = vmatpush1.msra.mxu0 %v4620
    %5442 = vmatprep.subr.mxu0 0.0
    %5443 = vmatpush1.msra.mxu0 %v4619
    %5444 = vmatprep.subr.mxu0 0.0
    %5445 = vmatpush1.msra.mxu0 %v4618
    %5446 = vmatprep.subr.mxu0 0.0
    %5447 = vmatpush1.msra.mxu0 %v4617
    %5448 = vmatprep.subr.mxu0 0.0
    %5449 = vmatpush1.msra.mxu0 %v4616
    %5450 = vmatprep.subr.mxu0 0.0
    %5451 = vmatpush1.msra.mxu0 %v4615
    %5452 = vmatprep.subr.mxu0 0.0
    %5453 = vmatpush1.msra.mxu0 %v4614
    %5454 = vmatprep.subr.mxu0 0.0
    %5455 = vmatpush1.msra.mxu0 %v4613
    %5456 = vmatprep.subr.mxu0 0.0
    %5457 = vmatpush2.msra.mxu0 %v4644
    %5458 = vmatprep.subr.mxu0 0.0
    %5459 = vmatpush2.msra.mxu0 %v4643
    %5460 = vmatprep.subr.mxu0 0.0
    %5461 = vmatpush2.msra.mxu0 %v4642
    %5462 = vmatprep.subr.mxu0 0.0
    %5463 = vmatpush2.msra.mxu0 %v4641
    %5464 = vmatprep.subr.mxu0 0.0
    %5465 = vmatpush2.msra.mxu0 %v4640
    %5466 = vmatprep.subr.mxu0 0.0
    %5467 = vmatpush2.msra.mxu0 %v4639
    %5468 = vmatprep.subr.mxu0 0.0
    %5469 = vmatpush2.msra.mxu0 %v4638
    %5470 = vmatprep.subr.mxu0 0.0
    %5471 = vmatpush2.msra.mxu0 %v4637
    %5472 = vmatprep.subr.mxu0 0.0
    %5473 = vmatpush2.msra.mxu0 %v4636
    %5474 = vmatprep.subr.mxu0 0.0
    %5475 = vmatpush2.msra.mxu0 %v4635
    %5476 = vmatprep.subr.mxu0 0.0
    %5477 = vmatpush2.msra.mxu0 %v4634
    %5478 = vmatprep.subr.mxu0 0.0
    %5479 = vmatpush2.msra.mxu0 %v4633
    %5480 = vmatprep.subr.mxu0 0.0
    %5481 = vmatpush2.msra.mxu0 %v4632
    %5482 = vmatprep.subr.mxu0 0.0
    %5483 = vmatpush2.msra.mxu0 %v4631
    %5484 = vmatprep.subr.mxu0 0.0
    %5485 = vmatpush2.msra.mxu0 %v4630
    %5486 = vmatprep.subr.mxu0 0.0
    %5487 = vmatpush2.msra.mxu0 %v4629
    %5488 = vmatprep.mubr.f32.mxu0 %v4398
    %5489 = vmatmul.mubr.f32.gmra.mxu0 %v4397
    %v5490 = vpop.f32.mrf.mxu0
    %v5491 = vadd.f32 %v5421, %v5490
    %v5492 = vpop.f32.mrf.mxu0
    %5493 = vdwg.mxu0
    %5494 = vmatprep.subr.mxu0 0.0
    %5495 = vmatpush1.msra.mxu0 %v4660
    %5496 = vmatprep.subr.mxu0 0.0
    %5497 = vmatpush1.msra.mxu0 %v4659
    %5498 = vmatprep.subr.mxu0 0.0
    %5499 = vmatpush1.msra.mxu0 %v4658
    %5500 = vmatprep.subr.mxu0 0.0
    %5501 = vmatpush1.msra.mxu0 %v4657
    %5502 = vmatprep.subr.mxu0 0.0
    %5503 = vmatpush1.msra.mxu0 %v4656
    %5504 = vmatprep.subr.mxu0 0.0
    %5505 = vmatpush1.msra.mxu0 %v4655
    %5506 = vmatprep.subr.mxu0 0.0
    %5507 = vmatpush1.msra.mxu0 %v4654
    %5508 = vmatprep.subr.mxu0 0.0
    %5509 = vmatpush1.msra.mxu0 %v4653
    %5510 = vmatprep.subr.mxu0 0.0
    %5511 = vmatpush1.msra.mxu0 %v4652
    %5512 = vmatprep.subr.mxu0 0.0
    %5513 = vmatpush1.msra.mxu0 %v4651
    %5514 = vmatprep.subr.mxu0 0.0
    %5515 = vmatpush1.msra.mxu0 %v4650
    %5516 = vmatprep.subr.mxu0 0.0
    %5517 = vmatpush1.msra.mxu0 %v4649
    %5518 = vmatprep.subr.mxu0 0.0
    %5519 = vmatpush1.msra.mxu0 %v4648
    %5520 = vmatprep.subr.mxu0 0.0
    %5521 = vmatpush1.msra.mxu0 %v4647
    %5522 = vmatprep.subr.mxu0 0.0
    %5523 = vmatpush1.msra.mxu0 %v4646
    %5524 = vmatprep.subr.mxu0 0.0
    %5525 = vmatpush1.msra.mxu0 %v4645
    %5526 = vmatprep.subr.mxu0 0.0
    %5527 = vmatpush2.msra.mxu0 %v4676
    %5528 = vmatprep.subr.mxu0 0.0
    %5529 = vmatpush2.msra.mxu0 %v4675
    %5530 = vmatprep.subr.mxu0 0.0
    %5531 = vmatpush2.msra.mxu0 %v4674
    %5532 = vmatprep.subr.mxu0 0.0
    %5533 = vmatpush2.msra.mxu0 %v4673
    %5534 = vmatprep.subr.mxu0 0.0
    %5535 = vmatpush2.msra.mxu0 %v4672
    %5536 = vmatprep.subr.mxu0 0.0
    %5537 = vmatpush2.msra.mxu0 %v4671
    %5538 = vmatprep.subr.mxu0 0.0
    %5539 = vmatpush2.msra.mxu0 %v4670
    %5540 = vmatprep.subr.mxu0 0.0
    %5541 = vmatpush2.msra.mxu0 %v4669
    %5542 = vmatprep.subr.mxu0 0.0
    %5543 = vmatpush2.msra.mxu0 %v4668
    %5544 = vmatprep.subr.mxu0 0.0
    %5545 = vmatpush2.msra.mxu0 %v4667
    %5546 = vmatprep.subr.mxu0 0.0
    %5547 = vmatpush2.msra.mxu0 %v4666
    %5548 = vmatprep.subr.mxu0 0.0
    %5549 = vmatpush2.msra.mxu0 %v4665
    %5550 = vmatprep.subr.mxu0 0.0
    %5551 = vmatpush2.msra.mxu0 %v4664
    %5552 = vmatprep.subr.mxu0 0.0
    %5553 = vmatpush2.msra.mxu0 %v4663
    %5554 = vmatprep.subr.mxu0 0.0
    %5555 = vmatpush2.msra.mxu0 %v4662
    %5556 = vmatprep.subr.mxu0 0.0
    %5557 = vmatpush2.msra.mxu0 %v4661
    %5558 = vmatprep.mubr.f32.mxu0 %v4400
    %5559 = vmatmul.mubr.f32.gmra.mxu0 %v4399
    %v5560 = vpop.f32.mrf.mxu0
    %v5561 = vadd.f32 %v5491, %v5560
    %v5562 = vpop.f32.mrf.mxu0
    %5563 = vdwg.mxu0
    %5564 = vmatprep.subr.mxu0 0.0
    %5565 = vmatpush1.msra.mxu0 %v4692
    %5566 = vmatprep.subr.mxu0 0.0
    %5567 = vmatpush1.msra.mxu0 %v4691
    %5568 = vmatprep.subr.mxu0 0.0
    %5569 = vmatpush1.msra.mxu0 %v4690
    %5570 = vmatprep.subr.mxu0 0.0
    %5571 = vmatpush1.msra.mxu0 %v4689
    %5572 = vmatprep.subr.mxu0 0.0
    %5573 = vmatpush1.msra.mxu0 %v4688
    %5574 = vmatprep.subr.mxu0 0.0
    %5575 = vmatpush1.msra.mxu0 %v4687
    %5576 = vmatprep.subr.mxu0 0.0
    %5577 = vmatpush1.msra.mxu0 %v4686
    %5578 = vmatprep.subr.mxu0 0.0
    %5579 = vmatpush1.msra.mxu0 %v4685
    %5580 = vmatprep.subr.mxu0 0.0
    %5581 = vmatpush1.msra.mxu0 %v4684
    %5582 = vmatprep.subr.mxu0 0.0
    %5583 = vmatpush1.msra.mxu0 %v4683
    %5584 = vmatprep.subr.mxu0 0.0
    %5585 = vmatpush1.msra.mxu0 %v4682
    %5586 = vmatprep.subr.mxu0 0.0
    %5587 = vmatpush1.msra.mxu0 %v4681
    %5588 = vmatprep.subr.mxu0 0.0
    %5589 = vmatpush1.msra.mxu0 %v4680
    %5590 = vmatprep.subr.mxu0 0.0
    %5591 = vmatpush1.msra.mxu0 %v4679
    %5592 = vmatprep.subr.mxu0 0.0
    %5593 = vmatpush1.msra.mxu0 %v4678
    %5594 = vmatprep.subr.mxu0 0.0
    %5595 = vmatpush1.msra.mxu0 %v4677
    %5596 = vmatprep.subr.mxu0 0.0
    %5597 = vmatpush2.msra.mxu0 %v4708
    %5598 = vmatprep.subr.mxu0 0.0
    %5599 = vmatpush2.msra.mxu0 %v4707
    %5600 = vmatprep.subr.mxu0 0.0
    %5601 = vmatpush2.msra.mxu0 %v4706
    %5602 = vmatprep.subr.mxu0 0.0
    %5603 = vmatpush2.msra.mxu0 %v4705
    %5604 = vmatprep.subr.mxu0 0.0
    %5605 = vmatpush2.msra.mxu0 %v4704
    %5606 = vmatprep.subr.mxu0 0.0
    %5607 = vmatpush2.msra.mxu0 %v4703
    %5608 = vmatprep.subr.mxu0 0.0
    %5609 = vmatpush2.msra.mxu0 %v4702
    %5610 = vmatprep.subr.mxu0 0.0
    %5611 = vmatpush2.msra.mxu0 %v4701
    %5612 = vmatprep.subr.mxu0 0.0
    %5613 = vmatpush2.msra.mxu0 %v4700
    %5614 = vmatprep.subr.mxu0 0.0
    %5615 = vmatpush2.msra.mxu0 %v4699
    %5616 = vmatprep.subr.mxu0 0.0
    %5617 = vmatpush2.msra.mxu0 %v4698
    %5618 = vmatprep.subr.mxu0 0.0
    %5619 = vmatpush2.msra.mxu0 %v4697
    %5620 = vmatprep.subr.mxu0 0.0
    %5621 = vmatpush2.msra.mxu0 %v4696
    %5622 = vmatprep.subr.mxu0 0.0
    %5623 = vmatpush2.msra.mxu0 %v4695
    %5624 = vmatprep.subr.mxu0 0.0
    %5625 = vmatpush2.msra.mxu0 %v4694
    %5626 = vmatprep.subr.mxu0 0.0
    %5627 = vmatpush2.msra.mxu0 %v4693
    %5628 = vmatprep.mubr.f32.mxu0 %v4402
    %5629 = vmatmul.mubr.f32.gmra.mxu0 %v4401
    %v5630 = vpop.f32.mrf.mxu0
    %v5631 = vadd.f32 %v5561, %v5630
    %v5632 = vpop.f32.mrf.mxu0
    %5633 = vdwg.mxu0
    %5634 = vmatprep.subr.mxu0 0.0
    %5635 = vmatpush1.msra.mxu0 %v4724
    %5636 = vmatprep.subr.mxu0 0.0
    %5637 = vmatpush1.msra.mxu0 %v4723
    %5638 = vmatprep.subr.mxu0 0.0
    %5639 = vmatpush1.msra.mxu0 %v4722
    %5640 = vmatprep.subr.mxu0 0.0
    %5641 = vmatpush1.msra.mxu0 %v4721
    %5642 = vmatprep.subr.mxu0 0.0
    %5643 = vmatpush1.msra.mxu0 %v4720
    %5644 = vmatprep.subr.mxu0 0.0
    %5645 = vmatpush1.msra.mxu0 %v4719
    %5646 = vmatprep.subr.mxu0 0.0
    %5647 = vmatpush1.msra.mxu0 %v4718
    %5648 = vmatprep.subr.mxu0 0.0
    %5649 = vmatpush1.msra.mxu0 %v4717
    %5650 = vmatprep.subr.mxu0 0.0
    %5651 = vmatpush1.msra.mxu0 %v4716
    %5652 = vmatprep.subr.mxu0 0.0
    %5653 = vmatpush1.msra.mxu0 %v4715
    %5654 = vmatprep.subr.mxu0 0.0
    %5655 = vmatpush1.msra.mxu0 %v4714
    %5656 = vmatprep.subr.mxu0 0.0
    %5657 = vmatpush1.msra.mxu0 %v4713
    %5658 = vmatprep.subr.mxu0 0.0
    %5659 = vmatpush1.msra.mxu0 %v4712
    %5660 = vmatprep.subr.mxu0 0.0
    %5661 = vmatpush1.msra.mxu0 %v4711
    %5662 = vmatprep.subr.mxu0 0.0
    %5663 = vmatpush1.msra.mxu0 %v4710
    %5664 = vmatprep.subr.mxu0 0.0
    %5665 = vmatpush1.msra.mxu0 %v4709
    %5666 = vmatprep.subr.mxu0 0.0
    %5667 = vmatpush2.msra.mxu0 %v4740
    %5668 = vmatprep.subr.mxu0 0.0
    %5669 = vmatpush2.msra.mxu0 %v4739
    %5670 = vmatprep.subr.mxu0 0.0
    %5671 = vmatpush2.msra.mxu0 %v4738
    %5672 = vmatprep.subr.mxu0 0.0
    %5673 = vmatpush2.msra.mxu0 %v4737
    %5674 = vmatprep.subr.mxu0 0.0
    %5675 = vmatpush2.msra.mxu0 %v4736
    %5676 = vmatprep.subr.mxu0 0.0
    %5677 = vmatpush2.msra.mxu0 %v4735
    %5678 = vmatprep.subr.mxu0 0.0
    %5679 = vmatpush2.msra.mxu0 %v4734
    %5680 = vmatprep.subr.mxu0 0.0
    %5681 = vmatpush2.msra.mxu0 %v4733
    %5682 = vmatprep.subr.mxu0 0.0
    %5683 = vmatpush2.msra.mxu0 %v4732
    %5684 = vmatprep.subr.mxu0 0.0
    %5685 = vmatpush2.msra.mxu0 %v4731
    %5686 = vmatprep.subr.mxu0 0.0
    %5687 = vmatpush2.msra.mxu0 %v4730
    %5688 = vmatprep.subr.mxu0 0.0
    %5689 = vmatpush2.msra.mxu0 %v4729
    %5690 = vmatprep.subr.mxu0 0.0
    %5691 = vmatpush2.msra.mxu0 %v4728
    %5692 = vmatprep.subr.mxu0 0.0
    %5693 = vmatpush2.msra.mxu0 %v4727
    %5694 = vmatprep.subr.mxu0 0.0
    %5695 = vmatpush2.msra.mxu0 %v4726
    %5696 = vmatprep.subr.mxu0 0.0
    %5697 = vmatpush2.msra.mxu0 %v4725
    %5698 = vmatprep.mubr.f32.mxu0 %v4404
    %5699 = vmatmul.mubr.f32.gmra.mxu0 %v4403
    %v5700 = vpop.f32.mrf.mxu0
    %v5701 = vadd.f32 %v5631, %v5700
    %v5702 = vpop.f32.mrf.mxu0
    %5703 = vdwg.mxu0
    %5704 = vmatprep.subr.mxu0 0.0
    %5705 = vmatpush1.msra.mxu0 %v4756
    %5706 = vmatprep.subr.mxu0 0.0
    %5707 = vmatpush1.msra.mxu0 %v4755
    %5708 = vmatprep.subr.mxu0 0.0
    %5709 = vmatpush1.msra.mxu0 %v4754
    %5710 = vmatprep.subr.mxu0 0.0
    %5711 = vmatpush1.msra.mxu0 %v4753
    %5712 = vmatprep.subr.mxu0 0.0
    %5713 = vmatpush1.msra.mxu0 %v4752
    %5714 = vmatprep.subr.mxu0 0.0
    %5715 = vmatpush1.msra.mxu0 %v4751
    %5716 = vmatprep.subr.mxu0 0.0
    %5717 = vmatpush1.msra.mxu0 %v4750
    %5718 = vmatprep.subr.mxu0 0.0
    %5719 = vmatpush1.msra.mxu0 %v4749
    %5720 = vmatprep.subr.mxu0 0.0
    %5721 = vmatpush1.msra.mxu0 %v4748
    %5722 = vmatprep.subr.mxu0 0.0
    %5723 = vmatpush1.msra.mxu0 %v4747
    %5724 = vmatprep.subr.mxu0 0.0
    %5725 = vmatpush1.msra.mxu0 %v4746
    %5726 = vmatprep.subr.mxu0 0.0
    %5727 = vmatpush1.msra.mxu0 %v4745
    %5728 = vmatprep.subr.mxu0 0.0
    %5729 = vmatpush1.msra.mxu0 %v4744
    %5730 = vmatprep.subr.mxu0 0.0
    %5731 = vmatpush1.msra.mxu0 %v4743
    %5732 = vmatprep.subr.mxu0 0.0
    %5733 = vmatpush1.msra.mxu0 %v4742
    %5734 = vmatprep.subr.mxu0 0.0
    %5735 = vmatpush1.msra.mxu0 %v4741
    %5736 = vmatprep.subr.mxu0 0.0
    %5737 = vmatpush2.msra.mxu0 %v4772
    %5738 = vmatprep.subr.mxu0 0.0
    %5739 = vmatpush2.msra.mxu0 %v4771
    %5740 = vmatprep.subr.mxu0 0.0
    %5741 = vmatpush2.msra.mxu0 %v4770
    %5742 = vmatprep.subr.mxu0 0.0
    %5743 = vmatpush2.msra.mxu0 %v4769
    %5744 = vmatprep.subr.mxu0 0.0
    %5745 = vmatpush2.msra.mxu0 %v4768
    %5746 = vmatprep.subr.mxu0 0.0
    %5747 = vmatpush2.msra.mxu0 %v4767
    %5748 = vmatprep.subr.mxu0 0.0
    %5749 = vmatpush2.msra.mxu0 %v4766
    %5750 = vmatprep.subr.mxu0 0.0
    %5751 = vmatpush2.msra.mxu0 %v4765
    %5752 = vmatprep.subr.mxu0 0.0
    %5753 = vmatpush2.msra.mxu0 %v4764
    %5754 = vmatprep.subr.mxu0 0.0
    %5755 = vmatpush2.msra.mxu0 %v4763
    %5756 = vmatprep.subr.mxu0 0.0
    %5757 = vmatpush2.msra.mxu0 %v4762
    %5758 = vmatprep.subr.mxu0 0.0
    %5759 = vmatpush2.msra.mxu0 %v4761
    %5760 = vmatprep.subr.mxu0 0.0
    %5761 = vmatpush2.msra.mxu0 %v4760
    %5762 = vmatprep.subr.mxu0 0.0
    %5763 = vmatpush2.msra.mxu0 %v4759
    %5764 = vmatprep.subr.mxu0 0.0
    %5765 = vmatpush2.msra.mxu0 %v4758
    %5766 = vmatprep.subr.mxu0 0.0
    %5767 = vmatpush2.msra.mxu0 %v4757
    %5768 = vmatprep.mubr.f32.mxu0 %v4406
    %5769 = vmatmul.mubr.f32.gmra.mxu0 %v4405
    %v5770 = vpop.f32.mrf.mxu0
    %v5771 = vadd.f32 %v5701, %v5770
    %v5772 = vpop.f32.mrf.mxu0
    %5773 = vdwg.mxu0
    %5774 = vmatprep.subr.mxu0 0.0
    %5775 = vmatpush1.msra.mxu0 %v4788
    %5776 = vmatprep.subr.mxu0 0.0
    %5777 = vmatpush1.msra.mxu0 %v4787
    %5778 = vmatprep.subr.mxu0 0.0
    %5779 = vmatpush1.msra.mxu0 %v4786
    %5780 = vmatprep.subr.mxu0 0.0
    %5781 = vmatpush1.msra.mxu0 %v4785
    %5782 = vmatprep.subr.mxu0 0.0
    %5783 = vmatpush1.msra.mxu0 %v4784
    %5784 = vmatprep.subr.mxu0 0.0
    %5785 = vmatpush1.msra.mxu0 %v4783
    %5786 = vmatprep.subr.mxu0 0.0
    %5787 = vmatpush1.msra.mxu0 %v4782
    %5788 = vmatprep.subr.mxu0 0.0
    %5789 = vmatpush1.msra.mxu0 %v4781
    %5790 = vmatprep.subr.mxu0 0.0
    %5791 = vmatpush1.msra.mxu0 %v4780
    %5792 = vmatprep.subr.mxu0 0.0
    %5793 = vmatpush1.msra.mxu0 %v4779
    %5794 = vmatprep.subr.mxu0 0.0
    %5795 = vmatpush1.msra.mxu0 %v4778
    %5796 = vmatprep.subr.mxu0 0.0
    %5797 = vmatpush1.msra.mxu0 %v4777
    %5798 = vmatprep.subr.mxu0 0.0
    %5799 = vmatpush1.msra.mxu0 %v4776
    %5800 = vmatprep.subr.mxu0 0.0
    %5801 = vmatpush1.msra.mxu0 %v4775
    %5802 = vmatprep.subr.mxu0 0.0
    %5803 = vmatpush1.msra.mxu0 %v4774
    %5804 = vmatprep.subr.mxu0 0.0
    %5805 = vmatpush1.msra.mxu0 %v4773
    %5806 = vmatprep.subr.mxu0 0.0
    %5807 = vmatpush2.msra.mxu0 %v4804
    %5808 = vmatprep.subr.mxu0 0.0
    %5809 = vmatpush2.msra.mxu0 %v4803
    %5810 = vmatprep.subr.mxu0 0.0
    %5811 = vmatpush2.msra.mxu0 %v4802
    %5812 = vmatprep.subr.mxu0 0.0
    %5813 = vmatpush2.msra.mxu0 %v4801
    %5814 = vmatprep.subr.mxu0 0.0
    %5815 = vmatpush2.msra.mxu0 %v4800
    %5816 = vmatprep.subr.mxu0 0.0
    %5817 = vmatpush2.msra.mxu0 %v4799
    %5818 = vmatprep.subr.mxu0 0.0
    %5819 = vmatpush2.msra.mxu0 %v4798
    %5820 = vmatprep.subr.mxu0 0.0
    %5821 = vmatpush2.msra.mxu0 %v4797
    %5822 = vmatprep.subr.mxu0 0.0
    %5823 = vmatpush2.msra.mxu0 %v4796
    %5824 = vmatprep.subr.mxu0 0.0
    %5825 = vmatpush2.msra.mxu0 %v4795
    %5826 = vmatprep.subr.mxu0 0.0
    %5827 = vmatpush2.msra.mxu0 %v4794
    %5828 = vmatprep.subr.mxu0 0.0
    %5829 = vmatpush2.msra.mxu0 %v4793
    %5830 = vmatprep.subr.mxu0 0.0
    %5831 = vmatpush2.msra.mxu0 %v4792
    %5832 = vmatprep.subr.mxu0 0.0
    %5833 = vmatpush2.msra.mxu0 %v4791
    %5834 = vmatprep.subr.mxu0 0.0
    %5835 = vmatpush2.msra.mxu0 %v4790
    %5836 = vmatprep.subr.mxu0 0.0
    %5837 = vmatpush2.msra.mxu0 %v4789
    %5838 = vmatprep.mubr.f32.mxu0 %v4408
    %5839 = vmatmul.mubr.f32.gmra.mxu0 %v4407
    %v5840 = vpop.f32.mrf.mxu0
    %v5841 = vadd.f32 %v5771, %v5840
    %v5842 = vpop.f32.mrf.mxu0
    %5843 = vdwg.mxu0
    %5844 = vmatprep.subr.mxu0 0.0
    %5845 = vmatpush1.msra.mxu0 %v4820
    %5846 = vmatprep.subr.mxu0 0.0
    %5847 = vmatpush1.msra.mxu0 %v4819
    %5848 = vmatprep.subr.mxu0 0.0
    %5849 = vmatpush1.msra.mxu0 %v4818
    %5850 = vmatprep.subr.mxu0 0.0
    %5851 = vmatpush1.msra.mxu0 %v4817
    %5852 = vmatprep.subr.mxu0 0.0
    %5853 = vmatpush1.msra.mxu0 %v4816
    %5854 = vmatprep.subr.mxu0 0.0
    %5855 = vmatpush1.msra.mxu0 %v4815
    %5856 = vmatprep.subr.mxu0 0.0
    %5857 = vmatpush1.msra.mxu0 %v4814
    %5858 = vmatprep.subr.mxu0 0.0
    %5859 = vmatpush1.msra.mxu0 %v4813
    %5860 = vmatprep.subr.mxu0 0.0
    %5861 = vmatpush1.msra.mxu0 %v4812
    %5862 = vmatprep.subr.mxu0 0.0
    %5863 = vmatpush1.msra.mxu0 %v4811
    %5864 = vmatprep.subr.mxu0 0.0
    %5865 = vmatpush1.msra.mxu0 %v4810
    %5866 = vmatprep.subr.mxu0 0.0
    %5867 = vmatpush1.msra.mxu0 %v4809
    %5868 = vmatprep.subr.mxu0 0.0
    %5869 = vmatpush1.msra.mxu0 %v4808
    %5870 = vmatprep.subr.mxu0 0.0
    %5871 = vmatpush1.msra.mxu0 %v4807
    %5872 = vmatprep.subr.mxu0 0.0
    %5873 = vmatpush1.msra.mxu0 %v4806
    %5874 = vmatprep.subr.mxu0 0.0
    %5875 = vmatpush1.msra.mxu0 %v4805
    %5876 = vmatprep.subr.mxu0 0.0
    %5877 = vmatpush2.msra.mxu0 %v4836
    %5878 = vmatprep.subr.mxu0 0.0
    %5879 = vmatpush2.msra.mxu0 %v4835
    %5880 = vmatprep.subr.mxu0 0.0
    %5881 = vmatpush2.msra.mxu0 %v4834
    %5882 = vmatprep.subr.mxu0 0.0
    %5883 = vmatpush2.msra.mxu0 %v4833
    %5884 = vmatprep.subr.mxu0 0.0
    %5885 = vmatpush2.msra.mxu0 %v4832
    %5886 = vmatprep.subr.mxu0 0.0
    %5887 = vmatpush2.msra.mxu0 %v4831
    %5888 = vmatprep.subr.mxu0 0.0
    %5889 = vmatpush2.msra.mxu0 %v4830
    %5890 = vmatprep.subr.mxu0 0.0
    %5891 = vmatpush2.msra.mxu0 %v4829
    %5892 = vmatprep.subr.mxu0 0.0
    %5893 = vmatpush2.msra.mxu0 %v4828
    %5894 = vmatprep.subr.mxu0 0.0
    %5895 = vmatpush2.msra.mxu0 %v4827
    %5896 = vmatprep.subr.mxu0 0.0
    %5897 = vmatpush2.msra.mxu0 %v4826
    %5898 = vmatprep.subr.mxu0 0.0
    %5899 = vmatpush2.msra.mxu0 %v4825
    %5900 = vmatprep.subr.mxu0 0.0
    %5901 = vmatpush2.msra.mxu0 %v4824
    %5902 = vmatprep.subr.mxu0 0.0
    %5903 = vmatpush2.msra.mxu0 %v4823
    %5904 = vmatprep.subr.mxu0 0.0
    %5905 = vmatpush2.msra.mxu0 %v4822
    %5906 = vmatprep.subr.mxu0 0.0
    %5907 = vmatpush2.msra.mxu0 %v4821
    %5908 = vmatprep.mubr.f32.mxu0 %v4410
    %5909 = vmatmul.mubr.f32.gmra.mxu0 %v4409
    %v5910 = vpop.f32.mrf.mxu0
    %v5911 = vadd.f32 %v5841, %v5910
    %v5912 = vpop.f32.mrf.mxu0
    %5913 = vdwg.mxu0
    %5914 = vmatprep.subr.mxu0 0.0
    %5915 = vmatpush1.msra.mxu0 %v4852
    %5916 = vmatprep.subr.mxu0 0.0
    %5917 = vmatpush1.msra.mxu0 %v4851
    %5918 = vmatprep.subr.mxu0 0.0
    %5919 = vmatpush1.msra.mxu0 %v4850
    %5920 = vmatprep.subr.mxu0 0.0
    %5921 = vmatpush1.msra.mxu0 %v4849
    %5922 = vmatprep.subr.mxu0 0.0
    %5923 = vmatpush1.msra.mxu0 %v4848
    %5924 = vmatprep.subr.mxu0 0.0
    %5925 = vmatpush1.msra.mxu0 %v4847
    %5926 = vmatprep.subr.mxu0 0.0
    %5927 = vmatpush1.msra.mxu0 %v4846
    %5928 = vmatprep.subr.mxu0 0.0
    %5929 = vmatpush1.msra.mxu0 %v4845
    %5930 = vmatprep.subr.mxu0 0.0
    %5931 = vmatpush1.msra.mxu0 %v4844
    %5932 = vmatprep.subr.mxu0 0.0
    %5933 = vmatpush1.msra.mxu0 %v4843
    %5934 = vmatprep.subr.mxu0 0.0
    %5935 = vmatpush1.msra.mxu0 %v4842
    %5936 = vmatprep.subr.mxu0 0.0
    %5937 = vmatpush1.msra.mxu0 %v4841
    %5938 = vmatprep.subr.mxu0 0.0
    %5939 = vmatpush1.msra.mxu0 %v4840
    %5940 = vmatprep.subr.mxu0 0.0
    %5941 = vmatpush1.msra.mxu0 %v4839
    %5942 = vmatprep.subr.mxu0 0.0
    %5943 = vmatpush1.msra.mxu0 %v4838
    %5944 = vmatprep.subr.mxu0 0.0
    %5945 = vmatpush1.msra.mxu0 %v4837
    %5946 = vmatprep.subr.mxu0 0.0
    %5947 = vmatpush2.msra.mxu0 %v4868
    %5948 = vmatprep.subr.mxu0 0.0
    %5949 = vmatpush2.msra.mxu0 %v4867
    %5950 = vmatprep.subr.mxu0 0.0
    %5951 = vmatpush2.msra.mxu0 %v4866
    %5952 = vmatprep.subr.mxu0 0.0
    %5953 = vmatpush2.msra.mxu0 %v4865
    %5954 = vmatprep.subr.mxu0 0.0
    %5955 = vmatpush2.msra.mxu0 %v4864
    %5956 = vmatprep.subr.mxu0 0.0
    %5957 = vmatpush2.msra.mxu0 %v4863
    %5958 = vmatprep.subr.mxu0 0.0
    %5959 = vmatpush2.msra.mxu0 %v4862
    %5960 = vmatprep.subr.mxu0 0.0
    %5961 = vmatpush2.msra.mxu0 %v4861
    %5962 = vmatprep.subr.mxu0 0.0
    %5963 = vmatpush2.msra.mxu0 %v4860
    %5964 = vmatprep.subr.mxu0 0.0
    %5965 = vmatpush2.msra.mxu0 %v4859
    %5966 = vmatprep.subr.mxu0 0.0
    %5967 = vmatpush2.msra.mxu0 %v4858
    %5968 = vmatprep.subr.mxu0 0.0
    %5969 = vmatpush2.msra.mxu0 %v4857
    %5970 = vmatprep.subr.mxu0 0.0
    %5971 = vmatpush2.msra.mxu0 %v4856
    %5972 = vmatprep.subr.mxu0 0.0
    %5973 = vmatpush2.msra.mxu0 %v4855
    %5974 = vmatprep.subr.mxu0 0.0
    %5975 = vmatpush2.msra.mxu0 %v4854
    %5976 = vmatprep.subr.mxu0 0.0
    %5977 = vmatpush2.msra.mxu0 %v4853
    %5978 = vmatprep.mubr.f32.mxu0 %v4412
    %5979 = vmatmul.mubr.f32.gmra.mxu0 %v4411
    %v5980 = vpop.f32.mrf.mxu0
    %v5981 = vadd.f32 %v5911, %v5980
    %v5982 = vpop.f32.mrf.mxu0
    %5983 = vdwg.mxu0
    %5984 = vmatprep.subr.mxu0 0.0
    %5985 = vmatpush1.msra.mxu0 %v4884
    %5986 = vmatprep.subr.mxu0 0.0
    %5987 = vmatpush1.msra.mxu0 %v4883
    %5988 = vmatprep.subr.mxu0 0.0
    %5989 = vmatpush1.msra.mxu0 %v4882
    %5990 = vmatprep.subr.mxu0 0.0
    %5991 = vmatpush1.msra.mxu0 %v4881
    %5992 = vmatprep.subr.mxu0 0.0
    %5993 = vmatpush1.msra.mxu0 %v4880
    %5994 = vmatprep.subr.mxu0 0.0
    %5995 = vmatpush1.msra.mxu0 %v4879
    %5996 = vmatprep.subr.mxu0 0.0
    %5997 = vmatpush1.msra.mxu0 %v4878
    %5998 = vmatprep.subr.mxu0 0.0
    %5999 = vmatpush1.msra.mxu0 %v4877
    %6000 = vmatprep.subr.mxu0 0.0
    %6001 = vmatpush1.msra.mxu0 %v4876
    %6002 = vmatprep.subr.mxu0 0.0
    %6003 = vmatpush1.msra.mxu0 %v4875
    %6004 = vmatprep.subr.mxu0 0.0
    %6005 = vmatpush1.msra.mxu0 %v4874
    %6006 = vmatprep.subr.mxu0 0.0
    %6007 = vmatpush1.msra.mxu0 %v4873
    %6008 = vmatprep.subr.mxu0 0.0
    %6009 = vmatpush1.msra.mxu0 %v4872
    %6010 = vmatprep.subr.mxu0 0.0
    %6011 = vmatpush1.msra.mxu0 %v4871
    %6012 = vmatprep.subr.mxu0 0.0
    %6013 = vmatpush1.msra.mxu0 %v4870
    %6014 = vmatprep.subr.mxu0 0.0
    %6015 = vmatpush1.msra.mxu0 %v4869
    %6016 = vmatprep.subr.mxu0 0.0
    %6017 = vmatpush2.msra.mxu0 %v4900
    %6018 = vmatprep.subr.mxu0 0.0
    %6019 = vmatpush2.msra.mxu0 %v4899
    %6020 = vmatprep.subr.mxu0 0.0
    %6021 = vmatpush2.msra.mxu0 %v4898
    %6022 = vmatprep.subr.mxu0 0.0
    %6023 = vmatpush2.msra.mxu0 %v4897
    %6024 = vmatprep.subr.mxu0 0.0
    %6025 = vmatpush2.msra.mxu0 %v4896
    %6026 = vmatprep.subr.mxu0 0.0
    %6027 = vmatpush2.msra.mxu0 %v4895
    %6028 = vmatprep.subr.mxu0 0.0
    %6029 = vmatpush2.msra.mxu0 %v4894
    %6030 = vmatprep.subr.mxu0 0.0
    %6031 = vmatpush2.msra.mxu0 %v4893
    %6032 = vmatprep.subr.mxu0 0.0
    %6033 = vmatpush2.msra.mxu0 %v4892
    %6034 = vmatprep.subr.mxu0 0.0
    %6035 = vmatpush2.msra.mxu0 %v4891
    %6036 = vmatprep.subr.mxu0 0.0
    %6037 = vmatpush2.msra.mxu0 %v4890
    %6038 = vmatprep.subr.mxu0 0.0
    %6039 = vmatpush2.msra.mxu0 %v4889
    %6040 = vmatprep.subr.mxu0 0.0
    %6041 = vmatpush2.msra.mxu0 %v4888
    %6042 = vmatprep.subr.mxu0 0.0
    %6043 = vmatpush2.msra.mxu0 %v4887
    %6044 = vmatprep.subr.mxu0 0.0
    %6045 = vmatpush2.msra.mxu0 %v4886
    %6046 = vmatprep.subr.mxu0 0.0
    %6047 = vmatpush2.msra.mxu0 %v4885
    %6048 = vmatprep.mubr.f32.mxu0 %v4414
    %6049 = vmatmul.mubr.f32.gmra.mxu0 %v4413
    %v6050 = vpop.f32.mrf.mxu0
    %v6051 = vadd.f32 %v5981, %v6050
    %v6052 = vpop.f32.mrf.mxu0
    %6053 = vdwg.mxu0
    %6054 = vmatprep.subr.mxu0 0.0
    %6055 = vmatpush1.msra.mxu0 %v4916
    %6056 = vmatprep.subr.mxu0 0.0
    %6057 = vmatpush1.msra.mxu0 %v4915
    %6058 = vmatprep.subr.mxu0 0.0
    %6059 = vmatpush1.msra.mxu0 %v4914
    %6060 = vmatprep.subr.mxu0 0.0
    %6061 = vmatpush1.msra.mxu0 %v4913
    %6062 = vmatprep.subr.mxu0 0.0
    %6063 = vmatpush1.msra.mxu0 %v4912
    %6064 = vmatprep.subr.mxu0 0.0
    %6065 = vmatpush1.msra.mxu0 %v4911
    %6066 = vmatprep.subr.mxu0 0.0
    %6067 = vmatpush1.msra.mxu0 %v4910
    %6068 = vmatprep.subr.mxu0 0.0
    %6069 = vmatpush1.msra.mxu0 %v4909
    %6070 = vmatprep.subr.mxu0 0.0
    %6071 = vmatpush1.msra.mxu0 %v4908
    %6072 = vmatprep.subr.mxu0 0.0
    %6073 = vmatpush1.msra.mxu0 %v4907
    %6074 = vmatprep.subr.mxu0 0.0
    %6075 = vmatpush1.msra.mxu0 %v4906
    %6076 = vmatprep.subr.mxu0 0.0
    %6077 = vmatpush1.msra.mxu0 %v4905
    %6078 = vmatprep.subr.mxu0 0.0
    %6079 = vmatpush1.msra.mxu0 %v4904
    %6080 = vmatprep.subr.mxu0 0.0
    %6081 = vmatpush1.msra.mxu0 %v4903
    %6082 = vmatprep.subr.mxu0 0.0
    %6083 = vmatpush1.msra.mxu0 %v4902
    %6084 = vmatprep.subr.mxu0 0.0
    %6085 = vmatpush1.msra.mxu0 %v4901
    %6086 = vmatprep.subr.mxu0 0.0
    %6087 = vmatpush2.msra.mxu0 %v4932
    %6088 = vmatprep.subr.mxu0 0.0
    %6089 = vmatpush2.msra.mxu0 %v4931
    %6090 = vmatprep.subr.mxu0 0.0
    %6091 = vmatpush2.msra.mxu0 %v4930
    %6092 = vmatprep.subr.mxu0 0.0
    %6093 = vmatpush2.msra.mxu0 %v4929
    %6094 = vmatprep.subr.mxu0 0.0
    %6095 = vmatpush2.msra.mxu0 %v4928
    %6096 = vmatprep.subr.mxu0 0.0
    %6097 = vmatpush2.msra.mxu0 %v4927
    %6098 = vmatprep.subr.mxu0 0.0
    %6099 = vmatpush2.msra.mxu0 %v4926
    %6100 = vmatprep.subr.mxu0 0.0
    %6101 = vmatpush2.msra.mxu0 %v4925
    %6102 = vmatprep.subr.mxu0 0.0
    %6103 = vmatpush2.msra.mxu0 %v4924
    %6104 = vmatprep.subr.mxu0 0.0
    %6105 = vmatpush2.msra.mxu0 %v4923
    %6106 = vmatprep.subr.mxu0 0.0
    %6107 = vmatpush2.msra.mxu0 %v4922
    %6108 = vmatprep.subr.mxu0 0.0
    %6109 = vmatpush2.msra.mxu0 %v4921
    %6110 = vmatprep.subr.mxu0 0.0
    %6111 = vmatpush2.msra.mxu0 %v4920
    %6112 = vmatprep.subr.mxu0 0.0
    %6113 = vmatpush2.msra.mxu0 %v4919
    %6114 = vmatprep.subr.mxu0 0.0
    %6115 = vmatpush2.msra.mxu0 %v4918
    %6116 = vmatprep.subr.mxu0 0.0
    %6117 = vmatpush2.msra.mxu0 %v4917
    %6118 = vmatprep.mubr.f32.mxu0 %v4416
    %6119 = vmatmul.mubr.f32.gmra.mxu0 %v4415
    %v6120 = vpop.f32.mrf.mxu0
    %v6121 = vadd.f32 %v6051, %v6120
    %v6122 = vpop.f32.mrf.mxu0
    %6123 = vdwg.mxu0
    %6124 = vmatprep.subr.mxu0 0.0
    %6125 = vmatpush1.msra.mxu0 %v4948
    %6126 = vmatprep.subr.mxu0 0.0
    %6127 = vmatpush1.msra.mxu0 %v4947
    %6128 = vmatprep.subr.mxu0 0.0
    %6129 = vmatpush1.msra.mxu0 %v4946
    %6130 = vmatprep.subr.mxu0 0.0
    %6131 = vmatpush1.msra.mxu0 %v4945
    %6132 = vmatprep.subr.mxu0 0.0
    %6133 = vmatpush1.msra.mxu0 %v4944
    %6134 = vmatprep.subr.mxu0 0.0
    %6135 = vmatpush1.msra.mxu0 %v4943
    %6136 = vmatprep.subr.mxu0 0.0
    %6137 = vmatpush1.msra.mxu0 %v4942
    %6138 = vmatprep.subr.mxu0 0.0
    %6139 = vmatpush1.msra.mxu0 %v4941
    %6140 = vmatprep.subr.mxu0 0.0
    %6141 = vmatpush1.msra.mxu0 %v4940
    %6142 = vmatprep.subr.mxu0 0.0
    %6143 = vmatpush1.msra.mxu0 %v4939
    %6144 = vmatprep.subr.mxu0 0.0
    %6145 = vmatpush1.msra.mxu0 %v4938
    %6146 = vmatprep.subr.mxu0 0.0
    %6147 = vmatpush1.msra.mxu0 %v4937
    %6148 = vmatprep.subr.mxu0 0.0
    %6149 = vmatpush1.msra.mxu0 %v4936
    %6150 = vmatprep.subr.mxu0 0.0
    %6151 = vmatpush1.msra.mxu0 %v4935
    %6152 = vmatprep.subr.mxu0 0.0
    %6153 = vmatpush1.msra.mxu0 %v4934
    %6154 = vmatprep.subr.mxu0 0.0
    %6155 = vmatpush1.msra.mxu0 %v4933
    %6156 = vmatprep.subr.mxu0 0.0
    %6157 = vmatpush2.msra.mxu0 %v4964
    %6158 = vmatprep.subr.mxu0 0.0
    %6159 = vmatpush2.msra.mxu0 %v4963
    %6160 = vmatprep.subr.mxu0 0.0
    %6161 = vmatpush2.msra.mxu0 %v4962
    %6162 = vmatprep.subr.mxu0 0.0
    %6163 = vmatpush2.msra.mxu0 %v4961
    %6164 = vmatprep.subr.mxu0 0.0
    %6165 = vmatpush2.msra.mxu0 %v4960
    %6166 = vmatprep.subr.mxu0 0.0
    %6167 = vmatpush2.msra.mxu0 %v4959
    %6168 = vmatprep.subr.mxu0 0.0
    %6169 = vmatpush2.msra.mxu0 %v4958
    %6170 = vmatprep.subr.mxu0 0.0
    %6171 = vmatpush2.msra.mxu0 %v4957
    %6172 = vmatprep.subr.mxu0 0.0
    %6173 = vmatpush2.msra.mxu0 %v4956
    %6174 = vmatprep.subr.mxu0 0.0
    %6175 = vmatpush2.msra.mxu0 %v4955
    %6176 = vmatprep.subr.mxu0 0.0
    %6177 = vmatpush2.msra.mxu0 %v4954
    %6178 = vmatprep.subr.mxu0 0.0
    %6179 = vmatpush2.msra.mxu0 %v4953
    %6180 = vmatprep.subr.mxu0 0.0
    %6181 = vmatpush2.msra.mxu0 %v4952
    %6182 = vmatprep.subr.mxu0 0.0
    %6183 = vmatpush2.msra.mxu0 %v4951
    %6184 = vmatprep.subr.mxu0 0.0
    %6185 = vmatpush2.msra.mxu0 %v4950
    %6186 = vmatprep.subr.mxu0 0.0
    %6187 = vmatpush2.msra.mxu0 %v4949
    %6188 = vmatprep.mubr.f32.mxu0 %v4418
    %6189 = vmatmul.mubr.f32.gmra.mxu0 %v4417
    %v6190 = vpop.f32.mrf.mxu0
    %v6191 = vadd.f32 %v6121, %v6190
    %v6192 = vpop.f32.mrf.mxu0
    %6193 = vdwg.mxu0
    %6194 = vmatprep.subr.mxu0 0.0
    %6195 = vmatpush1.msra.mxu0 %v4980
    %6196 = vmatprep.subr.mxu0 0.0
    %6197 = vmatpush1.msra.mxu0 %v4979
    %6198 = vmatprep.subr.mxu0 0.0
    %6199 = vmatpush1.msra.mxu0 %v4978
    %6200 = vmatprep.subr.mxu0 0.0
    %6201 = vmatpush1.msra.mxu0 %v4977
    %6202 = vmatprep.subr.mxu0 0.0
    %6203 = vmatpush1.msra.mxu0 %v4976
    %6204 = vmatprep.subr.mxu0 0.0
    %6205 = vmatpush1.msra.mxu0 %v4975
    %6206 = vmatprep.subr.mxu0 0.0
    %6207 = vmatpush1.msra.mxu0 %v4974
    %6208 = vmatprep.subr.mxu0 0.0
    %6209 = vmatpush1.msra.mxu0 %v4973
    %6210 = vmatprep.subr.mxu0 0.0
    %6211 = vmatpush1.msra.mxu0 %v4972
    %6212 = vmatprep.subr.mxu0 0.0
    %6213 = vmatpush1.msra.mxu0 %v4971
    %6214 = vmatprep.subr.mxu0 0.0
    %6215 = vmatpush1.msra.mxu0 %v4970
    %6216 = vmatprep.subr.mxu0 0.0
    %6217 = vmatpush1.msra.mxu0 %v4969
    %6218 = vmatprep.subr.mxu0 0.0
    %6219 = vmatpush1.msra.mxu0 %v4968
    %6220 = vmatprep.subr.mxu0 0.0
    %6221 = vmatpush1.msra.mxu0 %v4967
    %6222 = vmatprep.subr.mxu0 0.0
    %6223 = vmatpush1.msra.mxu0 %v4966
    %6224 = vmatprep.subr.mxu0 0.0
    %6225 = vmatpush1.msra.mxu0 %v4965
    %6226 = vmatprep.subr.mxu0 0.0
    %6227 = vmatpush2.msra.mxu0 %v4996
    %6228 = vmatprep.subr.mxu0 0.0
    %6229 = vmatpush2.msra.mxu0 %v4995
    %6230 = vmatprep.subr.mxu0 0.0
    %6231 = vmatpush2.msra.mxu0 %v4994
    %6232 = vmatprep.subr.mxu0 0.0
    %6233 = vmatpush2.msra.mxu0 %v4993
    %6234 = vmatprep.subr.mxu0 0.0
    %6235 = vmatpush2.msra.mxu0 %v4992
    %6236 = vmatprep.subr.mxu0 0.0
    %6237 = vmatpush2.msra.mxu0 %v4991
    %6238 = vmatprep.subr.mxu0 0.0
    %6239 = vmatpush2.msra.mxu0 %v4990
    %6240 = vmatprep.subr.mxu0 0.0
    %6241 = vmatpush2.msra.mxu0 %v4989
    %6242 = vmatprep.subr.mxu0 0.0
    %6243 = vmatpush2.msra.mxu0 %v4988
    %6244 = vmatprep.subr.mxu0 0.0
    %6245 = vmatpush2.msra.mxu0 %v4987
    %6246 = vmatprep.subr.mxu0 0.0
    %6247 = vmatpush2.msra.mxu0 %v4986
    %6248 = vmatprep.subr.mxu0 0.0
    %6249 = vmatpush2.msra.mxu0 %v4985
    %6250 = vmatprep.subr.mxu0 0.0
    %6251 = vmatpush2.msra.mxu0 %v4984
    %6252 = vmatprep.subr.mxu0 0.0
    %6253 = vmatpush2.msra.mxu0 %v4983
    %6254 = vmatprep.subr.mxu0 0.0
    %6255 = vmatpush2.msra.mxu0 %v4982
    %6256 = vmatprep.subr.mxu0 0.0
    %6257 = vmatpush2.msra.mxu0 %v4981
    %6258 = vmatprep.mubr.f32.mxu0 %v4420
    %6259 = vmatmul.mubr.f32.gmra.mxu0 %v4419
    %v6260 = vpop.f32.mrf.mxu0
    %v6261 = vadd.f32 %v6191, %v6260
    %v6262 = vpop.f32.mrf.mxu0
    %6263 = vdwg.mxu0
    %v6264 = vmax.f32 %v6261, 0.0
    %v6265 = vld [vmem:[#allocation9] sm:$0xff]
    %v6266 = vld [vmem:[#allocation9 + $0x8] sm:$0xff]
    %v6267 = vld [vmem:[#allocation9 + $0x10] sm:$0xff]
    %v6268 = vld [vmem:[#allocation9 + $0x18] sm:$0xff]
    %v6269 = vld [vmem:[#allocation9 + $0x20] sm:$0xff]
    %v6270 = vld [vmem:[#allocation9 + $0x28] sm:$0xff]
    %v6271 = vld [vmem:[#allocation9 + $0x30] sm:$0xff]
    %v6272 = vld [vmem:[#allocation9 + $0x38] sm:$0xff]
    %v6273 = vld [vmem:[#allocation9 + $0x40] sm:$0xff]
    %v6274 = vld [vmem:[#allocation9 + $0x48] sm:$0xff]
    %v6275 = vld [vmem:[#allocation9 + $0x50] sm:$0xff]
    %v6276 = vld [vmem:[#allocation9 + $0x58] sm:$0xff]
    %v6277 = vld [vmem:[#allocation9 + $0x60] sm:$0xff]
    %v6278 = vld [vmem:[#allocation9 + $0x68] sm:$0xff]
    %v6279 = vld [vmem:[#allocation9 + $0x70] sm:$0xff]
    %v6280 = vld [vmem:[#allocation9 + $0x78] sm:$0xff]
    %v6281 = vld [vmem:[#allocation10] sm:$0x1]
    %v6283 = vlaneseq
    %v6284 = vshrl.u32 %v6283, 7
    %v6285 = vsub.s32 0, %v6284
    %v6286 = vrot.slane %v6281, %v6285
    %6288 = vmatprep.subr.mxu0 0.0
    %6289 = vmatpush1.msra.mxu0 %v6280
    %6290 = vmatprep.subr.mxu0 0.0
    %6291 = vmatpush1.msra.mxu0 %v6279
    %6292 = vmatprep.subr.mxu0 0.0
    %6293 = vmatpush1.msra.mxu0 %v6278
    %6294 = vmatprep.subr.mxu0 0.0
    %6295 = vmatpush1.msra.mxu0 %v6277
    %6296 = vmatprep.subr.mxu0 0.0
    %6297 = vmatpush1.msra.mxu0 %v6276
    %6298 = vmatprep.subr.mxu0 0.0
    %6299 = vmatpush1.msra.mxu0 %v6275
    %6300 = vmatprep.subr.mxu0 0.0
    %6301 = vmatpush1.msra.mxu0 %v6274
    %6302 = vmatprep.subr.mxu0 0.0
    %6303 = vmatpush1.msra.mxu0 %v6273
    %6304 = vmatprep.subr.mxu0 0.0
    %6305 = vmatpush1.msra.mxu0 %v6272
    %6306 = vmatprep.subr.mxu0 0.0
    %6307 = vmatpush1.msra.mxu0 %v6271
    %6308 = vmatprep.subr.mxu0 0.0
    %6309 = vmatpush1.msra.mxu0 %v6270
    %6310 = vmatprep.subr.mxu0 0.0
    %6311 = vmatpush1.msra.mxu0 %v6269
    %6312 = vmatprep.subr.mxu0 0.0
    %6313 = vmatpush1.msra.mxu0 %v6268
    %6314 = vmatprep.subr.mxu0 0.0
    %6315 = vmatpush1.msra.mxu0 %v6267
    %6316 = vmatprep.subr.mxu0 0.0
    %6317 = vmatpush1.msra.mxu0 %v6266
    %6318 = vmatprep.subr.mxu0 0.0
    %6319 = vmatpush1.msra.mxu0 %v6265
    %6320 = vmatprep.subr.mxu0 0.0
    %6321 = vmatpush2.msra.mxu0 0.0
    %6322 = vmatprep.subr.mxu0 0.0
    %6323 = vmatpush2.msra.mxu0 0.0
    %6324 = vmatprep.subr.mxu0 0.0
    %6325 = vmatpush2.msra.mxu0 0.0
    %6326 = vmatprep.subr.mxu0 0.0
    %6327 = vmatpush2.msra.mxu0 0.0
    %6328 = vmatprep.subr.mxu0 0.0
    %6329 = vmatpush2.msra.mxu0 0.0
    %6330 = vmatprep.subr.mxu0 0.0
    %6331 = vmatpush2.msra.mxu0 0.0
    %6332 = vmatprep.subr.mxu0 0.0
    %6333 = vmatpush2.msra.mxu0 0.0
    %6334 = vmatprep.subr.mxu0 0.0
    %6335 = vmatpush2.msra.mxu0 0.0
    %6336 = vmatprep.subr.mxu0 0.0
    %6337 = vmatpush2.msra.mxu0 0.0
    %6338 = vmatprep.subr.mxu0 0.0
    %6339 = vmatpush2.msra.mxu0 0.0
    %6340 = vmatprep.subr.mxu0 0.0
    %6341 = vmatpush2.msra.mxu0 0.0
    %6342 = vmatprep.subr.mxu0 0.0
    %6343 = vmatpush2.msra.mxu0 0.0
    %6344 = vmatprep.subr.mxu0 0.0
    %6345 = vmatpush2.msra.mxu0 0.0
    %6346 = vmatprep.subr.mxu0 0.0
    %6347 = vmatpush2.msra.mxu0 0.0
    %6348 = vmatprep.subr.mxu0 0.0
    %6349 = vmatpush2.msra.mxu0 0.0
    %6350 = vmatprep.subr.mxu0 0.0
    %6351 = vmatpush2.msra.mxu0 0.0
    %6352 = vmatprep.mubr.f32.mxu0 0.0
    %6353 = vmatmul.mubr.f32.gmra.mxu0 %v6264
    %v6354 = vpop.f32.mrf.mxu0
    %v6355 = vadd.f32 %v6286, %v6354
    %v6356 = vpop.f32.mrf.mxu0
    %6357 = vdwg.mxu0
    %6358 = vst [vmem:[%s7] sm:$0xff] %v6355
    // Predicated region
    $region54: #{convnet_forward.1} parent=1 // pred_check
      _
    $region55: #{convnet_forward.1} parent=1 // pred_check_branch
      %6360 = sbr.rel (0) target = $region57
    $region56: #{convnet_forward.1} parent=1 // pred_region
      _
    $region57: #{convnet_forward.1} parent=1 // pred_fallthru
      _
    // Predicated region
    $region58: #{convnet_forward.1} parent=1 // pred_check
      _
    $region59: #{convnet_forward.1} parent=1 // pred_check_branch
      %6362 = sbr.rel (0) target = $region61
    $region60: #{convnet_forward.1} parent=1 // pred_region
      _
    $region61: #{convnet_forward.1} parent=1 // pred_fallthru
      _
    %6363 = vsyncpa [#allocation3], 1
    %6364 = vsyncpa [#allocation5], 1
    %6365 = vsyncpa [#allocation8], 1
    %6366 = vsyncpa [#allocation11], 1

</llo_original>
